<compile_context>
chip_gen: v7x
topology: tpu7x:2x2x1
jax: 0.10.0
libtpu: 0.0.40
codegen_flags: <defaults>
</compile_context>

<pallas_src>
import functools

import numpy as np

import jax
import jax.numpy as jnp
from jax.experimental import pallas as pl
from jax.experimental.pallas import tpu as pltpu

NEG_SLOPE = 0.01            # F.leaky_relu_ default
BN_EPS = 1e-5               # nn.BatchNorm2d default
MXU_DTYPE = jnp.bfloat16    # matmul operand dtype (accumulation stays f32)
PAD = 3                     # max vertical halo = 7 // 2


def _round_up(a, b):
    return -(-a // b) * b


def _padded_cin(in_channels, W):
    """Pad the input-channel count so W*Cin is a multiple of 128 lanes
    (keeps the layer-0 LHS lane-dense). No padding if W doesn't divide 128."""
    if 128 % W == 0:
        return _round_up(in_channels, 128 // W)
    return in_channels


def _layer_cfgs(cin0, mid_channels):
    """Static per-layer config: (kernel_size, cin, cout, residual, final)."""
    cfgs = [(7, cin0, mid_channels, False, False)]              # StartBlock
    for blk in range(6):
        is_last = blk == 5
        cfgs.append((5, mid_channels, mid_channels, False, False))   # bb1
        if is_last:
            cfgs.append((3, mid_channels, 1, False, True))            # bb2 (sigmoid)
        else:
            cfgs.append((3, mid_channels, mid_channels, True, False))  # bb2 (+id)
    return cfgs


def _stacked_band_weights(w, W, cin_pad):
    """w (k, k, cin, cout) f32 -> stacked band RHS (k*W*cin_pad, W*cout).

    Row index = dy*(W*cin_pad) + xin*cin_pad + c, column = x*cout + co, value
    w[dy, xin - x + p, c, co] when that horizontal tap is in range, 0 otherwise.
    This folds the kw horizontal taps AND the horizontal zero padding into the
    RHS; stacking over dy folds the kh vertical taps so the whole conv becomes
    ONE deep-K matmul against the kh vertically shifted input slabs."""
    k, _, cin, cout = w.shape
    p = k // 2
    B = np.zeros((k, W * cin_pad, W * cout), np.float32)
    for dy in range(k):
        for x in range(W):
            for dx in range(k):
                xin = x + dx - p
                if 0 <= xin < W:
                    B[dy, xin * cin_pad:xin * cin_pad + cin,
                          x * cout:(x + 1) * cout] = w[dy, dx]
    return B.reshape(k * W * cin_pad, W * cout)


def init_params(key, in_channels, mid_channels, W):
    """Deterministic parameters.

    Conv weights are stored as bf16 stacked band matrices (k*W*cin, W*cout);
    BN gamma/beta are identity-initialised and pre-tiled to the per-lane layout
    (1, W*cout), lane = x*cout + c."""
    cin_pad = _padded_cin(in_channels, W)
    cfgs = _layer_cfgs(cin_pad, mid_channels)
    keys = jax.random.split(key, len(cfgs))
    params = []
    for li, ((k, cinp, cout, _res, _fin), kk) in enumerate(zip(cfgs, keys)):
        cin_real = in_channels if li == 0 else cinp
        bound = 1.0 / float(np.sqrt(cin_real * k * k))   # kaiming-uniform-ish
        w = jax.random.uniform(kk, (k, k, cin_real, cout), jnp.float32,
                               -bound, bound)
        band = _stacked_band_weights(np.asarray(w), W, cinp)
        params.append(dict(
            w=jnp.asarray(band).astype(MXU_DTYPE),
            gamma=jnp.ones((1, W * cout), jnp.float32),   # per-lane tiled
            beta=jnp.zeros((1, W * cout), jnp.float32),
        ))
    return params


def make_resnet_kernel(N, H, W, cfgs):
    # The cyclic lane-roll BN fold only needs W to be a power of two: rolls are
    # multiples of cout, so the lane residue (= channel index) is preserved for
    # any cout; binary doubling then covers all W column positions exactly.
    assert W > 0 and (W & (W - 1)) == 0, \
        "cyclic lane-fold BN reduction assumes W is a power of two"
    mid = cfgs[0][2]
    P = PAD
    HP = H + 2 * P
    M = N * H * W               # per-channel BN element count
    inv_m = 1.0 / M
    n_layers = len(cfgs)

    def kernel(*refs):
        x_ref = refs[0]                        # (N, HP, W*cin_pad) f32, pre-padded
        p_refs = refs[1:1 + 3 * n_layers]
        probas_ref = refs[1 + 3 * n_layers]    # (N*H, W) f32
        buf_a = refs[2 + 3 * n_layers]         # (N, HP, W*mid) f32 ping
        buf_b = refs[3 + 3 * n_layers]         # (N, HP, W*mid) f32 pong

        # Zero only the halo rows (vertical conv zero-padding). Every layer
        # fully overwrites the interior, so the halos stay zero all network.
        zero_halo = jnp.zeros((N, P, W * mid), jnp.float32)
        buf_a[:, :P, :] = zero_halo
        buf_a[:, P + H:, :] = zero_halo
        buf_b[:, :P, :] = zero_halo
        buf_b[:, P + H:, :] = zero_halo

        def run_layer(li, slab, identity=None):
            """slab: (N, HP, W*cin) f32 zero-padded activation VALUE (read once)."""
            k, cin, cout, residual, final = cfgs[li]
            w_ref = p_refs[3 * li]             # (k*W*cin, W*cout) bf16 stacked band
            gm_ref = p_refs[3 * li + 1]        # (1, W*cout) f32
            bt_ref = p_refs[3 * li + 2]        # (1, W*cout) f32
            p = k // 2
            o = P - p

            # Deep-K LHS: k vertically shifted windows of the slab, concatenated
            # along lanes. All value-level (no per-tap VMEM relayout copies).
            parts = [slab[:, o + dy:o + dy + H, :] for dy in range(k)]
            lhs = jnp.concatenate(parts, axis=-1).reshape(N * H, k * W * cin)
            # ONE MXU matmul per layer (K = k*W*cin, up to 896), f32 accumulate.
            acc = jnp.dot(lhs.astype(MXU_DTYPE), w_ref[...],
                          preferred_element_type=jnp.float32)   # (N*H, W*cout)

            # BatchNorm (training-mode batch stats, biased variance), one pass,
            # folded into a single per-lane scale/shift FMA.
            if cout == 1:
                mean = jnp.sum(acc) * inv_m
                ex2 = jnp.sum(acc * acc) * inv_m
                var = jnp.maximum(ex2 - mean * mean, 0.0)
                scale_l = gm_ref[...] * jax.lax.rsqrt(var + BN_EPS)   # (1, W)
                shift_l = bt_ref[...] - mean * scale_l
            else:
                s1 = jnp.sum(acc, axis=0, keepdims=True)              # (1, W*cout)
                s2 = jnp.sum(acc * acc, axis=0, keepdims=True)
                # Cyclic lane fold: after log2(W) roll+add steps every lane
                # holds the total over all lanes with the same (lane % cout),
                # i.e. per-channel sums already broadcast to the lane layout.
                step = cout
                while step < W * cout:
                    s1 = s1 + pltpu.roll(s1, step, 1)
                    s2 = s2 + pltpu.roll(s2, step, 1)
                    step *= 2
                mean_l = s1 * inv_m
                var_l = jnp.maximum(s2 * inv_m - mean_l * mean_l, 0.0)
                scale_l = gm_ref[...] * jax.lax.rsqrt(var_l + BN_EPS)
                shift_l = bt_ref[...] - mean_l * scale_l
            y = acc * scale_l + shift_l

            if residual:
                y = y + identity                # identity threaded as f32 value
            if final:
                y = jax.nn.sigmoid(y)
            else:
                y = jnp.maximum(y, NEG_SLOPE * y)   # leaky-relu, 2 VPU ops
            return y

        def store(buf, y):
            buf[:, P:P + H, :] = y.reshape(N, H, W * mid)

        # ---- StartBlock: conv7x7 + BN + leaky ----
        y = run_layer(0, x_ref[...])
        store(buf_a, y)
        identity = y                            # block input for the next residual

        li = 1
        # ---- 5 residual BasicBlocks: conv5 -> conv3 (+identity) ----
        # TODO(synk): at realistic N*H, split these rows across v7x's two
        # TensorCores with a CMEM exchange of the (1,128) BN partial sums; at
        # N*H = 32 the barrier cost outweighs the win, so single-core here.
        for _ in range(5):
            y = run_layer(li, buf_a[...])
            store(buf_b, y)
            li += 1
            y = run_layer(li, buf_b[...], identity)
            store(buf_a, y)
            identity = y
            li += 1

        # ---- last BasicBlock: conv5 -> conv3 (Cout=1) + BN + sigmoid ----
        y = run_layer(li, buf_a[...])
        store(buf_b, y)
        li += 1
        probas_ref[...] = run_layer(li, buf_b[...])   # (N*H, W), already sigmoid

    return kernel


@functools.partial(jax.jit, static_argnames=("filter_name", "threshold"))
def resnet_forward(x_nchw, params, filter_name="canny", threshold=0.5):
    N, Cin, H, W = x_nchw.shape
    mid = params[0]["gamma"].shape[-1] // W
    cin_pad = _padded_cin(Cin, W)
    cfgs = _layer_cfgs(cin_pad, mid)
    binarize = filter_name in ("canny", "niblack")

    # NCHW -> NHWC, zero-pad channels to cin_pad, fold channels into lanes,
    # add the vertical zero halo.  All tiny fused XLA ops on a ~16 KiB array.
    x = jnp.transpose(x_nchw, (0, 2, 3, 1)).astype(jnp.float32)
    if cin_pad != Cin:
        x = jnp.pad(x, ((0, 0), (0, 0), (0, 0), (0, cin_pad - Cin)))
    x_rows = x.reshape(N, H, W * cin_pad)
    x_slab = jnp.pad(x_rows, ((0, 0), (PAD, PAD), (0, 0)))

    flat = []
    for prm in params:
        flat += [prm["w"], prm["gamma"], prm["beta"]]

    kernel = make_resnet_kernel(N, H, W, cfgs)
    vmem = pl.BlockSpec(memory_space=pltpu.MemorySpace.VMEM)
    HP = H + 2 * PAD

    probas_rows = pl.pallas_call(
        kernel,
        out_shape=jax.ShapeDtypeStruct((N * H, W), jnp.float32),
        in_specs=[vmem] * (1 + len(flat)),
        out_specs=vmem,
        scratch_shapes=[
            pltpu.VMEM((N, HP, W * mid), jnp.float32),   # activation ping
            pltpu.VMEM((N, HP, W * mid), jnp.float32),   # activation pong
        ],
    )(x_slab, *flat)

    probas = probas_rows.reshape(N, 1, H, W)             # back to NCHW
    if binarize:
        y_hat = (probas >= threshold).astype(jnp.float32)
    else:
        y_hat = probas
    return probas, y_hat


if __name__ == "__main__":
    key = jax.random.PRNGKey(0)
    k_x, k_p = jax.random.split(key)

    N, in_channels, mid_channels, H, W = 2, 4, 8, 16, 16
    x = jax.random.normal(k_x, (N, in_channels, H, W), jnp.float32)  # NCHW
    params = init_params(k_p, in_channels, mid_channels, W)

    probas, y_hat = resnet_forward(x, params, filter_name="canny", threshold=0.5)
    probas, y_hat = jax.block_until_ready((probas, y_hat))

    assert probas.shape == (N, 1, H, W)
    assert y_hat.shape == (N, 1, H, W)
    assert bool(jnp.all(jnp.isfinite(probas)))
    assert bool(jnp.all((probas >= 0.0) & (probas <= 1.0)))   # sigmoid output
    assert bool(jnp.all((y_hat == 0.0) | (y_hat == 1.0)))     # thresholded
    print("KERNEL_OK")
</pallas_src>

<mosaic_0001>
module attributes {stable_mosaic.version = 11 : i64} {
  func.func @kernel(%arg0: memref<2x22x128xf32, #tpu.memory_space<vmem>>, %arg1: memref<896x128xbf16, #tpu.memory_space<vmem>>, %arg2: memref<1x128xf32, #tpu.memory_space<vmem>>, %arg3: memref<1x128xf32, #tpu.memory_space<vmem>>, %arg4: memref<640x128xbf16, #tpu.memory_space<vmem>>, %arg5: memref<1x128xf32, #tpu.memory_space<vmem>>, %arg6: memref<1x128xf32, #tpu.memory_space<vmem>>, %arg7: memref<384x128xbf16, #tpu.memory_space<vmem>>, %arg8: memref<1x128xf32, #tpu.memory_space<vmem>>, %arg9: memref<1x128xf32, #tpu.memory_space<vmem>>, %arg10: memref<640x128xbf16, #tpu.memory_space<vmem>>, %arg11: memref<1x128xf32, #tpu.memory_space<vmem>>, %arg12: memref<1x128xf32, #tpu.memory_space<vmem>>, %arg13: memref<384x128xbf16, #tpu.memory_space<vmem>>, %arg14: memref<1x128xf32, #tpu.memory_space<vmem>>, %arg15: memref<1x128xf32, #tpu.memory_space<vmem>>, %arg16: memref<640x128xbf16, #tpu.memory_space<vmem>>, %arg17: memref<1x128xf32, #tpu.memory_space<vmem>>, %arg18: memref<1x128xf32, #tpu.memory_space<vmem>>, %arg19: memref<384x128xbf16, #tpu.memory_space<vmem>>, %arg20: memref<1x128xf32, #tpu.memory_space<vmem>>, %arg21: memref<1x128xf32, #tpu.memory_space<vmem>>, %arg22: memref<640x128xbf16, #tpu.memory_space<vmem>>, %arg23: memref<1x128xf32, #tpu.memory_space<vmem>>, %arg24: memref<1x128xf32, #tpu.memory_space<vmem>>, %arg25: memref<384x128xbf16, #tpu.memory_space<vmem>>, %arg26: memref<1x128xf32, #tpu.memory_space<vmem>>, %arg27: memref<1x128xf32, #tpu.memory_space<vmem>>, %arg28: memref<640x128xbf16, #tpu.memory_space<vmem>>, %arg29: memref<1x128xf32, #tpu.memory_space<vmem>>, %arg30: memref<1x128xf32, #tpu.memory_space<vmem>>, %arg31: memref<384x128xbf16, #tpu.memory_space<vmem>>, %arg32: memref<1x128xf32, #tpu.memory_space<vmem>>, %arg33: memref<1x128xf32, #tpu.memory_space<vmem>>, %arg34: memref<640x128xbf16, #tpu.memory_space<vmem>>, %arg35: memref<1x128xf32, #tpu.memory_space<vmem>>, %arg36: memref<1x128xf32, #tpu.memory_space<vmem>>, %arg37: memref<384x16xbf16, #tpu.memory_space<vmem>>, %arg38: memref<1x16xf32, #tpu.memory_space<vmem>>, %arg39: memref<1x16xf32, #tpu.memory_space<vmem>>, %arg40: memref<32x16xf32, #tpu.memory_space<vmem>>, %arg41: memref<2x22x128xf32, #tpu.memory_space<vmem>>, %arg42: memref<2x22x128xf32, #tpu.memory_space<vmem>>) attributes {dimension_semantics = [], scalar_prefetch = 0 : i64, scratch_operands = 2 : i64, tpu.core_type = #tpu.core_type<tc>} {
    %cst = arith.constant 0.000000e+00 : f32
    %0 = vector.broadcast %cst : f32 to vector<2x3x128xf32>
    %c0 = arith.constant 0 : index
    %c0_0 = arith.constant 0 : index
    %c0_1 = arith.constant 0 : index
    %1 = vector.load %arg41[%c0, %c0_0, %c0_1] : memref<2x22x128xf32, #tpu.memory_space<vmem>>, vector<2x3x128xf32>
    tpu.vector_store %arg41[%c0, %c0_0, %c0_1], %0 {strides = array<i32>} : memref<2x22x128xf32, #tpu.memory_space<vmem>>, vector<2x3x128xf32>,
    %c0_2 = arith.constant 0 : index
    %c19 = arith.constant 19 : index
    %c0_3 = arith.constant 0 : index
    %2 = vector.load %arg41[%c0_2, %c19, %c0_3] : memref<2x22x128xf32, #tpu.memory_space<vmem>>, vector<2x3x128xf32>
    tpu.vector_store %arg41[%c0_2, %c19, %c0_3], %0 {strides = array<i32>} : memref<2x22x128xf32, #tpu.memory_space<vmem>>, vector<2x3x128xf32>,
    %c0_4 = arith.constant 0 : index
    %c0_5 = arith.constant 0 : index
    %c0_6 = arith.constant 0 : index
    %3 = vector.load %arg42[%c0_4, %c0_5, %c0_6] : memref<2x22x128xf32, #tpu.memory_space<vmem>>, vector<2x3x128xf32>
    tpu.vector_store %arg42[%c0_4, %c0_5, %c0_6], %0 {strides = array<i32>} : memref<2x22x128xf32, #tpu.memory_space<vmem>>, vector<2x3x128xf32>,
    %c0_7 = arith.constant 0 : index
    %c19_8 = arith.constant 19 : index
    %c0_9 = arith.constant 0 : index
    %4 = vector.load %arg42[%c0_7, %c19_8, %c0_9] : memref<2x22x128xf32, #tpu.memory_space<vmem>>, vector<2x3x128xf32>
    tpu.vector_store %arg42[%c0_7, %c19_8, %c0_9], %0 {strides = array<i32>} : memref<2x22x128xf32, #tpu.memory_space<vmem>>, vector<2x3x128xf32>,
    %c0_10 = arith.constant 0 : index
    %c0_11 = arith.constant 0 : index
    %c0_12 = arith.constant 0 : index
    %5 = vector.load %arg0[%c0_10, %c0_11, %c0_12] : memref<2x22x128xf32, #tpu.memory_space<vmem>>, vector<2x22x128xf32>
    %6 = vector.extract_strided_slice %5 {offsets = [0, 0, 0], sizes = [2, 16, 128], strides = [1, 1, 1]} : vector<2x22x128xf32> to vector<2x16x128xf32>
    %7 = vector.extract_strided_slice %5 {offsets = [0, 1, 0], sizes = [2, 16, 128], strides = [1, 1, 1]} : vector<2x22x128xf32> to vector<2x16x128xf32>
    %8 = vector.extract_strided_slice %5 {offsets = [0, 2, 0], sizes = [2, 16, 128], strides = [1, 1, 1]} : vector<2x22x128xf32> to vector<2x16x128xf32>
    %9 = vector.extract_strided_slice %5 {offsets = [0, 3, 0], sizes = [2, 16, 128], strides = [1, 1, 1]} : vector<2x22x128xf32> to vector<2x16x128xf32>
    %10 = vector.extract_strided_slice %5 {offsets = [0, 4, 0], sizes = [2, 16, 128], strides = [1, 1, 1]} : vector<2x22x128xf32> to vector<2x16x128xf32>
    %11 = vector.extract_strided_slice %5 {offsets = [0, 5, 0], sizes = [2, 16, 128], strides = [1, 1, 1]} : vector<2x22x128xf32> to vector<2x16x128xf32>
    %12 = vector.extract_strided_slice %5 {offsets = [0, 6, 0], sizes = [2, 16, 128], strides = [1, 1, 1]} : vector<2x22x128xf32> to vector<2x16x128xf32>
    %13 = tpu.concatenate %6, %7, %8, %9, %10, %11, %12 in 2 : vector<2x16x128xf32>, vector<2x16x128xf32>, vector<2x16x128xf32>, vector<2x16x128xf32>, vector<2x16x128xf32>, vector<2x16x128xf32>, vector<2x16x128xf32> -> vector<2x16x896xf32>
    %14 = vector.shape_cast %13 : vector<2x16x896xf32> to vector<32x896xf32>
    %15 = arith.truncf %14 : vector<32x896xf32> to vector<32x896xbf16>
    %c0_13 = arith.constant 0 : index
    %c0_14 = arith.constant 0 : index
    %16 = vector.load %arg1[%c0_13, %c0_14] : memref<896x128xbf16, #tpu.memory_space<vmem>>, vector<896x128xbf16>
    %cst_15 = arith.constant dense<0.000000e+00> : vector<32x128xf32>
    %17 = tpu.matmul %15, %16, %cst_15 {dimension_numbers = #tpu.dot_dimension_numbers<[1], [0], [0], [1], [0, 0, 1, 1], [], []>} : vector<32x896xbf16>, vector<896x128xbf16>, vector<32x128xf32> -> vector<32x128xf32>
    %cst_16 = arith.constant dense<0.000000e+00> : vector<128xf32>
    %18 = vector.multi_reduction <add>, %17, %cst_16 [0] : vector<32x128xf32> to vector<128xf32>
    %19 = vector.shape_cast %18 : vector<128xf32> to vector<1x128xf32>
    %20 = arith.mulf %17, %17 : vector<32x128xf32>
    %cst_17 = arith.constant dense<0.000000e+00> : vector<128xf32>
    %21 = vector.multi_reduction <add>, %20, %cst_17 [0] : vector<32x128xf32> to vector<128xf32>
    %22 = vector.shape_cast %21 : vector<128xf32> to vector<1x128xf32>
    %c8_i32 = arith.constant 8 : i32
    %23 = tpu.dynamic_rotate %19 by %c8_i32 dim 1 : vector<1x128xf32>, i32 -> vector<1x128xf32>
    %24 = arith.addf %19, %23 : vector<1x128xf32>
    %c8_i32_18 = arith.constant 8 : i32
    %25 = tpu.dynamic_rotate %22 by %c8_i32_18 dim 1 : vector<1x128xf32>, i32 -> vector<1x128xf32>
    %26 = arith.addf %22, %25 : vector<1x128xf32>
    %c16_i32 = arith.constant 16 : i32
    %27 = tpu.dynamic_rotate %24 by %c16_i32 dim 1 : vector<1x128xf32>, i32 -> vector<1x128xf32>
    %28 = arith.addf %24, %27 : vector<1x128xf32>
    %c16_i32_19 = arith.constant 16 : i32
    %29 = tpu.dynamic_rotate %26 by %c16_i32_19 dim 1 : vector<1x128xf32>, i32 -> vector<1x128xf32>
    %30 = arith.addf %26, %29 : vector<1x128xf32>
    %c32_i32 = arith.constant 32 : i32
    %31 = tpu.dynamic_rotate %28 by %c32_i32 dim 1 : vector<1x128xf32>, i32 -> vector<1x128xf32>
    %32 = arith.addf %28, %31 : vector<1x128xf32>
    %c32_i32_20 = arith.constant 32 : i32
    %33 = tpu.dynamic_rotate %30 by %c32_i32_20 dim 1 : vector<1x128xf32>, i32 -> vector<1x128xf32>
    %34 = arith.addf %30, %33 : vector<1x128xf32>
    %c64_i32 = arith.constant 64 : i32
    %35 = tpu.dynamic_rotate %32 by %c64_i32 dim 1 : vector<1x128xf32>, i32 -> vector<1x128xf32>
    %36 = arith.addf %32, %35 : vector<1x128xf32>
    %c64_i32_21 = arith.constant 64 : i32
    %37 = tpu.dynamic_rotate %34 by %c64_i32_21 dim 1 : vector<1x128xf32>, i32 -> vector<1x128xf32>
    %38 = arith.addf %34, %37 : vector<1x128xf32>
    %cst_22 = arith.constant 0.001953125 : f32
    %39 = vector.broadcast %cst_22 : f32 to vector<1x128xf32>
    %40 = arith.mulf %36, %39 : vector<1x128xf32>
    %cst_23 = arith.constant 0.001953125 : f32
    %41 = vector.broadcast %cst_23 : f32 to vector<1x128xf32>
    %42 = arith.mulf %38, %41 : vector<1x128xf32>
    %43 = arith.mulf %40, %40 : vector<1x128xf32>
    %44 = arith.subf %42, %43 : vector<1x128xf32>
    %cst_24 = arith.constant 0.000000e+00 : f32
    %45 = vector.broadcast %cst_24 : f32 to vector<1x128xf32>
    %46 = arith.maximumf %44, %45 : vector<1x128xf32>
    %c0_25 = arith.constant 0 : index
    %c0_26 = arith.constant 0 : index
    %47 = vector.load %arg2[%c0_25, %c0_26] : memref<1x128xf32, #tpu.memory_space<vmem>>, vector<1x128xf32>
    %cst_27 = arith.constant 9.99999974E-6 : f32
    %48 = vector.broadcast %cst_27 : f32 to vector<1x128xf32>
    %49 = arith.addf %46, %48 : vector<1x128xf32>
    %50 = math.rsqrt %49 : vector<1x128xf32>
    %51 = arith.mulf %47, %50 : vector<1x128xf32>
    %c0_28 = arith.constant 0 : index
    %c0_29 = arith.constant 0 : index
    %52 = vector.load %arg3[%c0_28, %c0_29] : memref<1x128xf32, #tpu.memory_space<vmem>>, vector<1x128xf32>
    %53 = arith.mulf %40, %51 : vector<1x128xf32>
    %54 = arith.subf %52, %53 : vector<1x128xf32>
    %55 = vector.broadcast %51 : vector<1x128xf32> to vector<32x128xf32>
    %56 = arith.mulf %17, %55 : vector<32x128xf32>
    %57 = vector.broadcast %54 : vector<1x128xf32> to vector<32x128xf32>
    %58 = arith.addf %56, %57 : vector<32x128xf32>
    %cst_30 = arith.constant 0.00999999977 : f32
    %59 = vector.broadcast %cst_30 : f32 to vector<32x128xf32>
    %60 = arith.mulf %59, %58 : vector<32x128xf32>
    %61 = arith.maximumf %58, %60 : vector<32x128xf32>
    %62 = vector.shape_cast %61 : vector<32x128xf32> to vector<2x16x128xf32>
    %c0_31 = arith.constant 0 : index
    %c3 = arith.constant 3 : index
    %c0_32 = arith.constant 0 : index
    %63 = vector.load %arg41[%c0_31, %c3, %c0_32] : memref<2x22x128xf32, #tpu.memory_space<vmem>>, vector<2x16x128xf32>
    tpu.vector_store %arg41[%c0_31, %c3, %c0_32], %62 {strides = array<i32>} : memref<2x22x128xf32, #tpu.memory_space<vmem>>, vector<2x16x128xf32>,
    %c0_33 = arith.constant 0 : index
    %c0_34 = arith.constant 0 : index
    %c0_35 = arith.constant 0 : index
    %64 = vector.load %arg41[%c0_33, %c0_34, %c0_35] : memref<2x22x128xf32, #tpu.memory_space<vmem>>, vector<2x22x128xf32>
    %65 = vector.extract_strided_slice %64 {offsets = [0, 1, 0], sizes = [2, 16, 128], strides = [1, 1, 1]} : vector<2x22x128xf32> to vector<2x16x128xf32>
    %66 = vector.extract_strided_slice %64 {offsets = [0, 2, 0], sizes = [2, 16, 128], strides = [1, 1, 1]} : vector<2x22x128xf32> to vector<2x16x128xf32>
    %67 = vector.extract_strided_slice %64 {offsets = [0, 3, 0], sizes = [2, 16, 128], strides = [1, 1, 1]} : vector<2x22x128xf32> to vector<2x16x128xf32>
    %68 = vector.extract_strided_slice %64 {offsets = [0, 4, 0], sizes = [2, 16, 128], strides = [1, 1, 1]} : vector<2x22x128xf32> to vector<2x16x128xf32>
    %69 = vector.extract_strided_slice %64 {offsets = [0, 5, 0], sizes = [2, 16, 128], strides = [1, 1, 1]} : vector<2x22x128xf32> to vector<2x16x128xf32>
    %70 = tpu.concatenate %65, %66, %67, %68, %69 in 2 : vector<2x16x128xf32>, vector<2x16x128xf32>, vector<2x16x128xf32>, vector<2x16x128xf32>, vector<2x16x128xf32> -> vector<2x16x640xf32>
    %71 = vector.shape_cast %70 : vector<2x16x640xf32> to vector<32x640xf32>
    %72 = arith.truncf %71 : vector<32x640xf32> to vector<32x640xbf16>
    %c0_36 = arith.constant 0 : index
    %c0_37 = arith.constant 0 : index
    %73 = vector.load %arg4[%c0_36, %c0_37] : memref<640x128xbf16, #tpu.memory_space<vmem>>, vector<640x128xbf16>
    %cst_38 = arith.constant dense<0.000000e+00> : vector<32x128xf32>
    %74 = tpu.matmul %72, %73, %cst_38 {dimension_numbers = #tpu.dot_dimension_numbers<[1], [0], [0], [1], [0, 0, 1, 1], [], []>} : vector<32x640xbf16>, vector<640x128xbf16>, vector<32x128xf32> -> vector<32x128xf32>
    %cst_39 = arith.constant dense<0.000000e+00> : vector<128xf32>
    %75 = vector.multi_reduction <add>, %74, %cst_39 [0] : vector<32x128xf32> to vector<128xf32>
    %76 = vector.shape_cast %75 : vector<128xf32> to vector<1x128xf32>
    %77 = arith.mulf %74, %74 : vector<32x128xf32>
    %cst_40 = arith.constant dense<0.000000e+00> : vector<128xf32>
    %78 = vector.multi_reduction <add>, %77, %cst_40 [0] : vector<32x128xf32> to vector<128xf32>
    %79 = vector.shape_cast %78 : vector<128xf32> to vector<1x128xf32>
    %c8_i32_41 = arith.constant 8 : i32
    %80 = tpu.dynamic_rotate %76 by %c8_i32_41 dim 1 : vector<1x128xf32>, i32 -> vector<1x128xf32>
    %81 = arith.addf %76, %80 : vector<1x128xf32>
    %c8_i32_42 = arith.constant 8 : i32
    %82 = tpu.dynamic_rotate %79 by %c8_i32_42 dim 1 : vector<1x128xf32>, i32 -> vector<1x128xf32>
    %83 = arith.addf %79, %82 : vector<1x128xf32>
    %c16_i32_43 = arith.constant 16 : i32
    %84 = tpu.dynamic_rotate %81 by %c16_i32_43 dim 1 : vector<1x128xf32>, i32 -> vector<1x128xf32>
    %85 = arith.addf %81, %84 : vector<1x128xf32>
    %c16_i32_44 = arith.constant 16 : i32
    %86 = tpu.dynamic_rotate %83 by %c16_i32_44 dim 1 : vector<1x128xf32>, i32 -> vector<1x128xf32>
    %87 = arith.addf %83, %86 : vector<1x128xf32>
    %c32_i32_45 = arith.constant 32 : i32
    %88 = tpu.dynamic_rotate %85 by %c32_i32_45 dim 1 : vector<1x128xf32>, i32 -> vector<1x128xf32>
    %89 = arith.addf %85, %88 : vector<1x128xf32>
    %c32_i32_46 = arith.constant 32 : i32
    %90 = tpu.dynamic_rotate %87 by %c32_i32_46 dim 1 : vector<1x128xf32>, i32 -> vector<1x128xf32>
    %91 = arith.addf %87, %90 : vector<1x128xf32>
    %c64_i32_47 = arith.constant 64 : i32
    %92 = tpu.dynamic_rotate %89 by %c64_i32_47 dim 1 : vector<1x128xf32>, i32 -> vector<1x128xf32>
    %93 = arith.addf %89, %92 : vector<1x128xf32>
    %c64_i32_48 = arith.constant 64 : i32
    %94 = tpu.dynamic_rotate %91 by %c64_i32_48 dim 1 : vector<1x128xf32>, i32 -> vector<1x128xf32>
    %95 = arith.addf %91, %94 : vector<1x128xf32>
    %cst_49 = arith.constant 0.001953125 : f32
    %96 = vector.broadcast %cst_49 : f32 to vector<1x128xf32>
    %97 = arith.mulf %93, %96 : vector<1x128xf32>
    %cst_50 = arith.constant 0.001953125 : f32
    %98 = vector.broadcast %cst_50 : f32 to vector<1x128xf32>
    %99 = arith.mulf %95, %98 : vector<1x128xf32>
    %100 = arith.mulf %97, %97 : vector<1x128xf32>
    %101 = arith.subf %99, %100 : vector<1x128xf32>
    %cst_51 = arith.constant 0.000000e+00 : f32
    %102 = vector.broadcast %cst_51 : f32 to vector<1x128xf32>
    %103 = arith.maximumf %101, %102 : vector<1x128xf32>
    %c0_52 = arith.constant 0 : index
    %c0_53 = arith.constant 0 : index
    %104 = vector.load %arg5[%c0_52, %c0_53] : memref<1x128xf32, #tpu.memory_space<vmem>>, vector<1x128xf32>
    %cst_54 = arith.constant 9.99999974E-6 : f32
    %105 = vector.broadcast %cst_54 : f32 to vector<1x128xf32>
    %106 = arith.addf %103, %105 : vector<1x128xf32>
    %107 = math.rsqrt %106 : vector<1x128xf32>
    %108 = arith.mulf %104, %107 : vector<1x128xf32>
    %c0_55 = arith.constant 0 : index
    %c0_56 = arith.constant 0 : index
    %109 = vector.load %arg6[%c0_55, %c0_56] : memref<1x128xf32, #tpu.memory_space<vmem>>, vector<1x128xf32>
    %110 = arith.mulf %97, %108 : vector<1x128xf32>
    %111 = arith.subf %109, %110 : vector<1x128xf32>
    %112 = vector.broadcast %108 : vector<1x128xf32> to vector<32x128xf32>
    %113 = arith.mulf %74, %112 : vector<32x128xf32>
    %114 = vector.broadcast %111 : vector<1x128xf32> to vector<32x128xf32>
    %115 = arith.addf %113, %114 : vector<32x128xf32>
    %cst_57 = arith.constant 0.00999999977 : f32
    %116 = vector.broadcast %cst_57 : f32 to vector<32x128xf32>
    %117 = arith.mulf %116, %115 : vector<32x128xf32>
    %118 = arith.maximumf %115, %117 : vector<32x128xf32>
    %119 = vector.shape_cast %118 : vector<32x128xf32> to vector<2x16x128xf32>
    %c0_58 = arith.constant 0 : index
    %c3_59 = arith.constant 3 : index
    %c0_60 = arith.constant 0 : index
    %120 = vector.load %arg42[%c0_58, %c3_59, %c0_60] : memref<2x22x128xf32, #tpu.memory_space<vmem>>, vector<2x16x128xf32>
    tpu.vector_store %arg42[%c0_58, %c3_59, %c0_60], %119 {strides = array<i32>} : memref<2x22x128xf32, #tpu.memory_space<vmem>>, vector<2x16x128xf32>,
    %c0_61 = arith.constant 0 : index
    %c0_62 = arith.constant 0 : index
    %c0_63 = arith.constant 0 : index
    %121 = vector.load %arg42[%c0_61, %c0_62, %c0_63] : memref<2x22x128xf32, #tpu.memory_space<vmem>>, vector<2x22x128xf32>
    %122 = vector.extract_strided_slice %121 {offsets = [0, 2, 0], sizes = [2, 16, 128], strides = [1, 1, 1]} : vector<2x22x128xf32> to vector<2x16x128xf32>
    %123 = vector.extract_strided_slice %121 {offsets = [0, 3, 0], sizes = [2, 16, 128], strides = [1, 1, 1]} : vector<2x22x128xf32> to vector<2x16x128xf32>
    %124 = vector.extract_strided_slice %121 {offsets = [0, 4, 0], sizes = [2, 16, 128], strides = [1, 1, 1]} : vector<2x22x128xf32> to vector<2x16x128xf32>
    %125 = tpu.concatenate %122, %123, %124 in 2 : vector<2x16x128xf32>, vector<2x16x128xf32>, vector<2x16x128xf32> -> vector<2x16x384xf32>
    %126 = vector.shape_cast %125 : vector<2x16x384xf32> to vector<32x384xf32>
    %127 = arith.truncf %126 : vector<32x384xf32> to vector<32x384xbf16>
    %c0_64 = arith.constant 0 : index
    %c0_65 = arith.constant 0 : index
    %128 = vector.load %arg7[%c0_64, %c0_65] : memref<384x128xbf16, #tpu.memory_space<vmem>>, vector<384x128xbf16>
    %cst_66 = arith.constant dense<0.000000e+00> : vector<32x128xf32>
    %129 = tpu.matmul %127, %128, %cst_66 {dimension_numbers = #tpu.dot_dimension_numbers<[1], [0], [0], [1], [0, 0, 1, 1], [], []>} : vector<32x384xbf16>, vector<384x128xbf16>, vector<32x128xf32> -> vector<32x128xf32>
    %cst_67 = arith.constant dense<0.000000e+00> : vector<128xf32>
    %130 = vector.multi_reduction <add>, %129, %cst_67 [0] : vector<32x128xf32> to vector<128xf32>
    %131 = vector.shape_cast %130 : vector<128xf32> to vector<1x128xf32>
    %132 = arith.mulf %129, %129 : vector<32x128xf32>
    %cst_68 = arith.constant dense<0.000000e+00> : vector<128xf32>
    %133 = vector.multi_reduction <add>, %132, %cst_68 [0] : vector<32x128xf32> to vector<128xf32>
    %134 = vector.shape_cast %133 : vector<128xf32> to vector<1x128xf32>
    %c8_i32_69 = arith.constant 8 : i32
    %135 = tpu.dynamic_rotate %131 by %c8_i32_69 dim 1 : vector<1x128xf32>, i32 -> vector<1x128xf32>
    %136 = arith.addf %131, %135 : vector<1x128xf32>
    %c8_i32_70 = arith.constant 8 : i32
    %137 = tpu.dynamic_rotate %134 by %c8_i32_70 dim 1 : vector<1x128xf32>, i32 -> vector<1x128xf32>
    %138 = arith.addf %134, %137 : vector<1x128xf32>
    %c16_i32_71 = arith.constant 16 : i32
    %139 = tpu.dynamic_rotate %136 by %c16_i32_71 dim 1 : vector<1x128xf32>, i32 -> vector<1x128xf32>
    %140 = arith.addf %136, %139 : vector<1x128xf32>
    %c16_i32_72 = arith.constant 16 : i32
    %141 = tpu.dynamic_rotate %138 by %c16_i32_72 dim 1 : vector<1x128xf32>, i32 -> vector<1x128xf32>
    %142 = arith.addf %138, %141 : vector<1x128xf32>
    %c32_i32_73 = arith.constant 32 : i32
    %143 = tpu.dynamic_rotate %140 by %c32_i32_73 dim 1 : vector<1x128xf32>, i32 -> vector<1x128xf32>
    %144 = arith.addf %140, %143 : vector<1x128xf32>
    %c32_i32_74 = arith.constant 32 : i32
    %145 = tpu.dynamic_rotate %142 by %c32_i32_74 dim 1 : vector<1x128xf32>, i32 -> vector<1x128xf32>
    %146 = arith.addf %142, %145 : vector<1x128xf32>
    %c64_i32_75 = arith.constant 64 : i32
    %147 = tpu.dynamic_rotate %144 by %c64_i32_75 dim 1 : vector<1x128xf32>, i32 -> vector<1x128xf32>
    %148 = arith.addf %144, %147 : vector<1x128xf32>
    %c64_i32_76 = arith.constant 64 : i32
    %149 = tpu.dynamic_rotate %146 by %c64_i32_76 dim 1 : vector<1x128xf32>, i32 -> vector<1x128xf32>
    %150 = arith.addf %146, %149 : vector<1x128xf32>
    %cst_77 = arith.constant 0.001953125 : f32
    %151 = vector.broadcast %cst_77 : f32 to vector<1x128xf32>
    %152 = arith.mulf %148, %151 : vector<1x128xf32>
    %cst_78 = arith.constant 0.001953125 : f32
    %153 = vector.broadcast %cst_78 : f32 to vector<1x128xf32>
    %154 = arith.mulf %150, %153 : vector<1x128xf32>
    %155 = arith.mulf %152, %152 : vector<1x128xf32>
    %156 = arith.subf %154, %155 : vector<1x128xf32>
    %cst_79 = arith.constant 0.000000e+00 : f32
    %157 = vector.broadcast %cst_79 : f32 to vector<1x128xf32>
    %158 = arith.maximumf %156, %157 : vector<1x128xf32>
    %c0_80 = arith.constant 0 : index
    %c0_81 = arith.constant 0 : index
    %159 = vector.load %arg8[%c0_80, %c0_81] : memref<1x128xf32, #tpu.memory_space<vmem>>, vector<1x128xf32>
    %cst_82 = arith.constant 9.99999974E-6 : f32
    %160 = vector.broadcast %cst_82 : f32 to vector<1x128xf32>
    %161 = arith.addf %158, %160 : vector<1x128xf32>
    %162 = math.rsqrt %161 : vector<1x128xf32>
    %163 = arith.mulf %159, %162 : vector<1x128xf32>
    %c0_83 = arith.constant 0 : index
    %c0_84 = arith.constant 0 : index
    %164 = vector.load %arg9[%c0_83, %c0_84] : memref<1x128xf32, #tpu.memory_space<vmem>>, vector<1x128xf32>
    %165 = arith.mulf %152, %163 : vector<1x128xf32>
    %166 = arith.subf %164, %165 : vector<1x128xf32>
    %167 = vector.broadcast %163 : vector<1x128xf32> to vector<32x128xf32>
    %168 = arith.mulf %129, %167 : vector<32x128xf32>
    %169 = vector.broadcast %166 : vector<1x128xf32> to vector<32x128xf32>
    %170 = arith.addf %168, %169 : vector<32x128xf32>
    %171 = arith.addf %170, %61 : vector<32x128xf32>
    %cst_85 = arith.constant 0.00999999977 : f32
    %172 = vector.broadcast %cst_85 : f32 to vector<32x128xf32>
    %173 = arith.mulf %172, %171 : vector<32x128xf32>
    %174 = arith.maximumf %171, %173 : vector<32x128xf32>
    %175 = vector.shape_cast %174 : vector<32x128xf32> to vector<2x16x128xf32>
    %c0_86 = arith.constant 0 : index
    %c3_87 = arith.constant 3 : index
    %c0_88 = arith.constant 0 : index
    %176 = vector.load %arg41[%c0_86, %c3_87, %c0_88] : memref<2x22x128xf32, #tpu.memory_space<vmem>>, vector<2x16x128xf32>
    tpu.vector_store %arg41[%c0_86, %c3_87, %c0_88], %175 {strides = array<i32>} : memref<2x22x128xf32, #tpu.memory_space<vmem>>, vector<2x16x128xf32>,
    %c0_89 = arith.constant 0 : index
    %c0_90 = arith.constant 0 : index
    %c0_91 = arith.constant 0 : index
    %177 = vector.load %arg41[%c0_89, %c0_90, %c0_91] : memref<2x22x128xf32, #tpu.memory_space<vmem>>, vector<2x22x128xf32>
    %178 = vector.extract_strided_slice %177 {offsets = [0, 1, 0], sizes = [2, 16, 128], strides = [1, 1, 1]} : vector<2x22x128xf32> to vector<2x16x128xf32>
    %179 = vector.extract_strided_slice %177 {offsets = [0, 2, 0], sizes = [2, 16, 128], strides = [1, 1, 1]} : vector<2x22x128xf32> to vector<2x16x128xf32>
    %180 = vector.extract_strided_slice %177 {offsets = [0, 3, 0], sizes = [2, 16, 128], strides = [1, 1, 1]} : vector<2x22x128xf32> to vector<2x16x128xf32>
    %181 = vector.extract_strided_slice %177 {offsets = [0, 4, 0], sizes = [2, 16, 128], strides = [1, 1, 1]} : vector<2x22x128xf32> to vector<2x16x128xf32>
    %182 = vector.extract_strided_slice %177 {offsets = [0, 5, 0], sizes = [2, 16, 128], strides = [1, 1, 1]} : vector<2x22x128xf32> to vector<2x16x128xf32>
    %183 = tpu.concatenate %178, %179, %180, %181, %182 in 2 : vector<2x16x128xf32>, vector<2x16x128xf32>, vector<2x16x128xf32>, vector<2x16x128xf32>, vector<2x16x128xf32> -> vector<2x16x640xf32>
    %184 = vector.shape_cast %183 : vector<2x16x640xf32> to vector<32x640xf32>
    %185 = arith.truncf %184 : vector<32x640xf32> to vector<32x640xbf16>
    %c0_92 = arith.constant 0 : index
    %c0_93 = arith.constant 0 : index
    %186 = vector.load %arg10[%c0_92, %c0_93] : memref<640x128xbf16, #tpu.memory_space<vmem>>, vector<640x128xbf16>
    %cst_94 = arith.constant dense<0.000000e+00> : vector<32x128xf32>
    %187 = tpu.matmul %185, %186, %cst_94 {dimension_numbers = #tpu.dot_dimension_numbers<[1], [0], [0], [1], [0, 0, 1, 1], [], []>} : vector<32x640xbf16>, vector<640x128xbf16>, vector<32x128xf32> -> vector<32x128xf32>
    %cst_95 = arith.constant dense<0.000000e+00> : vector<128xf32>
    %188 = vector.multi_reduction <add>, %187, %cst_95 [0] : vector<32x128xf32> to vector<128xf32>
    %189 = vector.shape_cast %188 : vector<128xf32> to vector<1x128xf32>
    %190 = arith.mulf %187, %187 : vector<32x128xf32>
    %cst_96 = arith.constant dense<0.000000e+00> : vector<128xf32>
    %191 = vector.multi_reduction <add>, %190, %cst_96 [0] : vector<32x128xf32> to vector<128xf32>
    %192 = vector.shape_cast %191 : vector<128xf32> to vector<1x128xf32>
    %c8_i32_97 = arith.constant 8 : i32
    %193 = tpu.dynamic_rotate %189 by %c8_i32_97 dim 1 : vector<1x128xf32>, i32 -> vector<1x128xf32>
    %194 = arith.addf %189, %193 : vector<1x128xf32>
    %c8_i32_98 = arith.constant 8 : i32
    %195 = tpu.dynamic_rotate %192 by %c8_i32_98 dim 1 : vector<1x128xf32>, i32 -> vector<1x128xf32>
    %196 = arith.addf %192, %195 : vector<1x128xf32>
    %c16_i32_99 = arith.constant 16 : i32
    %197 = tpu.dynamic_rotate %194 by %c16_i32_99 dim 1 : vector<1x128xf32>, i32 -> vector<1x128xf32>
    %198 = arith.addf %194, %197 : vector<1x128xf32>
    %c16_i32_100 = arith.constant 16 : i32
    %199 = tpu.dynamic_rotate %196 by %c16_i32_100 dim 1 : vector<1x128xf32>, i32 -> vector<1x128xf32>
    %200 = arith.addf %196, %199 : vector<1x128xf32>
    %c32_i32_101 = arith.constant 32 : i32
    %201 = tpu.dynamic_rotate %198 by %c32_i32_101 dim 1 : vector<1x128xf32>, i32 -> vector<1x128xf32>
    %202 = arith.addf %198, %201 : vector<1x128xf32>
    %c32_i32_102 = arith.constant 32 : i32
    %203 = tpu.dynamic_rotate %200 by %c32_i32_102 dim 1 : vector<1x128xf32>, i32 -> vector<1x128xf32>
    %204 = arith.addf %200, %203 : vector<1x128xf32>
    %c64_i32_103 = arith.constant 64 : i32
    %205 = tpu.dynamic_rotate %202 by %c64_i32_103 dim 1 : vector<1x128xf32>, i32 -> vector<1x128xf32>
    %206 = arith.addf %202, %205 : vector<1x128xf32>
    %c64_i32_104 = arith.constant 64 : i32
    %207 = tpu.dynamic_rotate %204 by %c64_i32_104 dim 1 : vector<1x128xf32>, i32 -> vector<1x128xf32>
    %208 = arith.addf %204, %207 : vector<1x128xf32>
    %cst_105 = arith.constant 0.001953125 : f32
    %209 = vector.broadcast %cst_105 : f32 to vector<1x128xf32>
    %210 = arith.mulf %206, %209 : vector<1x128xf32>
    %cst_106 = arith.constant 0.001953125 : f32
    %211 = vector.broadcast %cst_106 : f32 to vector<1x128xf32>
    %212 = arith.mulf %208, %211 : vector<1x128xf32>
    %213 = arith.mulf %210, %210 : vector<1x128xf32>
    %214 = arith.subf %212, %213 : vector<1x128xf32>
    %cst_107 = arith.constant 0.000000e+00 : f32
    %215 = vector.broadcast %cst_107 : f32 to vector<1x128xf32>
    %216 = arith.maximumf %214, %215 : vector<1x128xf32>
    %c0_108 = arith.constant 0 : index
    %c0_109 = arith.constant 0 : index
    %217 = vector.load %arg11[%c0_108, %c0_109] : memref<1x128xf32, #tpu.memory_space<vmem>>, vector<1x128xf32>
    %cst_110 = arith.constant 9.99999974E-6 : f32
    %218 = vector.broadcast %cst_110 : f32 to vector<1x128xf32>
    %219 = arith.addf %216, %218 : vector<1x128xf32>
    %220 = math.rsqrt %219 : vector<1x128xf32>
    %221 = arith.mulf %217, %220 : vector<1x128xf32>
    %c0_111 = arith.constant 0 : index
    %c0_112 = arith.constant 0 : index
    %222 = vector.load %arg12[%c0_111, %c0_112] : memref<1x128xf32, #tpu.memory_space<vmem>>, vector<1x128xf32>
    %223 = arith.mulf %210, %221 : vector<1x128xf32>
    %224 = arith.subf %222, %223 : vector<1x128xf32>
    %225 = vector.broadcast %221 : vector<1x128xf32> to vector<32x128xf32>
    %226 = arith.mulf %187, %225 : vector<32x128xf32>
    %227 = vector.broadcast %224 : vector<1x128xf32> to vector<32x128xf32>
    %228 = arith.addf %226, %227 : vector<32x128xf32>
    %cst_113 = arith.constant 0.00999999977 : f32
    %229 = vector.broadcast %cst_113 : f32 to vector<32x128xf32>
    %230 = arith.mulf %229, %228 : vector<32x128xf32>
    %231 = arith.maximumf %228, %230 : vector<32x128xf32>
    %232 = vector.shape_cast %231 : vector<32x128xf32> to vector<2x16x128xf32>
    %c0_114 = arith.constant 0 : index
    %c3_115 = arith.constant 3 : index
    %c0_116 = arith.constant 0 : index
    %233 = vector.load %arg42[%c0_114, %c3_115, %c0_116] : memref<2x22x128xf32, #tpu.memory_space<vmem>>, vector<2x16x128xf32>
    tpu.vector_store %arg42[%c0_114, %c3_115, %c0_116], %232 {strides = array<i32>} : memref<2x22x128xf32, #tpu.memory_space<vmem>>, vector<2x16x128xf32>,
    %c0_117 = arith.constant 0 : index
    %c0_118 = arith.constant 0 : index
    %c0_119 = arith.constant 0 : index
    %234 = vector.load %arg42[%c0_117, %c0_118, %c0_119] : memref<2x22x128xf32, #tpu.memory_space<vmem>>, vector<2x22x128xf32>
    %235 = vector.extract_strided_slice %234 {offsets = [0, 2, 0], sizes = [2, 16, 128], strides = [1, 1, 1]} : vector<2x22x128xf32> to vector<2x16x128xf32>
    %236 = vector.extract_strided_slice %234 {offsets = [0, 3, 0], sizes = [2, 16, 128], strides = [1, 1, 1]} : vector<2x22x128xf32> to vector<2x16x128xf32>
    %237 = vector.extract_strided_slice %234 {offsets = [0, 4, 0], sizes = [2, 16, 128], strides = [1, 1, 1]} : vector<2x22x128xf32> to vector<2x16x128xf32>
    %238 = tpu.concatenate %235, %236, %237 in 2 : vector<2x16x128xf32>, vector<2x16x128xf32>, vector<2x16x128xf32> -> vector<2x16x384xf32>
    %239 = vector.shape_cast %238 : vector<2x16x384xf32> to vector<32x384xf32>
    %240 = arith.truncf %239 : vector<32x384xf32> to vector<32x384xbf16>
    %c0_120 = arith.constant 0 : index
    %c0_121 = arith.constant 0 : index
    %241 = vector.load %arg13[%c0_120, %c0_121] : memref<384x128xbf16, #tpu.memory_space<vmem>>, vector<384x128xbf16>
    %cst_122 = arith.constant dense<0.000000e+00> : vector<32x128xf32>
    %242 = tpu.matmul %240, %241, %cst_122 {dimension_numbers = #tpu.dot_dimension_numbers<[1], [0], [0], [1], [0, 0, 1, 1], [], []>} : vector<32x384xbf16>, vector<384x128xbf16>, vector<32x128xf32> -> vector<32x128xf32>
    %cst_123 = arith.constant dense<0.000000e+00> : vector<128xf32>
    %243 = vector.multi_reduction <add>, %242, %cst_123 [0] : vector<32x128xf32> to vector<128xf32>
    %244 = vector.shape_cast %243 : vector<128xf32> to vector<1x128xf32>
    %245 = arith.mulf %242, %242 : vector<32x128xf32>
    %cst_124 = arith.constant dense<0.000000e+00> : vector<128xf32>
    %246 = vector.multi_reduction <add>, %245, %cst_124 [0] : vector<32x128xf32> to vector<128xf32>
    %247 = vector.shape_cast %246 : vector<128xf32> to vector<1x128xf32>
    %c8_i32_125 = arith.constant 8 : i32
    %248 = tpu.dynamic_rotate %244 by %c8_i32_125 dim 1 : vector<1x128xf32>, i32 -> vector<1x128xf32>
    %249 = arith.addf %244, %248 : vector<1x128xf32>
    %c8_i32_126 = arith.constant 8 : i32
    %250 = tpu.dynamic_rotate %247 by %c8_i32_126 dim 1 : vector<1x128xf32>, i32 -> vector<1x128xf32>
    %251 = arith.addf %247, %250 : vector<1x128xf32>
    %c16_i32_127 = arith.constant 16 : i32
    %252 = tpu.dynamic_rotate %249 by %c16_i32_127 dim 1 : vector<1x128xf32>, i32 -> vector<1x128xf32>
    %253 = arith.addf %249, %252 : vector<1x128xf32>
    %c16_i32_128 = arith.constant 16 : i32
    %254 = tpu.dynamic_rotate %251 by %c16_i32_128 dim 1 : vector<1x128xf32>, i32 -> vector<1x128xf32>
    %255 = arith.addf %251, %254 : vector<1x128xf32>
    %c32_i32_129 = arith.constant 32 : i32
    %256 = tpu.dynamic_rotate %253 by %c32_i32_129 dim 1 : vector<1x128xf32>, i32 -> vector<1x128xf32>
    %257 = arith.addf %253, %256 : vector<1x128xf32>
    %c32_i32_130 = arith.constant 32 : i32
    %258 = tpu.dynamic_rotate %255 by %c32_i32_130 dim 1 : vector<1x128xf32>, i32 -> vector<1x128xf32>
    %259 = arith.addf %255, %258 : vector<1x128xf32>
    %c64_i32_131 = arith.constant 64 : i32
    %260 = tpu.dynamic_rotate %257 by %c64_i32_131 dim 1 : vector<1x128xf32>, i32 -> vector<1x128xf32>
    %261 = arith.addf %257, %260 : vector<1x128xf32>
    %c64_i32_132 = arith.constant 64 : i32
    %262 = tpu.dynamic_rotate %259 by %c64_i32_132 dim 1 : vector<1x128xf32>, i32 -> vector<1x128xf32>
    %263 = arith.addf %259, %262 : vector<1x128xf32>
    %cst_133 = arith.constant 0.001953125 : f32
    %264 = vector.broadcast %cst_133 : f32 to vector<1x128xf32>
    %265 = arith.mulf %261, %264 : vector<1x128xf32>
    %cst_134 = arith.constant 0.001953125 : f32
    %266 = vector.broadcast %cst_134 : f32 to vector<1x128xf32>
    %267 = arith.mulf %263, %266 : vector<1x128xf32>
    %268 = arith.mulf %265, %265 : vector<1x128xf32>
    %269 = arith.subf %267, %268 : vector<1x128xf32>
    %cst_135 = arith.constant 0.000000e+00 : f32
    %270 = vector.broadcast %cst_135 : f32 to vector<1x128xf32>
    %271 = arith.maximumf %269, %270 : vector<1x128xf32>
    %c0_136 = arith.constant 0 : index
    %c0_137 = arith.constant 0 : index
    %272 = vector.load %arg14[%c0_136, %c0_137] : memref<1x128xf32, #tpu.memory_space<vmem>>, vector<1x128xf32>
    %cst_138 = arith.constant 9.99999974E-6 : f32
    %273 = vector.broadcast %cst_138 : f32 to vector<1x128xf32>
    %274 = arith.addf %271, %273 : vector<1x128xf32>
    %275 = math.rsqrt %274 : vector<1x128xf32>
    %276 = arith.mulf %272, %275 : vector<1x128xf32>
    %c0_139 = arith.constant 0 : index
    %c0_140 = arith.constant 0 : index
    %277 = vector.load %arg15[%c0_139, %c0_140] : memref<1x128xf32, #tpu.memory_space<vmem>>, vector<1x128xf32>
    %278 = arith.mulf %265, %276 : vector<1x128xf32>
    %279 = arith.subf %277, %278 : vector<1x128xf32>
    %280 = vector.broadcast %276 : vector<1x128xf32> to vector<32x128xf32>
    %281 = arith.mulf %242, %280 : vector<32x128xf32>
    %282 = vector.broadcast %279 : vector<1x128xf32> to vector<32x128xf32>
    %283 = arith.addf %281, %282 : vector<32x128xf32>
    %284 = arith.addf %283, %174 : vector<32x128xf32>
    %cst_141 = arith.constant 0.00999999977 : f32
    %285 = vector.broadcast %cst_141 : f32 to vector<32x128xf32>
    %286 = arith.mulf %285, %284 : vector<32x128xf32>
    %287 = arith.maximumf %284, %286 : vector<32x128xf32>
    %288 = vector.shape_cast %287 : vector<32x128xf32> to vector<2x16x128xf32>
    %c0_142 = arith.constant 0 : index
    %c3_143 = arith.constant 3 : index
    %c0_144 = arith.constant 0 : index
    %289 = vector.load %arg41[%c0_142, %c3_143, %c0_144] : memref<2x22x128xf32, #tpu.memory_space<vmem>>, vector<2x16x128xf32>
    tpu.vector_store %arg41[%c0_142, %c3_143, %c0_144], %288 {strides = array<i32>} : memref<2x22x128xf32, #tpu.memory_space<vmem>>, vector<2x16x128xf32>,
    %c0_145 = arith.constant 0 : index
    %c0_146 = arith.constant 0 : index
    %c0_147 = arith.constant 0 : index
    %290 = vector.load %arg41[%c0_145, %c0_146, %c0_147] : memref<2x22x128xf32, #tpu.memory_space<vmem>>, vector<2x22x128xf32>
    %291 = vector.extract_strided_slice %290 {offsets = [0, 1, 0], sizes = [2, 16, 128], strides = [1, 1, 1]} : vector<2x22x128xf32> to vector<2x16x128xf32>
    %292 = vector.extract_strided_slice %290 {offsets = [0, 2, 0], sizes = [2, 16, 128], strides = [1, 1, 1]} : vector<2x22x128xf32> to vector<2x16x128xf32>
    %293 = vector.extract_strided_slice %290 {offsets = [0, 3, 0], sizes = [2, 16, 128], strides = [1, 1, 1]} : vector<2x22x128xf32> to vector<2x16x128xf32>
    %294 = vector.extract_strided_slice %290 {offsets = [0, 4, 0], sizes = [2, 16, 128], strides = [1, 1, 1]} : vector<2x22x128xf32> to vector<2x16x128xf32>
    %295 = vector.extract_strided_slice %290 {offsets = [0, 5, 0], sizes = [2, 16, 128], strides = [1, 1, 1]} : vector<2x22x128xf32> to vector<2x16x128xf32>
    %296 = tpu.concatenate %291, %292, %293, %294, %295 in 2 : vector<2x16x128xf32>, vector<2x16x128xf32>, vector<2x16x128xf32>, vector<2x16x128xf32>, vector<2x16x128xf32> -> vector<2x16x640xf32>
    %297 = vector.shape_cast %296 : vector<2x16x640xf32> to vector<32x640xf32>
    %298 = arith.truncf %297 : vector<32x640xf32> to vector<32x640xbf16>
    %c0_148 = arith.constant 0 : index
    %c0_149 = arith.constant 0 : index
    %299 = vector.load %arg16[%c0_148, %c0_149] : memref<640x128xbf16, #tpu.memory_space<vmem>>, vector<640x128xbf16>
    %cst_150 = arith.constant dense<0.000000e+00> : vector<32x128xf32>
    %300 = tpu.matmul %298, %299, %cst_150 {dimension_numbers = #tpu.dot_dimension_numbers<[1], [0], [0], [1], [0, 0, 1, 1], [], []>} : vector<32x640xbf16>, vector<640x128xbf16>, vector<32x128xf32> -> vector<32x128xf32>
    %cst_151 = arith.constant dense<0.000000e+00> : vector<128xf32>
    %301 = vector.multi_reduction <add>, %300, %cst_151 [0] : vector<32x128xf32> to vector<128xf32>
    %302 = vector.shape_cast %301 : vector<128xf32> to vector<1x128xf32>
    %303 = arith.mulf %300, %300 : vector<32x128xf32>
    %cst_152 = arith.constant dense<0.000000e+00> : vector<128xf32>
    %304 = vector.multi_reduction <add>, %303, %cst_152 [0] : vector<32x128xf32> to vector<128xf32>
    %305 = vector.shape_cast %304 : vector<128xf32> to vector<1x128xf32>
    %c8_i32_153 = arith.constant 8 : i32
    %306 = tpu.dynamic_rotate %302 by %c8_i32_153 dim 1 : vector<1x128xf32>, i32 -> vector<1x128xf32>
    %307 = arith.addf %302, %306 : vector<1x128xf32>
    %c8_i32_154 = arith.constant 8 : i32
    %308 = tpu.dynamic_rotate %305 by %c8_i32_154 dim 1 : vector<1x128xf32>, i32 -> vector<1x128xf32>
    %309 = arith.addf %305, %308 : vector<1x128xf32>
    %c16_i32_155 = arith.constant 16 : i32
    %310 = tpu.dynamic_rotate %307 by %c16_i32_155 dim 1 : vector<1x128xf32>, i32 -> vector<1x128xf32>
    %311 = arith.addf %307, %310 : vector<1x128xf32>
    %c16_i32_156 = arith.constant 16 : i32
    %312 = tpu.dynamic_rotate %309 by %c16_i32_156 dim 1 : vector<1x128xf32>, i32 -> vector<1x128xf32>
    %313 = arith.addf %309, %312 : vector<1x128xf32>
    %c32_i32_157 = arith.constant 32 : i32
    %314 = tpu.dynamic_rotate %311 by %c32_i32_157 dim 1 : vector<1x128xf32>, i32 -> vector<1x128xf32>
    %315 = arith.addf %311, %314 : vector<1x128xf32>
    %c32_i32_158 = arith.constant 32 : i32
    %316 = tpu.dynamic_rotate %313 by %c32_i32_158 dim 1 : vector<1x128xf32>, i32 -> vector<1x128xf32>
    %317 = arith.addf %313, %316 : vector<1x128xf32>
    %c64_i32_159 = arith.constant 64 : i32
    %318 = tpu.dynamic_rotate %315 by %c64_i32_159 dim 1 : vector<1x128xf32>, i32 -> vector<1x128xf32>
    %319 = arith.addf %315, %318 : vector<1x128xf32>
    %c64_i32_160 = arith.constant 64 : i32
    %320 = tpu.dynamic_rotate %317 by %c64_i32_160 dim 1 : vector<1x128xf32>, i32 -> vector<1x128xf32>
    %321 = arith.addf %317, %320 : vector<1x128xf32>
    %cst_161 = arith.constant 0.001953125 : f32
    %322 = vector.broadcast %cst_161 : f32 to vector<1x128xf32>
    %323 = arith.mulf %319, %322 : vector<1x128xf32>
    %cst_162 = arith.constant 0.001953125 : f32
    %324 = vector.broadcast %cst_162 : f32 to vector<1x128xf32>
    %325 = arith.mulf %321, %324 : vector<1x128xf32>
    %326 = arith.mulf %323, %323 : vector<1x128xf32>
    %327 = arith.subf %325, %326 : vector<1x128xf32>
    %cst_163 = arith.constant 0.000000e+00 : f32
    %328 = vector.broadcast %cst_163 : f32 to vector<1x128xf32>
    %329 = arith.maximumf %327, %328 : vector<1x128xf32>
    %c0_164 = arith.constant 0 : index
    %c0_165 = arith.constant 0 : index
    %330 = vector.load %arg17[%c0_164, %c0_165] : memref<1x128xf32, #tpu.memory_space<vmem>>, vector<1x128xf32>
    %cst_166 = arith.constant 9.99999974E-6 : f32
    %331 = vector.broadcast %cst_166 : f32 to vector<1x128xf32>
    %332 = arith.addf %329, %331 : vector<1x128xf32>
    %333 = math.rsqrt %332 : vector<1x128xf32>
    %334 = arith.mulf %330, %333 : vector<1x128xf32>
    %c0_167 = arith.constant 0 : index
    %c0_168 = arith.constant 0 : index
    %335 = vector.load %arg18[%c0_167, %c0_168] : memref<1x128xf32, #tpu.memory_space<vmem>>, vector<1x128xf32>
    %336 = arith.mulf %323, %334 : vector<1x128xf32>
    %337 = arith.subf %335, %336 : vector<1x128xf32>
    %338 = vector.broadcast %334 : vector<1x128xf32> to vector<32x128xf32>
    %339 = arith.mulf %300, %338 : vector<32x128xf32>
    %340 = vector.broadcast %337 : vector<1x128xf32> to vector<32x128xf32>
    %341 = arith.addf %339, %340 : vector<32x128xf32>
    %cst_169 = arith.constant 0.00999999977 : f32
    %342 = vector.broadcast %cst_169 : f32 to vector<32x128xf32>
    %343 = arith.mulf %342, %341 : vector<32x128xf32>
    %344 = arith.maximumf %341, %343 : vector<32x128xf32>
    %345 = vector.shape_cast %344 : vector<32x128xf32> to vector<2x16x128xf32>
    %c0_170 = arith.constant 0 : index
    %c3_171 = arith.constant 3 : index
    %c0_172 = arith.constant 0 : index
    %346 = vector.load %arg42[%c0_170, %c3_171, %c0_172] : memref<2x22x128xf32, #tpu.memory_space<vmem>>, vector<2x16x128xf32>
    tpu.vector_store %arg42[%c0_170, %c3_171, %c0_172], %345 {strides = array<i32>} : memref<2x22x128xf32, #tpu.memory_space<vmem>>, vector<2x16x128xf32>,
    %c0_173 = arith.constant 0 : index
    %c0_174 = arith.constant 0 : index
    %c0_175 = arith.constant 0 : index
    %347 = vector.load %arg42[%c0_173, %c0_174, %c0_175] : memref<2x22x128xf32, #tpu.memory_space<vmem>>, vector<2x22x128xf32>
    %348 = vector.extract_strided_slice %347 {offsets = [0, 2, 0], sizes = [2, 16, 128], strides = [1, 1, 1]} : vector<2x22x128xf32> to vector<2x16x128xf32>
    %349 = vector.extract_strided_slice %347 {offsets = [0, 3, 0], sizes = [2, 16, 128], strides = [1, 1, 1]} : vector<2x22x128xf32> to vector<2x16x128xf32>
    %350 = vector.extract_strided_slice %347 {offsets = [0, 4, 0], sizes = [2, 16, 128], strides = [1, 1, 1]} : vector<2x22x128xf32> to vector<2x16x128xf32>
    %351 = tpu.concatenate %348, %349, %350 in 2 : vector<2x16x128xf32>, vector<2x16x128xf32>, vector<2x16x128xf32> -> vector<2x16x384xf32>
    %352 = vector.shape_cast %351 : vector<2x16x384xf32> to vector<32x384xf32>
    %353 = arith.truncf %352 : vector<32x384xf32> to vector<32x384xbf16>
    %c0_176 = arith.constant 0 : index
    %c0_177 = arith.constant 0 : index
    %354 = vector.load %arg19[%c0_176, %c0_177] : memref<384x128xbf16, #tpu.memory_space<vmem>>, vector<384x128xbf16>
    %cst_178 = arith.constant dense<0.000000e+00> : vector<32x128xf32>
    %355 = tpu.matmul %353, %354, %cst_178 {dimension_numbers = #tpu.dot_dimension_numbers<[1], [0], [0], [1], [0, 0, 1, 1], [], []>} : vector<32x384xbf16>, vector<384x128xbf16>, vector<32x128xf32> -> vector<32x128xf32>
    %cst_179 = arith.constant dense<0.000000e+00> : vector<128xf32>
    %356 = vector.multi_reduction <add>, %355, %cst_179 [0] : vector<32x128xf32> to vector<128xf32>
    %357 = vector.shape_cast %356 : vector<128xf32> to vector<1x128xf32>
    %358 = arith.mulf %355, %355 : vector<32x128xf32>
    %cst_180 = arith.constant dense<0.000000e+00> : vector<128xf32>
    %359 = vector.multi_reduction <add>, %358, %cst_180 [0] : vector<32x128xf32> to vector<128xf32>
    %360 = vector.shape_cast %359 : vector<128xf32> to vector<1x128xf32>
    %c8_i32_181 = arith.constant 8 : i32
    %361 = tpu.dynamic_rotate %357 by %c8_i32_181 dim 1 : vector<1x128xf32>, i32 -> vector<1x128xf32>
    %362 = arith.addf %357, %361 : vector<1x128xf32>
    %c8_i32_182 = arith.constant 8 : i32
    %363 = tpu.dynamic_rotate %360 by %c8_i32_182 dim 1 : vector<1x128xf32>, i32 -> vector<1x128xf32>
    %364 = arith.addf %360, %363 : vector<1x128xf32>
    %c16_i32_183 = arith.constant 16 : i32
    %365 = tpu.dynamic_rotate %362 by %c16_i32_183 dim 1 : vector<1x128xf32>, i32 -> vector<1x128xf32>
    %366 = arith.addf %362, %365 : vector<1x128xf32>
    %c16_i32_184 = arith.constant 16 : i32
    %367 = tpu.dynamic_rotate %364 by %c16_i32_184 dim 1 : vector<1x128xf32>, i32 -> vector<1x128xf32>
    %368 = arith.addf %364, %367 : vector<1x128xf32>
    %c32_i32_185 = arith.constant 32 : i32
    %369 = tpu.dynamic_rotate %366 by %c32_i32_185 dim 1 : vector<1x128xf32>, i32 -> vector<1x128xf32>
    %370 = arith.addf %366, %369 : vector<1x128xf32>
    %c32_i32_186 = arith.constant 32 : i32
    %371 = tpu.dynamic_rotate %368 by %c32_i32_186 dim 1 : vector<1x128xf32>, i32 -> vector<1x128xf32>
    %372 = arith.addf %368, %371 : vector<1x128xf32>
    %c64_i32_187 = arith.constant 64 : i32
    %373 = tpu.dynamic_rotate %370 by %c64_i32_187 dim 1 : vector<1x128xf32>, i32 -> vector<1x128xf32>
    %374 = arith.addf %370, %373 : vector<1x128xf32>
    %c64_i32_188 = arith.constant 64 : i32
    %375 = tpu.dynamic_rotate %372 by %c64_i32_188 dim 1 : vector<1x128xf32>, i32 -> vector<1x128xf32>
    %376 = arith.addf %372, %375 : vector<1x128xf32>
    %cst_189 = arith.constant 0.001953125 : f32
    %377 = vector.broadcast %cst_189 : f32 to vector<1x128xf32>
    %378 = arith.mulf %374, %377 : vector<1x128xf32>
    %cst_190 = arith.constant 0.001953125 : f32
    %379 = vector.broadcast %cst_190 : f32 to vector<1x128xf32>
    %380 = arith.mulf %376, %379 : vector<1x128xf32>
    %381 = arith.mulf %378, %378 : vector<1x128xf32>
    %382 = arith.subf %380, %381 : vector<1x128xf32>
    %cst_191 = arith.constant 0.000000e+00 : f32
    %383 = vector.broadcast %cst_191 : f32 to vector<1x128xf32>
    %384 = arith.maximumf %382, %383 : vector<1x128xf32>
    %c0_192 = arith.constant 0 : index
    %c0_193 = arith.constant 0 : index
    %385 = vector.load %arg20[%c0_192, %c0_193] : memref<1x128xf32, #tpu.memory_space<vmem>>, vector<1x128xf32>
    %cst_194 = arith.constant 9.99999974E-6 : f32
    %386 = vector.broadcast %cst_194 : f32 to vector<1x128xf32>
    %387 = arith.addf %384, %386 : vector<1x128xf32>
    %388 = math.rsqrt %387 : vector<1x128xf32>
    %389 = arith.mulf %385, %388 : vector<1x128xf32>
    %c0_195 = arith.constant 0 : index
    %c0_196 = arith.constant 0 : index
    %390 = vector.load %arg21[%c0_195, %c0_196] : memref<1x128xf32, #tpu.memory_space<vmem>>, vector<1x128xf32>
    %391 = arith.mulf %378, %389 : vector<1x128xf32>
    %392 = arith.subf %390, %391 : vector<1x128xf32>
    %393 = vector.broadcast %389 : vector<1x128xf32> to vector<32x128xf32>
    %394 = arith.mulf %355, %393 : vector<32x128xf32>
    %395 = vector.broadcast %392 : vector<1x128xf32> to vector<32x128xf32>
    %396 = arith.addf %394, %395 : vector<32x128xf32>
    %397 = arith.addf %396, %287 : vector<32x128xf32>
    %cst_197 = arith.constant 0.00999999977 : f32
    %398 = vector.broadcast %cst_197 : f32 to vector<32x128xf32>
    %399 = arith.mulf %398, %397 : vector<32x128xf32>
    %400 = arith.maximumf %397, %399 : vector<32x128xf32>
    %401 = vector.shape_cast %400 : vector<32x128xf32> to vector<2x16x128xf32>
    %c0_198 = arith.constant 0 : index
    %c3_199 = arith.constant 3 : index
    %c0_200 = arith.constant 0 : index
    %402 = vector.load %arg41[%c0_198, %c3_199, %c0_200] : memref<2x22x128xf32, #tpu.memory_space<vmem>>, vector<2x16x128xf32>
    tpu.vector_store %arg41[%c0_198, %c3_199, %c0_200], %401 {strides = array<i32>} : memref<2x22x128xf32, #tpu.memory_space<vmem>>, vector<2x16x128xf32>,
    %c0_201 = arith.constant 0 : index
    %c0_202 = arith.constant 0 : index
    %c0_203 = arith.constant 0 : index
    %403 = vector.load %arg41[%c0_201, %c0_202, %c0_203] : memref<2x22x128xf32, #tpu.memory_space<vmem>>, vector<2x22x128xf32>
    %404 = vector.extract_strided_slice %403 {offsets = [0, 1, 0], sizes = [2, 16, 128], strides = [1, 1, 1]} : vector<2x22x128xf32> to vector<2x16x128xf32>
    %405 = vector.extract_strided_slice %403 {offsets = [0, 2, 0], sizes = [2, 16, 128], strides = [1, 1, 1]} : vector<2x22x128xf32> to vector<2x16x128xf32>
    %406 = vector.extract_strided_slice %403 {offsets = [0, 3, 0], sizes = [2, 16, 128], strides = [1, 1, 1]} : vector<2x22x128xf32> to vector<2x16x128xf32>
    %407 = vector.extract_strided_slice %403 {offsets = [0, 4, 0], sizes = [2, 16, 128], strides = [1, 1, 1]} : vector<2x22x128xf32> to vector<2x16x128xf32>
    %408 = vector.extract_strided_slice %403 {offsets = [0, 5, 0], sizes = [2, 16, 128], strides = [1, 1, 1]} : vector<2x22x128xf32> to vector<2x16x128xf32>
    %409 = tpu.concatenate %404, %405, %406, %407, %408 in 2 : vector<2x16x128xf32>, vector<2x16x128xf32>, vector<2x16x128xf32>, vector<2x16x128xf32>, vector<2x16x128xf32> -> vector<2x16x640xf32>
    %410 = vector.shape_cast %409 : vector<2x16x640xf32> to vector<32x640xf32>
    %411 = arith.truncf %410 : vector<32x640xf32> to vector<32x640xbf16>
    %c0_204 = arith.constant 0 : index
    %c0_205 = arith.constant 0 : index
    %412 = vector.load %arg22[%c0_204, %c0_205] : memref<640x128xbf16, #tpu.memory_space<vmem>>, vector<640x128xbf16>
    %cst_206 = arith.constant dense<0.000000e+00> : vector<32x128xf32>
    %413 = tpu.matmul %411, %412, %cst_206 {dimension_numbers = #tpu.dot_dimension_numbers<[1], [0], [0], [1], [0, 0, 1, 1], [], []>} : vector<32x640xbf16>, vector<640x128xbf16>, vector<32x128xf32> -> vector<32x128xf32>
    %cst_207 = arith.constant dense<0.000000e+00> : vector<128xf32>
    %414 = vector.multi_reduction <add>, %413, %cst_207 [0] : vector<32x128xf32> to vector<128xf32>
    %415 = vector.shape_cast %414 : vector<128xf32> to vector<1x128xf32>
    %416 = arith.mulf %413, %413 : vector<32x128xf32>
    %cst_208 = arith.constant dense<0.000000e+00> : vector<128xf32>
    %417 = vector.multi_reduction <add>, %416, %cst_208 [0] : vector<32x128xf32> to vector<128xf32>
    %418 = vector.shape_cast %417 : vector<128xf32> to vector<1x128xf32>
    %c8_i32_209 = arith.constant 8 : i32
    %419 = tpu.dynamic_rotate %415 by %c8_i32_209 dim 1 : vector<1x128xf32>, i32 -> vector<1x128xf32>
    %420 = arith.addf %415, %419 : vector<1x128xf32>
    %c8_i32_210 = arith.constant 8 : i32
    %421 = tpu.dynamic_rotate %418 by %c8_i32_210 dim 1 : vector<1x128xf32>, i32 -> vector<1x128xf32>
    %422 = arith.addf %418, %421 : vector<1x128xf32>
    %c16_i32_211 = arith.constant 16 : i32
    %423 = tpu.dynamic_rotate %420 by %c16_i32_211 dim 1 : vector<1x128xf32>, i32 -> vector<1x128xf32>
    %424 = arith.addf %420, %423 : vector<1x128xf32>
    %c16_i32_212 = arith.constant 16 : i32
    %425 = tpu.dynamic_rotate %422 by %c16_i32_212 dim 1 : vector<1x128xf32>, i32 -> vector<1x128xf32>
    %426 = arith.addf %422, %425 : vector<1x128xf32>
    %c32_i32_213 = arith.constant 32 : i32
    %427 = tpu.dynamic_rotate %424 by %c32_i32_213 dim 1 : vector<1x128xf32>, i32 -> vector<1x128xf32>
    %428 = arith.addf %424, %427 : vector<1x128xf32>
    %c32_i32_214 = arith.constant 32 : i32
    %429 = tpu.dynamic_rotate %426 by %c32_i32_214 dim 1 : vector<1x128xf32>, i32 -> vector<1x128xf32>
    %430 = arith.addf %426, %429 : vector<1x128xf32>
    %c64_i32_215 = arith.constant 64 : i32
    %431 = tpu.dynamic_rotate %428 by %c64_i32_215 dim 1 : vector<1x128xf32>, i32 -> vector<1x128xf32>
    %432 = arith.addf %428, %431 : vector<1x128xf32>
    %c64_i32_216 = arith.constant 64 : i32
    %433 = tpu.dynamic_rotate %430 by %c64_i32_216 dim 1 : vector<1x128xf32>, i32 -> vector<1x128xf32>
    %434 = arith.addf %430, %433 : vector<1x128xf32>
    %cst_217 = arith.constant 0.001953125 : f32
    %435 = vector.broadcast %cst_217 : f32 to vector<1x128xf32>
    %436 = arith.mulf %432, %435 : vector<1x128xf32>
    %cst_218 = arith.constant 0.001953125 : f32
    %437 = vector.broadcast %cst_218 : f32 to vector<1x128xf32>
    %438 = arith.mulf %434, %437 : vector<1x128xf32>
    %439 = arith.mulf %436, %436 : vector<1x128xf32>
    %440 = arith.subf %438, %439 : vector<1x128xf32>
    %cst_219 = arith.constant 0.000000e+00 : f32
    %441 = vector.broadcast %cst_219 : f32 to vector<1x128xf32>
    %442 = arith.maximumf %440, %441 : vector<1x128xf32>
    %c0_220 = arith.constant 0 : index
    %c0_221 = arith.constant 0 : index
    %443 = vector.load %arg23[%c0_220, %c0_221] : memref<1x128xf32, #tpu.memory_space<vmem>>, vector<1x128xf32>
    %cst_222 = arith.constant 9.99999974E-6 : f32
    %444 = vector.broadcast %cst_222 : f32 to vector<1x128xf32>
    %445 = arith.addf %442, %444 : vector<1x128xf32>
    %446 = math.rsqrt %445 : vector<1x128xf32>
    %447 = arith.mulf %443, %446 : vector<1x128xf32>
    %c0_223 = arith.constant 0 : index
    %c0_224 = arith.constant 0 : index
    %448 = vector.load %arg24[%c0_223, %c0_224] : memref<1x128xf32, #tpu.memory_space<vmem>>, vector<1x128xf32>
    %449 = arith.mulf %436, %447 : vector<1x128xf32>
    %450 = arith.subf %448, %449 : vector<1x128xf32>
    %451 = vector.broadcast %447 : vector<1x128xf32> to vector<32x128xf32>
    %452 = arith.mulf %413, %451 : vector<32x128xf32>
    %453 = vector.broadcast %450 : vector<1x128xf32> to vector<32x128xf32>
    %454 = arith.addf %452, %453 : vector<32x128xf32>
    %cst_225 = arith.constant 0.00999999977 : f32
    %455 = vector.broadcast %cst_225 : f32 to vector<32x128xf32>
    %456 = arith.mulf %455, %454 : vector<32x128xf32>
    %457 = arith.maximumf %454, %456 : vector<32x128xf32>
    %458 = vector.shape_cast %457 : vector<32x128xf32> to vector<2x16x128xf32>
    %c0_226 = arith.constant 0 : index
    %c3_227 = arith.constant 3 : index
    %c0_228 = arith.constant 0 : index
    %459 = vector.load %arg42[%c0_226, %c3_227, %c0_228] : memref<2x22x128xf32, #tpu.memory_space<vmem>>, vector<2x16x128xf32>
    tpu.vector_store %arg42[%c0_226, %c3_227, %c0_228], %458 {strides = array<i32>} : memref<2x22x128xf32, #tpu.memory_space<vmem>>, vector<2x16x128xf32>,
    %c0_229 = arith.constant 0 : index
    %c0_230 = arith.constant 0 : index
    %c0_231 = arith.constant 0 : index
    %460 = vector.load %arg42[%c0_229, %c0_230, %c0_231] : memref<2x22x128xf32, #tpu.memory_space<vmem>>, vector<2x22x128xf32>
    %461 = vector.extract_strided_slice %460 {offsets = [0, 2, 0], sizes = [2, 16, 128], strides = [1, 1, 1]} : vector<2x22x128xf32> to vector<2x16x128xf32>
    %462 = vector.extract_strided_slice %460 {offsets = [0, 3, 0], sizes = [2, 16, 128], strides = [1, 1, 1]} : vector<2x22x128xf32> to vector<2x16x128xf32>
    %463 = vector.extract_strided_slice %460 {offsets = [0, 4, 0], sizes = [2, 16, 128], strides = [1, 1, 1]} : vector<2x22x128xf32> to vector<2x16x128xf32>
    %464 = tpu.concatenate %461, %462, %463 in 2 : vector<2x16x128xf32>, vector<2x16x128xf32>, vector<2x16x128xf32> -> vector<2x16x384xf32>
    %465 = vector.shape_cast %464 : vector<2x16x384xf32> to vector<32x384xf32>
    %466 = arith.truncf %465 : vector<32x384xf32> to vector<32x384xbf16>
    %c0_232 = arith.constant 0 : index
    %c0_233 = arith.constant 0 : index
    %467 = vector.load %arg25[%c0_232, %c0_233] : memref<384x128xbf16, #tpu.memory_space<vmem>>, vector<384x128xbf16>
    %cst_234 = arith.constant dense<0.000000e+00> : vector<32x128xf32>
    %468 = tpu.matmul %466, %467, %cst_234 {dimension_numbers = #tpu.dot_dimension_numbers<[1], [0], [0], [1], [0, 0, 1, 1], [], []>} : vector<32x384xbf16>, vector<384x128xbf16>, vector<32x128xf32> -> vector<32x128xf32>
    %cst_235 = arith.constant dense<0.000000e+00> : vector<128xf32>
    %469 = vector.multi_reduction <add>, %468, %cst_235 [0] : vector<32x128xf32> to vector<128xf32>
    %470 = vector.shape_cast %469 : vector<128xf32> to vector<1x128xf32>
    %471 = arith.mulf %468, %468 : vector<32x128xf32>
    %cst_236 = arith.constant dense<0.000000e+00> : vector<128xf32>
    %472 = vector.multi_reduction <add>, %471, %cst_236 [0] : vector<32x128xf32> to vector<128xf32>
    %473 = vector.shape_cast %472 : vector<128xf32> to vector<1x128xf32>
    %c8_i32_237 = arith.constant 8 : i32
    %474 = tpu.dynamic_rotate %470 by %c8_i32_237 dim 1 : vector<1x128xf32>, i32 -> vector<1x128xf32>
    %475 = arith.addf %470, %474 : vector<1x128xf32>
    %c8_i32_238 = arith.constant 8 : i32
    %476 = tpu.dynamic_rotate %473 by %c8_i32_238 dim 1 : vector<1x128xf32>, i32 -> vector<1x128xf32>
    %477 = arith.addf %473, %476 : vector<1x128xf32>
    %c16_i32_239 = arith.constant 16 : i32
    %478 = tpu.dynamic_rotate %475 by %c16_i32_239 dim 1 : vector<1x128xf32>, i32 -> vector<1x128xf32>
    %479 = arith.addf %475, %478 : vector<1x128xf32>
    %c16_i32_240 = arith.constant 16 : i32
    %480 = tpu.dynamic_rotate %477 by %c16_i32_240 dim 1 : vector<1x128xf32>, i32 -> vector<1x128xf32>
    %481 = arith.addf %477, %480 : vector<1x128xf32>
    %c32_i32_241 = arith.constant 32 : i32
    %482 = tpu.dynamic_rotate %479 by %c32_i32_241 dim 1 : vector<1x128xf32>, i32 -> vector<1x128xf32>
    %483 = arith.addf %479, %482 : vector<1x128xf32>
    %c32_i32_242 = arith.constant 32 : i32
    %484 = tpu.dynamic_rotate %481 by %c32_i32_242 dim 1 : vector<1x128xf32>, i32 -> vector<1x128xf32>
    %485 = arith.addf %481, %484 : vector<1x128xf32>
    %c64_i32_243 = arith.constant 64 : i32
    %486 = tpu.dynamic_rotate %483 by %c64_i32_243 dim 1 : vector<1x128xf32>, i32 -> vector<1x128xf32>
    %487 = arith.addf %483, %486 : vector<1x128xf32>
    %c64_i32_244 = arith.constant 64 : i32
    %488 = tpu.dynamic_rotate %485 by %c64_i32_244 dim 1 : vector<1x128xf32>, i32 -> vector<1x128xf32>
    %489 = arith.addf %485, %488 : vector<1x128xf32>
    %cst_245 = arith.constant 0.001953125 : f32
    %490 = vector.broadcast %cst_245 : f32 to vector<1x128xf32>
    %491 = arith.mulf %487, %490 : vector<1x128xf32>
    %cst_246 = arith.constant 0.001953125 : f32
    %492 = vector.broadcast %cst_246 : f32 to vector<1x128xf32>
    %493 = arith.mulf %489, %492 : vector<1x128xf32>
    %494 = arith.mulf %491, %491 : vector<1x128xf32>
    %495 = arith.subf %493, %494 : vector<1x128xf32>
    %cst_247 = arith.constant 0.000000e+00 : f32
    %496 = vector.broadcast %cst_247 : f32 to vector<1x128xf32>
    %497 = arith.maximumf %495, %496 : vector<1x128xf32>
    %c0_248 = arith.constant 0 : index
    %c0_249 = arith.constant 0 : index
    %498 = vector.load %arg26[%c0_248, %c0_249] : memref<1x128xf32, #tpu.memory_space<vmem>>, vector<1x128xf32>
    %cst_250 = arith.constant 9.99999974E-6 : f32
    %499 = vector.broadcast %cst_250 : f32 to vector<1x128xf32>
    %500 = arith.addf %497, %499 : vector<1x128xf32>
    %501 = math.rsqrt %500 : vector<1x128xf32>
    %502 = arith.mulf %498, %501 : vector<1x128xf32>
    %c0_251 = arith.constant 0 : index
    %c0_252 = arith.constant 0 : index
    %503 = vector.load %arg27[%c0_251, %c0_252] : memref<1x128xf32, #tpu.memory_space<vmem>>, vector<1x128xf32>
    %504 = arith.mulf %491, %502 : vector<1x128xf32>
    %505 = arith.subf %503, %504 : vector<1x128xf32>
    %506 = vector.broadcast %502 : vector<1x128xf32> to vector<32x128xf32>
    %507 = arith.mulf %468, %506 : vector<32x128xf32>
    %508 = vector.broadcast %505 : vector<1x128xf32> to vector<32x128xf32>
    %509 = arith.addf %507, %508 : vector<32x128xf32>
    %510 = arith.addf %509, %400 : vector<32x128xf32>
    %cst_253 = arith.constant 0.00999999977 : f32
    %511 = vector.broadcast %cst_253 : f32 to vector<32x128xf32>
    %512 = arith.mulf %511, %510 : vector<32x128xf32>
    %513 = arith.maximumf %510, %512 : vector<32x128xf32>
    %514 = vector.shape_cast %513 : vector<32x128xf32> to vector<2x16x128xf32>
    %c0_254 = arith.constant 0 : index
    %c3_255 = arith.constant 3 : index
    %c0_256 = arith.constant 0 : index
    %515 = vector.load %arg41[%c0_254, %c3_255, %c0_256] : memref<2x22x128xf32, #tpu.memory_space<vmem>>, vector<2x16x128xf32>
    tpu.vector_store %arg41[%c0_254, %c3_255, %c0_256], %514 {strides = array<i32>} : memref<2x22x128xf32, #tpu.memory_space<vmem>>, vector<2x16x128xf32>,
    %c0_257 = arith.constant 0 : index
    %c0_258 = arith.constant 0 : index
    %c0_259 = arith.constant 0 : index
    %516 = vector.load %arg41[%c0_257, %c0_258, %c0_259] : memref<2x22x128xf32, #tpu.memory_space<vmem>>, vector<2x22x128xf32>
    %517 = vector.extract_strided_slice %516 {offsets = [0, 1, 0], sizes = [2, 16, 128], strides = [1, 1, 1]} : vector<2x22x128xf32> to vector<2x16x128xf32>
    %518 = vector.extract_strided_slice %516 {offsets = [0, 2, 0], sizes = [2, 16, 128], strides = [1, 1, 1]} : vector<2x22x128xf32> to vector<2x16x128xf32>
    %519 = vector.extract_strided_slice %516 {offsets = [0, 3, 0], sizes = [2, 16, 128], strides = [1, 1, 1]} : vector<2x22x128xf32> to vector<2x16x128xf32>
    %520 = vector.extract_strided_slice %516 {offsets = [0, 4, 0], sizes = [2, 16, 128], strides = [1, 1, 1]} : vector<2x22x128xf32> to vector<2x16x128xf32>
    %521 = vector.extract_strided_slice %516 {offsets = [0, 5, 0], sizes = [2, 16, 128], strides = [1, 1, 1]} : vector<2x22x128xf32> to vector<2x16x128xf32>
    %522 = tpu.concatenate %517, %518, %519, %520, %521 in 2 : vector<2x16x128xf32>, vector<2x16x128xf32>, vector<2x16x128xf32>, vector<2x16x128xf32>, vector<2x16x128xf32> -> vector<2x16x640xf32>
    %523 = vector.shape_cast %522 : vector<2x16x640xf32> to vector<32x640xf32>
    %524 = arith.truncf %523 : vector<32x640xf32> to vector<32x640xbf16>
    %c0_260 = arith.constant 0 : index
    %c0_261 = arith.constant 0 : index
    %525 = vector.load %arg28[%c0_260, %c0_261] : memref<640x128xbf16, #tpu.memory_space<vmem>>, vector<640x128xbf16>
    %cst_262 = arith.constant dense<0.000000e+00> : vector<32x128xf32>
    %526 = tpu.matmul %524, %525, %cst_262 {dimension_numbers = #tpu.dot_dimension_numbers<[1], [0], [0], [1], [0, 0, 1, 1], [], []>} : vector<32x640xbf16>, vector<640x128xbf16>, vector<32x128xf32> -> vector<32x128xf32>
    %cst_263 = arith.constant dense<0.000000e+00> : vector<128xf32>
    %527 = vector.multi_reduction <add>, %526, %cst_263 [0] : vector<32x128xf32> to vector<128xf32>
    %528 = vector.shape_cast %527 : vector<128xf32> to vector<1x128xf32>
    %529 = arith.mulf %526, %526 : vector<32x128xf32>
    %cst_264 = arith.constant dense<0.000000e+00> : vector<128xf32>
    %530 = vector.multi_reduction <add>, %529, %cst_264 [0] : vector<32x128xf32> to vector<128xf32>
    %531 = vector.shape_cast %530 : vector<128xf32> to vector<1x128xf32>
    %c8_i32_265 = arith.constant 8 : i32
    %532 = tpu.dynamic_rotate %528 by %c8_i32_265 dim 1 : vector<1x128xf32>, i32 -> vector<1x128xf32>
    %533 = arith.addf %528, %532 : vector<1x128xf32>
    %c8_i32_266 = arith.constant 8 : i32
    %534 = tpu.dynamic_rotate %531 by %c8_i32_266 dim 1 : vector<1x128xf32>, i32 -> vector<1x128xf32>
    %535 = arith.addf %531, %534 : vector<1x128xf32>
    %c16_i32_267 = arith.constant 16 : i32
    %536 = tpu.dynamic_rotate %533 by %c16_i32_267 dim 1 : vector<1x128xf32>, i32 -> vector<1x128xf32>
    %537 = arith.addf %533, %536 : vector<1x128xf32>
    %c16_i32_268 = arith.constant 16 : i32
    %538 = tpu.dynamic_rotate %535 by %c16_i32_268 dim 1 : vector<1x128xf32>, i32 -> vector<1x128xf32>
    %539 = arith.addf %535, %538 : vector<1x128xf32>
    %c32_i32_269 = arith.constant 32 : i32
    %540 = tpu.dynamic_rotate %537 by %c32_i32_269 dim 1 : vector<1x128xf32>, i32 -> vector<1x128xf32>
    %541 = arith.addf %537, %540 : vector<1x128xf32>
    %c32_i32_270 = arith.constant 32 : i32
    %542 = tpu.dynamic_rotate %539 by %c32_i32_270 dim 1 : vector<1x128xf32>, i32 -> vector<1x128xf32>
    %543 = arith.addf %539, %542 : vector<1x128xf32>
    %c64_i32_271 = arith.constant 64 : i32
    %544 = tpu.dynamic_rotate %541 by %c64_i32_271 dim 1 : vector<1x128xf32>, i32 -> vector<1x128xf32>
    %545 = arith.addf %541, %544 : vector<1x128xf32>
    %c64_i32_272 = arith.constant 64 : i32
    %546 = tpu.dynamic_rotate %543 by %c64_i32_272 dim 1 : vector<1x128xf32>, i32 -> vector<1x128xf32>
    %547 = arith.addf %543, %546 : vector<1x128xf32>
    %cst_273 = arith.constant 0.001953125 : f32
    %548 = vector.broadcast %cst_273 : f32 to vector<1x128xf32>
    %549 = arith.mulf %545, %548 : vector<1x128xf32>
    %cst_274 = arith.constant 0.001953125 : f32
    %550 = vector.broadcast %cst_274 : f32 to vector<1x128xf32>
    %551 = arith.mulf %547, %550 : vector<1x128xf32>
    %552 = arith.mulf %549, %549 : vector<1x128xf32>
    %553 = arith.subf %551, %552 : vector<1x128xf32>
    %cst_275 = arith.constant 0.000000e+00 : f32
    %554 = vector.broadcast %cst_275 : f32 to vector<1x128xf32>
    %555 = arith.maximumf %553, %554 : vector<1x128xf32>
    %c0_276 = arith.constant 0 : index
    %c0_277 = arith.constant 0 : index
    %556 = vector.load %arg29[%c0_276, %c0_277] : memref<1x128xf32, #tpu.memory_space<vmem>>, vector<1x128xf32>
    %cst_278 = arith.constant 9.99999974E-6 : f32
    %557 = vector.broadcast %cst_278 : f32 to vector<1x128xf32>
    %558 = arith.addf %555, %557 : vector<1x128xf32>
    %559 = math.rsqrt %558 : vector<1x128xf32>
    %560 = arith.mulf %556, %559 : vector<1x128xf32>
    %c0_279 = arith.constant 0 : index
    %c0_280 = arith.constant 0 : index
    %561 = vector.load %arg30[%c0_279, %c0_280] : memref<1x128xf32, #tpu.memory_space<vmem>>, vector<1x128xf32>
    %562 = arith.mulf %549, %560 : vector<1x128xf32>
    %563 = arith.subf %561, %562 : vector<1x128xf32>
    %564 = vector.broadcast %560 : vector<1x128xf32> to vector<32x128xf32>
    %565 = arith.mulf %526, %564 : vector<32x128xf32>
    %566 = vector.broadcast %563 : vector<1x128xf32> to vector<32x128xf32>
    %567 = arith.addf %565, %566 : vector<32x128xf32>
    %cst_281 = arith.constant 0.00999999977 : f32
    %568 = vector.broadcast %cst_281 : f32 to vector<32x128xf32>
    %569 = arith.mulf %568, %567 : vector<32x128xf32>
    %570 = arith.maximumf %567, %569 : vector<32x128xf32>
    %571 = vector.shape_cast %570 : vector<32x128xf32> to vector<2x16x128xf32>
    %c0_282 = arith.constant 0 : index
    %c3_283 = arith.constant 3 : index
    %c0_284 = arith.constant 0 : index
    %572 = vector.load %arg42[%c0_282, %c3_283, %c0_284] : memref<2x22x128xf32, #tpu.memory_space<vmem>>, vector<2x16x128xf32>
    tpu.vector_store %arg42[%c0_282, %c3_283, %c0_284], %571 {strides = array<i32>} : memref<2x22x128xf32, #tpu.memory_space<vmem>>, vector<2x16x128xf32>,
    %c0_285 = arith.constant 0 : index
    %c0_286 = arith.constant 0 : index
    %c0_287 = arith.constant 0 : index
    %573 = vector.load %arg42[%c0_285, %c0_286, %c0_287] : memref<2x22x128xf32, #tpu.memory_space<vmem>>, vector<2x22x128xf32>
    %574 = vector.extract_strided_slice %573 {offsets = [0, 2, 0], sizes = [2, 16, 128], strides = [1, 1, 1]} : vector<2x22x128xf32> to vector<2x16x128xf32>
    %575 = vector.extract_strided_slice %573 {offsets = [0, 3, 0], sizes = [2, 16, 128], strides = [1, 1, 1]} : vector<2x22x128xf32> to vector<2x16x128xf32>
    %576 = vector.extract_strided_slice %573 {offsets = [0, 4, 0], sizes = [2, 16, 128], strides = [1, 1, 1]} : vector<2x22x128xf32> to vector<2x16x128xf32>
    %577 = tpu.concatenate %574, %575, %576 in 2 : vector<2x16x128xf32>, vector<2x16x128xf32>, vector<2x16x128xf32> -> vector<2x16x384xf32>
    %578 = vector.shape_cast %577 : vector<2x16x384xf32> to vector<32x384xf32>
    %579 = arith.truncf %578 : vector<32x384xf32> to vector<32x384xbf16>
    %c0_288 = arith.constant 0 : index
    %c0_289 = arith.constant 0 : index
    %580 = vector.load %arg31[%c0_288, %c0_289] : memref<384x128xbf16, #tpu.memory_space<vmem>>, vector<384x128xbf16>
    %cst_290 = arith.constant dense<0.000000e+00> : vector<32x128xf32>
    %581 = tpu.matmul %579, %580, %cst_290 {dimension_numbers = #tpu.dot_dimension_numbers<[1], [0], [0], [1], [0, 0, 1, 1], [], []>} : vector<32x384xbf16>, vector<384x128xbf16>, vector<32x128xf32> -> vector<32x128xf32>
    %cst_291 = arith.constant dense<0.000000e+00> : vector<128xf32>
    %582 = vector.multi_reduction <add>, %581, %cst_291 [0] : vector<32x128xf32> to vector<128xf32>
    %583 = vector.shape_cast %582 : vector<128xf32> to vector<1x128xf32>
    %584 = arith.mulf %581, %581 : vector<32x128xf32>
    %cst_292 = arith.constant dense<0.000000e+00> : vector<128xf32>
    %585 = vector.multi_reduction <add>, %584, %cst_292 [0] : vector<32x128xf32> to vector<128xf32>
    %586 = vector.shape_cast %585 : vector<128xf32> to vector<1x128xf32>
    %c8_i32_293 = arith.constant 8 : i32
    %587 = tpu.dynamic_rotate %583 by %c8_i32_293 dim 1 : vector<1x128xf32>, i32 -> vector<1x128xf32>
    %588 = arith.addf %583, %587 : vector<1x128xf32>
    %c8_i32_294 = arith.constant 8 : i32
    %589 = tpu.dynamic_rotate %586 by %c8_i32_294 dim 1 : vector<1x128xf32>, i32 -> vector<1x128xf32>
    %590 = arith.addf %586, %589 : vector<1x128xf32>
    %c16_i32_295 = arith.constant 16 : i32
    %591 = tpu.dynamic_rotate %588 by %c16_i32_295 dim 1 : vector<1x128xf32>, i32 -> vector<1x128xf32>
    %592 = arith.addf %588, %591 : vector<1x128xf32>
    %c16_i32_296 = arith.constant 16 : i32
    %593 = tpu.dynamic_rotate %590 by %c16_i32_296 dim 1 : vector<1x128xf32>, i32 -> vector<1x128xf32>
    %594 = arith.addf %590, %593 : vector<1x128xf32>
    %c32_i32_297 = arith.constant 32 : i32
    %595 = tpu.dynamic_rotate %592 by %c32_i32_297 dim 1 : vector<1x128xf32>, i32 -> vector<1x128xf32>
    %596 = arith.addf %592, %595 : vector<1x128xf32>
    %c32_i32_298 = arith.constant 32 : i32
    %597 = tpu.dynamic_rotate %594 by %c32_i32_298 dim 1 : vector<1x128xf32>, i32 -> vector<1x128xf32>
    %598 = arith.addf %594, %597 : vector<1x128xf32>
    %c64_i32_299 = arith.constant 64 : i32
    %599 = tpu.dynamic_rotate %596 by %c64_i32_299 dim 1 : vector<1x128xf32>, i32 -> vector<1x128xf32>
    %600 = arith.addf %596, %599 : vector<1x128xf32>
    %c64_i32_300 = arith.constant 64 : i32
    %601 = tpu.dynamic_rotate %598 by %c64_i32_300 dim 1 : vector<1x128xf32>, i32 -> vector<1x128xf32>
    %602 = arith.addf %598, %601 : vector<1x128xf32>
    %cst_301 = arith.constant 0.001953125 : f32
    %603 = vector.broadcast %cst_301 : f32 to vector<1x128xf32>
    %604 = arith.mulf %600, %603 : vector<1x128xf32>
    %cst_302 = arith.constant 0.001953125 : f32
    %605 = vector.broadcast %cst_302 : f32 to vector<1x128xf32>
    %606 = arith.mulf %602, %605 : vector<1x128xf32>
    %607 = arith.mulf %604, %604 : vector<1x128xf32>
    %608 = arith.subf %606, %607 : vector<1x128xf32>
    %cst_303 = arith.constant 0.000000e+00 : f32
    %609 = vector.broadcast %cst_303 : f32 to vector<1x128xf32>
    %610 = arith.maximumf %608, %609 : vector<1x128xf32>
    %c0_304 = arith.constant 0 : index
    %c0_305 = arith.constant 0 : index
    %611 = vector.load %arg32[%c0_304, %c0_305] : memref<1x128xf32, #tpu.memory_space<vmem>>, vector<1x128xf32>
    %cst_306 = arith.constant 9.99999974E-6 : f32
    %612 = vector.broadcast %cst_306 : f32 to vector<1x128xf32>
    %613 = arith.addf %610, %612 : vector<1x128xf32>
    %614 = math.rsqrt %613 : vector<1x128xf32>
    %615 = arith.mulf %611, %614 : vector<1x128xf32>
    %c0_307 = arith.constant 0 : index
    %c0_308 = arith.constant 0 : index
    %616 = vector.load %arg33[%c0_307, %c0_308] : memref<1x128xf32, #tpu.memory_space<vmem>>, vector<1x128xf32>
    %617 = arith.mulf %604, %615 : vector<1x128xf32>
    %618 = arith.subf %616, %617 : vector<1x128xf32>
    %619 = vector.broadcast %615 : vector<1x128xf32> to vector<32x128xf32>
    %620 = arith.mulf %581, %619 : vector<32x128xf32>
    %621 = vector.broadcast %618 : vector<1x128xf32> to vector<32x128xf32>
    %622 = arith.addf %620, %621 : vector<32x128xf32>
    %623 = arith.addf %622, %513 : vector<32x128xf32>
    %cst_309 = arith.constant 0.00999999977 : f32
    %624 = vector.broadcast %cst_309 : f32 to vector<32x128xf32>
    %625 = arith.mulf %624, %623 : vector<32x128xf32>
    %626 = arith.maximumf %623, %625 : vector<32x128xf32>
    %627 = vector.shape_cast %626 : vector<32x128xf32> to vector<2x16x128xf32>
    %c0_310 = arith.constant 0 : index
    %c3_311 = arith.constant 3 : index
    %c0_312 = arith.constant 0 : index
    %628 = vector.load %arg41[%c0_310, %c3_311, %c0_312] : memref<2x22x128xf32, #tpu.memory_space<vmem>>, vector<2x16x128xf32>
    tpu.vector_store %arg41[%c0_310, %c3_311, %c0_312], %627 {strides = array<i32>} : memref<2x22x128xf32, #tpu.memory_space<vmem>>, vector<2x16x128xf32>,
    %c0_313 = arith.constant 0 : index
    %c0_314 = arith.constant 0 : index
    %c0_315 = arith.constant 0 : index
    %629 = vector.load %arg41[%c0_313, %c0_314, %c0_315] : memref<2x22x128xf32, #tpu.memory_space<vmem>>, vector<2x22x128xf32>
    %630 = vector.extract_strided_slice %629 {offsets = [0, 1, 0], sizes = [2, 16, 128], strides = [1, 1, 1]} : vector<2x22x128xf32> to vector<2x16x128xf32>
    %631 = vector.extract_strided_slice %629 {offsets = [0, 2, 0], sizes = [2, 16, 128], strides = [1, 1, 1]} : vector<2x22x128xf32> to vector<2x16x128xf32>
    %632 = vector.extract_strided_slice %629 {offsets = [0, 3, 0], sizes = [2, 16, 128], strides = [1, 1, 1]} : vector<2x22x128xf32> to vector<2x16x128xf32>
    %633 = vector.extract_strided_slice %629 {offsets = [0, 4, 0], sizes = [2, 16, 128], strides = [1, 1, 1]} : vector<2x22x128xf32> to vector<2x16x128xf32>
    %634 = vector.extract_strided_slice %629 {offsets = [0, 5, 0], sizes = [2, 16, 128], strides = [1, 1, 1]} : vector<2x22x128xf32> to vector<2x16x128xf32>
    %635 = tpu.concatenate %630, %631, %632, %633, %634 in 2 : vector<2x16x128xf32>, vector<2x16x128xf32>, vector<2x16x128xf32>, vector<2x16x128xf32>, vector<2x16x128xf32> -> vector<2x16x640xf32>
    %636 = vector.shape_cast %635 : vector<2x16x640xf32> to vector<32x640xf32>
    %637 = arith.truncf %636 : vector<32x640xf32> to vector<32x640xbf16>
    %c0_316 = arith.constant 0 : index
    %c0_317 = arith.constant 0 : index
    %638 = vector.load %arg34[%c0_316, %c0_317] : memref<640x128xbf16, #tpu.memory_space<vmem>>, vector<640x128xbf16>
    %cst_318 = arith.constant dense<0.000000e+00> : vector<32x128xf32>
    %639 = tpu.matmul %637, %638, %cst_318 {dimension_numbers = #tpu.dot_dimension_numbers<[1], [0], [0], [1], [0, 0, 1, 1], [], []>} : vector<32x640xbf16>, vector<640x128xbf16>, vector<32x128xf32> -> vector<32x128xf32>
    %cst_319 = arith.constant dense<0.000000e+00> : vector<128xf32>
    %640 = vector.multi_reduction <add>, %639, %cst_319 [0] : vector<32x128xf32> to vector<128xf32>
    %641 = vector.shape_cast %640 : vector<128xf32> to vector<1x128xf32>
    %642 = arith.mulf %639, %639 : vector<32x128xf32>
    %cst_320 = arith.constant dense<0.000000e+00> : vector<128xf32>
    %643 = vector.multi_reduction <add>, %642, %cst_320 [0] : vector<32x128xf32> to vector<128xf32>
    %644 = vector.shape_cast %643 : vector<128xf32> to vector<1x128xf32>
    %c8_i32_321 = arith.constant 8 : i32
    %645 = tpu.dynamic_rotate %641 by %c8_i32_321 dim 1 : vector<1x128xf32>, i32 -> vector<1x128xf32>
    %646 = arith.addf %641, %645 : vector<1x128xf32>
    %c8_i32_322 = arith.constant 8 : i32
    %647 = tpu.dynamic_rotate %644 by %c8_i32_322 dim 1 : vector<1x128xf32>, i32 -> vector<1x128xf32>
    %648 = arith.addf %644, %647 : vector<1x128xf32>
    %c16_i32_323 = arith.constant 16 : i32
    %649 = tpu.dynamic_rotate %646 by %c16_i32_323 dim 1 : vector<1x128xf32>, i32 -> vector<1x128xf32>
    %650 = arith.addf %646, %649 : vector<1x128xf32>
    %c16_i32_324 = arith.constant 16 : i32
    %651 = tpu.dynamic_rotate %648 by %c16_i32_324 dim 1 : vector<1x128xf32>, i32 -> vector<1x128xf32>
    %652 = arith.addf %648, %651 : vector<1x128xf32>
    %c32_i32_325 = arith.constant 32 : i32
    %653 = tpu.dynamic_rotate %650 by %c32_i32_325 dim 1 : vector<1x128xf32>, i32 -> vector<1x128xf32>
    %654 = arith.addf %650, %653 : vector<1x128xf32>
    %c32_i32_326 = arith.constant 32 : i32
    %655 = tpu.dynamic_rotate %652 by %c32_i32_326 dim 1 : vector<1x128xf32>, i32 -> vector<1x128xf32>
    %656 = arith.addf %652, %655 : vector<1x128xf32>
    %c64_i32_327 = arith.constant 64 : i32
    %657 = tpu.dynamic_rotate %654 by %c64_i32_327 dim 1 : vector<1x128xf32>, i32 -> vector<1x128xf32>
    %658 = arith.addf %654, %657 : vector<1x128xf32>
    %c64_i32_328 = arith.constant 64 : i32
    %659 = tpu.dynamic_rotate %656 by %c64_i32_328 dim 1 : vector<1x128xf32>, i32 -> vector<1x128xf32>
    %660 = arith.addf %656, %659 : vector<1x128xf32>
    %cst_329 = arith.constant 0.001953125 : f32
    %661 = vector.broadcast %cst_329 : f32 to vector<1x128xf32>
    %662 = arith.mulf %658, %661 : vector<1x128xf32>
    %cst_330 = arith.constant 0.001953125 : f32
    %663 = vector.broadcast %cst_330 : f32 to vector<1x128xf32>
    %664 = arith.mulf %660, %663 : vector<1x128xf32>
    %665 = arith.mulf %662, %662 : vector<1x128xf32>
    %666 = arith.subf %664, %665 : vector<1x128xf32>
    %cst_331 = arith.constant 0.000000e+00 : f32
    %667 = vector.broadcast %cst_331 : f32 to vector<1x128xf32>
    %668 = arith.maximumf %666, %667 : vector<1x128xf32>
    %c0_332 = arith.constant 0 : index
    %c0_333 = arith.constant 0 : index
    %669 = vector.load %arg35[%c0_332, %c0_333] : memref<1x128xf32, #tpu.memory_space<vmem>>, vector<1x128xf32>
    %cst_334 = arith.constant 9.99999974E-6 : f32
    %670 = vector.broadcast %cst_334 : f32 to vector<1x128xf32>
    %671 = arith.addf %668, %670 : vector<1x128xf32>
    %672 = math.rsqrt %671 : vector<1x128xf32>
    %673 = arith.mulf %669, %672 : vector<1x128xf32>
    %c0_335 = arith.constant 0 : index
    %c0_336 = arith.constant 0 : index
    %674 = vector.load %arg36[%c0_335, %c0_336] : memref<1x128xf32, #tpu.memory_space<vmem>>, vector<1x128xf32>
    %675 = arith.mulf %662, %673 : vector<1x128xf32>
    %676 = arith.subf %674, %675 : vector<1x128xf32>
    %677 = vector.broadcast %673 : vector<1x128xf32> to vector<32x128xf32>
    %678 = arith.mulf %639, %677 : vector<32x128xf32>
    %679 = vector.broadcast %676 : vector<1x128xf32> to vector<32x128xf32>
    %680 = arith.addf %678, %679 : vector<32x128xf32>
    %cst_337 = arith.constant 0.00999999977 : f32
    %681 = vector.broadcast %cst_337 : f32 to vector<32x128xf32>
    %682 = arith.mulf %681, %680 : vector<32x128xf32>
    %683 = arith.maximumf %680, %682 : vector<32x128xf32>
    %684 = vector.shape_cast %683 : vector<32x128xf32> to vector<2x16x128xf32>
    %c0_338 = arith.constant 0 : index
    %c3_339 = arith.constant 3 : index
    %c0_340 = arith.constant 0 : index
    %685 = vector.load %arg42[%c0_338, %c3_339, %c0_340] : memref<2x22x128xf32, #tpu.memory_space<vmem>>, vector<2x16x128xf32>
    tpu.vector_store %arg42[%c0_338, %c3_339, %c0_340], %684 {strides = array<i32>} : memref<2x22x128xf32, #tpu.memory_space<vmem>>, vector<2x16x128xf32>,
    %c0_341 = arith.constant 0 : index
    %c0_342 = arith.constant 0 : index
    %c0_343 = arith.constant 0 : index
    %686 = vector.load %arg42[%c0_341, %c0_342, %c0_343] : memref<2x22x128xf32, #tpu.memory_space<vmem>>, vector<2x22x128xf32>
    %687 = vector.extract_strided_slice %686 {offsets = [0, 2, 0], sizes = [2, 16, 128], strides = [1, 1, 1]} : vector<2x22x128xf32> to vector<2x16x128xf32>
    %688 = vector.extract_strided_slice %686 {offsets = [0, 3, 0], sizes = [2, 16, 128], strides = [1, 1, 1]} : vector<2x22x128xf32> to vector<2x16x128xf32>
    %689 = vector.extract_strided_slice %686 {offsets = [0, 4, 0], sizes = [2, 16, 128], strides = [1, 1, 1]} : vector<2x22x128xf32> to vector<2x16x128xf32>
    %690 = tpu.concatenate %687, %688, %689 in 2 : vector<2x16x128xf32>, vector<2x16x128xf32>, vector<2x16x128xf32> -> vector<2x16x384xf32>
    %691 = vector.shape_cast %690 : vector<2x16x384xf32> to vector<32x384xf32>
    %692 = arith.truncf %691 : vector<32x384xf32> to vector<32x384xbf16>
    %c0_344 = arith.constant 0 : index
    %c0_345 = arith.constant 0 : index
    %693 = vector.load %arg37[%c0_344, %c0_345] : memref<384x16xbf16, #tpu.memory_space<vmem>>, vector<384x16xbf16>
    %cst_346 = arith.constant dense<0.000000e+00> : vector<32x16xf32>
    %694 = tpu.matmul %692, %693, %cst_346 {dimension_numbers = #tpu.dot_dimension_numbers<[1], [0], [0], [1], [0, 0, 1, 1], [], []>} : vector<32x384xbf16>, vector<384x16xbf16>, vector<32x16xf32> -> vector<32x16xf32>
    %695 = vector.shape_cast %694 : vector<32x16xf32> to vector<1x32x16xf32>
    %cst_347 = arith.constant dense<0.000000e+00> : vector<1xf32>
    %696 = vector.multi_reduction <add>, %695, %cst_347 [1, 2] : vector<1x32x16xf32> to vector<1xf32>
    %697 = vector.shape_cast %696 : vector<1xf32> to vector<1x1x1xf32>
    %698 = vector.extract %697[0, 0, 0] : f32 from vector<1x1x1xf32>
    %cst_348 = arith.constant 0.001953125 : f32
    %699 = arith.mulf %698, %cst_348 : f32
    %700 = arith.mulf %694, %694 : vector<32x16xf32>
    %701 = vector.shape_cast %700 : vector<32x16xf32> to vector<1x32x16xf32>
    %cst_349 = arith.constant dense<0.000000e+00> : vector<1xf32>
    %702 = vector.multi_reduction <add>, %701, %cst_349 [1, 2] : vector<1x32x16xf32> to vector<1xf32>
    %703 = vector.shape_cast %702 : vector<1xf32> to vector<1x1x1xf32>
    %704 = vector.extract %703[0, 0, 0] : f32 from vector<1x1x1xf32>
    %cst_350 = arith.constant 0.001953125 : f32
    %705 = arith.mulf %704, %cst_350 : f32
    %706 = arith.mulf %699, %699 : f32
    %707 = arith.subf %705, %706 : f32
    %cst_351 = arith.constant 0.000000e+00 : f32
    %708 = arith.maximumf %707, %cst_351 : f32
    %c0_352 = arith.constant 0 : index
    %c0_353 = arith.constant 0 : index
    %709 = vector.load %arg38[%c0_352, %c0_353] : memref<1x16xf32, #tpu.memory_space<vmem>>, vector<1x16xf32>
    %cst_354 = arith.constant 9.99999974E-6 : f32
    %710 = arith.addf %708, %cst_354 : f32
    %711 = math.rsqrt %710 : f32
    %712 = vector.broadcast %711 : f32 to vector<1x16xf32>
    %713 = arith.mulf %709, %712 : vector<1x16xf32>
    %c0_355 = arith.constant 0 : index
    %c0_356 = arith.constant 0 : index
    %714 = vector.load %arg39[%c0_355, %c0_356] : memref<1x16xf32, #tpu.memory_space<vmem>>, vector<1x16xf32>
    %715 = vector.broadcast %699 : f32 to vector<1x16xf32>
    %716 = arith.mulf %715, %713 : vector<1x16xf32>
    %717 = arith.subf %714, %716 : vector<1x16xf32>
    %718 = vector.broadcast %713 : vector<1x16xf32> to vector<32x16xf32>
    %719 = arith.mulf %694, %718 : vector<32x16xf32>
    %720 = vector.broadcast %717 : vector<1x16xf32> to vector<32x16xf32>
    %721 = arith.addf %719, %720 : vector<32x16xf32>
    %722 = arith.negf %721 : vector<32x16xf32>
    %723 = math.exp %722 : vector<32x16xf32>
    %cst_357 = arith.constant 1.000000e+00 : f32
    %724 = vector.broadcast %cst_357 : f32 to vector<32x16xf32>
    %725 = arith.addf %724, %723 : vector<32x16xf32>
    %726 = arith.divf %724, %725 : vector<32x16xf32>
    %c0_358 = arith.constant 0 : index
    %c0_359 = arith.constant 0 : index
    %727 = vector.load %arg40[%c0_358, %c0_359] : memref<32x16xf32, #tpu.memory_space<vmem>>, vector<32x16xf32>
    tpu.vector_store %arg40[%c0_358, %c0_359], %726 {strides = array<i32>} : memref<32x16xf32, #tpu.memory_space<vmem>>, vector<32x16xf32>,
    return
  }
}

</mosaic_0001>

<llo_original>
// kernel: resnet_forward.1
$region0: #{resnet_forward.1}
  #allocation0 [shape = 'u32[]', space=smem, size = 0x4, offset = 0x4, fixed_abs, tag = 'smem constant byte address 0x4 - core index']
  #allocation1 [shape = 'u32[144,128]{1,0:T(1,128)}', space=vmem, size = 0x12000, scoped, tag = 'internal scratch']
  #allocation2 [shape = 'f32[2,22,128]{2,1,0:T(8,128)}', space=vmem, size = 0x6000, scoped, tag = 'scratch operand']
  #allocation3 [shape = 'f32[2,22,128]{2,1,0:T(8,128)}', space=vmem, size = 0x6000, scoped, tag = 'scratch operand']
  %s0 = inlined_call_operand.smem [shape: u32[41], index: -1, kind: input, shape index: {}]
  %s1 = sld [smem:[%s0]]
  %s2 = scalar_lea.smem %s0, 1
  %s3 = sld [smem:[%s2]]
  %s4 = scalar_lea.smem %s0, 2
  %s5 = sld [smem:[%s4]]
  %s6 = scalar_lea.smem %s0, 3
  %s7 = sld [smem:[%s6]]
  %s8 = scalar_lea.smem %s0, 4
  %s9 = sld [smem:[%s8]]
  %s10 = scalar_lea.smem %s0, 5
  %s11 = sld [smem:[%s10]]
  %s12 = scalar_lea.smem %s0, 6
  %s13 = sld [smem:[%s12]]
  %s14 = scalar_lea.smem %s0, 7
  %s15 = sld [smem:[%s14]]
  %s16 = scalar_lea.smem %s0, 8
  %s17 = sld [smem:[%s16]]
  %s18 = scalar_lea.smem %s0, 9
  %s19 = sld [smem:[%s18]]
  %s20 = scalar_lea.smem %s0, 10
  %s21 = sld [smem:[%s20]]
  %s22 = scalar_lea.smem %s0, 11
  %s23 = sld [smem:[%s22]]
  %s24 = scalar_lea.smem %s0, 12
  %s25 = sld [smem:[%s24]]
  %s26 = scalar_lea.smem %s0, 13
  %s27 = sld [smem:[%s26]]
  %s28 = scalar_lea.smem %s0, 14
  %s29 = sld [smem:[%s28]]
  %s30 = scalar_lea.smem %s0, 15
  %s31 = sld [smem:[%s30]]
  %s32 = scalar_lea.smem %s0, 16
  %s33 = sld [smem:[%s32]]
  %s34 = scalar_lea.smem %s0, 17
  %s35 = sld [smem:[%s34]]
  %s36 = scalar_lea.smem %s0, 18
  %s37 = sld [smem:[%s36]]
  %s38 = scalar_lea.smem %s0, 19
  %s39 = sld [smem:[%s38]]
  %s40 = scalar_lea.smem %s0, 20
  %s41 = sld [smem:[%s40]]
  %s42 = scalar_lea.smem %s0, 21
  %s43 = sld [smem:[%s42]]
  %s44 = scalar_lea.smem %s0, 22
  %s45 = sld [smem:[%s44]]
  %s46 = scalar_lea.smem %s0, 23
  %s47 = sld [smem:[%s46]]
  %s48 = scalar_lea.smem %s0, 24
  %s49 = sld [smem:[%s48]]
  %s50 = scalar_lea.smem %s0, 25
  %s51 = sld [smem:[%s50]]
  %s52 = scalar_lea.smem %s0, 26
  %s53 = sld [smem:[%s52]]
  %s54 = scalar_lea.smem %s0, 27
  %s55 = sld [smem:[%s54]]
  %s56 = scalar_lea.smem %s0, 28
  %s57 = sld [smem:[%s56]]
  %s58 = scalar_lea.smem %s0, 29
  %s59 = sld [smem:[%s58]]
  %s60 = scalar_lea.smem %s0, 30
  %s61 = sld [smem:[%s60]]
  %s62 = scalar_lea.smem %s0, 31
  %s63 = sld [smem:[%s62]]
  %s64 = scalar_lea.smem %s0, 32
  %s65 = sld [smem:[%s64]]
  %s66 = scalar_lea.smem %s0, 33
  %s67 = sld [smem:[%s66]]
  %s68 = scalar_lea.smem %s0, 34
  %s69 = sld [smem:[%s68]]
  %s70 = scalar_lea.smem %s0, 35
  %s71 = sld [smem:[%s70]]
  %s72 = scalar_lea.smem %s0, 36
  %s73 = sld [smem:[%s72]]
  %s74 = scalar_lea.smem %s0, 37
  %s75 = sld [smem:[%s74]]
  %s76 = scalar_lea.smem %s0, 38
  %s77 = sld [smem:[%s76]]
  %s78 = scalar_lea.smem %s0, 39
  %s79 = sld [smem:[%s78]]
  %s80 = scalar_lea.smem %s0, 40
  %s81 = sld [smem:[%s80]]
  %s82 = sld [smem:[#allocation0]]
  $region230: #{resnet_forward.1} parent=0
    _
  %s84 = ssub.s32 1, %s82
  %s85 = scalar_select 0, %s84, %s82
  $region1: #{resnet_forward.1} parent=0
    #allocation4 [shape = 'u8[98304]{0}', space=vmem, size = 0x18000, scoped, tag = 'input window, operand 7, single buffered']
    #allocation5 [shape = 's32[1]{0}', space=sflag, size = 0x4, scoped, tag = 'scoped memory for resnet_forward.1']
    #allocation6 [shape = 'u8[512]{0}', space=vmem, size = 0x400, scoped, tag = 'input window, operand 9, single buffered']
    #allocation7 [shape = 's32[1]{0}', space=sflag, size = 0x4, scoped, tag = 'scoped memory for resnet_forward.1']
    #allocation8 [shape = 'u8[512]{0}', space=vmem, size = 0x400, scoped, tag = 'input window, operand 11, single buffered']
    #allocation9 [shape = 'u8[512]{0}', space=vmem, size = 0x400, scoped, tag = 'input window, operand 12, single buffered']
    #allocation10 [shape = 's32[1]{0}', space=sflag, size = 0x4, scoped, tag = 'scoped memory for resnet_forward.1']
    #allocation11 [shape = 'u8[512]{0}', space=vmem, size = 0x400, scoped, tag = 'input window, operand 14, single buffered']
    #allocation12 [shape = 'u8[512]{0}', space=vmem, size = 0x400, scoped, tag = 'input window, operand 15, single buffered']
    #allocation13 [shape = 's32[1]{0}', space=sflag, size = 0x4, scoped, tag = 'scoped memory for resnet_forward.1']
    #allocation14 [shape = 'u8[163840]{0}', space=vmem, size = 0x28000, scoped, tag = 'input window, operand 16, single buffered']
    #allocation15 [shape = 'u8[512]{0}', space=vmem, size = 0x400, scoped, tag = 'input window, operand 17, single buffered']
    #allocation16 [shape = 's32[1]{0}', space=sflag, size = 0x4, scoped, tag = 'scoped memory for resnet_forward.1']
    #allocation17 [shape = 'u8[512]{0}', space=vmem, size = 0x400, scoped, tag = 'input window, operand 18, single buffered']
    #allocation18 [shape = 'u8[98304]{0}', space=vmem, size = 0x18000, scoped, tag = 'input window, operand 19, single buffered']
    #allocation19 [shape = 's32[1]{0}', space=sflag, size = 0x4, scoped, tag = 'scoped memory for resnet_forward.1']
    #allocation20 [shape = 'u8[163840]{0}', space=vmem, size = 0x28000, scoped, tag = 'input window, operand 22, single buffered']
    #allocation21 [shape = 'u8[98304]{0}', space=vmem, size = 0x18000, scoped, tag = 'input window, operand 25, single buffered']
    #allocation22 [shape = 's32[1]{0}', space=sflag, size = 0x4, scoped, tag = 'scoped memory for resnet_forward.1']
    #allocation23 [shape = 'u8[163840]{0}', space=vmem, size = 0x28000, scoped, tag = 'input window, operand 28, single buffered']
    #allocation24 [shape = 'u8[98304]{0}', space=vmem, size = 0x18000, scoped, tag = 'input window, operand 31, single buffered']
    #allocation25 [shape = 's32[1]{0}', space=sflag, size = 0x4, scoped, tag = 'scoped memory for resnet_forward.1']
    #allocation26 [shape = 'u8[163840]{0}', space=vmem, size = 0x28000, scoped, tag = 'input window, operand 34, single buffered']
    %86 = vsyncpa [#allocation5], 0
    %87 = vsyncpa [#allocation7], 0
    %88 = vsyncpa [#allocation10], 0
    %89 = vsyncpa [#allocation13], 0
    %90 = vsyncpa [#allocation16], 0
    %91 = vsyncpa [#allocation19], 0
    %92 = vsyncpa [#allocation22], 0
    %93 = vsyncpa [#allocation25], 0
    // Predicated region
    $region2: #{resnet_forward.1} parent=1 // pred_check
      _
    $region3: #{resnet_forward.1} parent=1 // pred_check_branch
      %95 = sbr.rel (0) target = $region5
    $region4: #{resnet_forward.1} parent=1 // pred_region
      _
    $region5: #{resnet_forward.1} parent=1 // pred_fallthru
      _
    // Predicated region
    $region6: #{resnet_forward.1} parent=1 // pred_check
      _
    $region7: #{resnet_forward.1} parent=1 // pred_check_branch
      %97 = sbr.rel (0) target = $region9
    $region8: #{resnet_forward.1} parent=1 // pred_region
      _
    $region9: #{resnet_forward.1} parent=1 // pred_fallthru
      _
    // Predicated region
    $region10: #{resnet_forward.1} parent=1 // pred_check
      _
    $region11: #{resnet_forward.1} parent=1 // pred_check_branch
      %99 = sbr.rel (0) target = $region13
    $region12: #{resnet_forward.1} parent=1 // pred_region
      _
    $region13: #{resnet_forward.1} parent=1 // pred_fallthru
      _
    // Predicated region
    $region14: #{resnet_forward.1} parent=1 // pred_check
      _
    $region15: #{resnet_forward.1} parent=1 // pred_check_branch
      %101 = sbr.rel (0) target = $region17
    $region16: #{resnet_forward.1} parent=1 // pred_region
      _
    $region17: #{resnet_forward.1} parent=1 // pred_fallthru
      _
    // Predicated region
    $region18: #{resnet_forward.1} parent=1 // pred_check
      _
    $region19: #{resnet_forward.1} parent=1 // pred_check_branch
      %103 = sbr.rel (0) target = $region21
    $region20: #{resnet_forward.1} parent=1 // pred_region
      _
    $region21: #{resnet_forward.1} parent=1 // pred_fallthru
      _
    // Predicated region
    $region22: #{resnet_forward.1} parent=1 // pred_check
      _
    $region23: #{resnet_forward.1} parent=1 // pred_check_branch
      %105 = sbr.rel (0) target = $region25
    $region24: #{resnet_forward.1} parent=1 // pred_region
      _
    $region25: #{resnet_forward.1} parent=1 // pred_fallthru
      _
    // Predicated region
    $region26: #{resnet_forward.1} parent=1 // pred_check
      _
    $region27: #{resnet_forward.1} parent=1 // pred_check_branch
      %107 = sbr.rel (0) target = $region29
    $region28: #{resnet_forward.1} parent=1 // pred_region
      _
    $region29: #{resnet_forward.1} parent=1 // pred_fallthru
      _
    // Predicated region
    $region30: #{resnet_forward.1} parent=1 // pred_check
      _
    $region31: #{resnet_forward.1} parent=1 // pred_check_branch
      %109 = sbr.rel (0) target = $region33
    $region32: #{resnet_forward.1} parent=1 // pred_region
      %s111 = ssub.s32 3072, 3072
      %112 = vsyncadd [#allocation5], %s111
      %s113 = sshll.u32 [#allocation4], 4
      %s114 = int_to_ptr.vmem [resolvable:$true] %s113
      %119 = dma.hbm_to_vmem [thread:$0]  %s15, 3072, %s114, [#allocation5], 64, 64, 4
    $region33: #{resnet_forward.1} parent=1 // pred_fallthru
      _
    // Predicated region
    $region34: #{resnet_forward.1} parent=1 // pred_check
      _
    $region35: #{resnet_forward.1} parent=1 // pred_check_branch
      %121 = sbr.rel (0) target = $region37
    $region36: #{resnet_forward.1} parent=1 // pred_region
      _
    $region37: #{resnet_forward.1} parent=1 // pred_fallthru
      _
    // Predicated region
    $region38: #{resnet_forward.1} parent=1 // pred_check
      _
    $region39: #{resnet_forward.1} parent=1 // pred_check_branch
      %123 = sbr.rel (0) target = $region41
    $region40: #{resnet_forward.1} parent=1 // pred_region
      %s125 = ssub.s32 16, 16
      %126 = vsyncadd [#allocation7], %s125
      %s128 = sshll.u32 [#allocation6], 4
      %s129 = int_to_ptr.vmem [resolvable:$true] %s128
      %131 = dma.hbm_to_vmem [thread:$0]  %s19, 16, %s129, [#allocation7]
    $region41: #{resnet_forward.1} parent=1 // pred_fallthru
      _
    // Predicated region
    $region42: #{resnet_forward.1} parent=1 // pred_check
      _
    $region43: #{resnet_forward.1} parent=1 // pred_check_branch
      %133 = sbr.rel (0) target = $region45
    $region44: #{resnet_forward.1} parent=1 // pred_region
      _
    $region45: #{resnet_forward.1} parent=1 // pred_fallthru
      _
    // Predicated region
    $region46: #{resnet_forward.1} parent=1 // pred_check
      _
    $region47: #{resnet_forward.1} parent=1 // pred_check_branch
      %135 = sbr.rel (0) target = $region49
    $region48: #{resnet_forward.1} parent=1 // pred_region
      %s137 = ssub.s32 16, 16
      %138 = vsyncadd [#allocation7], %s137
      %s140 = sshll.u32 [#allocation8], 4
      %s141 = int_to_ptr.vmem [resolvable:$true] %s140
      %143 = dma.hbm_to_vmem [thread:$0]  %s23, 16, %s141, [#allocation7]
    $region49: #{resnet_forward.1} parent=1 // pred_fallthru
      _
    // Predicated region
    $region50: #{resnet_forward.1} parent=1 // pred_check
      _
    $region51: #{resnet_forward.1} parent=1 // pred_check_branch
      %145 = sbr.rel (0) target = $region53
    $region52: #{resnet_forward.1} parent=1 // pred_region
      %s147 = ssub.s32 16, 16
      %148 = vsyncadd [#allocation10], %s147
      %s150 = sshll.u32 [#allocation9], 4
      %s151 = int_to_ptr.vmem [resolvable:$true] %s150
      %153 = dma.hbm_to_vmem [thread:$0]  %s25, 16, %s151, [#allocation10]
    $region53: #{resnet_forward.1} parent=1 // pred_fallthru
      _
    // Predicated region
    $region54: #{resnet_forward.1} parent=1 // pred_check
      _
    $region55: #{resnet_forward.1} parent=1 // pred_check_branch
      %155 = sbr.rel (0) target = $region57
    $region56: #{resnet_forward.1} parent=1 // pred_region
      _
    $region57: #{resnet_forward.1} parent=1 // pred_fallthru
      _
    // Predicated region
    $region58: #{resnet_forward.1} parent=1 // pred_check
      _
    $region59: #{resnet_forward.1} parent=1 // pred_check_branch
      %157 = sbr.rel (0) target = $region61
    $region60: #{resnet_forward.1} parent=1 // pred_region
      %s159 = ssub.s32 16, 16
      %160 = vsyncadd [#allocation10], %s159
      %s162 = sshll.u32 [#allocation11], 4
      %s163 = int_to_ptr.vmem [resolvable:$true] %s162
      %165 = dma.hbm_to_vmem [thread:$0]  %s29, 16, %s163, [#allocation10]
    $region61: #{resnet_forward.1} parent=1 // pred_fallthru
      _
    // Predicated region
    $region62: #{resnet_forward.1} parent=1 // pred_check
      _
    $region63: #{resnet_forward.1} parent=1 // pred_check_branch
      %167 = sbr.rel (0) target = $region65
    $region64: #{resnet_forward.1} parent=1 // pred_region
      %s169 = ssub.s32 16, 16
      %170 = vsyncadd [#allocation13], %s169
      %s172 = sshll.u32 [#allocation12], 4
      %s173 = int_to_ptr.vmem [resolvable:$true] %s172
      %175 = dma.hbm_to_vmem [thread:$0]  %s31, 16, %s173, [#allocation13]
    $region65: #{resnet_forward.1} parent=1 // pred_fallthru
      _
    // Predicated region
    $region66: #{resnet_forward.1} parent=1 // pred_check
      _
    $region67: #{resnet_forward.1} parent=1 // pred_check_branch
      %177 = sbr.rel (0) target = $region69
    $region68: #{resnet_forward.1} parent=1 // pred_region
      %s179 = ssub.s32 5120, 5120
      %180 = vsyncadd [#allocation13], %s179
      %s181 = sshll.u32 [#allocation14], 4
      %s182 = int_to_ptr.vmem [resolvable:$true] %s181
      %187 = dma.hbm_to_vmem [thread:$0]  %s33, 5120, %s182, [#allocation13], 64, 64, 4
    $region69: #{resnet_forward.1} parent=1 // pred_fallthru
      _
    // Predicated region
    $region70: #{resnet_forward.1} parent=1 // pred_check
      _
    $region71: #{resnet_forward.1} parent=1 // pred_check_branch
      %189 = sbr.rel (0) target = $region73
    $region72: #{resnet_forward.1} parent=1 // pred_region
      %s191 = ssub.s32 16, 16
      %192 = vsyncadd [#allocation16], %s191
      %s194 = sshll.u32 [#allocation15], 4
      %s195 = int_to_ptr.vmem [resolvable:$true] %s194
      %197 = dma.hbm_to_vmem [thread:$0]  %s35, 16, %s195, [#allocation16]
    $region73: #{resnet_forward.1} parent=1 // pred_fallthru
      _
    // Predicated region
    $region74: #{resnet_forward.1} parent=1 // pred_check
      _
    $region75: #{resnet_forward.1} parent=1 // pred_check_branch
      %199 = sbr.rel (0) target = $region77
    $region76: #{resnet_forward.1} parent=1 // pred_region
      %s201 = ssub.s32 16, 16
      %202 = vsyncadd [#allocation16], %s201
      %s204 = sshll.u32 [#allocation17], 4
      %s205 = int_to_ptr.vmem [resolvable:$true] %s204
      %207 = dma.hbm_to_vmem [thread:$0]  %s37, 16, %s205, [#allocation16]
    $region77: #{resnet_forward.1} parent=1 // pred_fallthru
      _
    // Predicated region
    $region78: #{resnet_forward.1} parent=1 // pred_check
      _
    $region79: #{resnet_forward.1} parent=1 // pred_check_branch
      %209 = sbr.rel (0) target = $region81
    $region80: #{resnet_forward.1} parent=1 // pred_region
      %s211 = ssub.s32 3072, 3072
      %212 = vsyncadd [#allocation19], %s211
      %s213 = sshll.u32 [#allocation18], 4
      %s214 = int_to_ptr.vmem [resolvable:$true] %s213
      %219 = dma.hbm_to_vmem [thread:$0]  %s39, 3072, %s214, [#allocation19], 64, 64, 4
    $region81: #{resnet_forward.1} parent=1 // pred_fallthru
      _
    // Predicated region
    $region82: #{resnet_forward.1} parent=1 // pred_check
      _
    $region83: #{resnet_forward.1} parent=1 // pred_check_branch
      %221 = sbr.rel (0) target = $region85
    $region84: #{resnet_forward.1} parent=1 // pred_region
      _
    $region85: #{resnet_forward.1} parent=1 // pred_fallthru
      _
    // Predicated region
    $region86: #{resnet_forward.1} parent=1 // pred_check
      _
    $region87: #{resnet_forward.1} parent=1 // pred_check_branch
      %223 = sbr.rel (0) target = $region89
    $region88: #{resnet_forward.1} parent=1 // pred_region
      _
    $region89: #{resnet_forward.1} parent=1 // pred_fallthru
      _
    // Predicated region
    $region90: #{resnet_forward.1} parent=1 // pred_check
      _
    $region91: #{resnet_forward.1} parent=1 // pred_check_branch
      %225 = sbr.rel (0) target = $region93
    $region92: #{resnet_forward.1} parent=1 // pred_region
      %s227 = ssub.s32 5120, 5120
      %228 = vsyncadd [#allocation19], %s227
      %s229 = sshll.u32 [#allocation20], 4
      %s230 = int_to_ptr.vmem [resolvable:$true] %s229
      %235 = dma.hbm_to_vmem [thread:$0]  %s45, 5120, %s230, [#allocation19], 64, 64, 4
    $region93: #{resnet_forward.1} parent=1 // pred_fallthru
      _
    // Predicated region
    $region94: #{resnet_forward.1} parent=1 // pred_check
      _
    $region95: #{resnet_forward.1} parent=1 // pred_check_branch
      %237 = sbr.rel (0) target = $region97
    $region96: #{resnet_forward.1} parent=1 // pred_region
      _
    $region97: #{resnet_forward.1} parent=1 // pred_fallthru
      _
    // Predicated region
    $region98: #{resnet_forward.1} parent=1 // pred_check
      _
    $region99: #{resnet_forward.1} parent=1 // pred_check_branch
      %239 = sbr.rel (0) target = $region101
    $region100: #{resnet_forward.1} parent=1 // pred_region
      _
    $region101: #{resnet_forward.1} parent=1 // pred_fallthru
      _
    // Predicated region
    $region102: #{resnet_forward.1} parent=1 // pred_check
      _
    $region103: #{resnet_forward.1} parent=1 // pred_check_branch
      %241 = sbr.rel (0) target = $region105
    $region104: #{resnet_forward.1} parent=1 // pred_region
      %s243 = ssub.s32 3072, 3072
      %244 = vsyncadd [#allocation22], %s243
      %s245 = sshll.u32 [#allocation21], 4
      %s246 = int_to_ptr.vmem [resolvable:$true] %s245
      %251 = dma.hbm_to_vmem [thread:$0]  %s51, 3072, %s246, [#allocation22], 64, 64, 4
    $region105: #{resnet_forward.1} parent=1 // pred_fallthru
      _
    // Predicated region
    $region106: #{resnet_forward.1} parent=1 // pred_check
      _
    $region107: #{resnet_forward.1} parent=1 // pred_check_branch
      %253 = sbr.rel (0) target = $region109
    $region108: #{resnet_forward.1} parent=1 // pred_region
      _
    $region109: #{resnet_forward.1} parent=1 // pred_fallthru
      _
    // Predicated region
    $region110: #{resnet_forward.1} parent=1 // pred_check
      _
    $region111: #{resnet_forward.1} parent=1 // pred_check_branch
      %255 = sbr.rel (0) target = $region113
    $region112: #{resnet_forward.1} parent=1 // pred_region
      _
    $region113: #{resnet_forward.1} parent=1 // pred_fallthru
      _
    // Predicated region
    $region114: #{resnet_forward.1} parent=1 // pred_check
      _
    $region115: #{resnet_forward.1} parent=1 // pred_check_branch
      %257 = sbr.rel (0) target = $region117
    $region116: #{resnet_forward.1} parent=1 // pred_region
      %s259 = ssub.s32 5120, 5120
      %260 = vsyncadd [#allocation22], %s259
      %s261 = sshll.u32 [#allocation23], 4
      %s262 = int_to_ptr.vmem [resolvable:$true] %s261
      %267 = dma.hbm_to_vmem [thread:$0]  %s57, 5120, %s262, [#allocation22], 64, 64, 4
    $region117: #{resnet_forward.1} parent=1 // pred_fallthru
      _
    // Predicated region
    $region118: #{resnet_forward.1} parent=1 // pred_check
      _
    $region119: #{resnet_forward.1} parent=1 // pred_check_branch
      %269 = sbr.rel (0) target = $region121
    $region120: #{resnet_forward.1} parent=1 // pred_region
      _
    $region121: #{resnet_forward.1} parent=1 // pred_fallthru
      _
    // Predicated region
    $region122: #{resnet_forward.1} parent=1 // pred_check
      _
    $region123: #{resnet_forward.1} parent=1 // pred_check_branch
      %271 = sbr.rel (0) target = $region125
    $region124: #{resnet_forward.1} parent=1 // pred_region
      _
    $region125: #{resnet_forward.1} parent=1 // pred_fallthru
      _
    // Predicated region
    $region126: #{resnet_forward.1} parent=1 // pred_check
      _
    $region127: #{resnet_forward.1} parent=1 // pred_check_branch
      %273 = sbr.rel (0) target = $region129
    $region128: #{resnet_forward.1} parent=1 // pred_region
      %s275 = ssub.s32 3072, 3072
      %276 = vsyncadd [#allocation25], %s275
      %s277 = sshll.u32 [#allocation24], 4
      %s278 = int_to_ptr.vmem [resolvable:$true] %s277
      %283 = dma.hbm_to_vmem [thread:$0]  %s63, 3072, %s278, [#allocation25], 64, 64, 4
    $region129: #{resnet_forward.1} parent=1 // pred_fallthru
      _
    // Predicated region
    $region130: #{resnet_forward.1} parent=1 // pred_check
      _
    $region131: #{resnet_forward.1} parent=1 // pred_check_branch
      %285 = sbr.rel (0) target = $region133
    $region132: #{resnet_forward.1} parent=1 // pred_region
      _
    $region133: #{resnet_forward.1} parent=1 // pred_fallthru
      _
    // Predicated region
    $region134: #{resnet_forward.1} parent=1 // pred_check
      _
    $region135: #{resnet_forward.1} parent=1 // pred_check_branch
      %287 = sbr.rel (0) target = $region137
    $region136: #{resnet_forward.1} parent=1 // pred_region
      _
    $region137: #{resnet_forward.1} parent=1 // pred_fallthru
      _
    // Predicated region
    $region138: #{resnet_forward.1} parent=1 // pred_check
      _
    $region139: #{resnet_forward.1} parent=1 // pred_check_branch
      %289 = sbr.rel (0) target = $region141
    $region140: #{resnet_forward.1} parent=1 // pred_region
      %s291 = ssub.s32 5120, 5120
      %292 = vsyncadd [#allocation25], %s291
      %s293 = sshll.u32 [#allocation26], 4
      %s294 = int_to_ptr.vmem [resolvable:$true] %s293
      %299 = dma.hbm_to_vmem [thread:$0]  %s69, 5120, %s294, [#allocation25], 64, 64, 4
    $region141: #{resnet_forward.1} parent=1 // pred_fallthru
      _
    // Predicated region
    $region142: #{resnet_forward.1} parent=1 // pred_check
      _
    $region143: #{resnet_forward.1} parent=1 // pred_check_branch
      %301 = sbr.rel (0) target = $region145
    $region144: #{resnet_forward.1} parent=1 // pred_region
      _
    $region145: #{resnet_forward.1} parent=1 // pred_fallthru
      _
    // Predicated region
    $region146: #{resnet_forward.1} parent=1 // pred_check
      _
    $region147: #{resnet_forward.1} parent=1 // pred_check_branch
      %303 = sbr.rel (0) target = $region149
    $region148: #{resnet_forward.1} parent=1 // pred_region
      _
    $region149: #{resnet_forward.1} parent=1 // pred_fallthru
      _
    // Predicated region
    $region150: #{resnet_forward.1} parent=1 // pred_check
      _
    $region151: #{resnet_forward.1} parent=1 // pred_check_branch
      %305 = sbr.rel (0) target = $region153
    $region152: #{resnet_forward.1} parent=1 // pred_region
      _
    $region153: #{resnet_forward.1} parent=1 // pred_fallthru
      _
    // Predicated region
    $region154: #{resnet_forward.1} parent=1 // pred_check
      _
    $region155: #{resnet_forward.1} parent=1 // pred_check_branch
      %307 = sbr.rel (0) target = $region157
    $region156: #{resnet_forward.1} parent=1 // pred_region
      _
    $region157: #{resnet_forward.1} parent=1 // pred_fallthru
      _
    // Predicated region
    $region158: #{resnet_forward.1} parent=1 // pred_check
      _
    $region159: #{resnet_forward.1} parent=1 // pred_check_branch
      %309 = sbr.rel (0) target = $region161
    $region160: #{resnet_forward.1} parent=1 // pred_region
      _
    $region161: #{resnet_forward.1} parent=1 // pred_fallthru
      _
    // Predicated region
    $region162: #{resnet_forward.1} parent=1 // pred_check
      _
    $region163: #{resnet_forward.1} parent=1 // pred_check_branch
      %311 = sbr.rel (0) target = $region165
    $region164: #{resnet_forward.1} parent=1 // pred_region
      %312 = dma.done [#allocation5], 3072
    $region165: #{resnet_forward.1} parent=1 // pred_fallthru
      _
    // Predicated region
    $region166: #{resnet_forward.1} parent=1 // pred_check
      _
    $region167: #{resnet_forward.1} parent=1 // pred_check_branch
      %314 = sbr.rel (0) target = $region169
    $region168: #{resnet_forward.1} parent=1 // pred_region
      %315 = dma.done [#allocation7], 16
    $region169: #{resnet_forward.1} parent=1 // pred_fallthru
      _
    // Predicated region
    $region170: #{resnet_forward.1} parent=1 // pred_check
      _
    $region171: #{resnet_forward.1} parent=1 // pred_check_branch
      %317 = sbr.rel (0) target = $region173
    $region172: #{resnet_forward.1} parent=1 // pred_region
      %318 = dma.done [#allocation7], 16
    $region173: #{resnet_forward.1} parent=1 // pred_fallthru
      _
    // Predicated region
    $region174: #{resnet_forward.1} parent=1 // pred_check
      _
    $region175: #{resnet_forward.1} parent=1 // pred_check_branch
      %320 = sbr.rel (0) target = $region177
    $region176: #{resnet_forward.1} parent=1 // pred_region
      %321 = dma.done [#allocation10], 16
    $region177: #{resnet_forward.1} parent=1 // pred_fallthru
      _
    // Predicated region
    $region178: #{resnet_forward.1} parent=1 // pred_check
      _
    $region179: #{resnet_forward.1} parent=1 // pred_check_branch
      %323 = sbr.rel (0) target = $region181
    $region180: #{resnet_forward.1} parent=1 // pred_region
      %324 = dma.done [#allocation10], 16
    $region181: #{resnet_forward.1} parent=1 // pred_fallthru
      _
    // Predicated region
    $region182: #{resnet_forward.1} parent=1 // pred_check
      _
    $region183: #{resnet_forward.1} parent=1 // pred_check_branch
      %326 = sbr.rel (0) target = $region185
    $region184: #{resnet_forward.1} parent=1 // pred_region
      %327 = dma.done [#allocation13], 16
    $region185: #{resnet_forward.1} parent=1 // pred_fallthru
      _
    // Predicated region
    $region186: #{resnet_forward.1} parent=1 // pred_check
      _
    $region187: #{resnet_forward.1} parent=1 // pred_check_branch
      %329 = sbr.rel (0) target = $region189
    $region188: #{resnet_forward.1} parent=1 // pred_region
      %330 = dma.done [#allocation13], 5120
    $region189: #{resnet_forward.1} parent=1 // pred_fallthru
      _
    // Predicated region
    $region190: #{resnet_forward.1} parent=1 // pred_check
      _
    $region191: #{resnet_forward.1} parent=1 // pred_check_branch
      %332 = sbr.rel (0) target = $region193
    $region192: #{resnet_forward.1} parent=1 // pred_region
      %333 = dma.done [#allocation16], 16
    $region193: #{resnet_forward.1} parent=1 // pred_fallthru
      _
    // Predicated region
    $region194: #{resnet_forward.1} parent=1 // pred_check
      _
    $region195: #{resnet_forward.1} parent=1 // pred_check_branch
      %335 = sbr.rel (0) target = $region197
    $region196: #{resnet_forward.1} parent=1 // pred_region
      %336 = dma.done [#allocation16], 16
    $region197: #{resnet_forward.1} parent=1 // pred_fallthru
      _
    // Predicated region
    $region198: #{resnet_forward.1} parent=1 // pred_check
      _
    $region199: #{resnet_forward.1} parent=1 // pred_check_branch
      %338 = sbr.rel (0) target = $region201
    $region200: #{resnet_forward.1} parent=1 // pred_region
      %339 = dma.done [#allocation19], 3072
    $region201: #{resnet_forward.1} parent=1 // pred_fallthru
      _
    // Predicated region
    $region202: #{resnet_forward.1} parent=1 // pred_check
      _
    $region203: #{resnet_forward.1} parent=1 // pred_check_branch
      %341 = sbr.rel (0) target = $region205
    $region204: #{resnet_forward.1} parent=1 // pred_region
      %342 = dma.done [#allocation19], 5120
    $region205: #{resnet_forward.1} parent=1 // pred_fallthru
      _
    // Predicated region
    $region206: #{resnet_forward.1} parent=1 // pred_check
      _
    $region207: #{resnet_forward.1} parent=1 // pred_check_branch
      %344 = sbr.rel (0) target = $region209
    $region208: #{resnet_forward.1} parent=1 // pred_region
      %345 = dma.done [#allocation22], 3072
    $region209: #{resnet_forward.1} parent=1 // pred_fallthru
      _
    // Predicated region
    $region210: #{resnet_forward.1} parent=1 // pred_check
      _
    $region211: #{resnet_forward.1} parent=1 // pred_check_branch
      %347 = sbr.rel (0) target = $region213
    $region212: #{resnet_forward.1} parent=1 // pred_region
      %348 = dma.done [#allocation22], 5120
    $region213: #{resnet_forward.1} parent=1 // pred_fallthru
      _
    // Predicated region
    $region214: #{resnet_forward.1} parent=1 // pred_check
      _
    $region215: #{resnet_forward.1} parent=1 // pred_check_branch
      %350 = sbr.rel (0) target = $region217
    $region216: #{resnet_forward.1} parent=1 // pred_region
      %351 = dma.done [#allocation25], 3072
    $region217: #{resnet_forward.1} parent=1 // pred_fallthru
      _
    // Predicated region
    $region218: #{resnet_forward.1} parent=1 // pred_check
      _
    $region219: #{resnet_forward.1} parent=1 // pred_check_branch
      %353 = sbr.rel (0) target = $region221
    $region220: #{resnet_forward.1} parent=1 // pred_region
      %354 = dma.done [#allocation25], 5120
    $region221: #{resnet_forward.1} parent=1 // pred_fallthru
      _
    %356 = vst [vmem:[#allocation2] sm:$0x7] 0.0
    %357 = vst [vmem:[#allocation2 + $0x18] sm:$0x7] 0.0
    %358 = vst [vmem:[#allocation2 + $0x13] sm:$0x7] 0.0
    %359 = vst [vmem:[#allocation2 + $0x2b] sm:$0x7] 0.0
    %360 = vst [vmem:[#allocation3] sm:$0x7] 0.0
    %361 = vst [vmem:[#allocation3 + $0x18] sm:$0x7] 0.0
    %362 = vst [vmem:[#allocation3 + $0x13] sm:$0x7] 0.0
    %363 = vst [vmem:[#allocation3 + $0x2b] sm:$0x7] 0.0
    %v364 = vld [vmem:[%s1] sm:$0xff]
    %v365 = vld [vmem:[%s1 + $0x8] sm:$0xff]
    %v366 = vld [vmem:[%s1 + $0x10] sm:$0x3f]
    %v367 = vld [vmem:[%s1 + $0x18] sm:$0xff]
    %v368 = vld [vmem:[%s1 + $0x20] sm:$0xff]
    %v369 = vld [vmem:[%s1 + $0x28] sm:$0x3f]
    %vm376 = vcmask 1046528
    %v377 = vrot.slane %v364, 1
    %v378 = vrot.slane %v365, 1
    %v379 = vsel %vm376, %v377, %v378
    %v380 = vrot.slane %v366, 1
    %v381 = vsel %vm376, %v378, %v380
    %v382 = vrot.slane %v367, 1
    %v383 = vrot.slane %v368, 1
    %v384 = vsel %vm376, %v382, %v383
    %v385 = vrot.slane %v369, 1
    %v386 = vsel %vm376, %v383, %v385
    %vm391 = vcmask 1045504
    %v392 = vrot.slane %v364, 2
    %v393 = vrot.slane %v365, 2
    %v394 = vsel %vm391, %v392, %v393
    %v395 = vrot.slane %v366, 2
    %v396 = vsel %vm391, %v393, %v395
    %v397 = vrot.slane %v367, 2
    %v398 = vrot.slane %v368, 2
    %v399 = vsel %vm391, %v397, %v398
    %v400 = vrot.slane %v369, 2
    %v401 = vsel %vm391, %v398, %v400
    %vm406 = vcmask 1044480
    %v407 = vrot.slane %v364, 3
    %v408 = vrot.slane %v365, 3
    %v409 = vsel %vm406, %v407, %v408
    %v410 = vrot.slane %v366, 3
    %v411 = vsel %vm406, %v408, %v410
    %v412 = vrot.slane %v367, 3
    %v413 = vrot.slane %v368, 3
    %v414 = vsel %vm406, %v412, %v413
    %v415 = vrot.slane %v369, 3
    %v416 = vsel %vm406, %v413, %v415
    %vm421 = vcmask 1043456
    %v422 = vrot.slane %v364, 4
    %v423 = vrot.slane %v365, 4
    %v424 = vsel %vm421, %v422, %v423
    %v425 = vrot.slane %v366, 4
    %v426 = vsel %vm421, %v423, %v425
    %v427 = vrot.slane %v367, 4
    %v428 = vrot.slane %v368, 4
    %v429 = vsel %vm421, %v427, %v428
    %v430 = vrot.slane %v369, 4
    %v431 = vsel %vm421, %v428, %v430
    %vm436 = vcmask 1042432
    %v437 = vrot.slane %v364, 5
    %v438 = vrot.slane %v365, 5
    %v439 = vsel %vm436, %v437, %v438
    %v440 = vrot.slane %v366, 5
    %v441 = vsel %vm436, %v438, %v440
    %v442 = vrot.slane %v367, 5
    %v443 = vrot.slane %v368, 5
    %v444 = vsel %vm436, %v442, %v443
    %v445 = vrot.slane %v369, 5
    %v446 = vsel %vm436, %v443, %v445
    %vm451 = vcmask 1041408
    %v452 = vrot.slane %v364, 6
    %v453 = vrot.slane %v365, 6
    %v454 = vsel %vm451, %v452, %v453
    %v455 = vrot.slane %v366, 6
    %v456 = vsel %vm451, %v453, %v455
    %v457 = vrot.slane %v367, 6
    %v458 = vrot.slane %v368, 6
    %v459 = vsel %vm451, %v457, %v458
    %v460 = vrot.slane %v369, 6
    %v461 = vsel %vm451, %v458, %v460
    %v466 = vpack.c.bf16 %v365, %v364
    %v467 = vpack.c.bf16 %v381, %v379
    %v468 = vpack.c.bf16 %v396, %v394
    %v469 = vpack.c.bf16 %v411, %v409
    %v470 = vpack.c.bf16 %v426, %v424
    %v471 = vpack.c.bf16 %v441, %v439
    %v472 = vpack.c.bf16 %v456, %v454
    %v473 = vpack.c.bf16 %v368, %v367
    %v474 = vpack.c.bf16 %v386, %v384
    %v475 = vpack.c.bf16 %v401, %v399
    %v476 = vpack.c.bf16 %v416, %v414
    %v477 = vpack.c.bf16 %v431, %v429
    %v478 = vpack.c.bf16 %v446, %v444
    %v479 = vpack.c.bf16 %v461, %v459
    %v480 = vld [vmem:[%s3] sm:$0xf]
    %v481 = vld [vmem:[%s3 + $0x4] sm:$0xf]
    %v482 = vld [vmem:[%s3 + $0x8] sm:$0xf]
    %v483 = vld [vmem:[%s3 + $0xc] sm:$0xf]
    %v484 = vld [vmem:[%s3 + $0x10] sm:$0xf]
    %v485 = vld [vmem:[%s3 + $0x14] sm:$0xf]
    %v486 = vld [vmem:[%s3 + $0x18] sm:$0xf]
    %v487 = vld [vmem:[%s3 + $0x1c] sm:$0xf]
    %v488 = vld [vmem:[%s3 + $0x20] sm:$0xf]
    %v489 = vld [vmem:[%s3 + $0x24] sm:$0xf]
    %v490 = vld [vmem:[%s3 + $0x28] sm:$0xf]
    %v491 = vld [vmem:[%s3 + $0x2c] sm:$0xf]
    %v492 = vld [vmem:[%s3 + $0x30] sm:$0xf]
    %v493 = vld [vmem:[%s3 + $0x34] sm:$0xf]
    %v494 = vld [vmem:[%s3 + $0x38] sm:$0xf]
    %v495 = vld [vmem:[%s3 + $0x3c] sm:$0xf]
    %v496 = vld [vmem:[%s3 + $0x40] sm:$0xf]
    %v497 = vld [vmem:[%s3 + $0x44] sm:$0xf]
    %v498 = vld [vmem:[%s3 + $0x48] sm:$0xf]
    %v499 = vld [vmem:[%s3 + $0x4c] sm:$0xf]
    %v500 = vld [vmem:[%s3 + $0x50] sm:$0xf]
    %v501 = vld [vmem:[%s3 + $0x54] sm:$0xf]
    %v502 = vld [vmem:[%s3 + $0x58] sm:$0xf]
    %v503 = vld [vmem:[%s3 + $0x5c] sm:$0xf]
    %v504 = vld [vmem:[%s3 + $0x60] sm:$0xf]
    %v505 = vld [vmem:[%s3 + $0x64] sm:$0xf]
    %v506 = vld [vmem:[%s3 + $0x68] sm:$0xf]
    %v507 = vld [vmem:[%s3 + $0x6c] sm:$0xf]
    %v508 = vld [vmem:[%s3 + $0x70] sm:$0xf]
    %v509 = vld [vmem:[%s3 + $0x74] sm:$0xf]
    %v510 = vld [vmem:[%s3 + $0x78] sm:$0xf]
    %v511 = vld [vmem:[%s3 + $0x7c] sm:$0xf]
    %v512 = vld [vmem:[%s3 + $0x80] sm:$0xf]
    %v513 = vld [vmem:[%s3 + $0x84] sm:$0xf]
    %v514 = vld [vmem:[%s3 + $0x88] sm:$0xf]
    %v515 = vld [vmem:[%s3 + $0x8c] sm:$0xf]
    %v516 = vld [vmem:[%s3 + $0x90] sm:$0xf]
    %v517 = vld [vmem:[%s3 + $0x94] sm:$0xf]
    %v518 = vld [vmem:[%s3 + $0x98] sm:$0xf]
    %v519 = vld [vmem:[%s3 + $0x9c] sm:$0xf]
    %v520 = vld [vmem:[%s3 + $0xa0] sm:$0xf]
    %v521 = vld [vmem:[%s3 + $0xa4] sm:$0xf]
    %v522 = vld [vmem:[%s3 + $0xa8] sm:$0xf]
    %v523 = vld [vmem:[%s3 + $0xac] sm:$0xf]
    %v524 = vld [vmem:[%s3 + $0xb0] sm:$0xf]
    %v525 = vld [vmem:[%s3 + $0xb4] sm:$0xf]
    %v526 = vld [vmem:[%s3 + $0xb8] sm:$0xf]
    %v527 = vld [vmem:[%s3 + $0xbc] sm:$0xf]
    %v528 = vld [vmem:[%s3 + $0xc0] sm:$0xf]
    %v529 = vld [vmem:[%s3 + $0xc4] sm:$0xf]
    %v530 = vld [vmem:[%s3 + $0xc8] sm:$0xf]
    %v531 = vld [vmem:[%s3 + $0xcc] sm:$0xf]
    %v532 = vld [vmem:[%s3 + $0xd0] sm:$0xf]
    %v533 = vld [vmem:[%s3 + $0xd4] sm:$0xf]
    %v534 = vld [vmem:[%s3 + $0xd8] sm:$0xf]
    %v535 = vld [vmem:[%s3 + $0xdc] sm:$0xf]
    %v536 = vld [vmem:[%s3 + $0xe0] sm:$0xf]
    %v537 = vld [vmem:[%s3 + $0xe4] sm:$0xf]
    %v538 = vld [vmem:[%s3 + $0xe8] sm:$0xf]
    %v539 = vld [vmem:[%s3 + $0xec] sm:$0xf]
    %v540 = vld [vmem:[%s3 + $0xf0] sm:$0xf]
    %v541 = vld [vmem:[%s3 + $0xf4] sm:$0xf]
    %v542 = vld [vmem:[%s3 + $0xf8] sm:$0xf]
    %v543 = vld [vmem:[%s3 + $0xfc] sm:$0xf]
    %v544 = vld [vmem:[%s3 + $0x100] sm:$0xf]
    %v545 = vld [vmem:[%s3 + $0x104] sm:$0xf]
    %v546 = vld [vmem:[%s3 + $0x108] sm:$0xf]
    %v547 = vld [vmem:[%s3 + $0x10c] sm:$0xf]
    %v548 = vld [vmem:[%s3 + $0x110] sm:$0xf]
    %v549 = vld [vmem:[%s3 + $0x114] sm:$0xf]
    %v550 = vld [vmem:[%s3 + $0x118] sm:$0xf]
    %v551 = vld [vmem:[%s3 + $0x11c] sm:$0xf]
    %v552 = vld [vmem:[%s3 + $0x120] sm:$0xf]
    %v553 = vld [vmem:[%s3 + $0x124] sm:$0xf]
    %v554 = vld [vmem:[%s3 + $0x128] sm:$0xf]
    %v555 = vld [vmem:[%s3 + $0x12c] sm:$0xf]
    %v556 = vld [vmem:[%s3 + $0x130] sm:$0xf]
    %v557 = vld [vmem:[%s3 + $0x134] sm:$0xf]
    %v558 = vld [vmem:[%s3 + $0x138] sm:$0xf]
    %v559 = vld [vmem:[%s3 + $0x13c] sm:$0xf]
    %v560 = vld [vmem:[%s3 + $0x140] sm:$0xf]
    %v561 = vld [vmem:[%s3 + $0x144] sm:$0xf]
    %v562 = vld [vmem:[%s3 + $0x148] sm:$0xf]
    %v563 = vld [vmem:[%s3 + $0x14c] sm:$0xf]
    %v564 = vld [vmem:[%s3 + $0x150] sm:$0xf]
    %v565 = vld [vmem:[%s3 + $0x154] sm:$0xf]
    %v566 = vld [vmem:[%s3 + $0x158] sm:$0xf]
    %v567 = vld [vmem:[%s3 + $0x15c] sm:$0xf]
    %v568 = vld [vmem:[%s3 + $0x160] sm:$0xf]
    %v569 = vld [vmem:[%s3 + $0x164] sm:$0xf]
    %v570 = vld [vmem:[%s3 + $0x168] sm:$0xf]
    %v571 = vld [vmem:[%s3 + $0x16c] sm:$0xf]
    %v572 = vld [vmem:[%s3 + $0x170] sm:$0xf]
    %v573 = vld [vmem:[%s3 + $0x174] sm:$0xf]
    %v574 = vld [vmem:[%s3 + $0x178] sm:$0xf]
    %v575 = vld [vmem:[%s3 + $0x17c] sm:$0xf]
    %v576 = vld [vmem:[%s3 + $0x180] sm:$0xf]
    %v577 = vld [vmem:[%s3 + $0x184] sm:$0xf]
    %v578 = vld [vmem:[%s3 + $0x188] sm:$0xf]
    %v579 = vld [vmem:[%s3 + $0x18c] sm:$0xf]
    %v580 = vld [vmem:[%s3 + $0x190] sm:$0xf]
    %v581 = vld [vmem:[%s3 + $0x194] sm:$0xf]
    %v582 = vld [vmem:[%s3 + $0x198] sm:$0xf]
    %v583 = vld [vmem:[%s3 + $0x19c] sm:$0xf]
    %v584 = vld [vmem:[%s3 + $0x1a0] sm:$0xf]
    %v585 = vld [vmem:[%s3 + $0x1a4] sm:$0xf]
    %v586 = vld [vmem:[%s3 + $0x1a8] sm:$0xf]
    %v587 = vld [vmem:[%s3 + $0x1ac] sm:$0xf]
    %v588 = vld [vmem:[%s3 + $0x1b0] sm:$0xf]
    %v589 = vld [vmem:[%s3 + $0x1b4] sm:$0xf]
    %v590 = vld [vmem:[%s3 + $0x1b8] sm:$0xf]
    %v591 = vld [vmem:[%s3 + $0x1bc] sm:$0xf]
    %v704 = vunpack.c.l.b16 %v480
    %v705 = vunpack.c.l.b16 %v481
    %v706 = vunpack.c.l.b16 %v482
    %v707 = vunpack.c.l.b16 %v483
    %v708 = vunpack.c.l.b16 %v484
    %v709 = vunpack.c.l.b16 %v485
    %v710 = vunpack.c.l.b16 %v486
    %v711 = vunpack.c.l.b16 %v487
    %v712 = vunpack.c.l.b16 %v488
    %v713 = vunpack.c.l.b16 %v489
    %v714 = vunpack.c.l.b16 %v490
    %v715 = vunpack.c.l.b16 %v491
    %v716 = vunpack.c.l.b16 %v492
    %v717 = vunpack.c.l.b16 %v493
    %v718 = vunpack.c.l.b16 %v494
    %v719 = vunpack.c.l.b16 %v495
    %v720 = vunpack.c.l.b16 %v496
    %v721 = vunpack.c.l.b16 %v497
    %v722 = vunpack.c.l.b16 %v498
    %v723 = vunpack.c.l.b16 %v499
    %v724 = vunpack.c.l.b16 %v500
    %v725 = vunpack.c.l.b16 %v501
    %v726 = vunpack.c.l.b16 %v502
    %v727 = vunpack.c.l.b16 %v503
    %v728 = vunpack.c.l.b16 %v504
    %v729 = vunpack.c.l.b16 %v505
    %v730 = vunpack.c.l.b16 %v506
    %v731 = vunpack.c.l.b16 %v507
    %v732 = vunpack.c.l.b16 %v508
    %v733 = vunpack.c.l.b16 %v509
    %v734 = vunpack.c.l.b16 %v510
    %v735 = vunpack.c.l.b16 %v511
    %v736 = vunpack.c.l.b16 %v512
    %v737 = vunpack.c.l.b16 %v513
    %v738 = vunpack.c.l.b16 %v514
    %v739 = vunpack.c.l.b16 %v515
    %v740 = vunpack.c.l.b16 %v516
    %v741 = vunpack.c.l.b16 %v517
    %v742 = vunpack.c.l.b16 %v518
    %v743 = vunpack.c.l.b16 %v519
    %v744 = vunpack.c.l.b16 %v520
    %v745 = vunpack.c.l.b16 %v521
    %v746 = vunpack.c.l.b16 %v522
    %v747 = vunpack.c.l.b16 %v523
    %v748 = vunpack.c.l.b16 %v524
    %v749 = vunpack.c.l.b16 %v525
    %v750 = vunpack.c.l.b16 %v526
    %v751 = vunpack.c.l.b16 %v527
    %v752 = vunpack.c.l.b16 %v528
    %v753 = vunpack.c.l.b16 %v529
    %v754 = vunpack.c.l.b16 %v530
    %v755 = vunpack.c.l.b16 %v531
    %v756 = vunpack.c.l.b16 %v532
    %v757 = vunpack.c.l.b16 %v533
    %v758 = vunpack.c.l.b16 %v534
    %v759 = vunpack.c.l.b16 %v535
    %v760 = vunpack.c.l.b16 %v536
    %v761 = vunpack.c.l.b16 %v537
    %v762 = vunpack.c.l.b16 %v538
    %v763 = vunpack.c.l.b16 %v539
    %v764 = vunpack.c.l.b16 %v540
    %v765 = vunpack.c.l.b16 %v541
    %v766 = vunpack.c.l.b16 %v542
    %v767 = vunpack.c.l.b16 %v543
    %v768 = vunpack.c.l.b16 %v544
    %v769 = vunpack.c.l.b16 %v545
    %v770 = vunpack.c.l.b16 %v546
    %v771 = vunpack.c.l.b16 %v547
    %v772 = vunpack.c.l.b16 %v548
    %v773 = vunpack.c.l.b16 %v549
    %v774 = vunpack.c.l.b16 %v550
    %v775 = vunpack.c.l.b16 %v551
    %v776 = vunpack.c.l.b16 %v552
    %v777 = vunpack.c.l.b16 %v553
    %v778 = vunpack.c.l.b16 %v554
    %v779 = vunpack.c.l.b16 %v555
    %v780 = vunpack.c.l.b16 %v556
    %v781 = vunpack.c.l.b16 %v557
    %v782 = vunpack.c.l.b16 %v558
    %v783 = vunpack.c.l.b16 %v559
    %v784 = vunpack.c.l.b16 %v560
    %v785 = vunpack.c.l.b16 %v561
    %v786 = vunpack.c.l.b16 %v562
    %v787 = vunpack.c.l.b16 %v563
    %v788 = vunpack.c.l.b16 %v564
    %v789 = vunpack.c.l.b16 %v565
    %v790 = vunpack.c.l.b16 %v566
    %v791 = vunpack.c.l.b16 %v567
    %v792 = vunpack.c.l.b16 %v568
    %v793 = vunpack.c.l.b16 %v569
    %v794 = vunpack.c.l.b16 %v570
    %v795 = vunpack.c.l.b16 %v571
    %v796 = vunpack.c.l.b16 %v572
    %v797 = vunpack.c.l.b16 %v573
    %v798 = vunpack.c.l.b16 %v574
    %v799 = vunpack.c.l.b16 %v575
    %v800 = vunpack.c.l.b16 %v576
    %v801 = vunpack.c.l.b16 %v577
    %v802 = vunpack.c.l.b16 %v578
    %v803 = vunpack.c.l.b16 %v579
    %v804 = vunpack.c.l.b16 %v580
    %v805 = vunpack.c.l.b16 %v581
    %v806 = vunpack.c.l.b16 %v582
    %v807 = vunpack.c.l.b16 %v583
    %v808 = vunpack.c.l.b16 %v584
    %v809 = vunpack.c.l.b16 %v585
    %v810 = vunpack.c.l.b16 %v586
    %v811 = vunpack.c.l.b16 %v587
    %v812 = vunpack.c.l.b16 %v588
    %v813 = vunpack.c.l.b16 %v589
    %v814 = vunpack.c.l.b16 %v590
    %v815 = vunpack.c.l.b16 %v591
    %v816 = vpack.c.b16 %v705, %v704
    %v817 = vpack.c.b16 %v707, %v706
    %v818 = vpack.c.b16 %v709, %v708
    %v819 = vpack.c.b16 %v711, %v710
    %v820 = vpack.c.b16 %v713, %v712
    %v821 = vpack.c.b16 %v715, %v714
    %v822 = vpack.c.b16 %v717, %v716
    %v823 = vpack.c.b16 %v719, %v718
    %v824 = vpack.c.b16 %v721, %v720
    %v825 = vpack.c.b16 %v723, %v722
    %v826 = vpack.c.b16 %v725, %v724
    %v827 = vpack.c.b16 %v727, %v726
    %v828 = vpack.c.b16 %v729, %v728
    %v829 = vpack.c.b16 %v731, %v730
    %v830 = vpack.c.b16 %v733, %v732
    %v831 = vpack.c.b16 %v735, %v734
    %v832 = vpack.c.b16 %v737, %v736
    %v833 = vpack.c.b16 %v739, %v738
    %v834 = vpack.c.b16 %v741, %v740
    %v835 = vpack.c.b16 %v743, %v742
    %v836 = vpack.c.b16 %v745, %v744
    %v837 = vpack.c.b16 %v747, %v746
    %v838 = vpack.c.b16 %v749, %v748
    %v839 = vpack.c.b16 %v751, %v750
    %v840 = vpack.c.b16 %v753, %v752
    %v841 = vpack.c.b16 %v755, %v754
    %v842 = vpack.c.b16 %v757, %v756
    %v843 = vpack.c.b16 %v759, %v758
    %v844 = vpack.c.b16 %v761, %v760
    %v845 = vpack.c.b16 %v763, %v762
    %v846 = vpack.c.b16 %v765, %v764
    %v847 = vpack.c.b16 %v767, %v766
    %v848 = vpack.c.b16 %v769, %v768
    %v849 = vpack.c.b16 %v771, %v770
    %v850 = vpack.c.b16 %v773, %v772
    %v851 = vpack.c.b16 %v775, %v774
    %v852 = vpack.c.b16 %v777, %v776
    %v853 = vpack.c.b16 %v779, %v778
    %v854 = vpack.c.b16 %v781, %v780
    %v855 = vpack.c.b16 %v783, %v782
    %v856 = vpack.c.b16 %v785, %v784
    %v857 = vpack.c.b16 %v787, %v786
    %v858 = vpack.c.b16 %v789, %v788
    %v859 = vpack.c.b16 %v791, %v790
    %v860 = vpack.c.b16 %v793, %v792
    %v861 = vpack.c.b16 %v795, %v794
    %v862 = vpack.c.b16 %v797, %v796
    %v863 = vpack.c.b16 %v799, %v798
    %v864 = vpack.c.b16 %v801, %v800
    %v865 = vpack.c.b16 %v803, %v802
    %v866 = vpack.c.b16 %v805, %v804
    %v867 = vpack.c.b16 %v807, %v806
    %v868 = vpack.c.b16 %v809, %v808
    %v869 = vpack.c.b16 %v811, %v810
    %v870 = vpack.c.b16 %v813, %v812
    %v871 = vpack.c.b16 %v815, %v814
    %928 = vmatprep.subr.bf16.mxu0 0
    %929 = vmatpush1.bf16.msra.mxu0 %v816
    %930 = vmatprep.subr.bf16.mxu0 0
    %931 = vmatpush1.bf16.msra.mxu0 %v817
    %932 = vmatprep.subr.bf16.mxu0 0
    %933 = vmatpush1.bf16.msra.mxu0 %v818
    %934 = vmatprep.subr.bf16.mxu0 0
    %935 = vmatpush1.bf16.msra.mxu0 %v819
    %936 = vmatprep.subr.bf16.mxu0 0
    %937 = vmatpush1.bf16.msra.mxu0 %v820
    %938 = vmatprep.subr.bf16.mxu0 0
    %939 = vmatpush1.bf16.msra.mxu0 %v821
    %940 = vmatprep.subr.bf16.mxu0 0
    %941 = vmatpush1.bf16.msra.mxu0 %v822
    %942 = vmatprep.subr.bf16.mxu0 0
    %943 = vmatpush1.bf16.msra.mxu0 %v823
    %944 = vmatprep.subr.bf16.mxu0 0
    %945 = vmatpush1.bf16.msra.mxu0 %v824
    %946 = vmatprep.subr.bf16.mxu0 0
    %947 = vmatpush1.bf16.msra.mxu0 %v825
    %948 = vmatprep.subr.bf16.mxu0 0
    %949 = vmatpush1.bf16.msra.mxu0 %v826
    %950 = vmatprep.subr.bf16.mxu0 0
    %951 = vmatpush1.bf16.msra.mxu0 %v827
    %952 = vmatprep.subr.bf16.mxu0 0
    %953 = vmatpush1.bf16.msra.mxu0 %v828
    %954 = vmatprep.subr.bf16.mxu0 0
    %955 = vmatpush1.bf16.msra.mxu0 %v829
    %956 = vmatprep.subr.bf16.mxu0 0
    %957 = vmatpush1.bf16.msra.mxu0 %v830
    %958 = vmatprep.subr.bf16.mxu0 0
    %959 = vmatpush1.bf16.msra.mxu0 %v831
    %960 = vmatprep.mubr.bf16.mxu0 %v467
    %961 = vmatmul.mubr.bf16.gmra.mrb[0].mxu0 %v466
    %v962 = vpop.f32.mrb[0].mxu0
    %v963 = vadd.f32 0.0, %v962
    %v964 = vpop.f32.mrb[0].mxu0
    %v965 = vpop.f32.mrb[0].mxu0
    %v966 = vadd.f32 0.0, %v965
    %v967 = vpop.f32.mrb[0].mxu0
    %968 = vmatprep.mubr.bf16.mxu0 %v474
    %969 = vmatmul.mubr.bf16.gmra.mrb[0].mxu0 %v473
    %v970 = vpop.f32.mrb[0].mxu0
    %v971 = vadd.f32 0.0, %v970
    %v972 = vpop.f32.mrb[0].mxu0
    %v973 = vpop.f32.mrb[0].mxu0
    %v974 = vadd.f32 0.0, %v973
    %v975 = vpop.f32.mrb[0].mxu0
    %976 = vdwg.mxu0
    %977 = vmatprep.subr.bf16.mxu0 0
    %978 = vmatpush1.bf16.msra.mxu0 %v832
    %979 = vmatprep.subr.bf16.mxu0 0
    %980 = vmatpush1.bf16.msra.mxu0 %v833
    %981 = vmatprep.subr.bf16.mxu0 0
    %982 = vmatpush1.bf16.msra.mxu0 %v834
    %983 = vmatprep.subr.bf16.mxu0 0
    %984 = vmatpush1.bf16.msra.mxu0 %v835
    %985 = vmatprep.subr.bf16.mxu0 0
    %986 = vmatpush1.bf16.msra.mxu0 %v836
    %987 = vmatprep.subr.bf16.mxu0 0
    %988 = vmatpush1.bf16.msra.mxu0 %v837
    %989 = vmatprep.subr.bf16.mxu0 0
    %990 = vmatpush1.bf16.msra.mxu0 %v838
    %991 = vmatprep.subr.bf16.mxu0 0
    %992 = vmatpush1.bf16.msra.mxu0 %v839
    %993 = vmatprep.subr.bf16.mxu0 0
    %994 = vmatpush1.bf16.msra.mxu0 %v840
    %995 = vmatprep.subr.bf16.mxu0 0
    %996 = vmatpush1.bf16.msra.mxu0 %v841
    %997 = vmatprep.subr.bf16.mxu0 0
    %998 = vmatpush1.bf16.msra.mxu0 %v842
    %999 = vmatprep.subr.bf16.mxu0 0
    %1000 = vmatpush1.bf16.msra.mxu0 %v843
    %1001 = vmatprep.subr.bf16.mxu0 0
    %1002 = vmatpush1.bf16.msra.mxu0 %v844
    %1003 = vmatprep.subr.bf16.mxu0 0
    %1004 = vmatpush1.bf16.msra.mxu0 %v845
    %1005 = vmatprep.subr.bf16.mxu0 0
    %1006 = vmatpush1.bf16.msra.mxu0 %v846
    %1007 = vmatprep.subr.bf16.mxu0 0
    %1008 = vmatpush1.bf16.msra.mxu0 %v847
    %1009 = vmatprep.mubr.bf16.mxu0 %v469
    %1010 = vmatmul.mubr.bf16.gmra.mrb[0].mxu0 %v468
    %v1011 = vpop.f32.mrb[0].mxu0
    %v1012 = vadd.f32 %v963, %v1011
    %v1013 = vpop.f32.mrb[0].mxu0
    %v1014 = vpop.f32.mrb[0].mxu0
    %v1015 = vadd.f32 %v966, %v1014
    %v1016 = vpop.f32.mrb[0].mxu0
    %1017 = vmatprep.mubr.bf16.mxu0 %v476
    %1018 = vmatmul.mubr.bf16.gmra.mrb[0].mxu0 %v475
    %v1019 = vpop.f32.mrb[0].mxu0
    %v1020 = vadd.f32 %v971, %v1019
    %v1021 = vpop.f32.mrb[0].mxu0
    %v1022 = vpop.f32.mrb[0].mxu0
    %v1023 = vadd.f32 %v974, %v1022
    %v1024 = vpop.f32.mrb[0].mxu0
    %1025 = vdwg.mxu0
    %1026 = vmatprep.subr.bf16.mxu0 0
    %1027 = vmatpush1.bf16.msra.mxu0 %v848
    %1028 = vmatprep.subr.bf16.mxu0 0
    %1029 = vmatpush1.bf16.msra.mxu0 %v849
    %1030 = vmatprep.subr.bf16.mxu0 0
    %1031 = vmatpush1.bf16.msra.mxu0 %v850
    %1032 = vmatprep.subr.bf16.mxu0 0
    %1033 = vmatpush1.bf16.msra.mxu0 %v851
    %1034 = vmatprep.subr.bf16.mxu0 0
    %1035 = vmatpush1.bf16.msra.mxu0 %v852
    %1036 = vmatprep.subr.bf16.mxu0 0
    %1037 = vmatpush1.bf16.msra.mxu0 %v853
    %1038 = vmatprep.subr.bf16.mxu0 0
    %1039 = vmatpush1.bf16.msra.mxu0 %v854
    %1040 = vmatprep.subr.bf16.mxu0 0
    %1041 = vmatpush1.bf16.msra.mxu0 %v855
    %1042 = vmatprep.subr.bf16.mxu0 0
    %1043 = vmatpush1.bf16.msra.mxu0 %v856
    %1044 = vmatprep.subr.bf16.mxu0 0
    %1045 = vmatpush1.bf16.msra.mxu0 %v857
    %1046 = vmatprep.subr.bf16.mxu0 0
    %1047 = vmatpush1.bf16.msra.mxu0 %v858
    %1048 = vmatprep.subr.bf16.mxu0 0
    %1049 = vmatpush1.bf16.msra.mxu0 %v859
    %1050 = vmatprep.subr.bf16.mxu0 0
    %1051 = vmatpush1.bf16.msra.mxu0 %v860
    %1052 = vmatprep.subr.bf16.mxu0 0
    %1053 = vmatpush1.bf16.msra.mxu0 %v861
    %1054 = vmatprep.subr.bf16.mxu0 0
    %1055 = vmatpush1.bf16.msra.mxu0 %v862
    %1056 = vmatprep.subr.bf16.mxu0 0
    %1057 = vmatpush1.bf16.msra.mxu0 %v863
    %1058 = vmatprep.mubr.bf16.mxu0 %v471
    %1059 = vmatmul.mubr.bf16.gmra.mrb[0].mxu0 %v470
    %v1060 = vpop.f32.mrb[0].mxu0
    %v1061 = vadd.f32 %v1012, %v1060
    %v1062 = vpop.f32.mrb[0].mxu0
    %v1063 = vpop.f32.mrb[0].mxu0
    %v1064 = vadd.f32 %v1015, %v1063
    %v1065 = vpop.f32.mrb[0].mxu0
    %1066 = vmatprep.mubr.bf16.mxu0 %v478
    %1067 = vmatmul.mubr.bf16.gmra.mrb[0].mxu0 %v477
    %v1068 = vpop.f32.mrb[0].mxu0
    %v1069 = vadd.f32 %v1020, %v1068
    %v1070 = vpop.f32.mrb[0].mxu0
    %v1071 = vpop.f32.mrb[0].mxu0
    %v1072 = vadd.f32 %v1023, %v1071
    %v1073 = vpop.f32.mrb[0].mxu0
    %1074 = vdwg.mxu0
    %1075 = vmatprep.subr.bf16.mxu0 0
    %1076 = vmatpush1.bf16.msra.mxu0 %v864
    %1077 = vmatprep.subr.bf16.mxu0 0
    %1078 = vmatpush1.bf16.msra.mxu0 %v865
    %1079 = vmatprep.subr.bf16.mxu0 0
    %1080 = vmatpush1.bf16.msra.mxu0 %v866
    %1081 = vmatprep.subr.bf16.mxu0 0
    %1082 = vmatpush1.bf16.msra.mxu0 %v867
    %1083 = vmatprep.subr.bf16.mxu0 0
    %1084 = vmatpush1.bf16.msra.mxu0 %v868
    %1085 = vmatprep.subr.bf16.mxu0 0
    %1086 = vmatpush1.bf16.msra.mxu0 %v869
    %1087 = vmatprep.subr.bf16.mxu0 0
    %1088 = vmatpush1.bf16.msra.mxu0 %v870
    %1089 = vmatprep.subr.bf16.mxu0 0
    %1090 = vmatpush1.bf16.msra.mxu0 %v871
    %1091 = vmatprep.subr.bf16.mxu0 0
    %1092 = vmatpush1.bf16.msra.mxu0 0
    %1093 = vmatprep.subr.bf16.mxu0 0
    %1094 = vmatpush1.bf16.msra.mxu0 0
    %1095 = vmatprep.subr.bf16.mxu0 0
    %1096 = vmatpush1.bf16.msra.mxu0 0
    %1097 = vmatprep.subr.bf16.mxu0 0
    %1098 = vmatpush1.bf16.msra.mxu0 0
    %1099 = vmatprep.subr.bf16.mxu0 0
    %1100 = vmatpush1.bf16.msra.mxu0 0
    %1101 = vmatprep.subr.bf16.mxu0 0
    %1102 = vmatpush1.bf16.msra.mxu0 0
    %1103 = vmatprep.subr.bf16.mxu0 0
    %1104 = vmatpush1.bf16.msra.mxu0 0
    %1105 = vmatprep.subr.bf16.mxu0 0
    %1106 = vmatpush1.bf16.msra.mxu0 0
    %1107 = vmatprep.mubr.bf16.mxu0 0
    %1108 = vmatmul.mubr.bf16.gmra.mrb[0].mxu0 %v472
    %v1109 = vpop.f32.mrb[0].mxu0
    %v1110 = vadd.f32 %v1061, %v1109
    %v1111 = vpop.f32.mrb[0].mxu0
    %v1112 = vpop.f32.mrb[0].mxu0
    %v1113 = vadd.f32 %v1064, %v1112
    %v1114 = vpop.f32.mrb[0].mxu0
    %1115 = vmatprep.mubr.bf16.mxu0 0
    %1116 = vmatmul.mubr.bf16.gmra.mrb[0].mxu0 %v479
    %v1117 = vpop.f32.mrb[0].mxu0
    %v1118 = vadd.f32 %v1069, %v1117
    %v1119 = vpop.f32.mrb[0].mxu0
    %v1120 = vpop.f32.mrb[0].mxu0
    %v1121 = vadd.f32 %v1072, %v1120
    %v1122 = vpop.f32.mrb[0].mxu0
    %1123 = vdwg.mxu0
    %v1124 = vadd.f32 %v1110, %v1113
    %v1125 = vadd.f32 %v1124, %v1118
    %v1126 = vadd.f32 %v1125, %v1121
    %v1127 = vrot.slane %v1126, 4
    %v1128 = vadd.f32 %v1126, %v1127
    %v1129 = vrot.slane %v1128, 2
    %v1130 = vadd.f32 %v1128, %v1129
    %v1131 = vrot.slane %v1130, 1
    %v1132 = vadd.f32 %v1130, %v1131
    %v1133 = vmul.f32 %v1110, %v1110
    %v1134 = vmul.f32 %v1113, %v1113
    %v1135 = vmul.f32 %v1118, %v1118
    %v1136 = vmul.f32 %v1121, %v1121
    %v1137 = vadd.f32 %v1133, %v1134
    %v1138 = vadd.f32 %v1137, %v1135
    %v1139 = vadd.f32 %v1138, %v1136
    %v1140 = vrot.slane %v1139, 4
    %v1141 = vadd.f32 %v1139, %v1140
    %v1142 = vrot.slane %v1141, 2
    %v1143 = vadd.f32 %v1141, %v1142
    %v1144 = vrot.slane %v1143, 1
    %v1145 = vadd.f32 %v1143, %v1144
    %1146 = vrot.lane.b32.xlu0 %v1132, 8
    %v1147 = vpop.permute.xlu0 %1146
    %v1148 = vadd.f32 %v1132, %v1147
    %1149 = vrot.lane.b32.xlu0 %v1145, 8
    %v1150 = vpop.permute.xlu0 %1149
    %v1151 = vadd.f32 %v1145, %v1150
    %1152 = vrot.lane.b32.xlu0 %v1148, 16
    %v1153 = vpop.permute.xlu0 %1152
    %v1154 = vadd.f32 %v1148, %v1153
    %1155 = vrot.lane.b32.xlu0 %v1151, 16
    %v1156 = vpop.permute.xlu0 %1155
    %v1157 = vadd.f32 %v1151, %v1156
    %1158 = vrot.lane.b32.xlu0 %v1154, 32
    %v1159 = vpop.permute.xlu0 %1158
    %v1160 = vadd.f32 %v1154, %v1159
    %1161 = vrot.lane.b32.xlu0 %v1157, 32
    %v1162 = vpop.permute.xlu0 %1161
    %v1163 = vadd.f32 %v1157, %v1162
    %1164 = vrot.lane.b32.xlu0 %v1160, 64
    %v1165 = vpop.permute.xlu0 %1164
    %v1166 = vadd.f32 %v1160, %v1165
    %1167 = vrot.lane.b32.xlu0 %v1163, 64
    %v1168 = vpop.permute.xlu0 %1167
    %v1169 = vadd.f32 %v1163, %v1168
    %v1170 = vmul.f32 %v1166, 0.001953125
    %v1171 = vmul.f32 %v1169, 0.001953125
    %v1172 = vmul.f32 %v1170, %v1170
    %v1173 = vsub.f32 %v1171, %v1172
    %v1174 = vmax.f32 %v1173, 0.0
    %v1175 = vld [vmem:[%s5] sm:$0x1]
    %v1176 = vadd.f32 %v1174, 1e-05
    %v1177 = vrsqrt.pop %v1176
    %v1178 = vmul.f32 %v1175, %v1177
    %v1179 = vld [vmem:[%s7] sm:$0x1]
    %v1180 = vmul.f32 %v1170, %v1178
    %v1181 = vsub.f32 %v1179, %v1180
    %v1183 = vlaneseq
    %v1184 = vshrl.u32 %v1183, 7
    %v1185 = vsub.s32 0, %v1184
    %v1186 = vrot.slane %v1178, %v1185
    %v1188 = vmul.f32 %v1110, %v1186
    %v1189 = vmul.f32 %v1113, %v1186
    %v1190 = vmul.f32 %v1118, %v1186
    %v1191 = vmul.f32 %v1121, %v1186
    %v1193 = vlaneseq
    %v1194 = vshrl.u32 %v1193, 7
    %v1195 = vsub.s32 0, %v1194
    %v1196 = vrot.slane %v1181, %v1195
    %v1198 = vadd.f32 %v1188, %v1196
    %v1199 = vadd.f32 %v1189, %v1196
    %v1200 = vadd.f32 %v1190, %v1196
    %v1201 = vadd.f32 %v1191, %v1196
    %v1202 = vmul.f32 %v1198, 0.01
    %v1203 = vmul.f32 %v1199, 0.01
    %v1204 = vmul.f32 %v1200, 0.01
    %v1205 = vmul.f32 %v1201, 0.01
    %v1206 = vmax.f32 %v1198, %v1202
    %v1207 = vmax.f32 %v1199, %v1203
    %v1208 = vmax.f32 %v1200, %v1204
    %v1209 = vmax.f32 %v1201, %v1205
    %1210 = vst [vmem:[#allocation2 + $0x3] sm:$0xff] %v1206
    %1211 = vst [vmem:[#allocation2 + $0xb] sm:$0xff] %v1207
    %1212 = vst [vmem:[#allocation2 + $0x1b] sm:$0xff] %v1208
    %1213 = vst [vmem:[#allocation2 + $0x23] sm:$0xff] %v1209
    %v1214 = vld [vmem:[#allocation2] sm:$0xff]
    %v1215 = vld [vmem:[#allocation2 + $0x8] sm:$0xff]
    %v1216 = vld [vmem:[#allocation2 + $0x10] sm:$0x3f]
    %v1217 = vld [vmem:[#allocation2 + $0x18] sm:$0xff]
    %v1218 = vld [vmem:[#allocation2 + $0x20] sm:$0xff]
    %v1219 = vld [vmem:[#allocation2 + $0x28] sm:$0x3f]
    %v1226 = vrot.slane %v1214, 1
    %v1227 = vrot.slane %v1215, 1
    %v1228 = vsel %vm376, %v1226, %v1227
    %v1229 = vrot.slane %v1216, 1
    %v1230 = vsel %vm376, %v1227, %v1229
    %v1231 = vrot.slane %v1217, 1
    %v1232 = vrot.slane %v1218, 1
    %v1233 = vsel %vm376, %v1231, %v1232
    %v1234 = vrot.slane %v1219, 1
    %v1235 = vsel %vm376, %v1232, %v1234
    %v1236 = vrot.slane %v1214, 2
    %v1237 = vrot.slane %v1215, 2
    %v1238 = vsel %vm391, %v1236, %v1237
    %v1239 = vrot.slane %v1216, 2
    %v1240 = vsel %vm391, %v1237, %v1239
    %v1241 = vrot.slane %v1217, 2
    %v1242 = vrot.slane %v1218, 2
    %v1243 = vsel %vm391, %v1241, %v1242
    %v1244 = vrot.slane %v1219, 2
    %v1245 = vsel %vm391, %v1242, %v1244
    %v1246 = vrot.slane %v1214, 3
    %v1247 = vrot.slane %v1215, 3
    %v1248 = vsel %vm406, %v1246, %v1247
    %v1249 = vrot.slane %v1216, 3
    %v1250 = vsel %vm406, %v1247, %v1249
    %v1251 = vrot.slane %v1217, 3
    %v1252 = vrot.slane %v1218, 3
    %v1253 = vsel %vm406, %v1251, %v1252
    %v1254 = vrot.slane %v1219, 3
    %v1255 = vsel %vm406, %v1252, %v1254
    %v1256 = vrot.slane %v1214, 4
    %v1257 = vrot.slane %v1215, 4
    %v1258 = vsel %vm421, %v1256, %v1257
    %v1259 = vrot.slane %v1216, 4
    %v1260 = vsel %vm421, %v1257, %v1259
    %v1261 = vrot.slane %v1217, 4
    %v1262 = vrot.slane %v1218, 4
    %v1263 = vsel %vm421, %v1261, %v1262
    %v1264 = vrot.slane %v1219, 4
    %v1265 = vsel %vm421, %v1262, %v1264
    %v1266 = vrot.slane %v1228, 1
    %v1267 = vrot.slane %v1230, 1
    %v1268 = vsel %vm376, %v1266, %v1267
    %v1269 = vrot.slane %v1238, 1
    %v1270 = vrot.slane %v1240, 1
    %v1271 = vsel %vm376, %v1269, %v1270
    %v1272 = vrot.slane %v1248, 1
    %v1273 = vrot.slane %v1250, 1
    %v1274 = vsel %vm376, %v1272, %v1273
    %v1275 = vrot.slane %v1258, 1
    %v1276 = vrot.slane %v1260, 1
    %v1277 = vsel %vm376, %v1275, %v1276
    %v1278 = vrot.slane %v1229, 1
    %v1279 = vsel %vm376, %v1267, %v1278
    %v1280 = vrot.slane %v1239, 1
    %v1281 = vsel %vm376, %v1270, %v1280
    %v1282 = vrot.slane %v1249, 1
    %v1283 = vsel %vm376, %v1273, %v1282
    %v1284 = vrot.slane %v1259, 1
    %v1285 = vsel %vm376, %v1276, %v1284
    %v1286 = vrot.slane %v1233, 1
    %v1287 = vrot.slane %v1235, 1
    %v1288 = vsel %vm376, %v1286, %v1287
    %v1289 = vrot.slane %v1243, 1
    %v1290 = vrot.slane %v1245, 1
    %v1291 = vsel %vm376, %v1289, %v1290
    %v1292 = vrot.slane %v1253, 1
    %v1293 = vrot.slane %v1255, 1
    %v1294 = vsel %vm376, %v1292, %v1293
    %v1295 = vrot.slane %v1263, 1
    %v1296 = vrot.slane %v1265, 1
    %v1297 = vsel %vm376, %v1295, %v1296
    %v1298 = vrot.slane %v1234, 1
    %v1299 = vsel %vm376, %v1287, %v1298
    %v1300 = vrot.slane %v1244, 1
    %v1301 = vsel %vm376, %v1290, %v1300
    %v1302 = vrot.slane %v1254, 1
    %v1303 = vsel %vm376, %v1293, %v1302
    %v1304 = vrot.slane %v1264, 1
    %v1305 = vsel %vm376, %v1296, %v1304
    %v1326 = vpack.c.bf16 %v1230, %v1228
    %v1327 = vpack.c.bf16 %v1279, %v1268
    %v1328 = vpack.c.bf16 %v1281, %v1271
    %v1329 = vpack.c.bf16 %v1283, %v1274
    %v1330 = vpack.c.bf16 %v1285, %v1277
    %v1331 = vpack.c.bf16 %v1235, %v1233
    %v1332 = vpack.c.bf16 %v1299, %v1288
    %v1333 = vpack.c.bf16 %v1301, %v1291
    %v1334 = vpack.c.bf16 %v1303, %v1294
    %v1335 = vpack.c.bf16 %v1305, %v1297
    %v1336 = vld [vmem:[%s9] sm:$0xf]
    %v1337 = vld [vmem:[%s9 + $0x4] sm:$0xf]
    %v1338 = vld [vmem:[%s9 + $0x8] sm:$0xf]
    %v1339 = vld [vmem:[%s9 + $0xc] sm:$0xf]
    %v1340 = vld [vmem:[%s9 + $0x10] sm:$0xf]
    %v1341 = vld [vmem:[%s9 + $0x14] sm:$0xf]
    %v1342 = vld [vmem:[%s9 + $0x18] sm:$0xf]
    %v1343 = vld [vmem:[%s9 + $0x1c] sm:$0xf]
    %v1344 = vld [vmem:[%s9 + $0x20] sm:$0xf]
    %v1345 = vld [vmem:[%s9 + $0x24] sm:$0xf]
    %v1346 = vld [vmem:[%s9 + $0x28] sm:$0xf]
    %v1347 = vld [vmem:[%s9 + $0x2c] sm:$0xf]
    %v1348 = vld [vmem:[%s9 + $0x30] sm:$0xf]
    %v1349 = vld [vmem:[%s9 + $0x34] sm:$0xf]
    %v1350 = vld [vmem:[%s9 + $0x38] sm:$0xf]
    %v1351 = vld [vmem:[%s9 + $0x3c] sm:$0xf]
    %v1352 = vld [vmem:[%s9 + $0x40] sm:$0xf]
    %v1353 = vld [vmem:[%s9 + $0x44] sm:$0xf]
    %v1354 = vld [vmem:[%s9 + $0x48] sm:$0xf]
    %v1355 = vld [vmem:[%s9 + $0x4c] sm:$0xf]
    %v1356 = vld [vmem:[%s9 + $0x50] sm:$0xf]
    %v1357 = vld [vmem:[%s9 + $0x54] sm:$0xf]
    %v1358 = vld [vmem:[%s9 + $0x58] sm:$0xf]
    %v1359 = vld [vmem:[%s9 + $0x5c] sm:$0xf]
    %v1360 = vld [vmem:[%s9 + $0x60] sm:$0xf]
    %v1361 = vld [vmem:[%s9 + $0x64] sm:$0xf]
    %v1362 = vld [vmem:[%s9 + $0x68] sm:$0xf]
    %v1363 = vld [vmem:[%s9 + $0x6c] sm:$0xf]
    %v1364 = vld [vmem:[%s9 + $0x70] sm:$0xf]
    %v1365 = vld [vmem:[%s9 + $0x74] sm:$0xf]
    %v1366 = vld [vmem:[%s9 + $0x78] sm:$0xf]
    %v1367 = vld [vmem:[%s9 + $0x7c] sm:$0xf]
    %v1368 = vld [vmem:[%s9 + $0x80] sm:$0xf]
    %v1369 = vld [vmem:[%s9 + $0x84] sm:$0xf]
    %v1370 = vld [vmem:[%s9 + $0x88] sm:$0xf]
    %v1371 = vld [vmem:[%s9 + $0x8c] sm:$0xf]
    %v1372 = vld [vmem:[%s9 + $0x90] sm:$0xf]
    %v1373 = vld [vmem:[%s9 + $0x94] sm:$0xf]
    %v1374 = vld [vmem:[%s9 + $0x98] sm:$0xf]
    %v1375 = vld [vmem:[%s9 + $0x9c] sm:$0xf]
    %v1376 = vld [vmem:[%s9 + $0xa0] sm:$0xf]
    %v1377 = vld [vmem:[%s9 + $0xa4] sm:$0xf]
    %v1378 = vld [vmem:[%s9 + $0xa8] sm:$0xf]
    %v1379 = vld [vmem:[%s9 + $0xac] sm:$0xf]
    %v1380 = vld [vmem:[%s9 + $0xb0] sm:$0xf]
    %v1381 = vld [vmem:[%s9 + $0xb4] sm:$0xf]
    %v1382 = vld [vmem:[%s9 + $0xb8] sm:$0xf]
    %v1383 = vld [vmem:[%s9 + $0xbc] sm:$0xf]
    %v1384 = vld [vmem:[%s9 + $0xc0] sm:$0xf]
    %v1385 = vld [vmem:[%s9 + $0xc4] sm:$0xf]
    %v1386 = vld [vmem:[%s9 + $0xc8] sm:$0xf]
    %v1387 = vld [vmem:[%s9 + $0xcc] sm:$0xf]
    %v1388 = vld [vmem:[%s9 + $0xd0] sm:$0xf]
    %v1389 = vld [vmem:[%s9 + $0xd4] sm:$0xf]
    %v1390 = vld [vmem:[%s9 + $0xd8] sm:$0xf]
    %v1391 = vld [vmem:[%s9 + $0xdc] sm:$0xf]
    %v1392 = vld [vmem:[%s9 + $0xe0] sm:$0xf]
    %v1393 = vld [vmem:[%s9 + $0xe4] sm:$0xf]
    %v1394 = vld [vmem:[%s9 + $0xe8] sm:$0xf]
    %v1395 = vld [vmem:[%s9 + $0xec] sm:$0xf]
    %v1396 = vld [vmem:[%s9 + $0xf0] sm:$0xf]
    %v1397 = vld [vmem:[%s9 + $0xf4] sm:$0xf]
    %v1398 = vld [vmem:[%s9 + $0xf8] sm:$0xf]
    %v1399 = vld [vmem:[%s9 + $0xfc] sm:$0xf]
    %v1400 = vld [vmem:[%s9 + $0x100] sm:$0xf]
    %v1401 = vld [vmem:[%s9 + $0x104] sm:$0xf]
    %v1402 = vld [vmem:[%s9 + $0x108] sm:$0xf]
    %v1403 = vld [vmem:[%s9 + $0x10c] sm:$0xf]
    %v1404 = vld [vmem:[%s9 + $0x110] sm:$0xf]
    %v1405 = vld [vmem:[%s9 + $0x114] sm:$0xf]
    %v1406 = vld [vmem:[%s9 + $0x118] sm:$0xf]
    %v1407 = vld [vmem:[%s9 + $0x11c] sm:$0xf]
    %v1408 = vld [vmem:[%s9 + $0x120] sm:$0xf]
    %v1409 = vld [vmem:[%s9 + $0x124] sm:$0xf]
    %v1410 = vld [vmem:[%s9 + $0x128] sm:$0xf]
    %v1411 = vld [vmem:[%s9 + $0x12c] sm:$0xf]
    %v1412 = vld [vmem:[%s9 + $0x130] sm:$0xf]
    %v1413 = vld [vmem:[%s9 + $0x134] sm:$0xf]
    %v1414 = vld [vmem:[%s9 + $0x138] sm:$0xf]
    %v1415 = vld [vmem:[%s9 + $0x13c] sm:$0xf]
    %v1496 = vunpack.c.l.b16 %v1336
    %v1497 = vunpack.c.l.b16 %v1337
    %v1498 = vunpack.c.l.b16 %v1338
    %v1499 = vunpack.c.l.b16 %v1339
    %v1500 = vunpack.c.l.b16 %v1340
    %v1501 = vunpack.c.l.b16 %v1341
    %v1502 = vunpack.c.l.b16 %v1342
    %v1503 = vunpack.c.l.b16 %v1343
    %v1504 = vunpack.c.l.b16 %v1344
    %v1505 = vunpack.c.l.b16 %v1345
    %v1506 = vunpack.c.l.b16 %v1346
    %v1507 = vunpack.c.l.b16 %v1347
    %v1508 = vunpack.c.l.b16 %v1348
    %v1509 = vunpack.c.l.b16 %v1349
    %v1510 = vunpack.c.l.b16 %v1350
    %v1511 = vunpack.c.l.b16 %v1351
    %v1512 = vunpack.c.l.b16 %v1352
    %v1513 = vunpack.c.l.b16 %v1353
    %v1514 = vunpack.c.l.b16 %v1354
    %v1515 = vunpack.c.l.b16 %v1355
    %v1516 = vunpack.c.l.b16 %v1356
    %v1517 = vunpack.c.l.b16 %v1357
    %v1518 = vunpack.c.l.b16 %v1358
    %v1519 = vunpack.c.l.b16 %v1359
    %v1520 = vunpack.c.l.b16 %v1360
    %v1521 = vunpack.c.l.b16 %v1361
    %v1522 = vunpack.c.l.b16 %v1362
    %v1523 = vunpack.c.l.b16 %v1363
    %v1524 = vunpack.c.l.b16 %v1364
    %v1525 = vunpack.c.l.b16 %v1365
    %v1526 = vunpack.c.l.b16 %v1366
    %v1527 = vunpack.c.l.b16 %v1367
    %v1528 = vunpack.c.l.b16 %v1368
    %v1529 = vunpack.c.l.b16 %v1369
    %v1530 = vunpack.c.l.b16 %v1370
    %v1531 = vunpack.c.l.b16 %v1371
    %v1532 = vunpack.c.l.b16 %v1372
    %v1533 = vunpack.c.l.b16 %v1373
    %v1534 = vunpack.c.l.b16 %v1374
    %v1535 = vunpack.c.l.b16 %v1375
    %v1536 = vunpack.c.l.b16 %v1376
    %v1537 = vunpack.c.l.b16 %v1377
    %v1538 = vunpack.c.l.b16 %v1378
    %v1539 = vunpack.c.l.b16 %v1379
    %v1540 = vunpack.c.l.b16 %v1380
    %v1541 = vunpack.c.l.b16 %v1381
    %v1542 = vunpack.c.l.b16 %v1382
    %v1543 = vunpack.c.l.b16 %v1383
    %v1544 = vunpack.c.l.b16 %v1384
    %v1545 = vunpack.c.l.b16 %v1385
    %v1546 = vunpack.c.l.b16 %v1386
    %v1547 = vunpack.c.l.b16 %v1387
    %v1548 = vunpack.c.l.b16 %v1388
    %v1549 = vunpack.c.l.b16 %v1389
    %v1550 = vunpack.c.l.b16 %v1390
    %v1551 = vunpack.c.l.b16 %v1391
    %v1552 = vunpack.c.l.b16 %v1392
    %v1553 = vunpack.c.l.b16 %v1393
    %v1554 = vunpack.c.l.b16 %v1394
    %v1555 = vunpack.c.l.b16 %v1395
    %v1556 = vunpack.c.l.b16 %v1396
    %v1557 = vunpack.c.l.b16 %v1397
    %v1558 = vunpack.c.l.b16 %v1398
    %v1559 = vunpack.c.l.b16 %v1399
    %v1560 = vunpack.c.l.b16 %v1400
    %v1561 = vunpack.c.l.b16 %v1401
    %v1562 = vunpack.c.l.b16 %v1402
    %v1563 = vunpack.c.l.b16 %v1403
    %v1564 = vunpack.c.l.b16 %v1404
    %v1565 = vunpack.c.l.b16 %v1405
    %v1566 = vunpack.c.l.b16 %v1406
    %v1567 = vunpack.c.l.b16 %v1407
    %v1568 = vunpack.c.l.b16 %v1408
    %v1569 = vunpack.c.l.b16 %v1409
    %v1570 = vunpack.c.l.b16 %v1410
    %v1571 = vunpack.c.l.b16 %v1411
    %v1572 = vunpack.c.l.b16 %v1412
    %v1573 = vunpack.c.l.b16 %v1413
    %v1574 = vunpack.c.l.b16 %v1414
    %v1575 = vunpack.c.l.b16 %v1415
    %v1576 = vpack.c.b16 %v1497, %v1496
    %v1577 = vpack.c.b16 %v1499, %v1498
    %v1578 = vpack.c.b16 %v1501, %v1500
    %v1579 = vpack.c.b16 %v1503, %v1502
    %v1580 = vpack.c.b16 %v1505, %v1504
    %v1581 = vpack.c.b16 %v1507, %v1506
    %v1582 = vpack.c.b16 %v1509, %v1508
    %v1583 = vpack.c.b16 %v1511, %v1510
    %v1584 = vpack.c.b16 %v1513, %v1512
    %v1585 = vpack.c.b16 %v1515, %v1514
    %v1586 = vpack.c.b16 %v1517, %v1516
    %v1587 = vpack.c.b16 %v1519, %v1518
    %v1588 = vpack.c.b16 %v1521, %v1520
    %v1589 = vpack.c.b16 %v1523, %v1522
    %v1590 = vpack.c.b16 %v1525, %v1524
    %v1591 = vpack.c.b16 %v1527, %v1526
    %v1592 = vpack.c.b16 %v1529, %v1528
    %v1593 = vpack.c.b16 %v1531, %v1530
    %v1594 = vpack.c.b16 %v1533, %v1532
    %v1595 = vpack.c.b16 %v1535, %v1534
    %v1596 = vpack.c.b16 %v1537, %v1536
    %v1597 = vpack.c.b16 %v1539, %v1538
    %v1598 = vpack.c.b16 %v1541, %v1540
    %v1599 = vpack.c.b16 %v1543, %v1542
    %v1600 = vpack.c.b16 %v1545, %v1544
    %v1601 = vpack.c.b16 %v1547, %v1546
    %v1602 = vpack.c.b16 %v1549, %v1548
    %v1603 = vpack.c.b16 %v1551, %v1550
    %v1604 = vpack.c.b16 %v1553, %v1552
    %v1605 = vpack.c.b16 %v1555, %v1554
    %v1606 = vpack.c.b16 %v1557, %v1556
    %v1607 = vpack.c.b16 %v1559, %v1558
    %v1608 = vpack.c.b16 %v1561, %v1560
    %v1609 = vpack.c.b16 %v1563, %v1562
    %v1610 = vpack.c.b16 %v1565, %v1564
    %v1611 = vpack.c.b16 %v1567, %v1566
    %v1612 = vpack.c.b16 %v1569, %v1568
    %v1613 = vpack.c.b16 %v1571, %v1570
    %v1614 = vpack.c.b16 %v1573, %v1572
    %v1615 = vpack.c.b16 %v1575, %v1574
    %1656 = vmatprep.subr.bf16.mxu0 0
    %1657 = vmatpush1.bf16.msra.mxu0 %v1576
    %1658 = vmatprep.subr.bf16.mxu0 0
    %1659 = vmatpush1.bf16.msra.mxu0 %v1577
    %1660 = vmatprep.subr.bf16.mxu0 0
    %1661 = vmatpush1.bf16.msra.mxu0 %v1578
    %1662 = vmatprep.subr.bf16.mxu0 0
    %1663 = vmatpush1.bf16.msra.mxu0 %v1579
    %1664 = vmatprep.subr.bf16.mxu0 0
    %1665 = vmatpush1.bf16.msra.mxu0 %v1580
    %1666 = vmatprep.subr.bf16.mxu0 0
    %1667 = vmatpush1.bf16.msra.mxu0 %v1581
    %1668 = vmatprep.subr.bf16.mxu0 0
    %1669 = vmatpush1.bf16.msra.mxu0 %v1582
    %1670 = vmatprep.subr.bf16.mxu0 0
    %1671 = vmatpush1.bf16.msra.mxu0 %v1583
    %1672 = vmatprep.subr.bf16.mxu0 0
    %1673 = vmatpush1.bf16.msra.mxu0 %v1584
    %1674 = vmatprep.subr.bf16.mxu0 0
    %1675 = vmatpush1.bf16.msra.mxu0 %v1585
    %1676 = vmatprep.subr.bf16.mxu0 0
    %1677 = vmatpush1.bf16.msra.mxu0 %v1586
    %1678 = vmatprep.subr.bf16.mxu0 0
    %1679 = vmatpush1.bf16.msra.mxu0 %v1587
    %1680 = vmatprep.subr.bf16.mxu0 0
    %1681 = vmatpush1.bf16.msra.mxu0 %v1588
    %1682 = vmatprep.subr.bf16.mxu0 0
    %1683 = vmatpush1.bf16.msra.mxu0 %v1589
    %1684 = vmatprep.subr.bf16.mxu0 0
    %1685 = vmatpush1.bf16.msra.mxu0 %v1590
    %1686 = vmatprep.subr.bf16.mxu0 0
    %1687 = vmatpush1.bf16.msra.mxu0 %v1591
    %1688 = vmatprep.mubr.bf16.mxu0 %v1327
    %1689 = vmatmul.mubr.bf16.gmra.mrb[0].mxu0 %v1326
    %v1690 = vpop.f32.mrb[0].mxu0
    %v1691 = vadd.f32 0.0, %v1690
    %v1692 = vpop.f32.mrb[0].mxu0
    %v1693 = vpop.f32.mrb[0].mxu0
    %v1694 = vadd.f32 0.0, %v1693
    %v1695 = vpop.f32.mrb[0].mxu0
    %1696 = vmatprep.mubr.bf16.mxu0 %v1332
    %1697 = vmatmul.mubr.bf16.gmra.mrb[0].mxu0 %v1331
    %v1698 = vpop.f32.mrb[0].mxu0
    %v1699 = vadd.f32 0.0, %v1698
    %v1700 = vpop.f32.mrb[0].mxu0
    %v1701 = vpop.f32.mrb[0].mxu0
    %v1702 = vadd.f32 0.0, %v1701
    %v1703 = vpop.f32.mrb[0].mxu0
    %1704 = vdwg.mxu0
    %1705 = vmatprep.subr.bf16.mxu0 0
    %1706 = vmatpush1.bf16.msra.mxu0 %v1592
    %1707 = vmatprep.subr.bf16.mxu0 0
    %1708 = vmatpush1.bf16.msra.mxu0 %v1593
    %1709 = vmatprep.subr.bf16.mxu0 0
    %1710 = vmatpush1.bf16.msra.mxu0 %v1594
    %1711 = vmatprep.subr.bf16.mxu0 0
    %1712 = vmatpush1.bf16.msra.mxu0 %v1595
    %1713 = vmatprep.subr.bf16.mxu0 0
    %1714 = vmatpush1.bf16.msra.mxu0 %v1596
    %1715 = vmatprep.subr.bf16.mxu0 0
    %1716 = vmatpush1.bf16.msra.mxu0 %v1597
    %1717 = vmatprep.subr.bf16.mxu0 0
    %1718 = vmatpush1.bf16.msra.mxu0 %v1598
    %1719 = vmatprep.subr.bf16.mxu0 0
    %1720 = vmatpush1.bf16.msra.mxu0 %v1599
    %1721 = vmatprep.subr.bf16.mxu0 0
    %1722 = vmatpush1.bf16.msra.mxu0 %v1600
    %1723 = vmatprep.subr.bf16.mxu0 0
    %1724 = vmatpush1.bf16.msra.mxu0 %v1601
    %1725 = vmatprep.subr.bf16.mxu0 0
    %1726 = vmatpush1.bf16.msra.mxu0 %v1602
    %1727 = vmatprep.subr.bf16.mxu0 0
    %1728 = vmatpush1.bf16.msra.mxu0 %v1603
    %1729 = vmatprep.subr.bf16.mxu0 0
    %1730 = vmatpush1.bf16.msra.mxu0 %v1604
    %1731 = vmatprep.subr.bf16.mxu0 0
    %1732 = vmatpush1.bf16.msra.mxu0 %v1605
    %1733 = vmatprep.subr.bf16.mxu0 0
    %1734 = vmatpush1.bf16.msra.mxu0 %v1606
    %1735 = vmatprep.subr.bf16.mxu0 0
    %1736 = vmatpush1.bf16.msra.mxu0 %v1607
    %1737 = vmatprep.mubr.bf16.mxu0 %v1329
    %1738 = vmatmul.mubr.bf16.gmra.mrb[0].mxu0 %v1328
    %v1739 = vpop.f32.mrb[0].mxu0
    %v1740 = vadd.f32 %v1691, %v1739
    %v1741 = vpop.f32.mrb[0].mxu0
    %v1742 = vpop.f32.mrb[0].mxu0
    %v1743 = vadd.f32 %v1694, %v1742
    %v1744 = vpop.f32.mrb[0].mxu0
    %1745 = vmatprep.mubr.bf16.mxu0 %v1334
    %1746 = vmatmul.mubr.bf16.gmra.mrb[0].mxu0 %v1333
    %v1747 = vpop.f32.mrb[0].mxu0
    %v1748 = vadd.f32 %v1699, %v1747
    %v1749 = vpop.f32.mrb[0].mxu0
    %v1750 = vpop.f32.mrb[0].mxu0
    %v1751 = vadd.f32 %v1702, %v1750
    %v1752 = vpop.f32.mrb[0].mxu0
    %1753 = vdwg.mxu0
    %1754 = vmatprep.subr.bf16.mxu0 0
    %1755 = vmatpush1.bf16.msra.mxu0 %v1608
    %1756 = vmatprep.subr.bf16.mxu0 0
    %1757 = vmatpush1.bf16.msra.mxu0 %v1609
    %1758 = vmatprep.subr.bf16.mxu0 0
    %1759 = vmatpush1.bf16.msra.mxu0 %v1610
    %1760 = vmatprep.subr.bf16.mxu0 0
    %1761 = vmatpush1.bf16.msra.mxu0 %v1611
    %1762 = vmatprep.subr.bf16.mxu0 0
    %1763 = vmatpush1.bf16.msra.mxu0 %v1612
    %1764 = vmatprep.subr.bf16.mxu0 0
    %1765 = vmatpush1.bf16.msra.mxu0 %v1613
    %1766 = vmatprep.subr.bf16.mxu0 0
    %1767 = vmatpush1.bf16.msra.mxu0 %v1614
    %1768 = vmatprep.subr.bf16.mxu0 0
    %1769 = vmatpush1.bf16.msra.mxu0 %v1615
    %1770 = vmatprep.subr.bf16.mxu0 0
    %1771 = vmatpush1.bf16.msra.mxu0 0
    %1772 = vmatprep.subr.bf16.mxu0 0
    %1773 = vmatpush1.bf16.msra.mxu0 0
    %1774 = vmatprep.subr.bf16.mxu0 0
    %1775 = vmatpush1.bf16.msra.mxu0 0
    %1776 = vmatprep.subr.bf16.mxu0 0
    %1777 = vmatpush1.bf16.msra.mxu0 0
    %1778 = vmatprep.subr.bf16.mxu0 0
    %1779 = vmatpush1.bf16.msra.mxu0 0
    %1780 = vmatprep.subr.bf16.mxu0 0
    %1781 = vmatpush1.bf16.msra.mxu0 0
    %1782 = vmatprep.subr.bf16.mxu0 0
    %1783 = vmatpush1.bf16.msra.mxu0 0
    %1784 = vmatprep.subr.bf16.mxu0 0
    %1785 = vmatpush1.bf16.msra.mxu0 0
    %1786 = vmatprep.mubr.bf16.mxu0 0
    %1787 = vmatmul.mubr.bf16.gmra.mrb[0].mxu0 %v1330
    %v1788 = vpop.f32.mrb[0].mxu0
    %v1789 = vadd.f32 %v1740, %v1788
    %v1790 = vpop.f32.mrb[0].mxu0
    %v1791 = vpop.f32.mrb[0].mxu0
    %v1792 = vadd.f32 %v1743, %v1791
    %v1793 = vpop.f32.mrb[0].mxu0
    %1794 = vmatprep.mubr.bf16.mxu0 0
    %1795 = vmatmul.mubr.bf16.gmra.mrb[0].mxu0 %v1335
    %v1796 = vpop.f32.mrb[0].mxu0
    %v1797 = vadd.f32 %v1748, %v1796
    %v1798 = vpop.f32.mrb[0].mxu0
    %v1799 = vpop.f32.mrb[0].mxu0
    %v1800 = vadd.f32 %v1751, %v1799
    %v1801 = vpop.f32.mrb[0].mxu0
    %1802 = vdwg.mxu0
    %v1803 = vadd.f32 %v1789, %v1792
    %v1804 = vadd.f32 %v1803, %v1797
    %v1805 = vadd.f32 %v1804, %v1800
    %v1806 = vrot.slane %v1805, 4
    %v1807 = vadd.f32 %v1805, %v1806
    %v1808 = vrot.slane %v1807, 2
    %v1809 = vadd.f32 %v1807, %v1808
    %v1810 = vrot.slane %v1809, 1
    %v1811 = vadd.f32 %v1809, %v1810
    %v1812 = vmul.f32 %v1789, %v1789
    %v1813 = vmul.f32 %v1792, %v1792
    %v1814 = vmul.f32 %v1797, %v1797
    %v1815 = vmul.f32 %v1800, %v1800
    %v1816 = vadd.f32 %v1812, %v1813
    %v1817 = vadd.f32 %v1816, %v1814
    %v1818 = vadd.f32 %v1817, %v1815
    %v1819 = vrot.slane %v1818, 4
    %v1820 = vadd.f32 %v1818, %v1819
    %v1821 = vrot.slane %v1820, 2
    %v1822 = vadd.f32 %v1820, %v1821
    %v1823 = vrot.slane %v1822, 1
    %v1824 = vadd.f32 %v1822, %v1823
    %1825 = vrot.lane.b32.xlu0 %v1811, 8
    %v1826 = vpop.permute.xlu0 %1825
    %v1827 = vadd.f32 %v1811, %v1826
    %1828 = vrot.lane.b32.xlu0 %v1824, 8
    %v1829 = vpop.permute.xlu0 %1828
    %v1830 = vadd.f32 %v1824, %v1829
    %1831 = vrot.lane.b32.xlu0 %v1827, 16
    %v1832 = vpop.permute.xlu0 %1831
    %v1833 = vadd.f32 %v1827, %v1832
    %1834 = vrot.lane.b32.xlu0 %v1830, 16
    %v1835 = vpop.permute.xlu0 %1834
    %v1836 = vadd.f32 %v1830, %v1835
    %1837 = vrot.lane.b32.xlu0 %v1833, 32
    %v1838 = vpop.permute.xlu0 %1837
    %v1839 = vadd.f32 %v1833, %v1838
    %1840 = vrot.lane.b32.xlu0 %v1836, 32
    %v1841 = vpop.permute.xlu0 %1840
    %v1842 = vadd.f32 %v1836, %v1841
    %1843 = vrot.lane.b32.xlu0 %v1839, 64
    %v1844 = vpop.permute.xlu0 %1843
    %v1845 = vadd.f32 %v1839, %v1844
    %1846 = vrot.lane.b32.xlu0 %v1842, 64
    %v1847 = vpop.permute.xlu0 %1846
    %v1848 = vadd.f32 %v1842, %v1847
    %v1849 = vmul.f32 %v1845, 0.001953125
    %v1850 = vmul.f32 %v1848, 0.001953125
    %v1851 = vmul.f32 %v1849, %v1849
    %v1852 = vsub.f32 %v1850, %v1851
    %v1853 = vmax.f32 %v1852, 0.0
    %v1854 = vld [vmem:[%s11] sm:$0x1]
    %v1855 = vadd.f32 %v1853, 1e-05
    %v1856 = vrsqrt.pop %v1855
    %v1857 = vmul.f32 %v1854, %v1856
    %v1858 = vld [vmem:[%s13] sm:$0x1]
    %v1859 = vmul.f32 %v1849, %v1857
    %v1860 = vsub.f32 %v1858, %v1859
    %v1862 = vlaneseq
    %v1863 = vshrl.u32 %v1862, 7
    %v1864 = vsub.s32 0, %v1863
    %v1865 = vrot.slane %v1857, %v1864
    %v1867 = vmul.f32 %v1789, %v1865
    %v1868 = vmul.f32 %v1792, %v1865
    %v1869 = vmul.f32 %v1797, %v1865
    %v1870 = vmul.f32 %v1800, %v1865
    %v1872 = vlaneseq
    %v1873 = vshrl.u32 %v1872, 7
    %v1874 = vsub.s32 0, %v1873
    %v1875 = vrot.slane %v1860, %v1874
    %v1877 = vadd.f32 %v1867, %v1875
    %v1878 = vadd.f32 %v1868, %v1875
    %v1879 = vadd.f32 %v1869, %v1875
    %v1880 = vadd.f32 %v1870, %v1875
    %v1881 = vmul.f32 %v1877, 0.01
    %v1882 = vmul.f32 %v1878, 0.01
    %v1883 = vmul.f32 %v1879, 0.01
    %v1884 = vmul.f32 %v1880, 0.01
    %v1885 = vmax.f32 %v1877, %v1881
    %v1886 = vmax.f32 %v1878, %v1882
    %v1887 = vmax.f32 %v1879, %v1883
    %v1888 = vmax.f32 %v1880, %v1884
    %1889 = vst [vmem:[#allocation3 + $0x3] sm:$0xff] %v1885
    %1890 = vst [vmem:[#allocation3 + $0xb] sm:$0xff] %v1886
    %1891 = vst [vmem:[#allocation3 + $0x1b] sm:$0xff] %v1887
    %1892 = vst [vmem:[#allocation3 + $0x23] sm:$0xff] %v1888
    %v1893 = vld [vmem:[#allocation3] sm:$0xff]
    %v1894 = vld [vmem:[#allocation3 + $0x8] sm:$0xff]
    %v1895 = vld [vmem:[#allocation3 + $0x10] sm:$0x3f]
    %v1896 = vld [vmem:[#allocation3 + $0x18] sm:$0xff]
    %v1897 = vld [vmem:[#allocation3 + $0x20] sm:$0xff]
    %v1898 = vld [vmem:[#allocation3 + $0x28] sm:$0x3f]
    %v1905 = vrot.slane %v1893, 1
    %v1906 = vrot.slane %v1894, 1
    %v1907 = vsel %vm376, %v1905, %v1906
    %v1908 = vrot.slane %v1895, 1
    %v1909 = vsel %vm376, %v1906, %v1908
    %v1910 = vrot.slane %v1896, 1
    %v1911 = vrot.slane %v1897, 1
    %v1912 = vsel %vm376, %v1910, %v1911
    %v1913 = vrot.slane %v1898, 1
    %v1914 = vsel %vm376, %v1911, %v1913
    %v1915 = vrot.slane %v1893, 2
    %v1916 = vrot.slane %v1894, 2
    %v1917 = vsel %vm391, %v1915, %v1916
    %v1918 = vrot.slane %v1895, 2
    %v1919 = vsel %vm391, %v1916, %v1918
    %v1920 = vrot.slane %v1896, 2
    %v1921 = vrot.slane %v1897, 2
    %v1922 = vsel %vm391, %v1920, %v1921
    %v1923 = vrot.slane %v1898, 2
    %v1924 = vsel %vm391, %v1921, %v1923
    %v1925 = vrot.slane %v1907, 2
    %v1926 = vrot.slane %v1909, 2
    %v1927 = vsel %vm391, %v1925, %v1926
    %v1928 = vrot.slane %v1917, 2
    %v1929 = vrot.slane %v1919, 2
    %v1930 = vsel %vm391, %v1928, %v1929
    %v1931 = vrot.slane %v1908, 2
    %v1932 = vsel %vm391, %v1926, %v1931
    %v1933 = vrot.slane %v1918, 2
    %v1934 = vsel %vm391, %v1929, %v1933
    %v1935 = vrot.slane %v1912, 2
    %v1936 = vrot.slane %v1914, 2
    %v1937 = vsel %vm391, %v1935, %v1936
    %v1938 = vrot.slane %v1922, 2
    %v1939 = vrot.slane %v1924, 2
    %v1940 = vsel %vm391, %v1938, %v1939
    %v1941 = vrot.slane %v1913, 2
    %v1942 = vsel %vm391, %v1936, %v1941
    %v1943 = vrot.slane %v1923, 2
    %v1944 = vsel %vm391, %v1939, %v1943
    %v1957 = vpack.c.bf16 %v1919, %v1917
    %v1958 = vpack.c.bf16 %v1932, %v1927
    %v1959 = vpack.c.bf16 %v1934, %v1930
    %v1960 = vpack.c.bf16 %v1924, %v1922
    %v1961 = vpack.c.bf16 %v1942, %v1937
    %v1962 = vpack.c.bf16 %v1944, %v1940
    %v1963 = vld [vmem:[#allocation4] sm:$0xf]
    %v1964 = vld [vmem:[#allocation4 + $0x4] sm:$0xf]
    %v1965 = vld [vmem:[#allocation4 + $0x8] sm:$0xf]
    %v1966 = vld [vmem:[#allocation4 + $0xc] sm:$0xf]
    %v1967 = vld [vmem:[#allocation4 + $0x10] sm:$0xf]
    %v1968 = vld [vmem:[#allocation4 + $0x14] sm:$0xf]
    %v1969 = vld [vmem:[#allocation4 + $0x18] sm:$0xf]
    %v1970 = vld [vmem:[#allocation4 + $0x1c] sm:$0xf]
    %v1971 = vld [vmem:[#allocation4 + $0x20] sm:$0xf]
    %v1972 = vld [vmem:[#allocation4 + $0x24] sm:$0xf]
    %v1973 = vld [vmem:[#allocation4 + $0x28] sm:$0xf]
    %v1974 = vld [vmem:[#allocation4 + $0x2c] sm:$0xf]
    %v1975 = vld [vmem:[#allocation4 + $0x30] sm:$0xf]
    %v1976 = vld [vmem:[#allocation4 + $0x34] sm:$0xf]
    %v1977 = vld [vmem:[#allocation4 + $0x38] sm:$0xf]
    %v1978 = vld [vmem:[#allocation4 + $0x3c] sm:$0xf]
    %v1979 = vld [vmem:[#allocation4 + $0x40] sm:$0xf]
    %v1980 = vld [vmem:[#allocation4 + $0x44] sm:$0xf]
    %v1981 = vld [vmem:[#allocation4 + $0x48] sm:$0xf]
    %v1982 = vld [vmem:[#allocation4 + $0x4c] sm:$0xf]
    %v1983 = vld [vmem:[#allocation4 + $0x50] sm:$0xf]
    %v1984 = vld [vmem:[#allocation4 + $0x54] sm:$0xf]
    %v1985 = vld [vmem:[#allocation4 + $0x58] sm:$0xf]
    %v1986 = vld [vmem:[#allocation4 + $0x5c] sm:$0xf]
    %v1987 = vld [vmem:[#allocation4 + $0x60] sm:$0xf]
    %v1988 = vld [vmem:[#allocation4 + $0x64] sm:$0xf]
    %v1989 = vld [vmem:[#allocation4 + $0x68] sm:$0xf]
    %v1990 = vld [vmem:[#allocation4 + $0x6c] sm:$0xf]
    %v1991 = vld [vmem:[#allocation4 + $0x70] sm:$0xf]
    %v1992 = vld [vmem:[#allocation4 + $0x74] sm:$0xf]
    %v1993 = vld [vmem:[#allocation4 + $0x78] sm:$0xf]
    %v1994 = vld [vmem:[#allocation4 + $0x7c] sm:$0xf]
    %v1995 = vld [vmem:[#allocation4 + $0x80] sm:$0xf]
    %v1996 = vld [vmem:[#allocation4 + $0x84] sm:$0xf]
    %v1997 = vld [vmem:[#allocation4 + $0x88] sm:$0xf]
    %v1998 = vld [vmem:[#allocation4 + $0x8c] sm:$0xf]
    %v1999 = vld [vmem:[#allocation4 + $0x90] sm:$0xf]
    %v2000 = vld [vmem:[#allocation4 + $0x94] sm:$0xf]
    %v2001 = vld [vmem:[#allocation4 + $0x98] sm:$0xf]
    %v2002 = vld [vmem:[#allocation4 + $0x9c] sm:$0xf]
    %v2003 = vld [vmem:[#allocation4 + $0xa0] sm:$0xf]
    %v2004 = vld [vmem:[#allocation4 + $0xa4] sm:$0xf]
    %v2005 = vld [vmem:[#allocation4 + $0xa8] sm:$0xf]
    %v2006 = vld [vmem:[#allocation4 + $0xac] sm:$0xf]
    %v2007 = vld [vmem:[#allocation4 + $0xb0] sm:$0xf]
    %v2008 = vld [vmem:[#allocation4 + $0xb4] sm:$0xf]
    %v2009 = vld [vmem:[#allocation4 + $0xb8] sm:$0xf]
    %v2010 = vld [vmem:[#allocation4 + $0xbc] sm:$0xf]
    %v2059 = vunpack.c.l.b16 %v1963
    %v2060 = vunpack.c.l.b16 %v1964
    %v2061 = vunpack.c.l.b16 %v1965
    %v2062 = vunpack.c.l.b16 %v1966
    %v2063 = vunpack.c.l.b16 %v1967
    %v2064 = vunpack.c.l.b16 %v1968
    %v2065 = vunpack.c.l.b16 %v1969
    %v2066 = vunpack.c.l.b16 %v1970
    %v2067 = vunpack.c.l.b16 %v1971
    %v2068 = vunpack.c.l.b16 %v1972
    %v2069 = vunpack.c.l.b16 %v1973
    %v2070 = vunpack.c.l.b16 %v1974
    %v2071 = vunpack.c.l.b16 %v1975
    %v2072 = vunpack.c.l.b16 %v1976
    %v2073 = vunpack.c.l.b16 %v1977
    %v2074 = vunpack.c.l.b16 %v1978
    %v2075 = vunpack.c.l.b16 %v1979
    %v2076 = vunpack.c.l.b16 %v1980
    %v2077 = vunpack.c.l.b16 %v1981
    %v2078 = vunpack.c.l.b16 %v1982
    %v2079 = vunpack.c.l.b16 %v1983
    %v2080 = vunpack.c.l.b16 %v1984
    %v2081 = vunpack.c.l.b16 %v1985
    %v2082 = vunpack.c.l.b16 %v1986
    %v2083 = vunpack.c.l.b16 %v1987
    %v2084 = vunpack.c.l.b16 %v1988
    %v2085 = vunpack.c.l.b16 %v1989
    %v2086 = vunpack.c.l.b16 %v1990
    %v2087 = vunpack.c.l.b16 %v1991
    %v2088 = vunpack.c.l.b16 %v1992
    %v2089 = vunpack.c.l.b16 %v1993
    %v2090 = vunpack.c.l.b16 %v1994
    %v2091 = vunpack.c.l.b16 %v1995
    %v2092 = vunpack.c.l.b16 %v1996
    %v2093 = vunpack.c.l.b16 %v1997
    %v2094 = vunpack.c.l.b16 %v1998
    %v2095 = vunpack.c.l.b16 %v1999
    %v2096 = vunpack.c.l.b16 %v2000
    %v2097 = vunpack.c.l.b16 %v2001
    %v2098 = vunpack.c.l.b16 %v2002
    %v2099 = vunpack.c.l.b16 %v2003
    %v2100 = vunpack.c.l.b16 %v2004
    %v2101 = vunpack.c.l.b16 %v2005
    %v2102 = vunpack.c.l.b16 %v2006
    %v2103 = vunpack.c.l.b16 %v2007
    %v2104 = vunpack.c.l.b16 %v2008
    %v2105 = vunpack.c.l.b16 %v2009
    %v2106 = vunpack.c.l.b16 %v2010
    %v2107 = vpack.c.b16 %v2060, %v2059
    %v2108 = vpack.c.b16 %v2062, %v2061
    %v2109 = vpack.c.b16 %v2064, %v2063
    %v2110 = vpack.c.b16 %v2066, %v2065
    %v2111 = vpack.c.b16 %v2068, %v2067
    %v2112 = vpack.c.b16 %v2070, %v2069
    %v2113 = vpack.c.b16 %v2072, %v2071
    %v2114 = vpack.c.b16 %v2074, %v2073
    %v2115 = vpack.c.b16 %v2076, %v2075
    %v2116 = vpack.c.b16 %v2078, %v2077
    %v2117 = vpack.c.b16 %v2080, %v2079
    %v2118 = vpack.c.b16 %v2082, %v2081
    %v2119 = vpack.c.b16 %v2084, %v2083
    %v2120 = vpack.c.b16 %v2086, %v2085
    %v2121 = vpack.c.b16 %v2088, %v2087
    %v2122 = vpack.c.b16 %v2090, %v2089
    %v2123 = vpack.c.b16 %v2092, %v2091
    %v2124 = vpack.c.b16 %v2094, %v2093
    %v2125 = vpack.c.b16 %v2096, %v2095
    %v2126 = vpack.c.b16 %v2098, %v2097
    %v2127 = vpack.c.b16 %v2100, %v2099
    %v2128 = vpack.c.b16 %v2102, %v2101
    %v2129 = vpack.c.b16 %v2104, %v2103
    %v2130 = vpack.c.b16 %v2106, %v2105
    %2155 = vmatprep.subr.bf16.mxu0 0
    %2156 = vmatpush1.bf16.msra.mxu0 %v2107
    %2157 = vmatprep.subr.bf16.mxu0 0
    %2158 = vmatpush1.bf16.msra.mxu0 %v2108
    %2159 = vmatprep.subr.bf16.mxu0 0
    %2160 = vmatpush1.bf16.msra.mxu0 %v2109
    %2161 = vmatprep.subr.bf16.mxu0 0
    %2162 = vmatpush1.bf16.msra.mxu0 %v2110
    %2163 = vmatprep.subr.bf16.mxu0 0
    %2164 = vmatpush1.bf16.msra.mxu0 %v2111
    %2165 = vmatprep.subr.bf16.mxu0 0
    %2166 = vmatpush1.bf16.msra.mxu0 %v2112
    %2167 = vmatprep.subr.bf16.mxu0 0
    %2168 = vmatpush1.bf16.msra.mxu0 %v2113
    %2169 = vmatprep.subr.bf16.mxu0 0
    %2170 = vmatpush1.bf16.msra.mxu0 %v2114
    %2171 = vmatprep.subr.bf16.mxu0 0
    %2172 = vmatpush1.bf16.msra.mxu0 %v2115
    %2173 = vmatprep.subr.bf16.mxu0 0
    %2174 = vmatpush1.bf16.msra.mxu0 %v2116
    %2175 = vmatprep.subr.bf16.mxu0 0
    %2176 = vmatpush1.bf16.msra.mxu0 %v2117
    %2177 = vmatprep.subr.bf16.mxu0 0
    %2178 = vmatpush1.bf16.msra.mxu0 %v2118
    %2179 = vmatprep.subr.bf16.mxu0 0
    %2180 = vmatpush1.bf16.msra.mxu0 %v2119
    %2181 = vmatprep.subr.bf16.mxu0 0
    %2182 = vmatpush1.bf16.msra.mxu0 %v2120
    %2183 = vmatprep.subr.bf16.mxu0 0
    %2184 = vmatpush1.bf16.msra.mxu0 %v2121
    %2185 = vmatprep.subr.bf16.mxu0 0
    %2186 = vmatpush1.bf16.msra.mxu0 %v2122
    %2187 = vmatprep.mubr.bf16.mxu0 %v1958
    %2188 = vmatmul.mubr.bf16.gmra.mrb[0].mxu0 %v1957
    %v2189 = vpop.f32.mrb[0].mxu0
    %v2190 = vadd.f32 0.0, %v2189
    %v2191 = vpop.f32.mrb[0].mxu0
    %v2192 = vpop.f32.mrb[0].mxu0
    %v2193 = vadd.f32 0.0, %v2192
    %v2194 = vpop.f32.mrb[0].mxu0
    %2195 = vmatprep.mubr.bf16.mxu0 %v1961
    %2196 = vmatmul.mubr.bf16.gmra.mrb[0].mxu0 %v1960
    %v2197 = vpop.f32.mrb[0].mxu0
    %v2198 = vadd.f32 0.0, %v2197
    %v2199 = vpop.f32.mrb[0].mxu0
    %v2200 = vpop.f32.mrb[0].mxu0
    %v2201 = vadd.f32 0.0, %v2200
    %v2202 = vpop.f32.mrb[0].mxu0
    %2203 = vdwg.mxu0
    %2204 = vmatprep.subr.bf16.mxu0 0
    %2205 = vmatpush1.bf16.msra.mxu0 %v2123
    %2206 = vmatprep.subr.bf16.mxu0 0
    %2207 = vmatpush1.bf16.msra.mxu0 %v2124
    %2208 = vmatprep.subr.bf16.mxu0 0
    %2209 = vmatpush1.bf16.msra.mxu0 %v2125
    %2210 = vmatprep.subr.bf16.mxu0 0
    %2211 = vmatpush1.bf16.msra.mxu0 %v2126
    %2212 = vmatprep.subr.bf16.mxu0 0
    %2213 = vmatpush1.bf16.msra.mxu0 %v2127
    %2214 = vmatprep.subr.bf16.mxu0 0
    %2215 = vmatpush1.bf16.msra.mxu0 %v2128
    %2216 = vmatprep.subr.bf16.mxu0 0
    %2217 = vmatpush1.bf16.msra.mxu0 %v2129
    %2218 = vmatprep.subr.bf16.mxu0 0
    %2219 = vmatpush1.bf16.msra.mxu0 %v2130
    %2220 = vmatprep.subr.bf16.mxu0 0
    %2221 = vmatpush1.bf16.msra.mxu0 0
    %2222 = vmatprep.subr.bf16.mxu0 0
    %2223 = vmatpush1.bf16.msra.mxu0 0
    %2224 = vmatprep.subr.bf16.mxu0 0
    %2225 = vmatpush1.bf16.msra.mxu0 0
    %2226 = vmatprep.subr.bf16.mxu0 0
    %2227 = vmatpush1.bf16.msra.mxu0 0
    %2228 = vmatprep.subr.bf16.mxu0 0
    %2229 = vmatpush1.bf16.msra.mxu0 0
    %2230 = vmatprep.subr.bf16.mxu0 0
    %2231 = vmatpush1.bf16.msra.mxu0 0
    %2232 = vmatprep.subr.bf16.mxu0 0
    %2233 = vmatpush1.bf16.msra.mxu0 0
    %2234 = vmatprep.subr.bf16.mxu0 0
    %2235 = vmatpush1.bf16.msra.mxu0 0
    %2236 = vmatprep.mubr.bf16.mxu0 0
    %2237 = vmatmul.mubr.bf16.gmra.mrb[0].mxu0 %v1959
    %v2238 = vpop.f32.mrb[0].mxu0
    %v2239 = vadd.f32 %v2190, %v2238
    %v2240 = vpop.f32.mrb[0].mxu0
    %v2241 = vpop.f32.mrb[0].mxu0
    %v2242 = vadd.f32 %v2193, %v2241
    %v2243 = vpop.f32.mrb[0].mxu0
    %2244 = vmatprep.mubr.bf16.mxu0 0
    %2245 = vmatmul.mubr.bf16.gmra.mrb[0].mxu0 %v1962
    %v2246 = vpop.f32.mrb[0].mxu0
    %v2247 = vadd.f32 %v2198, %v2246
    %v2248 = vpop.f32.mrb[0].mxu0
    %v2249 = vpop.f32.mrb[0].mxu0
    %v2250 = vadd.f32 %v2201, %v2249
    %v2251 = vpop.f32.mrb[0].mxu0
    %2252 = vdwg.mxu0
    %v2253 = vadd.f32 %v2239, %v2242
    %v2254 = vadd.f32 %v2253, %v2247
    %v2255 = vadd.f32 %v2254, %v2250
    %v2256 = vrot.slane %v2255, 4
    %v2257 = vadd.f32 %v2255, %v2256
    %v2258 = vrot.slane %v2257, 2
    %v2259 = vadd.f32 %v2257, %v2258
    %v2260 = vrot.slane %v2259, 1
    %v2261 = vadd.f32 %v2259, %v2260
    %v2262 = vmul.f32 %v2239, %v2239
    %v2263 = vmul.f32 %v2242, %v2242
    %v2264 = vmul.f32 %v2247, %v2247
    %v2265 = vmul.f32 %v2250, %v2250
    %v2266 = vadd.f32 %v2262, %v2263
    %v2267 = vadd.f32 %v2266, %v2264
    %v2268 = vadd.f32 %v2267, %v2265
    %v2269 = vrot.slane %v2268, 4
    %v2270 = vadd.f32 %v2268, %v2269
    %v2271 = vrot.slane %v2270, 2
    %v2272 = vadd.f32 %v2270, %v2271
    %v2273 = vrot.slane %v2272, 1
    %v2274 = vadd.f32 %v2272, %v2273
    %2275 = vrot.lane.b32.xlu0 %v2261, 8
    %v2276 = vpop.permute.xlu0 %2275
    %v2277 = vadd.f32 %v2261, %v2276
    %2278 = vrot.lane.b32.xlu0 %v2274, 8
    %v2279 = vpop.permute.xlu0 %2278
    %v2280 = vadd.f32 %v2274, %v2279
    %2281 = vrot.lane.b32.xlu0 %v2277, 16
    %v2282 = vpop.permute.xlu0 %2281
    %v2283 = vadd.f32 %v2277, %v2282
    %2284 = vrot.lane.b32.xlu0 %v2280, 16
    %v2285 = vpop.permute.xlu0 %2284
    %v2286 = vadd.f32 %v2280, %v2285
    %2287 = vrot.lane.b32.xlu0 %v2283, 32
    %v2288 = vpop.permute.xlu0 %2287
    %v2289 = vadd.f32 %v2283, %v2288
    %2290 = vrot.lane.b32.xlu0 %v2286, 32
    %v2291 = vpop.permute.xlu0 %2290
    %v2292 = vadd.f32 %v2286, %v2291
    %2293 = vrot.lane.b32.xlu0 %v2289, 64
    %v2294 = vpop.permute.xlu0 %2293
    %v2295 = vadd.f32 %v2289, %v2294
    %2296 = vrot.lane.b32.xlu0 %v2292, 64
    %v2297 = vpop.permute.xlu0 %2296
    %v2298 = vadd.f32 %v2292, %v2297
    %v2299 = vmul.f32 %v2295, 0.001953125
    %v2300 = vmul.f32 %v2298, 0.001953125
    %v2301 = vmul.f32 %v2299, %v2299
    %v2302 = vsub.f32 %v2300, %v2301
    %v2303 = vmax.f32 %v2302, 0.0
    %v2304 = vld [vmem:[%s17] sm:$0x1]
    %v2305 = vadd.f32 %v2303, 1e-05
    %v2306 = vrsqrt.pop %v2305
    %v2307 = vmul.f32 %v2304, %v2306
    %v2308 = vld [vmem:[#allocation6] sm:$0x1]
    %v2309 = vmul.f32 %v2299, %v2307
    %v2310 = vsub.f32 %v2308, %v2309
    %v2312 = vlaneseq
    %v2313 = vshrl.u32 %v2312, 7
    %v2314 = vsub.s32 0, %v2313
    %v2315 = vrot.slane %v2307, %v2314
    %v2317 = vmul.f32 %v2239, %v2315
    %v2318 = vmul.f32 %v2242, %v2315
    %v2319 = vmul.f32 %v2247, %v2315
    %v2320 = vmul.f32 %v2250, %v2315
    %v2322 = vlaneseq
    %v2323 = vshrl.u32 %v2322, 7
    %v2324 = vsub.s32 0, %v2323
    %v2325 = vrot.slane %v2310, %v2324
    %v2327 = vadd.f32 %v2317, %v2325
    %v2328 = vadd.f32 %v2318, %v2325
    %v2329 = vadd.f32 %v2319, %v2325
    %v2330 = vadd.f32 %v2320, %v2325
    %v2331 = vadd.f32 %v2327, %v1206
    %v2332 = vadd.f32 %v2328, %v1207
    %v2333 = vadd.f32 %v2329, %v1208
    %v2334 = vadd.f32 %v2330, %v1209
    %v2335 = vmul.f32 %v2331, 0.01
    %v2336 = vmul.f32 %v2332, 0.01
    %v2337 = vmul.f32 %v2333, 0.01
    %v2338 = vmul.f32 %v2334, 0.01
    %v2339 = vmax.f32 %v2331, %v2335
    %v2340 = vmax.f32 %v2332, %v2336
    %v2341 = vmax.f32 %v2333, %v2337
    %v2342 = vmax.f32 %v2334, %v2338
    %2343 = vst [vmem:[#allocation2 + $0x3] sm:$0xff] %v2339
    %2344 = vst [vmem:[#allocation2 + $0xb] sm:$0xff] %v2340
    %2345 = vst [vmem:[#allocation2 + $0x1b] sm:$0xff] %v2341
    %2346 = vst [vmem:[#allocation2 + $0x23] sm:$0xff] %v2342
    %v2347 = vld [vmem:[#allocation2] sm:$0xff]
    %v2348 = vld [vmem:[#allocation2 + $0x8] sm:$0xff]
    %v2349 = vld [vmem:[#allocation2 + $0x10] sm:$0x3f]
    %v2350 = vld [vmem:[#allocation2 + $0x18] sm:$0xff]
    %v2351 = vld [vmem:[#allocation2 + $0x20] sm:$0xff]
    %v2352 = vld [vmem:[#allocation2 + $0x28] sm:$0x3f]
    %v2359 = vrot.slane %v2347, 1
    %v2360 = vrot.slane %v2348, 1
    %v2361 = vsel %vm376, %v2359, %v2360
    %v2362 = vrot.slane %v2349, 1
    %v2363 = vsel %vm376, %v2360, %v2362
    %v2364 = vrot.slane %v2350, 1
    %v2365 = vrot.slane %v2351, 1
    %v2366 = vsel %vm376, %v2364, %v2365
    %v2367 = vrot.slane %v2352, 1
    %v2368 = vsel %vm376, %v2365, %v2367
    %v2369 = vrot.slane %v2347, 2
    %v2370 = vrot.slane %v2348, 2
    %v2371 = vsel %vm391, %v2369, %v2370
    %v2372 = vrot.slane %v2349, 2
    %v2373 = vsel %vm391, %v2370, %v2372
    %v2374 = vrot.slane %v2350, 2
    %v2375 = vrot.slane %v2351, 2
    %v2376 = vsel %vm391, %v2374, %v2375
    %v2377 = vrot.slane %v2352, 2
    %v2378 = vsel %vm391, %v2375, %v2377
    %v2379 = vrot.slane %v2347, 3
    %v2380 = vrot.slane %v2348, 3
    %v2381 = vsel %vm406, %v2379, %v2380
    %v2382 = vrot.slane %v2349, 3
    %v2383 = vsel %vm406, %v2380, %v2382
    %v2384 = vrot.slane %v2350, 3
    %v2385 = vrot.slane %v2351, 3
    %v2386 = vsel %vm406, %v2384, %v2385
    %v2387 = vrot.slane %v2352, 3
    %v2388 = vsel %vm406, %v2385, %v2387
    %v2389 = vrot.slane %v2347, 4
    %v2390 = vrot.slane %v2348, 4
    %v2391 = vsel %vm421, %v2389, %v2390
    %v2392 = vrot.slane %v2349, 4
    %v2393 = vsel %vm421, %v2390, %v2392
    %v2394 = vrot.slane %v2350, 4
    %v2395 = vrot.slane %v2351, 4
    %v2396 = vsel %vm421, %v2394, %v2395
    %v2397 = vrot.slane %v2352, 4
    %v2398 = vsel %vm421, %v2395, %v2397
    %v2399 = vrot.slane %v2361, 1
    %v2400 = vrot.slane %v2363, 1
    %v2401 = vsel %vm376, %v2399, %v2400
    %v2402 = vrot.slane %v2371, 1
    %v2403 = vrot.slane %v2373, 1
    %v2404 = vsel %vm376, %v2402, %v2403
    %v2405 = vrot.slane %v2381, 1
    %v2406 = vrot.slane %v2383, 1
    %v2407 = vsel %vm376, %v2405, %v2406
    %v2408 = vrot.slane %v2391, 1
    %v2409 = vrot.slane %v2393, 1
    %v2410 = vsel %vm376, %v2408, %v2409
    %v2411 = vrot.slane %v2362, 1
    %v2412 = vsel %vm376, %v2400, %v2411
    %v2413 = vrot.slane %v2372, 1
    %v2414 = vsel %vm376, %v2403, %v2413
    %v2415 = vrot.slane %v2382, 1
    %v2416 = vsel %vm376, %v2406, %v2415
    %v2417 = vrot.slane %v2392, 1
    %v2418 = vsel %vm376, %v2409, %v2417
    %v2419 = vrot.slane %v2366, 1
    %v2420 = vrot.slane %v2368, 1
    %v2421 = vsel %vm376, %v2419, %v2420
    %v2422 = vrot.slane %v2376, 1
    %v2423 = vrot.slane %v2378, 1
    %v2424 = vsel %vm376, %v2422, %v2423
    %v2425 = vrot.slane %v2386, 1
    %v2426 = vrot.slane %v2388, 1
    %v2427 = vsel %vm376, %v2425, %v2426
    %v2428 = vrot.slane %v2396, 1
    %v2429 = vrot.slane %v2398, 1
    %v2430 = vsel %vm376, %v2428, %v2429
    %v2431 = vrot.slane %v2367, 1
    %v2432 = vsel %vm376, %v2420, %v2431
    %v2433 = vrot.slane %v2377, 1
    %v2434 = vsel %vm376, %v2423, %v2433
    %v2435 = vrot.slane %v2387, 1
    %v2436 = vsel %vm376, %v2426, %v2435
    %v2437 = vrot.slane %v2397, 1
    %v2438 = vsel %vm376, %v2429, %v2437
    %v2459 = vpack.c.bf16 %v2363, %v2361
    %v2460 = vpack.c.bf16 %v2412, %v2401
    %v2461 = vpack.c.bf16 %v2414, %v2404
    %v2462 = vpack.c.bf16 %v2416, %v2407
    %v2463 = vpack.c.bf16 %v2418, %v2410
    %v2464 = vpack.c.bf16 %v2368, %v2366
    %v2465 = vpack.c.bf16 %v2432, %v2421
    %v2466 = vpack.c.bf16 %v2434, %v2424
    %v2467 = vpack.c.bf16 %v2436, %v2427
    %v2468 = vpack.c.bf16 %v2438, %v2430
    %v2469 = vld [vmem:[%s21] sm:$0xf]
    %v2470 = vld [vmem:[%s21 + $0x4] sm:$0xf]
    %v2471 = vld [vmem:[%s21 + $0x8] sm:$0xf]
    %v2472 = vld [vmem:[%s21 + $0xc] sm:$0xf]
    %v2473 = vld [vmem:[%s21 + $0x10] sm:$0xf]
    %v2474 = vld [vmem:[%s21 + $0x14] sm:$0xf]
    %v2475 = vld [vmem:[%s21 + $0x18] sm:$0xf]
    %v2476 = vld [vmem:[%s21 + $0x1c] sm:$0xf]
    %v2477 = vld [vmem:[%s21 + $0x20] sm:$0xf]
    %v2478 = vld [vmem:[%s21 + $0x24] sm:$0xf]
    %v2479 = vld [vmem:[%s21 + $0x28] sm:$0xf]
    %v2480 = vld [vmem:[%s21 + $0x2c] sm:$0xf]
    %v2481 = vld [vmem:[%s21 + $0x30] sm:$0xf]
    %v2482 = vld [vmem:[%s21 + $0x34] sm:$0xf]
    %v2483 = vld [vmem:[%s21 + $0x38] sm:$0xf]
    %v2484 = vld [vmem:[%s21 + $0x3c] sm:$0xf]
    %v2485 = vld [vmem:[%s21 + $0x40] sm:$0xf]
    %v2486 = vld [vmem:[%s21 + $0x44] sm:$0xf]
    %v2487 = vld [vmem:[%s21 + $0x48] sm:$0xf]
    %v2488 = vld [vmem:[%s21 + $0x4c] sm:$0xf]
    %v2489 = vld [vmem:[%s21 + $0x50] sm:$0xf]
    %v2490 = vld [vmem:[%s21 + $0x54] sm:$0xf]
    %v2491 = vld [vmem:[%s21 + $0x58] sm:$0xf]
    %v2492 = vld [vmem:[%s21 + $0x5c] sm:$0xf]
    %v2493 = vld [vmem:[%s21 + $0x60] sm:$0xf]
    %v2494 = vld [vmem:[%s21 + $0x64] sm:$0xf]
    %v2495 = vld [vmem:[%s21 + $0x68] sm:$0xf]
    %v2496 = vld [vmem:[%s21 + $0x6c] sm:$0xf]
    %v2497 = vld [vmem:[%s21 + $0x70] sm:$0xf]
    %v2498 = vld [vmem:[%s21 + $0x74] sm:$0xf]
    %v2499 = vld [vmem:[%s21 + $0x78] sm:$0xf]
    %v2500 = vld [vmem:[%s21 + $0x7c] sm:$0xf]
    %v2501 = vld [vmem:[%s21 + $0x80] sm:$0xf]
    %v2502 = vld [vmem:[%s21 + $0x84] sm:$0xf]
    %v2503 = vld [vmem:[%s21 + $0x88] sm:$0xf]
    %v2504 = vld [vmem:[%s21 + $0x8c] sm:$0xf]
    %v2505 = vld [vmem:[%s21 + $0x90] sm:$0xf]
    %v2506 = vld [vmem:[%s21 + $0x94] sm:$0xf]
    %v2507 = vld [vmem:[%s21 + $0x98] sm:$0xf]
    %v2508 = vld [vmem:[%s21 + $0x9c] sm:$0xf]
    %v2509 = vld [vmem:[%s21 + $0xa0] sm:$0xf]
    %v2510 = vld [vmem:[%s21 + $0xa4] sm:$0xf]
    %v2511 = vld [vmem:[%s21 + $0xa8] sm:$0xf]
    %v2512 = vld [vmem:[%s21 + $0xac] sm:$0xf]
    %v2513 = vld [vmem:[%s21 + $0xb0] sm:$0xf]
    %v2514 = vld [vmem:[%s21 + $0xb4] sm:$0xf]
    %v2515 = vld [vmem:[%s21 + $0xb8] sm:$0xf]
    %v2516 = vld [vmem:[%s21 + $0xbc] sm:$0xf]
    %v2517 = vld [vmem:[%s21 + $0xc0] sm:$0xf]
    %v2518 = vld [vmem:[%s21 + $0xc4] sm:$0xf]
    %v2519 = vld [vmem:[%s21 + $0xc8] sm:$0xf]
    %v2520 = vld [vmem:[%s21 + $0xcc] sm:$0xf]
    %v2521 = vld [vmem:[%s21 + $0xd0] sm:$0xf]
    %v2522 = vld [vmem:[%s21 + $0xd4] sm:$0xf]
    %v2523 = vld [vmem:[%s21 + $0xd8] sm:$0xf]
    %v2524 = vld [vmem:[%s21 + $0xdc] sm:$0xf]
    %v2525 = vld [vmem:[%s21 + $0xe0] sm:$0xf]
    %v2526 = vld [vmem:[%s21 + $0xe4] sm:$0xf]
    %v2527 = vld [vmem:[%s21 + $0xe8] sm:$0xf]
    %v2528 = vld [vmem:[%s21 + $0xec] sm:$0xf]
    %v2529 = vld [vmem:[%s21 + $0xf0] sm:$0xf]
    %v2530 = vld [vmem:[%s21 + $0xf4] sm:$0xf]
    %v2531 = vld [vmem:[%s21 + $0xf8] sm:$0xf]
    %v2532 = vld [vmem:[%s21 + $0xfc] sm:$0xf]
    %v2533 = vld [vmem:[%s21 + $0x100] sm:$0xf]
    %v2534 = vld [vmem:[%s21 + $0x104] sm:$0xf]
    %v2535 = vld [vmem:[%s21 + $0x108] sm:$0xf]
    %v2536 = vld [vmem:[%s21 + $0x10c] sm:$0xf]
    %v2537 = vld [vmem:[%s21 + $0x110] sm:$0xf]
    %v2538 = vld [vmem:[%s21 + $0x114] sm:$0xf]
    %v2539 = vld [vmem:[%s21 + $0x118] sm:$0xf]
    %v2540 = vld [vmem:[%s21 + $0x11c] sm:$0xf]
    %v2541 = vld [vmem:[%s21 + $0x120] sm:$0xf]
    %v2542 = vld [vmem:[%s21 + $0x124] sm:$0xf]
    %v2543 = vld [vmem:[%s21 + $0x128] sm:$0xf]
    %v2544 = vld [vmem:[%s21 + $0x12c] sm:$0xf]
    %v2545 = vld [vmem:[%s21 + $0x130] sm:$0xf]
    %v2546 = vld [vmem:[%s21 + $0x134] sm:$0xf]
    %v2547 = vld [vmem:[%s21 + $0x138] sm:$0xf]
    %v2548 = vld [vmem:[%s21 + $0x13c] sm:$0xf]
    %v2629 = vunpack.c.l.b16 %v2469
    %v2630 = vunpack.c.l.b16 %v2470
    %v2631 = vunpack.c.l.b16 %v2471
    %v2632 = vunpack.c.l.b16 %v2472
    %v2633 = vunpack.c.l.b16 %v2473
    %v2634 = vunpack.c.l.b16 %v2474
    %v2635 = vunpack.c.l.b16 %v2475
    %v2636 = vunpack.c.l.b16 %v2476
    %v2637 = vunpack.c.l.b16 %v2477
    %v2638 = vunpack.c.l.b16 %v2478
    %v2639 = vunpack.c.l.b16 %v2479
    %v2640 = vunpack.c.l.b16 %v2480
    %v2641 = vunpack.c.l.b16 %v2481
    %v2642 = vunpack.c.l.b16 %v2482
    %v2643 = vunpack.c.l.b16 %v2483
    %v2644 = vunpack.c.l.b16 %v2484
    %v2645 = vunpack.c.l.b16 %v2485
    %v2646 = vunpack.c.l.b16 %v2486
    %v2647 = vunpack.c.l.b16 %v2487
    %v2648 = vunpack.c.l.b16 %v2488
    %v2649 = vunpack.c.l.b16 %v2489
    %v2650 = vunpack.c.l.b16 %v2490
    %v2651 = vunpack.c.l.b16 %v2491
    %v2652 = vunpack.c.l.b16 %v2492
    %v2653 = vunpack.c.l.b16 %v2493
    %v2654 = vunpack.c.l.b16 %v2494
    %v2655 = vunpack.c.l.b16 %v2495
    %v2656 = vunpack.c.l.b16 %v2496
    %v2657 = vunpack.c.l.b16 %v2497
    %v2658 = vunpack.c.l.b16 %v2498
    %v2659 = vunpack.c.l.b16 %v2499
    %v2660 = vunpack.c.l.b16 %v2500
    %v2661 = vunpack.c.l.b16 %v2501
    %v2662 = vunpack.c.l.b16 %v2502
    %v2663 = vunpack.c.l.b16 %v2503
    %v2664 = vunpack.c.l.b16 %v2504
    %v2665 = vunpack.c.l.b16 %v2505
    %v2666 = vunpack.c.l.b16 %v2506
    %v2667 = vunpack.c.l.b16 %v2507
    %v2668 = vunpack.c.l.b16 %v2508
    %v2669 = vunpack.c.l.b16 %v2509
    %v2670 = vunpack.c.l.b16 %v2510
    %v2671 = vunpack.c.l.b16 %v2511
    %v2672 = vunpack.c.l.b16 %v2512
    %v2673 = vunpack.c.l.b16 %v2513
    %v2674 = vunpack.c.l.b16 %v2514
    %v2675 = vunpack.c.l.b16 %v2515
    %v2676 = vunpack.c.l.b16 %v2516
    %v2677 = vunpack.c.l.b16 %v2517
    %v2678 = vunpack.c.l.b16 %v2518
    %v2679 = vunpack.c.l.b16 %v2519
    %v2680 = vunpack.c.l.b16 %v2520
    %v2681 = vunpack.c.l.b16 %v2521
    %v2682 = vunpack.c.l.b16 %v2522
    %v2683 = vunpack.c.l.b16 %v2523
    %v2684 = vunpack.c.l.b16 %v2524
    %v2685 = vunpack.c.l.b16 %v2525
    %v2686 = vunpack.c.l.b16 %v2526
    %v2687 = vunpack.c.l.b16 %v2527
    %v2688 = vunpack.c.l.b16 %v2528
    %v2689 = vunpack.c.l.b16 %v2529
    %v2690 = vunpack.c.l.b16 %v2530
    %v2691 = vunpack.c.l.b16 %v2531
    %v2692 = vunpack.c.l.b16 %v2532
    %v2693 = vunpack.c.l.b16 %v2533
    %v2694 = vunpack.c.l.b16 %v2534
    %v2695 = vunpack.c.l.b16 %v2535
    %v2696 = vunpack.c.l.b16 %v2536
    %v2697 = vunpack.c.l.b16 %v2537
    %v2698 = vunpack.c.l.b16 %v2538
    %v2699 = vunpack.c.l.b16 %v2539
    %v2700 = vunpack.c.l.b16 %v2540
    %v2701 = vunpack.c.l.b16 %v2541
    %v2702 = vunpack.c.l.b16 %v2542
    %v2703 = vunpack.c.l.b16 %v2543
    %v2704 = vunpack.c.l.b16 %v2544
    %v2705 = vunpack.c.l.b16 %v2545
    %v2706 = vunpack.c.l.b16 %v2546
    %v2707 = vunpack.c.l.b16 %v2547
    %v2708 = vunpack.c.l.b16 %v2548
    %v2709 = vpack.c.b16 %v2630, %v2629
    %v2710 = vpack.c.b16 %v2632, %v2631
    %v2711 = vpack.c.b16 %v2634, %v2633
    %v2712 = vpack.c.b16 %v2636, %v2635
    %v2713 = vpack.c.b16 %v2638, %v2637
    %v2714 = vpack.c.b16 %v2640, %v2639
    %v2715 = vpack.c.b16 %v2642, %v2641
    %v2716 = vpack.c.b16 %v2644, %v2643
    %v2717 = vpack.c.b16 %v2646, %v2645
    %v2718 = vpack.c.b16 %v2648, %v2647
    %v2719 = vpack.c.b16 %v2650, %v2649
    %v2720 = vpack.c.b16 %v2652, %v2651
    %v2721 = vpack.c.b16 %v2654, %v2653
    %v2722 = vpack.c.b16 %v2656, %v2655
    %v2723 = vpack.c.b16 %v2658, %v2657
    %v2724 = vpack.c.b16 %v2660, %v2659
    %v2725 = vpack.c.b16 %v2662, %v2661
    %v2726 = vpack.c.b16 %v2664, %v2663
    %v2727 = vpack.c.b16 %v2666, %v2665
    %v2728 = vpack.c.b16 %v2668, %v2667
    %v2729 = vpack.c.b16 %v2670, %v2669
    %v2730 = vpack.c.b16 %v2672, %v2671
    %v2731 = vpack.c.b16 %v2674, %v2673
    %v2732 = vpack.c.b16 %v2676, %v2675
    %v2733 = vpack.c.b16 %v2678, %v2677
    %v2734 = vpack.c.b16 %v2680, %v2679
    %v2735 = vpack.c.b16 %v2682, %v2681
    %v2736 = vpack.c.b16 %v2684, %v2683
    %v2737 = vpack.c.b16 %v2686, %v2685
    %v2738 = vpack.c.b16 %v2688, %v2687
    %v2739 = vpack.c.b16 %v2690, %v2689
    %v2740 = vpack.c.b16 %v2692, %v2691
    %v2741 = vpack.c.b16 %v2694, %v2693
    %v2742 = vpack.c.b16 %v2696, %v2695
    %v2743 = vpack.c.b16 %v2698, %v2697
    %v2744 = vpack.c.b16 %v2700, %v2699
    %v2745 = vpack.c.b16 %v2702, %v2701
    %v2746 = vpack.c.b16 %v2704, %v2703
    %v2747 = vpack.c.b16 %v2706, %v2705
    %v2748 = vpack.c.b16 %v2708, %v2707
    %2789 = vmatprep.subr.bf16.mxu0 0
    %2790 = vmatpush1.bf16.msra.mxu0 %v2709
    %2791 = vmatprep.subr.bf16.mxu0 0
    %2792 = vmatpush1.bf16.msra.mxu0 %v2710
    %2793 = vmatprep.subr.bf16.mxu0 0
    %2794 = vmatpush1.bf16.msra.mxu0 %v2711
    %2795 = vmatprep.subr.bf16.mxu0 0
    %2796 = vmatpush1.bf16.msra.mxu0 %v2712
    %2797 = vmatprep.subr.bf16.mxu0 0
    %2798 = vmatpush1.bf16.msra.mxu0 %v2713
    %2799 = vmatprep.subr.bf16.mxu0 0
    %2800 = vmatpush1.bf16.msra.mxu0 %v2714
    %2801 = vmatprep.subr.bf16.mxu0 0
    %2802 = vmatpush1.bf16.msra.mxu0 %v2715
    %2803 = vmatprep.subr.bf16.mxu0 0
    %2804 = vmatpush1.bf16.msra.mxu0 %v2716
    %2805 = vmatprep.subr.bf16.mxu0 0
    %2806 = vmatpush1.bf16.msra.mxu0 %v2717
    %2807 = vmatprep.subr.bf16.mxu0 0
    %2808 = vmatpush1.bf16.msra.mxu0 %v2718
    %2809 = vmatprep.subr.bf16.mxu0 0
    %2810 = vmatpush1.bf16.msra.mxu0 %v2719
    %2811 = vmatprep.subr.bf16.mxu0 0
    %2812 = vmatpush1.bf16.msra.mxu0 %v2720
    %2813 = vmatprep.subr.bf16.mxu0 0
    %2814 = vmatpush1.bf16.msra.mxu0 %v2721
    %2815 = vmatprep.subr.bf16.mxu0 0
    %2816 = vmatpush1.bf16.msra.mxu0 %v2722
    %2817 = vmatprep.subr.bf16.mxu0 0
    %2818 = vmatpush1.bf16.msra.mxu0 %v2723
    %2819 = vmatprep.subr.bf16.mxu0 0
    %2820 = vmatpush1.bf16.msra.mxu0 %v2724
    %2821 = vmatprep.mubr.bf16.mxu0 %v2460
    %2822 = vmatmul.mubr.bf16.gmra.mrb[0].mxu0 %v2459
    %v2823 = vpop.f32.mrb[0].mxu0
    %v2824 = vadd.f32 0.0, %v2823
    %v2825 = vpop.f32.mrb[0].mxu0
    %v2826 = vpop.f32.mrb[0].mxu0
    %v2827 = vadd.f32 0.0, %v2826
    %v2828 = vpop.f32.mrb[0].mxu0
    %2829 = vmatprep.mubr.bf16.mxu0 %v2465
    %2830 = vmatmul.mubr.bf16.gmra.mrb[0].mxu0 %v2464
    %v2831 = vpop.f32.mrb[0].mxu0
    %v2832 = vadd.f32 0.0, %v2831
    %v2833 = vpop.f32.mrb[0].mxu0
    %v2834 = vpop.f32.mrb[0].mxu0
    %v2835 = vadd.f32 0.0, %v2834
    %v2836 = vpop.f32.mrb[0].mxu0
    %2837 = vdwg.mxu0
    %2838 = vmatprep.subr.bf16.mxu0 0
    %2839 = vmatpush1.bf16.msra.mxu0 %v2725
    %2840 = vmatprep.subr.bf16.mxu0 0
    %2841 = vmatpush1.bf16.msra.mxu0 %v2726
    %2842 = vmatprep.subr.bf16.mxu0 0
    %2843 = vmatpush1.bf16.msra.mxu0 %v2727
    %2844 = vmatprep.subr.bf16.mxu0 0
    %2845 = vmatpush1.bf16.msra.mxu0 %v2728
    %2846 = vmatprep.subr.bf16.mxu0 0
    %2847 = vmatpush1.bf16.msra.mxu0 %v2729
    %2848 = vmatprep.subr.bf16.mxu0 0
    %2849 = vmatpush1.bf16.msra.mxu0 %v2730
    %2850 = vmatprep.subr.bf16.mxu0 0
    %2851 = vmatpush1.bf16.msra.mxu0 %v2731
    %2852 = vmatprep.subr.bf16.mxu0 0
    %2853 = vmatpush1.bf16.msra.mxu0 %v2732
    %2854 = vmatprep.subr.bf16.mxu0 0
    %2855 = vmatpush1.bf16.msra.mxu0 %v2733
    %2856 = vmatprep.subr.bf16.mxu0 0
    %2857 = vmatpush1.bf16.msra.mxu0 %v2734
    %2858 = vmatprep.subr.bf16.mxu0 0
    %2859 = vmatpush1.bf16.msra.mxu0 %v2735
    %2860 = vmatprep.subr.bf16.mxu0 0
    %2861 = vmatpush1.bf16.msra.mxu0 %v2736
    %2862 = vmatprep.subr.bf16.mxu0 0
    %2863 = vmatpush1.bf16.msra.mxu0 %v2737
    %2864 = vmatprep.subr.bf16.mxu0 0
    %2865 = vmatpush1.bf16.msra.mxu0 %v2738
    %2866 = vmatprep.subr.bf16.mxu0 0
    %2867 = vmatpush1.bf16.msra.mxu0 %v2739
    %2868 = vmatprep.subr.bf16.mxu0 0
    %2869 = vmatpush1.bf16.msra.mxu0 %v2740
    %2870 = vmatprep.mubr.bf16.mxu0 %v2462
    %2871 = vmatmul.mubr.bf16.gmra.mrb[0].mxu0 %v2461
    %v2872 = vpop.f32.mrb[0].mxu0
    %v2873 = vadd.f32 %v2824, %v2872
    %v2874 = vpop.f32.mrb[0].mxu0
    %v2875 = vpop.f32.mrb[0].mxu0
    %v2876 = vadd.f32 %v2827, %v2875
    %v2877 = vpop.f32.mrb[0].mxu0
    %2878 = vmatprep.mubr.bf16.mxu0 %v2467
    %2879 = vmatmul.mubr.bf16.gmra.mrb[0].mxu0 %v2466
    %v2880 = vpop.f32.mrb[0].mxu0
    %v2881 = vadd.f32 %v2832, %v2880
    %v2882 = vpop.f32.mrb[0].mxu0
    %v2883 = vpop.f32.mrb[0].mxu0
    %v2884 = vadd.f32 %v2835, %v2883
    %v2885 = vpop.f32.mrb[0].mxu0
    %2886 = vdwg.mxu0
    %2887 = vmatprep.subr.bf16.mxu0 0
    %2888 = vmatpush1.bf16.msra.mxu0 %v2741
    %2889 = vmatprep.subr.bf16.mxu0 0
    %2890 = vmatpush1.bf16.msra.mxu0 %v2742
    %2891 = vmatprep.subr.bf16.mxu0 0
    %2892 = vmatpush1.bf16.msra.mxu0 %v2743
    %2893 = vmatprep.subr.bf16.mxu0 0
    %2894 = vmatpush1.bf16.msra.mxu0 %v2744
    %2895 = vmatprep.subr.bf16.mxu0 0
    %2896 = vmatpush1.bf16.msra.mxu0 %v2745
    %2897 = vmatprep.subr.bf16.mxu0 0
    %2898 = vmatpush1.bf16.msra.mxu0 %v2746
    %2899 = vmatprep.subr.bf16.mxu0 0
    %2900 = vmatpush1.bf16.msra.mxu0 %v2747
    %2901 = vmatprep.subr.bf16.mxu0 0
    %2902 = vmatpush1.bf16.msra.mxu0 %v2748
    %2903 = vmatprep.subr.bf16.mxu0 0
    %2904 = vmatpush1.bf16.msra.mxu0 0
    %2905 = vmatprep.subr.bf16.mxu0 0
    %2906 = vmatpush1.bf16.msra.mxu0 0
    %2907 = vmatprep.subr.bf16.mxu0 0
    %2908 = vmatpush1.bf16.msra.mxu0 0
    %2909 = vmatprep.subr.bf16.mxu0 0
    %2910 = vmatpush1.bf16.msra.mxu0 0
    %2911 = vmatprep.subr.bf16.mxu0 0
    %2912 = vmatpush1.bf16.msra.mxu0 0
    %2913 = vmatprep.subr.bf16.mxu0 0
    %2914 = vmatpush1.bf16.msra.mxu0 0
    %2915 = vmatprep.subr.bf16.mxu0 0
    %2916 = vmatpush1.bf16.msra.mxu0 0
    %2917 = vmatprep.subr.bf16.mxu0 0
    %2918 = vmatpush1.bf16.msra.mxu0 0
    %2919 = vmatprep.mubr.bf16.mxu0 0
    %2920 = vmatmul.mubr.bf16.gmra.mrb[0].mxu0 %v2463
    %v2921 = vpop.f32.mrb[0].mxu0
    %v2922 = vadd.f32 %v2873, %v2921
    %v2923 = vpop.f32.mrb[0].mxu0
    %v2924 = vpop.f32.mrb[0].mxu0
    %v2925 = vadd.f32 %v2876, %v2924
    %v2926 = vpop.f32.mrb[0].mxu0
    %2927 = vmatprep.mubr.bf16.mxu0 0
    %2928 = vmatmul.mubr.bf16.gmra.mrb[0].mxu0 %v2468
    %v2929 = vpop.f32.mrb[0].mxu0
    %v2930 = vadd.f32 %v2881, %v2929
    %v2931 = vpop.f32.mrb[0].mxu0
    %v2932 = vpop.f32.mrb[0].mxu0
    %v2933 = vadd.f32 %v2884, %v2932
    %v2934 = vpop.f32.mrb[0].mxu0
    %2935 = vdwg.mxu0
    %v2936 = vadd.f32 %v2922, %v2925
    %v2937 = vadd.f32 %v2936, %v2930
    %v2938 = vadd.f32 %v2937, %v2933
    %v2939 = vrot.slane %v2938, 4
    %v2940 = vadd.f32 %v2938, %v2939
    %v2941 = vrot.slane %v2940, 2
    %v2942 = vadd.f32 %v2940, %v2941
    %v2943 = vrot.slane %v2942, 1
    %v2944 = vadd.f32 %v2942, %v2943
    %v2945 = vmul.f32 %v2922, %v2922
    %v2946 = vmul.f32 %v2925, %v2925
    %v2947 = vmul.f32 %v2930, %v2930
    %v2948 = vmul.f32 %v2933, %v2933
    %v2949 = vadd.f32 %v2945, %v2946
    %v2950 = vadd.f32 %v2949, %v2947
    %v2951 = vadd.f32 %v2950, %v2948
    %v2952 = vrot.slane %v2951, 4
    %v2953 = vadd.f32 %v2951, %v2952
    %v2954 = vrot.slane %v2953, 2
    %v2955 = vadd.f32 %v2953, %v2954
    %v2956 = vrot.slane %v2955, 1
    %v2957 = vadd.f32 %v2955, %v2956
    %2958 = vrot.lane.b32.xlu0 %v2944, 8
    %v2959 = vpop.permute.xlu0 %2958
    %v2960 = vadd.f32 %v2944, %v2959
    %2961 = vrot.lane.b32.xlu0 %v2957, 8
    %v2962 = vpop.permute.xlu0 %2961
    %v2963 = vadd.f32 %v2957, %v2962
    %2964 = vrot.lane.b32.xlu0 %v2960, 16
    %v2965 = vpop.permute.xlu0 %2964
    %v2966 = vadd.f32 %v2960, %v2965
    %2967 = vrot.lane.b32.xlu0 %v2963, 16
    %v2968 = vpop.permute.xlu0 %2967
    %v2969 = vadd.f32 %v2963, %v2968
    %2970 = vrot.lane.b32.xlu0 %v2966, 32
    %v2971 = vpop.permute.xlu0 %2970
    %v2972 = vadd.f32 %v2966, %v2971
    %2973 = vrot.lane.b32.xlu0 %v2969, 32
    %v2974 = vpop.permute.xlu0 %2973
    %v2975 = vadd.f32 %v2969, %v2974
    %2976 = vrot.lane.b32.xlu0 %v2972, 64
    %v2977 = vpop.permute.xlu0 %2976
    %v2978 = vadd.f32 %v2972, %v2977
    %2979 = vrot.lane.b32.xlu0 %v2975, 64
    %v2980 = vpop.permute.xlu0 %2979
    %v2981 = vadd.f32 %v2975, %v2980
    %v2982 = vmul.f32 %v2978, 0.001953125
    %v2983 = vmul.f32 %v2981, 0.001953125
    %v2984 = vmul.f32 %v2982, %v2982
    %v2985 = vsub.f32 %v2983, %v2984
    %v2986 = vmax.f32 %v2985, 0.0
    %v2987 = vld [vmem:[#allocation8] sm:$0x1]
    %v2988 = vadd.f32 %v2986, 1e-05
    %v2989 = vrsqrt.pop %v2988
    %v2990 = vmul.f32 %v2987, %v2989
    %v2991 = vld [vmem:[#allocation9] sm:$0x1]
    %v2992 = vmul.f32 %v2982, %v2990
    %v2993 = vsub.f32 %v2991, %v2992
    %v2995 = vlaneseq
    %v2996 = vshrl.u32 %v2995, 7
    %v2997 = vsub.s32 0, %v2996
    %v2998 = vrot.slane %v2990, %v2997
    %v3000 = vmul.f32 %v2922, %v2998
    %v3001 = vmul.f32 %v2925, %v2998
    %v3002 = vmul.f32 %v2930, %v2998
    %v3003 = vmul.f32 %v2933, %v2998
    %v3005 = vlaneseq
    %v3006 = vshrl.u32 %v3005, 7
    %v3007 = vsub.s32 0, %v3006
    %v3008 = vrot.slane %v2993, %v3007
    %v3010 = vadd.f32 %v3000, %v3008
    %v3011 = vadd.f32 %v3001, %v3008
    %v3012 = vadd.f32 %v3002, %v3008
    %v3013 = vadd.f32 %v3003, %v3008
    %v3014 = vmul.f32 %v3010, 0.01
    %v3015 = vmul.f32 %v3011, 0.01
    %v3016 = vmul.f32 %v3012, 0.01
    %v3017 = vmul.f32 %v3013, 0.01
    %v3018 = vmax.f32 %v3010, %v3014
    %v3019 = vmax.f32 %v3011, %v3015
    %v3020 = vmax.f32 %v3012, %v3016
    %v3021 = vmax.f32 %v3013, %v3017
    %3022 = vst [vmem:[#allocation3 + $0x3] sm:$0xff] %v3018
    %3023 = vst [vmem:[#allocation3 + $0xb] sm:$0xff] %v3019
    %3024 = vst [vmem:[#allocation3 + $0x1b] sm:$0xff] %v3020
    %3025 = vst [vmem:[#allocation3 + $0x23] sm:$0xff] %v3021
    %v3026 = vld [vmem:[#allocation3] sm:$0xff]
    %v3027 = vld [vmem:[#allocation3 + $0x8] sm:$0xff]
    %v3028 = vld [vmem:[#allocation3 + $0x10] sm:$0x3f]
    %v3029 = vld [vmem:[#allocation3 + $0x18] sm:$0xff]
    %v3030 = vld [vmem:[#allocation3 + $0x20] sm:$0xff]
    %v3031 = vld [vmem:[#allocation3 + $0x28] sm:$0x3f]
    %v3038 = vrot.slane %v3026, 1
    %v3039 = vrot.slane %v3027, 1
    %v3040 = vsel %vm376, %v3038, %v3039
    %v3041 = vrot.slane %v3028, 1
    %v3042 = vsel %vm376, %v3039, %v3041
    %v3043 = vrot.slane %v3029, 1
    %v3044 = vrot.slane %v3030, 1
    %v3045 = vsel %vm376, %v3043, %v3044
    %v3046 = vrot.slane %v3031, 1
    %v3047 = vsel %vm376, %v3044, %v3046
    %v3048 = vrot.slane %v3026, 2
    %v3049 = vrot.slane %v3027, 2
    %v3050 = vsel %vm391, %v3048, %v3049
    %v3051 = vrot.slane %v3028, 2
    %v3052 = vsel %vm391, %v3049, %v3051
    %v3053 = vrot.slane %v3029, 2
    %v3054 = vrot.slane %v3030, 2
    %v3055 = vsel %vm391, %v3053, %v3054
    %v3056 = vrot.slane %v3031, 2
    %v3057 = vsel %vm391, %v3054, %v3056
    %v3058 = vrot.slane %v3040, 2
    %v3059 = vrot.slane %v3042, 2
    %v3060 = vsel %vm391, %v3058, %v3059
    %v3061 = vrot.slane %v3050, 2
    %v3062 = vrot.slane %v3052, 2
    %v3063 = vsel %vm391, %v3061, %v3062
    %v3064 = vrot.slane %v3041, 2
    %v3065 = vsel %vm391, %v3059, %v3064
    %v3066 = vrot.slane %v3051, 2
    %v3067 = vsel %vm391, %v3062, %v3066
    %v3068 = vrot.slane %v3045, 2
    %v3069 = vrot.slane %v3047, 2
    %v3070 = vsel %vm391, %v3068, %v3069
    %v3071 = vrot.slane %v3055, 2
    %v3072 = vrot.slane %v3057, 2
    %v3073 = vsel %vm391, %v3071, %v3072
    %v3074 = vrot.slane %v3046, 2
    %v3075 = vsel %vm391, %v3069, %v3074
    %v3076 = vrot.slane %v3056, 2
    %v3077 = vsel %vm391, %v3072, %v3076
    %v3090 = vpack.c.bf16 %v3052, %v3050
    %v3091 = vpack.c.bf16 %v3065, %v3060
    %v3092 = vpack.c.bf16 %v3067, %v3063
    %v3093 = vpack.c.bf16 %v3057, %v3055
    %v3094 = vpack.c.bf16 %v3075, %v3070
    %v3095 = vpack.c.bf16 %v3077, %v3073
    %v3096 = vld [vmem:[%s27] sm:$0xf]
    %v3097 = vld [vmem:[%s27 + $0x4] sm:$0xf]
    %v3098 = vld [vmem:[%s27 + $0x8] sm:$0xf]
    %v3099 = vld [vmem:[%s27 + $0xc] sm:$0xf]
    %v3100 = vld [vmem:[%s27 + $0x10] sm:$0xf]
    %v3101 = vld [vmem:[%s27 + $0x14] sm:$0xf]
    %v3102 = vld [vmem:[%s27 + $0x18] sm:$0xf]
    %v3103 = vld [vmem:[%s27 + $0x1c] sm:$0xf]
    %v3104 = vld [vmem:[%s27 + $0x20] sm:$0xf]
    %v3105 = vld [vmem:[%s27 + $0x24] sm:$0xf]
    %v3106 = vld [vmem:[%s27 + $0x28] sm:$0xf]
    %v3107 = vld [vmem:[%s27 + $0x2c] sm:$0xf]
    %v3108 = vld [vmem:[%s27 + $0x30] sm:$0xf]
    %v3109 = vld [vmem:[%s27 + $0x34] sm:$0xf]
    %v3110 = vld [vmem:[%s27 + $0x38] sm:$0xf]
    %v3111 = vld [vmem:[%s27 + $0x3c] sm:$0xf]
    %v3112 = vld [vmem:[%s27 + $0x40] sm:$0xf]
    %v3113 = vld [vmem:[%s27 + $0x44] sm:$0xf]
    %v3114 = vld [vmem:[%s27 + $0x48] sm:$0xf]
    %v3115 = vld [vmem:[%s27 + $0x4c] sm:$0xf]
    %v3116 = vld [vmem:[%s27 + $0x50] sm:$0xf]
    %v3117 = vld [vmem:[%s27 + $0x54] sm:$0xf]
    %v3118 = vld [vmem:[%s27 + $0x58] sm:$0xf]
    %v3119 = vld [vmem:[%s27 + $0x5c] sm:$0xf]
    %v3120 = vld [vmem:[%s27 + $0x60] sm:$0xf]
    %v3121 = vld [vmem:[%s27 + $0x64] sm:$0xf]
    %v3122 = vld [vmem:[%s27 + $0x68] sm:$0xf]
    %v3123 = vld [vmem:[%s27 + $0x6c] sm:$0xf]
    %v3124 = vld [vmem:[%s27 + $0x70] sm:$0xf]
    %v3125 = vld [vmem:[%s27 + $0x74] sm:$0xf]
    %v3126 = vld [vmem:[%s27 + $0x78] sm:$0xf]
    %v3127 = vld [vmem:[%s27 + $0x7c] sm:$0xf]
    %v3128 = vld [vmem:[%s27 + $0x80] sm:$0xf]
    %v3129 = vld [vmem:[%s27 + $0x84] sm:$0xf]
    %v3130 = vld [vmem:[%s27 + $0x88] sm:$0xf]
    %v3131 = vld [vmem:[%s27 + $0x8c] sm:$0xf]
    %v3132 = vld [vmem:[%s27 + $0x90] sm:$0xf]
    %v3133 = vld [vmem:[%s27 + $0x94] sm:$0xf]
    %v3134 = vld [vmem:[%s27 + $0x98] sm:$0xf]
    %v3135 = vld [vmem:[%s27 + $0x9c] sm:$0xf]
    %v3136 = vld [vmem:[%s27 + $0xa0] sm:$0xf]
    %v3137 = vld [vmem:[%s27 + $0xa4] sm:$0xf]
    %v3138 = vld [vmem:[%s27 + $0xa8] sm:$0xf]
    %v3139 = vld [vmem:[%s27 + $0xac] sm:$0xf]
    %v3140 = vld [vmem:[%s27 + $0xb0] sm:$0xf]
    %v3141 = vld [vmem:[%s27 + $0xb4] sm:$0xf]
    %v3142 = vld [vmem:[%s27 + $0xb8] sm:$0xf]
    %v3143 = vld [vmem:[%s27 + $0xbc] sm:$0xf]
    %v3192 = vunpack.c.l.b16 %v3096
    %v3193 = vunpack.c.l.b16 %v3097
    %v3194 = vunpack.c.l.b16 %v3098
    %v3195 = vunpack.c.l.b16 %v3099
    %v3196 = vunpack.c.l.b16 %v3100
    %v3197 = vunpack.c.l.b16 %v3101
    %v3198 = vunpack.c.l.b16 %v3102
    %v3199 = vunpack.c.l.b16 %v3103
    %v3200 = vunpack.c.l.b16 %v3104
    %v3201 = vunpack.c.l.b16 %v3105
    %v3202 = vunpack.c.l.b16 %v3106
    %v3203 = vunpack.c.l.b16 %v3107
    %v3204 = vunpack.c.l.b16 %v3108
    %v3205 = vunpack.c.l.b16 %v3109
    %v3206 = vunpack.c.l.b16 %v3110
    %v3207 = vunpack.c.l.b16 %v3111
    %v3208 = vunpack.c.l.b16 %v3112
    %v3209 = vunpack.c.l.b16 %v3113
    %v3210 = vunpack.c.l.b16 %v3114
    %v3211 = vunpack.c.l.b16 %v3115
    %v3212 = vunpack.c.l.b16 %v3116
    %v3213 = vunpack.c.l.b16 %v3117
    %v3214 = vunpack.c.l.b16 %v3118
    %v3215 = vunpack.c.l.b16 %v3119
    %v3216 = vunpack.c.l.b16 %v3120
    %v3217 = vunpack.c.l.b16 %v3121
    %v3218 = vunpack.c.l.b16 %v3122
    %v3219 = vunpack.c.l.b16 %v3123
    %v3220 = vunpack.c.l.b16 %v3124
    %v3221 = vunpack.c.l.b16 %v3125
    %v3222 = vunpack.c.l.b16 %v3126
    %v3223 = vunpack.c.l.b16 %v3127
    %v3224 = vunpack.c.l.b16 %v3128
    %v3225 = vunpack.c.l.b16 %v3129
    %v3226 = vunpack.c.l.b16 %v3130
    %v3227 = vunpack.c.l.b16 %v3131
    %v3228 = vunpack.c.l.b16 %v3132
    %v3229 = vunpack.c.l.b16 %v3133
    %v3230 = vunpack.c.l.b16 %v3134
    %v3231 = vunpack.c.l.b16 %v3135
    %v3232 = vunpack.c.l.b16 %v3136
    %v3233 = vunpack.c.l.b16 %v3137
    %v3234 = vunpack.c.l.b16 %v3138
    %v3235 = vunpack.c.l.b16 %v3139
    %v3236 = vunpack.c.l.b16 %v3140
    %v3237 = vunpack.c.l.b16 %v3141
    %v3238 = vunpack.c.l.b16 %v3142
    %v3239 = vunpack.c.l.b16 %v3143
    %v3240 = vpack.c.b16 %v3193, %v3192
    %v3241 = vpack.c.b16 %v3195, %v3194
    %v3242 = vpack.c.b16 %v3197, %v3196
    %v3243 = vpack.c.b16 %v3199, %v3198
    %v3244 = vpack.c.b16 %v3201, %v3200
    %v3245 = vpack.c.b16 %v3203, %v3202
    %v3246 = vpack.c.b16 %v3205, %v3204
    %v3247 = vpack.c.b16 %v3207, %v3206
    %v3248 = vpack.c.b16 %v3209, %v3208
    %v3249 = vpack.c.b16 %v3211, %v3210
    %v3250 = vpack.c.b16 %v3213, %v3212
    %v3251 = vpack.c.b16 %v3215, %v3214
    %v3252 = vpack.c.b16 %v3217, %v3216
    %v3253 = vpack.c.b16 %v3219, %v3218
    %v3254 = vpack.c.b16 %v3221, %v3220
    %v3255 = vpack.c.b16 %v3223, %v3222
    %v3256 = vpack.c.b16 %v3225, %v3224
    %v3257 = vpack.c.b16 %v3227, %v3226
    %v3258 = vpack.c.b16 %v3229, %v3228
    %v3259 = vpack.c.b16 %v3231, %v3230
    %v3260 = vpack.c.b16 %v3233, %v3232
    %v3261 = vpack.c.b16 %v3235, %v3234
    %v3262 = vpack.c.b16 %v3237, %v3236
    %v3263 = vpack.c.b16 %v3239, %v3238
    %3288 = vmatprep.subr.bf16.mxu0 0
    %3289 = vmatpush1.bf16.msra.mxu0 %v3240
    %3290 = vmatprep.subr.bf16.mxu0 0
    %3291 = vmatpush1.bf16.msra.mxu0 %v3241
    %3292 = vmatprep.subr.bf16.mxu0 0
    %3293 = vmatpush1.bf16.msra.mxu0 %v3242
    %3294 = vmatprep.subr.bf16.mxu0 0
    %3295 = vmatpush1.bf16.msra.mxu0 %v3243
    %3296 = vmatprep.subr.bf16.mxu0 0
    %3297 = vmatpush1.bf16.msra.mxu0 %v3244
    %3298 = vmatprep.subr.bf16.mxu0 0
    %3299 = vmatpush1.bf16.msra.mxu0 %v3245
    %3300 = vmatprep.subr.bf16.mxu0 0
    %3301 = vmatpush1.bf16.msra.mxu0 %v3246
    %3302 = vmatprep.subr.bf16.mxu0 0
    %3303 = vmatpush1.bf16.msra.mxu0 %v3247
    %3304 = vmatprep.subr.bf16.mxu0 0
    %3305 = vmatpush1.bf16.msra.mxu0 %v3248
    %3306 = vmatprep.subr.bf16.mxu0 0
    %3307 = vmatpush1.bf16.msra.mxu0 %v3249
    %3308 = vmatprep.subr.bf16.mxu0 0
    %3309 = vmatpush1.bf16.msra.mxu0 %v3250
    %3310 = vmatprep.subr.bf16.mxu0 0
    %3311 = vmatpush1.bf16.msra.mxu0 %v3251
    %3312 = vmatprep.subr.bf16.mxu0 0
    %3313 = vmatpush1.bf16.msra.mxu0 %v3252
    %3314 = vmatprep.subr.bf16.mxu0 0
    %3315 = vmatpush1.bf16.msra.mxu0 %v3253
    %3316 = vmatprep.subr.bf16.mxu0 0
    %3317 = vmatpush1.bf16.msra.mxu0 %v3254
    %3318 = vmatprep.subr.bf16.mxu0 0
    %3319 = vmatpush1.bf16.msra.mxu0 %v3255
    %3320 = vmatprep.mubr.bf16.mxu0 %v3091
    %3321 = vmatmul.mubr.bf16.gmra.mrb[0].mxu0 %v3090
    %v3322 = vpop.f32.mrb[0].mxu0
    %v3323 = vadd.f32 0.0, %v3322
    %v3324 = vpop.f32.mrb[0].mxu0
    %v3325 = vpop.f32.mrb[0].mxu0
    %v3326 = vadd.f32 0.0, %v3325
    %v3327 = vpop.f32.mrb[0].mxu0
    %3328 = vmatprep.mubr.bf16.mxu0 %v3094
    %3329 = vmatmul.mubr.bf16.gmra.mrb[0].mxu0 %v3093
    %v3330 = vpop.f32.mrb[0].mxu0
    %v3331 = vadd.f32 0.0, %v3330
    %v3332 = vpop.f32.mrb[0].mxu0
    %v3333 = vpop.f32.mrb[0].mxu0
    %v3334 = vadd.f32 0.0, %v3333
    %v3335 = vpop.f32.mrb[0].mxu0
    %3336 = vdwg.mxu0
    %3337 = vmatprep.subr.bf16.mxu0 0
    %3338 = vmatpush1.bf16.msra.mxu0 %v3256
    %3339 = vmatprep.subr.bf16.mxu0 0
    %3340 = vmatpush1.bf16.msra.mxu0 %v3257
    %3341 = vmatprep.subr.bf16.mxu0 0
    %3342 = vmatpush1.bf16.msra.mxu0 %v3258
    %3343 = vmatprep.subr.bf16.mxu0 0
    %3344 = vmatpush1.bf16.msra.mxu0 %v3259
    %3345 = vmatprep.subr.bf16.mxu0 0
    %3346 = vmatpush1.bf16.msra.mxu0 %v3260
    %3347 = vmatprep.subr.bf16.mxu0 0
    %3348 = vmatpush1.bf16.msra.mxu0 %v3261
    %3349 = vmatprep.subr.bf16.mxu0 0
    %3350 = vmatpush1.bf16.msra.mxu0 %v3262
    %3351 = vmatprep.subr.bf16.mxu0 0
    %3352 = vmatpush1.bf16.msra.mxu0 %v3263
    %3353 = vmatprep.subr.bf16.mxu0 0
    %3354 = vmatpush1.bf16.msra.mxu0 0
    %3355 = vmatprep.subr.bf16.mxu0 0
    %3356 = vmatpush1.bf16.msra.mxu0 0
    %3357 = vmatprep.subr.bf16.mxu0 0
    %3358 = vmatpush1.bf16.msra.mxu0 0
    %3359 = vmatprep.subr.bf16.mxu0 0
    %3360 = vmatpush1.bf16.msra.mxu0 0
    %3361 = vmatprep.subr.bf16.mxu0 0
    %3362 = vmatpush1.bf16.msra.mxu0 0
    %3363 = vmatprep.subr.bf16.mxu0 0
    %3364 = vmatpush1.bf16.msra.mxu0 0
    %3365 = vmatprep.subr.bf16.mxu0 0
    %3366 = vmatpush1.bf16.msra.mxu0 0
    %3367 = vmatprep.subr.bf16.mxu0 0
    %3368 = vmatpush1.bf16.msra.mxu0 0
    %3369 = vmatprep.mubr.bf16.mxu0 0
    %3370 = vmatmul.mubr.bf16.gmra.mrb[0].mxu0 %v3092
    %v3371 = vpop.f32.mrb[0].mxu0
    %v3372 = vadd.f32 %v3323, %v3371
    %v3373 = vpop.f32.mrb[0].mxu0
    %v3374 = vpop.f32.mrb[0].mxu0
    %v3375 = vadd.f32 %v3326, %v3374
    %v3376 = vpop.f32.mrb[0].mxu0
    %3377 = vmatprep.mubr.bf16.mxu0 0
    %3378 = vmatmul.mubr.bf16.gmra.mrb[0].mxu0 %v3095
    %v3379 = vpop.f32.mrb[0].mxu0
    %v3380 = vadd.f32 %v3331, %v3379
    %v3381 = vpop.f32.mrb[0].mxu0
    %v3382 = vpop.f32.mrb[0].mxu0
    %v3383 = vadd.f32 %v3334, %v3382
    %v3384 = vpop.f32.mrb[0].mxu0
    %3385 = vdwg.mxu0
    %v3386 = vadd.f32 %v3372, %v3375
    %v3387 = vadd.f32 %v3386, %v3380
    %v3388 = vadd.f32 %v3387, %v3383
    %v3389 = vrot.slane %v3388, 4
    %v3390 = vadd.f32 %v3388, %v3389
    %v3391 = vrot.slane %v3390, 2
    %v3392 = vadd.f32 %v3390, %v3391
    %v3393 = vrot.slane %v3392, 1
    %v3394 = vadd.f32 %v3392, %v3393
    %v3395 = vmul.f32 %v3372, %v3372
    %v3396 = vmul.f32 %v3375, %v3375
    %v3397 = vmul.f32 %v3380, %v3380
    %v3398 = vmul.f32 %v3383, %v3383
    %v3399 = vadd.f32 %v3395, %v3396
    %v3400 = vadd.f32 %v3399, %v3397
    %v3401 = vadd.f32 %v3400, %v3398
    %v3402 = vrot.slane %v3401, 4
    %v3403 = vadd.f32 %v3401, %v3402
    %v3404 = vrot.slane %v3403, 2
    %v3405 = vadd.f32 %v3403, %v3404
    %v3406 = vrot.slane %v3405, 1
    %v3407 = vadd.f32 %v3405, %v3406
    %3408 = vrot.lane.b32.xlu0 %v3394, 8
    %v3409 = vpop.permute.xlu0 %3408
    %v3410 = vadd.f32 %v3394, %v3409
    %3411 = vrot.lane.b32.xlu0 %v3407, 8
    %v3412 = vpop.permute.xlu0 %3411
    %v3413 = vadd.f32 %v3407, %v3412
    %3414 = vrot.lane.b32.xlu0 %v3410, 16
    %v3415 = vpop.permute.xlu0 %3414
    %v3416 = vadd.f32 %v3410, %v3415
    %3417 = vrot.lane.b32.xlu0 %v3413, 16
    %v3418 = vpop.permute.xlu0 %3417
    %v3419 = vadd.f32 %v3413, %v3418
    %3420 = vrot.lane.b32.xlu0 %v3416, 32
    %v3421 = vpop.permute.xlu0 %3420
    %v3422 = vadd.f32 %v3416, %v3421
    %3423 = vrot.lane.b32.xlu0 %v3419, 32
    %v3424 = vpop.permute.xlu0 %3423
    %v3425 = vadd.f32 %v3419, %v3424
    %3426 = vrot.lane.b32.xlu0 %v3422, 64
    %v3427 = vpop.permute.xlu0 %3426
    %v3428 = vadd.f32 %v3422, %v3427
    %3429 = vrot.lane.b32.xlu0 %v3425, 64
    %v3430 = vpop.permute.xlu0 %3429
    %v3431 = vadd.f32 %v3425, %v3430
    %v3432 = vmul.f32 %v3428, 0.001953125
    %v3433 = vmul.f32 %v3431, 0.001953125
    %v3434 = vmul.f32 %v3432, %v3432
    %v3435 = vsub.f32 %v3433, %v3434
    %v3436 = vmax.f32 %v3435, 0.0
    %v3437 = vld [vmem:[#allocation11] sm:$0x1]
    %v3438 = vadd.f32 %v3436, 1e-05
    %v3439 = vrsqrt.pop %v3438
    %v3440 = vmul.f32 %v3437, %v3439
    %v3441 = vld [vmem:[#allocation12] sm:$0x1]
    %v3442 = vmul.f32 %v3432, %v3440
    %v3443 = vsub.f32 %v3441, %v3442
    %v3445 = vlaneseq
    %v3446 = vshrl.u32 %v3445, 7
    %v3447 = vsub.s32 0, %v3446
    %v3448 = vrot.slane %v3440, %v3447
    %v3450 = vmul.f32 %v3372, %v3448
    %v3451 = vmul.f32 %v3375, %v3448
    %v3452 = vmul.f32 %v3380, %v3448
    %v3453 = vmul.f32 %v3383, %v3448
    %v3455 = vlaneseq
    %v3456 = vshrl.u32 %v3455, 7
    %v3457 = vsub.s32 0, %v3456
    %v3458 = vrot.slane %v3443, %v3457
    %v3460 = vadd.f32 %v3450, %v3458
    %v3461 = vadd.f32 %v3451, %v3458
    %v3462 = vadd.f32 %v3452, %v3458
    %v3463 = vadd.f32 %v3453, %v3458
    %v3464 = vadd.f32 %v3460, %v2339
    %v3465 = vadd.f32 %v3461, %v2340
    %v3466 = vadd.f32 %v3462, %v2341
    %v3467 = vadd.f32 %v3463, %v2342
    %v3468 = vmul.f32 %v3464, 0.01
    %v3469 = vmul.f32 %v3465, 0.01
    %v3470 = vmul.f32 %v3466, 0.01
    %v3471 = vmul.f32 %v3467, 0.01
    %v3472 = vmax.f32 %v3464, %v3468
    %v3473 = vmax.f32 %v3465, %v3469
    %v3474 = vmax.f32 %v3466, %v3470
    %v3475 = vmax.f32 %v3467, %v3471
    %3476 = vst [vmem:[#allocation2 + $0x3] sm:$0xff] %v3472
    %3477 = vst [vmem:[#allocation2 + $0xb] sm:$0xff] %v3473
    %3478 = vst [vmem:[#allocation2 + $0x1b] sm:$0xff] %v3474
    %3479 = vst [vmem:[#allocation2 + $0x23] sm:$0xff] %v3475
    %v3480 = vld [vmem:[#allocation2] sm:$0xff]
    %v3481 = vld [vmem:[#allocation2 + $0x8] sm:$0xff]
    %v3482 = vld [vmem:[#allocation2 + $0x10] sm:$0x3f]
    %v3483 = vld [vmem:[#allocation2 + $0x18] sm:$0xff]
    %v3484 = vld [vmem:[#allocation2 + $0x20] sm:$0xff]
    %v3485 = vld [vmem:[#allocation2 + $0x28] sm:$0x3f]
    %v3492 = vrot.slane %v3480, 1
    %v3493 = vrot.slane %v3481, 1
    %v3494 = vsel %vm376, %v3492, %v3493
    %v3495 = vrot.slane %v3482, 1
    %v3496 = vsel %vm376, %v3493, %v3495
    %v3497 = vrot.slane %v3483, 1
    %v3498 = vrot.slane %v3484, 1
    %v3499 = vsel %vm376, %v3497, %v3498
    %v3500 = vrot.slane %v3485, 1
    %v3501 = vsel %vm376, %v3498, %v3500
    %v3502 = vrot.slane %v3480, 2
    %v3503 = vrot.slane %v3481, 2
    %v3504 = vsel %vm391, %v3502, %v3503
    %v3505 = vrot.slane %v3482, 2
    %v3506 = vsel %vm391, %v3503, %v3505
    %v3507 = vrot.slane %v3483, 2
    %v3508 = vrot.slane %v3484, 2
    %v3509 = vsel %vm391, %v3507, %v3508
    %v3510 = vrot.slane %v3485, 2
    %v3511 = vsel %vm391, %v3508, %v3510
    %v3512 = vrot.slane %v3480, 3
    %v3513 = vrot.slane %v3481, 3
    %v3514 = vsel %vm406, %v3512, %v3513
    %v3515 = vrot.slane %v3482, 3
    %v3516 = vsel %vm406, %v3513, %v3515
    %v3517 = vrot.slane %v3483, 3
    %v3518 = vrot.slane %v3484, 3
    %v3519 = vsel %vm406, %v3517, %v3518
    %v3520 = vrot.slane %v3485, 3
    %v3521 = vsel %vm406, %v3518, %v3520
    %v3522 = vrot.slane %v3480, 4
    %v3523 = vrot.slane %v3481, 4
    %v3524 = vsel %vm421, %v3522, %v3523
    %v3525 = vrot.slane %v3482, 4
    %v3526 = vsel %vm421, %v3523, %v3525
    %v3527 = vrot.slane %v3483, 4
    %v3528 = vrot.slane %v3484, 4
    %v3529 = vsel %vm421, %v3527, %v3528
    %v3530 = vrot.slane %v3485, 4
    %v3531 = vsel %vm421, %v3528, %v3530
    %v3532 = vrot.slane %v3494, 1
    %v3533 = vrot.slane %v3496, 1
    %v3534 = vsel %vm376, %v3532, %v3533
    %v3535 = vrot.slane %v3504, 1
    %v3536 = vrot.slane %v3506, 1
    %v3537 = vsel %vm376, %v3535, %v3536
    %v3538 = vrot.slane %v3514, 1
    %v3539 = vrot.slane %v3516, 1
    %v3540 = vsel %vm376, %v3538, %v3539
    %v3541 = vrot.slane %v3524, 1
    %v3542 = vrot.slane %v3526, 1
    %v3543 = vsel %vm376, %v3541, %v3542
    %v3544 = vrot.slane %v3495, 1
    %v3545 = vsel %vm376, %v3533, %v3544
    %v3546 = vrot.slane %v3505, 1
    %v3547 = vsel %vm376, %v3536, %v3546
    %v3548 = vrot.slane %v3515, 1
    %v3549 = vsel %vm376, %v3539, %v3548
    %v3550 = vrot.slane %v3525, 1
    %v3551 = vsel %vm376, %v3542, %v3550
    %v3552 = vrot.slane %v3499, 1
    %v3553 = vrot.slane %v3501, 1
    %v3554 = vsel %vm376, %v3552, %v3553
    %v3555 = vrot.slane %v3509, 1
    %v3556 = vrot.slane %v3511, 1
    %v3557 = vsel %vm376, %v3555, %v3556
    %v3558 = vrot.slane %v3519, 1
    %v3559 = vrot.slane %v3521, 1
    %v3560 = vsel %vm376, %v3558, %v3559
    %v3561 = vrot.slane %v3529, 1
    %v3562 = vrot.slane %v3531, 1
    %v3563 = vsel %vm376, %v3561, %v3562
    %v3564 = vrot.slane %v3500, 1
    %v3565 = vsel %vm376, %v3553, %v3564
    %v3566 = vrot.slane %v3510, 1
    %v3567 = vsel %vm376, %v3556, %v3566
    %v3568 = vrot.slane %v3520, 1
    %v3569 = vsel %vm376, %v3559, %v3568
    %v3570 = vrot.slane %v3530, 1
    %v3571 = vsel %vm376, %v3562, %v3570
    %v3592 = vpack.c.bf16 %v3496, %v3494
    %v3593 = vpack.c.bf16 %v3545, %v3534
    %v3594 = vpack.c.bf16 %v3547, %v3537
    %v3595 = vpack.c.bf16 %v3549, %v3540
    %v3596 = vpack.c.bf16 %v3551, %v3543
    %v3597 = vpack.c.bf16 %v3501, %v3499
    %v3598 = vpack.c.bf16 %v3565, %v3554
    %v3599 = vpack.c.bf16 %v3567, %v3557
    %v3600 = vpack.c.bf16 %v3569, %v3560
    %v3601 = vpack.c.bf16 %v3571, %v3563
    %v3602 = vld [vmem:[#allocation14] sm:$0xf]
    %v3603 = vld [vmem:[#allocation14 + $0x4] sm:$0xf]
    %v3604 = vld [vmem:[#allocation14 + $0x8] sm:$0xf]
    %v3605 = vld [vmem:[#allocation14 + $0xc] sm:$0xf]
    %v3606 = vld [vmem:[#allocation14 + $0x10] sm:$0xf]
    %v3607 = vld [vmem:[#allocation14 + $0x14] sm:$0xf]
    %v3608 = vld [vmem:[#allocation14 + $0x18] sm:$0xf]
    %v3609 = vld [vmem:[#allocation14 + $0x1c] sm:$0xf]
    %v3610 = vld [vmem:[#allocation14 + $0x20] sm:$0xf]
    %v3611 = vld [vmem:[#allocation14 + $0x24] sm:$0xf]
    %v3612 = vld [vmem:[#allocation14 + $0x28] sm:$0xf]
    %v3613 = vld [vmem:[#allocation14 + $0x2c] sm:$0xf]
    %v3614 = vld [vmem:[#allocation14 + $0x30] sm:$0xf]
    %v3615 = vld [vmem:[#allocation14 + $0x34] sm:$0xf]
    %v3616 = vld [vmem:[#allocation14 + $0x38] sm:$0xf]
    %v3617 = vld [vmem:[#allocation14 + $0x3c] sm:$0xf]
    %v3618 = vld [vmem:[#allocation14 + $0x40] sm:$0xf]
    %v3619 = vld [vmem:[#allocation14 + $0x44] sm:$0xf]
    %v3620 = vld [vmem:[#allocation14 + $0x48] sm:$0xf]
    %v3621 = vld [vmem:[#allocation14 + $0x4c] sm:$0xf]
    %v3622 = vld [vmem:[#allocation14 + $0x50] sm:$0xf]
    %v3623 = vld [vmem:[#allocation14 + $0x54] sm:$0xf]
    %v3624 = vld [vmem:[#allocation14 + $0x58] sm:$0xf]
    %v3625 = vld [vmem:[#allocation14 + $0x5c] sm:$0xf]
    %v3626 = vld [vmem:[#allocation14 + $0x60] sm:$0xf]
    %v3627 = vld [vmem:[#allocation14 + $0x64] sm:$0xf]
    %v3628 = vld [vmem:[#allocation14 + $0x68] sm:$0xf]
    %v3629 = vld [vmem:[#allocation14 + $0x6c] sm:$0xf]
    %v3630 = vld [vmem:[#allocation14 + $0x70] sm:$0xf]
    %v3631 = vld [vmem:[#allocation14 + $0x74] sm:$0xf]
    %v3632 = vld [vmem:[#allocation14 + $0x78] sm:$0xf]
    %v3633 = vld [vmem:[#allocation14 + $0x7c] sm:$0xf]
    %v3634 = vld [vmem:[#allocation14 + $0x80] sm:$0xf]
    %v3635 = vld [vmem:[#allocation14 + $0x84] sm:$0xf]
    %v3636 = vld [vmem:[#allocation14 + $0x88] sm:$0xf]
    %v3637 = vld [vmem:[#allocation14 + $0x8c] sm:$0xf]
    %v3638 = vld [vmem:[#allocation14 + $0x90] sm:$0xf]
    %v3639 = vld [vmem:[#allocation14 + $0x94] sm:$0xf]
    %v3640 = vld [vmem:[#allocation14 + $0x98] sm:$0xf]
    %v3641 = vld [vmem:[#allocation14 + $0x9c] sm:$0xf]
    %v3642 = vld [vmem:[#allocation14 + $0xa0] sm:$0xf]
    %v3643 = vld [vmem:[#allocation14 + $0xa4] sm:$0xf]
    %v3644 = vld [vmem:[#allocation14 + $0xa8] sm:$0xf]
    %v3645 = vld [vmem:[#allocation14 + $0xac] sm:$0xf]
    %v3646 = vld [vmem:[#allocation14 + $0xb0] sm:$0xf]
    %v3647 = vld [vmem:[#allocation14 + $0xb4] sm:$0xf]
    %v3648 = vld [vmem:[#allocation14 + $0xb8] sm:$0xf]
    %v3649 = vld [vmem:[#allocation14 + $0xbc] sm:$0xf]
    %v3650 = vld [vmem:[#allocation14 + $0xc0] sm:$0xf]
    %v3651 = vld [vmem:[#allocation14 + $0xc4] sm:$0xf]
    %v3652 = vld [vmem:[#allocation14 + $0xc8] sm:$0xf]
    %v3653 = vld [vmem:[#allocation14 + $0xcc] sm:$0xf]
    %v3654 = vld [vmem:[#allocation14 + $0xd0] sm:$0xf]
    %v3655 = vld [vmem:[#allocation14 + $0xd4] sm:$0xf]
    %v3656 = vld [vmem:[#allocation14 + $0xd8] sm:$0xf]
    %v3657 = vld [vmem:[#allocation14 + $0xdc] sm:$0xf]
    %v3658 = vld [vmem:[#allocation14 + $0xe0] sm:$0xf]
    %v3659 = vld [vmem:[#allocation14 + $0xe4] sm:$0xf]
    %v3660 = vld [vmem:[#allocation14 + $0xe8] sm:$0xf]
    %v3661 = vld [vmem:[#allocation14 + $0xec] sm:$0xf]
    %v3662 = vld [vmem:[#allocation14 + $0xf0] sm:$0xf]
    %v3663 = vld [vmem:[#allocation14 + $0xf4] sm:$0xf]
    %v3664 = vld [vmem:[#allocation14 + $0xf8] sm:$0xf]
    %v3665 = vld [vmem:[#allocation14 + $0xfc] sm:$0xf]
    %v3666 = vld [vmem:[#allocation14 + $0x100] sm:$0xf]
    %v3667 = vld [vmem:[#allocation14 + $0x104] sm:$0xf]
    %v3668 = vld [vmem:[#allocation14 + $0x108] sm:$0xf]
    %v3669 = vld [vmem:[#allocation14 + $0x10c] sm:$0xf]
    %v3670 = vld [vmem:[#allocation14 + $0x110] sm:$0xf]
    %v3671 = vld [vmem:[#allocation14 + $0x114] sm:$0xf]
    %v3672 = vld [vmem:[#allocation14 + $0x118] sm:$0xf]
    %v3673 = vld [vmem:[#allocation14 + $0x11c] sm:$0xf]
    %v3674 = vld [vmem:[#allocation14 + $0x120] sm:$0xf]
    %v3675 = vld [vmem:[#allocation14 + $0x124] sm:$0xf]
    %v3676 = vld [vmem:[#allocation14 + $0x128] sm:$0xf]
    %v3677 = vld [vmem:[#allocation14 + $0x12c] sm:$0xf]
    %v3678 = vld [vmem:[#allocation14 + $0x130] sm:$0xf]
    %v3679 = vld [vmem:[#allocation14 + $0x134] sm:$0xf]
    %v3680 = vld [vmem:[#allocation14 + $0x138] sm:$0xf]
    %v3681 = vld [vmem:[#allocation14 + $0x13c] sm:$0xf]
    %v3762 = vunpack.c.l.b16 %v3602
    %v3763 = vunpack.c.l.b16 %v3603
    %v3764 = vunpack.c.l.b16 %v3604
    %v3765 = vunpack.c.l.b16 %v3605
    %v3766 = vunpack.c.l.b16 %v3606
    %v3767 = vunpack.c.l.b16 %v3607
    %v3768 = vunpack.c.l.b16 %v3608
    %v3769 = vunpack.c.l.b16 %v3609
    %v3770 = vunpack.c.l.b16 %v3610
    %v3771 = vunpack.c.l.b16 %v3611
    %v3772 = vunpack.c.l.b16 %v3612
    %v3773 = vunpack.c.l.b16 %v3613
    %v3774 = vunpack.c.l.b16 %v3614
    %v3775 = vunpack.c.l.b16 %v3615
    %v3776 = vunpack.c.l.b16 %v3616
    %v3777 = vunpack.c.l.b16 %v3617
    %v3778 = vunpack.c.l.b16 %v3618
    %v3779 = vunpack.c.l.b16 %v3619
    %v3780 = vunpack.c.l.b16 %v3620
    %v3781 = vunpack.c.l.b16 %v3621
    %v3782 = vunpack.c.l.b16 %v3622
    %v3783 = vunpack.c.l.b16 %v3623
    %v3784 = vunpack.c.l.b16 %v3624
    %v3785 = vunpack.c.l.b16 %v3625
    %v3786 = vunpack.c.l.b16 %v3626
    %v3787 = vunpack.c.l.b16 %v3627
    %v3788 = vunpack.c.l.b16 %v3628
    %v3789 = vunpack.c.l.b16 %v3629
    %v3790 = vunpack.c.l.b16 %v3630
    %v3791 = vunpack.c.l.b16 %v3631
    %v3792 = vunpack.c.l.b16 %v3632
    %v3793 = vunpack.c.l.b16 %v3633
    %v3794 = vunpack.c.l.b16 %v3634
    %v3795 = vunpack.c.l.b16 %v3635
    %v3796 = vunpack.c.l.b16 %v3636
    %v3797 = vunpack.c.l.b16 %v3637
    %v3798 = vunpack.c.l.b16 %v3638
    %v3799 = vunpack.c.l.b16 %v3639
    %v3800 = vunpack.c.l.b16 %v3640
    %v3801 = vunpack.c.l.b16 %v3641
    %v3802 = vunpack.c.l.b16 %v3642
    %v3803 = vunpack.c.l.b16 %v3643
    %v3804 = vunpack.c.l.b16 %v3644
    %v3805 = vunpack.c.l.b16 %v3645
    %v3806 = vunpack.c.l.b16 %v3646
    %v3807 = vunpack.c.l.b16 %v3647
    %v3808 = vunpack.c.l.b16 %v3648
    %v3809 = vunpack.c.l.b16 %v3649
    %v3810 = vunpack.c.l.b16 %v3650
    %v3811 = vunpack.c.l.b16 %v3651
    %v3812 = vunpack.c.l.b16 %v3652
    %v3813 = vunpack.c.l.b16 %v3653
    %v3814 = vunpack.c.l.b16 %v3654
    %v3815 = vunpack.c.l.b16 %v3655
    %v3816 = vunpack.c.l.b16 %v3656
    %v3817 = vunpack.c.l.b16 %v3657
    %v3818 = vunpack.c.l.b16 %v3658
    %v3819 = vunpack.c.l.b16 %v3659
    %v3820 = vunpack.c.l.b16 %v3660
    %v3821 = vunpack.c.l.b16 %v3661
    %v3822 = vunpack.c.l.b16 %v3662
    %v3823 = vunpack.c.l.b16 %v3663
    %v3824 = vunpack.c.l.b16 %v3664
    %v3825 = vunpack.c.l.b16 %v3665
    %v3826 = vunpack.c.l.b16 %v3666
    %v3827 = vunpack.c.l.b16 %v3667
    %v3828 = vunpack.c.l.b16 %v3668
    %v3829 = vunpack.c.l.b16 %v3669
    %v3830 = vunpack.c.l.b16 %v3670
    %v3831 = vunpack.c.l.b16 %v3671
    %v3832 = vunpack.c.l.b16 %v3672
    %v3833 = vunpack.c.l.b16 %v3673
    %v3834 = vunpack.c.l.b16 %v3674
    %v3835 = vunpack.c.l.b16 %v3675
    %v3836 = vunpack.c.l.b16 %v3676
    %v3837 = vunpack.c.l.b16 %v3677
    %v3838 = vunpack.c.l.b16 %v3678
    %v3839 = vunpack.c.l.b16 %v3679
    %v3840 = vunpack.c.l.b16 %v3680
    %v3841 = vunpack.c.l.b16 %v3681
    %v3842 = vpack.c.b16 %v3763, %v3762
    %v3843 = vpack.c.b16 %v3765, %v3764
    %v3844 = vpack.c.b16 %v3767, %v3766
    %v3845 = vpack.c.b16 %v3769, %v3768
    %v3846 = vpack.c.b16 %v3771, %v3770
    %v3847 = vpack.c.b16 %v3773, %v3772
    %v3848 = vpack.c.b16 %v3775, %v3774
    %v3849 = vpack.c.b16 %v3777, %v3776
    %v3850 = vpack.c.b16 %v3779, %v3778
    %v3851 = vpack.c.b16 %v3781, %v3780
    %v3852 = vpack.c.b16 %v3783, %v3782
    %v3853 = vpack.c.b16 %v3785, %v3784
    %v3854 = vpack.c.b16 %v3787, %v3786
    %v3855 = vpack.c.b16 %v3789, %v3788
    %v3856 = vpack.c.b16 %v3791, %v3790
    %v3857 = vpack.c.b16 %v3793, %v3792
    %v3858 = vpack.c.b16 %v3795, %v3794
    %v3859 = vpack.c.b16 %v3797, %v3796
    %v3860 = vpack.c.b16 %v3799, %v3798
    %v3861 = vpack.c.b16 %v3801, %v3800
    %v3862 = vpack.c.b16 %v3803, %v3802
    %v3863 = vpack.c.b16 %v3805, %v3804
    %v3864 = vpack.c.b16 %v3807, %v3806
    %v3865 = vpack.c.b16 %v3809, %v3808
    %v3866 = vpack.c.b16 %v3811, %v3810
    %v3867 = vpack.c.b16 %v3813, %v3812
    %v3868 = vpack.c.b16 %v3815, %v3814
    %v3869 = vpack.c.b16 %v3817, %v3816
    %v3870 = vpack.c.b16 %v3819, %v3818
    %v3871 = vpack.c.b16 %v3821, %v3820
    %v3872 = vpack.c.b16 %v3823, %v3822
    %v3873 = vpack.c.b16 %v3825, %v3824
    %v3874 = vpack.c.b16 %v3827, %v3826
    %v3875 = vpack.c.b16 %v3829, %v3828
    %v3876 = vpack.c.b16 %v3831, %v3830
    %v3877 = vpack.c.b16 %v3833, %v3832
    %v3878 = vpack.c.b16 %v3835, %v3834
    %v3879 = vpack.c.b16 %v3837, %v3836
    %v3880 = vpack.c.b16 %v3839, %v3838
    %v3881 = vpack.c.b16 %v3841, %v3840
    %3922 = vmatprep.subr.bf16.mxu0 0
    %3923 = vmatpush1.bf16.msra.mxu0 %v3842
    %3924 = vmatprep.subr.bf16.mxu0 0
    %3925 = vmatpush1.bf16.msra.mxu0 %v3843
    %3926 = vmatprep.subr.bf16.mxu0 0
    %3927 = vmatpush1.bf16.msra.mxu0 %v3844
    %3928 = vmatprep.subr.bf16.mxu0 0
    %3929 = vmatpush1.bf16.msra.mxu0 %v3845
    %3930 = vmatprep.subr.bf16.mxu0 0
    %3931 = vmatpush1.bf16.msra.mxu0 %v3846
    %3932 = vmatprep.subr.bf16.mxu0 0
    %3933 = vmatpush1.bf16.msra.mxu0 %v3847
    %3934 = vmatprep.subr.bf16.mxu0 0
    %3935 = vmatpush1.bf16.msra.mxu0 %v3848
    %3936 = vmatprep.subr.bf16.mxu0 0
    %3937 = vmatpush1.bf16.msra.mxu0 %v3849
    %3938 = vmatprep.subr.bf16.mxu0 0
    %3939 = vmatpush1.bf16.msra.mxu0 %v3850
    %3940 = vmatprep.subr.bf16.mxu0 0
    %3941 = vmatpush1.bf16.msra.mxu0 %v3851
    %3942 = vmatprep.subr.bf16.mxu0 0
    %3943 = vmatpush1.bf16.msra.mxu0 %v3852
    %3944 = vmatprep.subr.bf16.mxu0 0
    %3945 = vmatpush1.bf16.msra.mxu0 %v3853
    %3946 = vmatprep.subr.bf16.mxu0 0
    %3947 = vmatpush1.bf16.msra.mxu0 %v3854
    %3948 = vmatprep.subr.bf16.mxu0 0
    %3949 = vmatpush1.bf16.msra.mxu0 %v3855
    %3950 = vmatprep.subr.bf16.mxu0 0
    %3951 = vmatpush1.bf16.msra.mxu0 %v3856
    %3952 = vmatprep.subr.bf16.mxu0 0
    %3953 = vmatpush1.bf16.msra.mxu0 %v3857
    %3954 = vmatprep.mubr.bf16.mxu0 %v3593
    %3955 = vmatmul.mubr.bf16.gmra.mrb[0].mxu0 %v3592
    %v3956 = vpop.f32.mrb[0].mxu0
    %v3957 = vadd.f32 0.0, %v3956
    %v3958 = vpop.f32.mrb[0].mxu0
    %v3959 = vpop.f32.mrb[0].mxu0
    %v3960 = vadd.f32 0.0, %v3959
    %v3961 = vpop.f32.mrb[0].mxu0
    %3962 = vmatprep.mubr.bf16.mxu0 %v3598
    %3963 = vmatmul.mubr.bf16.gmra.mrb[0].mxu0 %v3597
    %v3964 = vpop.f32.mrb[0].mxu0
    %v3965 = vadd.f32 0.0, %v3964
    %v3966 = vpop.f32.mrb[0].mxu0
    %v3967 = vpop.f32.mrb[0].mxu0
    %v3968 = vadd.f32 0.0, %v3967
    %v3969 = vpop.f32.mrb[0].mxu0
    %3970 = vdwg.mxu0
    %3971 = vmatprep.subr.bf16.mxu0 0
    %3972 = vmatpush1.bf16.msra.mxu0 %v3858
    %3973 = vmatprep.subr.bf16.mxu0 0
    %3974 = vmatpush1.bf16.msra.mxu0 %v3859
    %3975 = vmatprep.subr.bf16.mxu0 0
    %3976 = vmatpush1.bf16.msra.mxu0 %v3860
    %3977 = vmatprep.subr.bf16.mxu0 0
    %3978 = vmatpush1.bf16.msra.mxu0 %v3861
    %3979 = vmatprep.subr.bf16.mxu0 0
    %3980 = vmatpush1.bf16.msra.mxu0 %v3862
    %3981 = vmatprep.subr.bf16.mxu0 0
    %3982 = vmatpush1.bf16.msra.mxu0 %v3863
    %3983 = vmatprep.subr.bf16.mxu0 0
    %3984 = vmatpush1.bf16.msra.mxu0 %v3864
    %3985 = vmatprep.subr.bf16.mxu0 0
    %3986 = vmatpush1.bf16.msra.mxu0 %v3865
    %3987 = vmatprep.subr.bf16.mxu0 0
    %3988 = vmatpush1.bf16.msra.mxu0 %v3866
    %3989 = vmatprep.subr.bf16.mxu0 0
    %3990 = vmatpush1.bf16.msra.mxu0 %v3867
    %3991 = vmatprep.subr.bf16.mxu0 0
    %3992 = vmatpush1.bf16.msra.mxu0 %v3868
    %3993 = vmatprep.subr.bf16.mxu0 0
    %3994 = vmatpush1.bf16.msra.mxu0 %v3869
    %3995 = vmatprep.subr.bf16.mxu0 0
    %3996 = vmatpush1.bf16.msra.mxu0 %v3870
    %3997 = vmatprep.subr.bf16.mxu0 0
    %3998 = vmatpush1.bf16.msra.mxu0 %v3871
    %3999 = vmatprep.subr.bf16.mxu0 0
    %4000 = vmatpush1.bf16.msra.mxu0 %v3872
    %4001 = vmatprep.subr.bf16.mxu0 0
    %4002 = vmatpush1.bf16.msra.mxu0 %v3873
    %4003 = vmatprep.mubr.bf16.mxu0 %v3595
    %4004 = vmatmul.mubr.bf16.gmra.mrb[0].mxu0 %v3594
    %v4005 = vpop.f32.mrb[0].mxu0
    %v4006 = vadd.f32 %v3957, %v4005
    %v4007 = vpop.f32.mrb[0].mxu0
    %v4008 = vpop.f32.mrb[0].mxu0
    %v4009 = vadd.f32 %v3960, %v4008
    %v4010 = vpop.f32.mrb[0].mxu0
    %4011 = vmatprep.mubr.bf16.mxu0 %v3600
    %4012 = vmatmul.mubr.bf16.gmra.mrb[0].mxu0 %v3599
    %v4013 = vpop.f32.mrb[0].mxu0
    %v4014 = vadd.f32 %v3965, %v4013
    %v4015 = vpop.f32.mrb[0].mxu0
    %v4016 = vpop.f32.mrb[0].mxu0
    %v4017 = vadd.f32 %v3968, %v4016
    %v4018 = vpop.f32.mrb[0].mxu0
    %4019 = vdwg.mxu0
    %4020 = vmatprep.subr.bf16.mxu0 0
    %4021 = vmatpush1.bf16.msra.mxu0 %v3874
    %4022 = vmatprep.subr.bf16.mxu0 0
    %4023 = vmatpush1.bf16.msra.mxu0 %v3875
    %4024 = vmatprep.subr.bf16.mxu0 0
    %4025 = vmatpush1.bf16.msra.mxu0 %v3876
    %4026 = vmatprep.subr.bf16.mxu0 0
    %4027 = vmatpush1.bf16.msra.mxu0 %v3877
    %4028 = vmatprep.subr.bf16.mxu0 0
    %4029 = vmatpush1.bf16.msra.mxu0 %v3878
    %4030 = vmatprep.subr.bf16.mxu0 0
    %4031 = vmatpush1.bf16.msra.mxu0 %v3879
    %4032 = vmatprep.subr.bf16.mxu0 0
    %4033 = vmatpush1.bf16.msra.mxu0 %v3880
    %4034 = vmatprep.subr.bf16.mxu0 0
    %4035 = vmatpush1.bf16.msra.mxu0 %v3881
    %4036 = vmatprep.subr.bf16.mxu0 0
    %4037 = vmatpush1.bf16.msra.mxu0 0
    %4038 = vmatprep.subr.bf16.mxu0 0
    %4039 = vmatpush1.bf16.msra.mxu0 0
    %4040 = vmatprep.subr.bf16.mxu0 0
    %4041 = vmatpush1.bf16.msra.mxu0 0
    %4042 = vmatprep.subr.bf16.mxu0 0
    %4043 = vmatpush1.bf16.msra.mxu0 0
    %4044 = vmatprep.subr.bf16.mxu0 0
    %4045 = vmatpush1.bf16.msra.mxu0 0
    %4046 = vmatprep.subr.bf16.mxu0 0
    %4047 = vmatpush1.bf16.msra.mxu0 0
    %4048 = vmatprep.subr.bf16.mxu0 0
    %4049 = vmatpush1.bf16.msra.mxu0 0
    %4050 = vmatprep.subr.bf16.mxu0 0
    %4051 = vmatpush1.bf16.msra.mxu0 0
    %4052 = vmatprep.mubr.bf16.mxu0 0
    %4053 = vmatmul.mubr.bf16.gmra.mrb[0].mxu0 %v3596
    %v4054 = vpop.f32.mrb[0].mxu0
    %v4055 = vadd.f32 %v4006, %v4054
    %v4056 = vpop.f32.mrb[0].mxu0
    %v4057 = vpop.f32.mrb[0].mxu0
    %v4058 = vadd.f32 %v4009, %v4057
    %v4059 = vpop.f32.mrb[0].mxu0
    %4060 = vmatprep.mubr.bf16.mxu0 0
    %4061 = vmatmul.mubr.bf16.gmra.mrb[0].mxu0 %v3601
    %v4062 = vpop.f32.mrb[0].mxu0
    %v4063 = vadd.f32 %v4014, %v4062
    %v4064 = vpop.f32.mrb[0].mxu0
    %v4065 = vpop.f32.mrb[0].mxu0
    %v4066 = vadd.f32 %v4017, %v4065
    %v4067 = vpop.f32.mrb[0].mxu0
    %4068 = vdwg.mxu0
    %v4069 = vadd.f32 %v4055, %v4058
    %v4070 = vadd.f32 %v4069, %v4063
    %v4071 = vadd.f32 %v4070, %v4066
    %v4072 = vrot.slane %v4071, 4
    %v4073 = vadd.f32 %v4071, %v4072
    %v4074 = vrot.slane %v4073, 2
    %v4075 = vadd.f32 %v4073, %v4074
    %v4076 = vrot.slane %v4075, 1
    %v4077 = vadd.f32 %v4075, %v4076
    %v4078 = vmul.f32 %v4055, %v4055
    %v4079 = vmul.f32 %v4058, %v4058
    %v4080 = vmul.f32 %v4063, %v4063
    %v4081 = vmul.f32 %v4066, %v4066
    %v4082 = vadd.f32 %v4078, %v4079
    %v4083 = vadd.f32 %v4082, %v4080
    %v4084 = vadd.f32 %v4083, %v4081
    %v4085 = vrot.slane %v4084, 4
    %v4086 = vadd.f32 %v4084, %v4085
    %v4087 = vrot.slane %v4086, 2
    %v4088 = vadd.f32 %v4086, %v4087
    %v4089 = vrot.slane %v4088, 1
    %v4090 = vadd.f32 %v4088, %v4089
    %4091 = vrot.lane.b32.xlu0 %v4077, 8
    %v4092 = vpop.permute.xlu0 %4091
    %v4093 = vadd.f32 %v4077, %v4092
    %4094 = vrot.lane.b32.xlu0 %v4090, 8
    %v4095 = vpop.permute.xlu0 %4094
    %v4096 = vadd.f32 %v4090, %v4095
    %4097 = vrot.lane.b32.xlu0 %v4093, 16
    %v4098 = vpop.permute.xlu0 %4097
    %v4099 = vadd.f32 %v4093, %v4098
    %4100 = vrot.lane.b32.xlu0 %v4096, 16
    %v4101 = vpop.permute.xlu0 %4100
    %v4102 = vadd.f32 %v4096, %v4101
    %4103 = vrot.lane.b32.xlu0 %v4099, 32
    %v4104 = vpop.permute.xlu0 %4103
    %v4105 = vadd.f32 %v4099, %v4104
    %4106 = vrot.lane.b32.xlu0 %v4102, 32
    %v4107 = vpop.permute.xlu0 %4106
    %v4108 = vadd.f32 %v4102, %v4107
    %4109 = vrot.lane.b32.xlu0 %v4105, 64
    %v4110 = vpop.permute.xlu0 %4109
    %v4111 = vadd.f32 %v4105, %v4110
    %4112 = vrot.lane.b32.xlu0 %v4108, 64
    %v4113 = vpop.permute.xlu0 %4112
    %v4114 = vadd.f32 %v4108, %v4113
    %v4115 = vmul.f32 %v4111, 0.001953125
    %v4116 = vmul.f32 %v4114, 0.001953125
    %v4117 = vmul.f32 %v4115, %v4115
    %v4118 = vsub.f32 %v4116, %v4117
    %v4119 = vmax.f32 %v4118, 0.0
    %v4120 = vld [vmem:[#allocation15] sm:$0x1]
    %v4121 = vadd.f32 %v4119, 1e-05
    %v4122 = vrsqrt.pop %v4121
    %v4123 = vmul.f32 %v4120, %v4122
    %v4124 = vld [vmem:[#allocation17] sm:$0x1]
    %v4125 = vmul.f32 %v4115, %v4123
    %v4126 = vsub.f32 %v4124, %v4125
    %v4128 = vlaneseq
    %v4129 = vshrl.u32 %v4128, 7
    %v4130 = vsub.s32 0, %v4129
    %v4131 = vrot.slane %v4123, %v4130
    %v4133 = vmul.f32 %v4055, %v4131
    %v4134 = vmul.f32 %v4058, %v4131
    %v4135 = vmul.f32 %v4063, %v4131
    %v4136 = vmul.f32 %v4066, %v4131
    %v4138 = vlaneseq
    %v4139 = vshrl.u32 %v4138, 7
    %v4140 = vsub.s32 0, %v4139
    %v4141 = vrot.slane %v4126, %v4140
    %v4143 = vadd.f32 %v4133, %v4141
    %v4144 = vadd.f32 %v4134, %v4141
    %v4145 = vadd.f32 %v4135, %v4141
    %v4146 = vadd.f32 %v4136, %v4141
    %v4147 = vmul.f32 %v4143, 0.01
    %v4148 = vmul.f32 %v4144, 0.01
    %v4149 = vmul.f32 %v4145, 0.01
    %v4150 = vmul.f32 %v4146, 0.01
    %v4151 = vmax.f32 %v4143, %v4147
    %v4152 = vmax.f32 %v4144, %v4148
    %v4153 = vmax.f32 %v4145, %v4149
    %v4154 = vmax.f32 %v4146, %v4150
    %4155 = vst [vmem:[#allocation3 + $0x3] sm:$0xff] %v4151
    %4156 = vst [vmem:[#allocation3 + $0xb] sm:$0xff] %v4152
    %4157 = vst [vmem:[#allocation3 + $0x1b] sm:$0xff] %v4153
    %4158 = vst [vmem:[#allocation3 + $0x23] sm:$0xff] %v4154
    %v4159 = vld [vmem:[#allocation3] sm:$0xff]
    %v4160 = vld [vmem:[#allocation3 + $0x8] sm:$0xff]
    %v4161 = vld [vmem:[#allocation3 + $0x10] sm:$0x3f]
    %v4162 = vld [vmem:[#allocation3 + $0x18] sm:$0xff]
    %v4163 = vld [vmem:[#allocation3 + $0x20] sm:$0xff]
    %v4164 = vld [vmem:[#allocation3 + $0x28] sm:$0x3f]
    %v4171 = vrot.slane %v4159, 1
    %v4172 = vrot.slane %v4160, 1
    %v4173 = vsel %vm376, %v4171, %v4172
    %v4174 = vrot.slane %v4161, 1
    %v4175 = vsel %vm376, %v4172, %v4174
    %v4176 = vrot.slane %v4162, 1
    %v4177 = vrot.slane %v4163, 1
    %v4178 = vsel %vm376, %v4176, %v4177
    %v4179 = vrot.slane %v4164, 1
    %v4180 = vsel %vm376, %v4177, %v4179
    %v4181 = vrot.slane %v4159, 2
    %v4182 = vrot.slane %v4160, 2
    %v4183 = vsel %vm391, %v4181, %v4182
    %v4184 = vrot.slane %v4161, 2
    %v4185 = vsel %vm391, %v4182, %v4184
    %v4186 = vrot.slane %v4162, 2
    %v4187 = vrot.slane %v4163, 2
    %v4188 = vsel %vm391, %v4186, %v4187
    %v4189 = vrot.slane %v4164, 2
    %v4190 = vsel %vm391, %v4187, %v4189
    %v4191 = vrot.slane %v4173, 2
    %v4192 = vrot.slane %v4175, 2
    %v4193 = vsel %vm391, %v4191, %v4192
    %v4194 = vrot.slane %v4183, 2
    %v4195 = vrot.slane %v4185, 2
    %v4196 = vsel %vm391, %v4194, %v4195
    %v4197 = vrot.slane %v4174, 2
    %v4198 = vsel %vm391, %v4192, %v4197
    %v4199 = vrot.slane %v4184, 2
    %v4200 = vsel %vm391, %v4195, %v4199
    %v4201 = vrot.slane %v4178, 2
    %v4202 = vrot.slane %v4180, 2
    %v4203 = vsel %vm391, %v4201, %v4202
    %v4204 = vrot.slane %v4188, 2
    %v4205 = vrot.slane %v4190, 2
    %v4206 = vsel %vm391, %v4204, %v4205
    %v4207 = vrot.slane %v4179, 2
    %v4208 = vsel %vm391, %v4202, %v4207
    %v4209 = vrot.slane %v4189, 2
    %v4210 = vsel %vm391, %v4205, %v4209
    %v4223 = vpack.c.bf16 %v4185, %v4183
    %v4224 = vpack.c.bf16 %v4198, %v4193
    %v4225 = vpack.c.bf16 %v4200, %v4196
    %v4226 = vpack.c.bf16 %v4190, %v4188
    %v4227 = vpack.c.bf16 %v4208, %v4203
    %v4228 = vpack.c.bf16 %v4210, %v4206
    %v4229 = vld [vmem:[#allocation18] sm:$0xf]
    %v4230 = vld [vmem:[#allocation18 + $0x4] sm:$0xf]
    %v4231 = vld [vmem:[#allocation18 + $0x8] sm:$0xf]
    %v4232 = vld [vmem:[#allocation18 + $0xc] sm:$0xf]
    %v4233 = vld [vmem:[#allocation18 + $0x10] sm:$0xf]
    %v4234 = vld [vmem:[#allocation18 + $0x14] sm:$0xf]
    %v4235 = vld [vmem:[#allocation18 + $0x18] sm:$0xf]
    %v4236 = vld [vmem:[#allocation18 + $0x1c] sm:$0xf]
    %v4237 = vld [vmem:[#allocation18 + $0x20] sm:$0xf]
    %v4238 = vld [vmem:[#allocation18 + $0x24] sm:$0xf]
    %v4239 = vld [vmem:[#allocation18 + $0x28] sm:$0xf]
    %v4240 = vld [vmem:[#allocation18 + $0x2c] sm:$0xf]
    %v4241 = vld [vmem:[#allocation18 + $0x30] sm:$0xf]
    %v4242 = vld [vmem:[#allocation18 + $0x34] sm:$0xf]
    %v4243 = vld [vmem:[#allocation18 + $0x38] sm:$0xf]
    %v4244 = vld [vmem:[#allocation18 + $0x3c] sm:$0xf]
    %v4245 = vld [vmem:[#allocation18 + $0x40] sm:$0xf]
    %v4246 = vld [vmem:[#allocation18 + $0x44] sm:$0xf]
    %v4247 = vld [vmem:[#allocation18 + $0x48] sm:$0xf]
    %v4248 = vld [vmem:[#allocation18 + $0x4c] sm:$0xf]
    %v4249 = vld [vmem:[#allocation18 + $0x50] sm:$0xf]
    %v4250 = vld [vmem:[#allocation18 + $0x54] sm:$0xf]
    %v4251 = vld [vmem:[#allocation18 + $0x58] sm:$0xf]
    %v4252 = vld [vmem:[#allocation18 + $0x5c] sm:$0xf]
    %v4253 = vld [vmem:[#allocation18 + $0x60] sm:$0xf]
    %v4254 = vld [vmem:[#allocation18 + $0x64] sm:$0xf]
    %v4255 = vld [vmem:[#allocation18 + $0x68] sm:$0xf]
    %v4256 = vld [vmem:[#allocation18 + $0x6c] sm:$0xf]
    %v4257 = vld [vmem:[#allocation18 + $0x70] sm:$0xf]
    %v4258 = vld [vmem:[#allocation18 + $0x74] sm:$0xf]
    %v4259 = vld [vmem:[#allocation18 + $0x78] sm:$0xf]
    %v4260 = vld [vmem:[#allocation18 + $0x7c] sm:$0xf]
    %v4261 = vld [vmem:[#allocation18 + $0x80] sm:$0xf]
    %v4262 = vld [vmem:[#allocation18 + $0x84] sm:$0xf]
    %v4263 = vld [vmem:[#allocation18 + $0x88] sm:$0xf]
    %v4264 = vld [vmem:[#allocation18 + $0x8c] sm:$0xf]
    %v4265 = vld [vmem:[#allocation18 + $0x90] sm:$0xf]
    %v4266 = vld [vmem:[#allocation18 + $0x94] sm:$0xf]
    %v4267 = vld [vmem:[#allocation18 + $0x98] sm:$0xf]
    %v4268 = vld [vmem:[#allocation18 + $0x9c] sm:$0xf]
    %v4269 = vld [vmem:[#allocation18 + $0xa0] sm:$0xf]
    %v4270 = vld [vmem:[#allocation18 + $0xa4] sm:$0xf]
    %v4271 = vld [vmem:[#allocation18 + $0xa8] sm:$0xf]
    %v4272 = vld [vmem:[#allocation18 + $0xac] sm:$0xf]
    %v4273 = vld [vmem:[#allocation18 + $0xb0] sm:$0xf]
    %v4274 = vld [vmem:[#allocation18 + $0xb4] sm:$0xf]
    %v4275 = vld [vmem:[#allocation18 + $0xb8] sm:$0xf]
    %v4276 = vld [vmem:[#allocation18 + $0xbc] sm:$0xf]
    %v4325 = vunpack.c.l.b16 %v4229
    %v4326 = vunpack.c.l.b16 %v4230
    %v4327 = vunpack.c.l.b16 %v4231
    %v4328 = vunpack.c.l.b16 %v4232
    %v4329 = vunpack.c.l.b16 %v4233
    %v4330 = vunpack.c.l.b16 %v4234
    %v4331 = vunpack.c.l.b16 %v4235
    %v4332 = vunpack.c.l.b16 %v4236
    %v4333 = vunpack.c.l.b16 %v4237
    %v4334 = vunpack.c.l.b16 %v4238
    %v4335 = vunpack.c.l.b16 %v4239
    %v4336 = vunpack.c.l.b16 %v4240
    %v4337 = vunpack.c.l.b16 %v4241
    %v4338 = vunpack.c.l.b16 %v4242
    %v4339 = vunpack.c.l.b16 %v4243
    %v4340 = vunpack.c.l.b16 %v4244
    %v4341 = vunpack.c.l.b16 %v4245
    %v4342 = vunpack.c.l.b16 %v4246
    %v4343 = vunpack.c.l.b16 %v4247
    %v4344 = vunpack.c.l.b16 %v4248
    %v4345 = vunpack.c.l.b16 %v4249
    %v4346 = vunpack.c.l.b16 %v4250
    %v4347 = vunpack.c.l.b16 %v4251
    %v4348 = vunpack.c.l.b16 %v4252
    %v4349 = vunpack.c.l.b16 %v4253
    %v4350 = vunpack.c.l.b16 %v4254
    %v4351 = vunpack.c.l.b16 %v4255
    %v4352 = vunpack.c.l.b16 %v4256
    %v4353 = vunpack.c.l.b16 %v4257
    %v4354 = vunpack.c.l.b16 %v4258
    %v4355 = vunpack.c.l.b16 %v4259
    %v4356 = vunpack.c.l.b16 %v4260
    %v4357 = vunpack.c.l.b16 %v4261
    %v4358 = vunpack.c.l.b16 %v4262
    %v4359 = vunpack.c.l.b16 %v4263
    %v4360 = vunpack.c.l.b16 %v4264
    %v4361 = vunpack.c.l.b16 %v4265
    %v4362 = vunpack.c.l.b16 %v4266
    %v4363 = vunpack.c.l.b16 %v4267
    %v4364 = vunpack.c.l.b16 %v4268
    %v4365 = vunpack.c.l.b16 %v4269
    %v4366 = vunpack.c.l.b16 %v4270
    %v4367 = vunpack.c.l.b16 %v4271
    %v4368 = vunpack.c.l.b16 %v4272
    %v4369 = vunpack.c.l.b16 %v4273
    %v4370 = vunpack.c.l.b16 %v4274
    %v4371 = vunpack.c.l.b16 %v4275
    %v4372 = vunpack.c.l.b16 %v4276
    %v4373 = vpack.c.b16 %v4326, %v4325
    %v4374 = vpack.c.b16 %v4328, %v4327
    %v4375 = vpack.c.b16 %v4330, %v4329
    %v4376 = vpack.c.b16 %v4332, %v4331
    %v4377 = vpack.c.b16 %v4334, %v4333
    %v4378 = vpack.c.b16 %v4336, %v4335
    %v4379 = vpack.c.b16 %v4338, %v4337
    %v4380 = vpack.c.b16 %v4340, %v4339
    %v4381 = vpack.c.b16 %v4342, %v4341
    %v4382 = vpack.c.b16 %v4344, %v4343
    %v4383 = vpack.c.b16 %v4346, %v4345
    %v4384 = vpack.c.b16 %v4348, %v4347
    %v4385 = vpack.c.b16 %v4350, %v4349
    %v4386 = vpack.c.b16 %v4352, %v4351
    %v4387 = vpack.c.b16 %v4354, %v4353
    %v4388 = vpack.c.b16 %v4356, %v4355
    %v4389 = vpack.c.b16 %v4358, %v4357
    %v4390 = vpack.c.b16 %v4360, %v4359
    %v4391 = vpack.c.b16 %v4362, %v4361
    %v4392 = vpack.c.b16 %v4364, %v4363
    %v4393 = vpack.c.b16 %v4366, %v4365
    %v4394 = vpack.c.b16 %v4368, %v4367
    %v4395 = vpack.c.b16 %v4370, %v4369
    %v4396 = vpack.c.b16 %v4372, %v4371
    %4421 = vmatprep.subr.bf16.mxu0 0
    %4422 = vmatpush1.bf16.msra.mxu0 %v4373
    %4423 = vmatprep.subr.bf16.mxu0 0
    %4424 = vmatpush1.bf16.msra.mxu0 %v4374
    %4425 = vmatprep.subr.bf16.mxu0 0
    %4426 = vmatpush1.bf16.msra.mxu0 %v4375
    %4427 = vmatprep.subr.bf16.mxu0 0
    %4428 = vmatpush1.bf16.msra.mxu0 %v4376
    %4429 = vmatprep.subr.bf16.mxu0 0
    %4430 = vmatpush1.bf16.msra.mxu0 %v4377
    %4431 = vmatprep.subr.bf16.mxu0 0
    %4432 = vmatpush1.bf16.msra.mxu0 %v4378
    %4433 = vmatprep.subr.bf16.mxu0 0
    %4434 = vmatpush1.bf16.msra.mxu0 %v4379
    %4435 = vmatprep.subr.bf16.mxu0 0
    %4436 = vmatpush1.bf16.msra.mxu0 %v4380
    %4437 = vmatprep.subr.bf16.mxu0 0
    %4438 = vmatpush1.bf16.msra.mxu0 %v4381
    %4439 = vmatprep.subr.bf16.mxu0 0
    %4440 = vmatpush1.bf16.msra.mxu0 %v4382
    %4441 = vmatprep.subr.bf16.mxu0 0
    %4442 = vmatpush1.bf16.msra.mxu0 %v4383
    %4443 = vmatprep.subr.bf16.mxu0 0
    %4444 = vmatpush1.bf16.msra.mxu0 %v4384
    %4445 = vmatprep.subr.bf16.mxu0 0
    %4446 = vmatpush1.bf16.msra.mxu0 %v4385
    %4447 = vmatprep.subr.bf16.mxu0 0
    %4448 = vmatpush1.bf16.msra.mxu0 %v4386
    %4449 = vmatprep.subr.bf16.mxu0 0
    %4450 = vmatpush1.bf16.msra.mxu0 %v4387
    %4451 = vmatprep.subr.bf16.mxu0 0
    %4452 = vmatpush1.bf16.msra.mxu0 %v4388
    %4453 = vmatprep.mubr.bf16.mxu0 %v4224
    %4454 = vmatmul.mubr.bf16.gmra.mrb[0].mxu0 %v4223
    %v4455 = vpop.f32.mrb[0].mxu0
    %v4456 = vadd.f32 0.0, %v4455
    %v4457 = vpop.f32.mrb[0].mxu0
    %v4458 = vpop.f32.mrb[0].mxu0
    %v4459 = vadd.f32 0.0, %v4458
    %v4460 = vpop.f32.mrb[0].mxu0
    %4461 = vmatprep.mubr.bf16.mxu0 %v4227
    %4462 = vmatmul.mubr.bf16.gmra.mrb[0].mxu0 %v4226
    %v4463 = vpop.f32.mrb[0].mxu0
    %v4464 = vadd.f32 0.0, %v4463
    %v4465 = vpop.f32.mrb[0].mxu0
    %v4466 = vpop.f32.mrb[0].mxu0
    %v4467 = vadd.f32 0.0, %v4466
    %v4468 = vpop.f32.mrb[0].mxu0
    %4469 = vdwg.mxu0
    %4470 = vmatprep.subr.bf16.mxu0 0
    %4471 = vmatpush1.bf16.msra.mxu0 %v4389
    %4472 = vmatprep.subr.bf16.mxu0 0
    %4473 = vmatpush1.bf16.msra.mxu0 %v4390
    %4474 = vmatprep.subr.bf16.mxu0 0
    %4475 = vmatpush1.bf16.msra.mxu0 %v4391
    %4476 = vmatprep.subr.bf16.mxu0 0
    %4477 = vmatpush1.bf16.msra.mxu0 %v4392
    %4478 = vmatprep.subr.bf16.mxu0 0
    %4479 = vmatpush1.bf16.msra.mxu0 %v4393
    %4480 = vmatprep.subr.bf16.mxu0 0
    %4481 = vmatpush1.bf16.msra.mxu0 %v4394
    %4482 = vmatprep.subr.bf16.mxu0 0
    %4483 = vmatpush1.bf16.msra.mxu0 %v4395
    %4484 = vmatprep.subr.bf16.mxu0 0
    %4485 = vmatpush1.bf16.msra.mxu0 %v4396
    %4486 = vmatprep.subr.bf16.mxu0 0
    %4487 = vmatpush1.bf16.msra.mxu0 0
    %4488 = vmatprep.subr.bf16.mxu0 0
    %4489 = vmatpush1.bf16.msra.mxu0 0
    %4490 = vmatprep.subr.bf16.mxu0 0
    %4491 = vmatpush1.bf16.msra.mxu0 0
    %4492 = vmatprep.subr.bf16.mxu0 0
    %4493 = vmatpush1.bf16.msra.mxu0 0
    %4494 = vmatprep.subr.bf16.mxu0 0
    %4495 = vmatpush1.bf16.msra.mxu0 0
    %4496 = vmatprep.subr.bf16.mxu0 0
    %4497 = vmatpush1.bf16.msra.mxu0 0
    %4498 = vmatprep.subr.bf16.mxu0 0
    %4499 = vmatpush1.bf16.msra.mxu0 0
    %4500 = vmatprep.subr.bf16.mxu0 0
    %4501 = vmatpush1.bf16.msra.mxu0 0
    %4502 = vmatprep.mubr.bf16.mxu0 0
    %4503 = vmatmul.mubr.bf16.gmra.mrb[0].mxu0 %v4225
    %v4504 = vpop.f32.mrb[0].mxu0
    %v4505 = vadd.f32 %v4456, %v4504
    %v4506 = vpop.f32.mrb[0].mxu0
    %v4507 = vpop.f32.mrb[0].mxu0
    %v4508 = vadd.f32 %v4459, %v4507
    %v4509 = vpop.f32.mrb[0].mxu0
    %4510 = vmatprep.mubr.bf16.mxu0 0
    %4511 = vmatmul.mubr.bf16.gmra.mrb[0].mxu0 %v4228
    %v4512 = vpop.f32.mrb[0].mxu0
    %v4513 = vadd.f32 %v4464, %v4512
    %v4514 = vpop.f32.mrb[0].mxu0
    %v4515 = vpop.f32.mrb[0].mxu0
    %v4516 = vadd.f32 %v4467, %v4515
    %v4517 = vpop.f32.mrb[0].mxu0
    %4518 = vdwg.mxu0
    %v4519 = vadd.f32 %v4505, %v4508
    %v4520 = vadd.f32 %v4519, %v4513
    %v4521 = vadd.f32 %v4520, %v4516
    %v4522 = vrot.slane %v4521, 4
    %v4523 = vadd.f32 %v4521, %v4522
    %v4524 = vrot.slane %v4523, 2
    %v4525 = vadd.f32 %v4523, %v4524
    %v4526 = vrot.slane %v4525, 1
    %v4527 = vadd.f32 %v4525, %v4526
    %v4528 = vmul.f32 %v4505, %v4505
    %v4529 = vmul.f32 %v4508, %v4508
    %v4530 = vmul.f32 %v4513, %v4513
    %v4531 = vmul.f32 %v4516, %v4516
    %v4532 = vadd.f32 %v4528, %v4529
    %v4533 = vadd.f32 %v4532, %v4530
    %v4534 = vadd.f32 %v4533, %v4531
    %v4535 = vrot.slane %v4534, 4
    %v4536 = vadd.f32 %v4534, %v4535
    %v4537 = vrot.slane %v4536, 2
    %v4538 = vadd.f32 %v4536, %v4537
    %v4539 = vrot.slane %v4538, 1
    %v4540 = vadd.f32 %v4538, %v4539
    %4541 = vrot.lane.b32.xlu0 %v4527, 8
    %v4542 = vpop.permute.xlu0 %4541
    %v4543 = vadd.f32 %v4527, %v4542
    %4544 = vrot.lane.b32.xlu0 %v4540, 8
    %v4545 = vpop.permute.xlu0 %4544
    %v4546 = vadd.f32 %v4540, %v4545
    %4547 = vrot.lane.b32.xlu0 %v4543, 16
    %v4548 = vpop.permute.xlu0 %4547
    %v4549 = vadd.f32 %v4543, %v4548
    %4550 = vrot.lane.b32.xlu0 %v4546, 16
    %v4551 = vpop.permute.xlu0 %4550
    %v4552 = vadd.f32 %v4546, %v4551
    %4553 = vrot.lane.b32.xlu0 %v4549, 32
    %v4554 = vpop.permute.xlu0 %4553
    %v4555 = vadd.f32 %v4549, %v4554
    %4556 = vrot.lane.b32.xlu0 %v4552, 32
    %v4557 = vpop.permute.xlu0 %4556
    %v4558 = vadd.f32 %v4552, %v4557
    %4559 = vrot.lane.b32.xlu0 %v4555, 64
    %v4560 = vpop.permute.xlu0 %4559
    %v4561 = vadd.f32 %v4555, %v4560
    %4562 = vrot.lane.b32.xlu0 %v4558, 64
    %v4563 = vpop.permute.xlu0 %4562
    %v4564 = vadd.f32 %v4558, %v4563
    %v4565 = vmul.f32 %v4561, 0.001953125
    %v4566 = vmul.f32 %v4564, 0.001953125
    %v4567 = vmul.f32 %v4565, %v4565
    %v4568 = vsub.f32 %v4566, %v4567
    %v4569 = vmax.f32 %v4568, 0.0
    %v4570 = vld [vmem:[%s41] sm:$0x1]
    %v4571 = vadd.f32 %v4569, 1e-05
    %v4572 = vrsqrt.pop %v4571
    %v4573 = vmul.f32 %v4570, %v4572
    %v4574 = vld [vmem:[%s43] sm:$0x1]
    %v4575 = vmul.f32 %v4565, %v4573
    %v4576 = vsub.f32 %v4574, %v4575
    %v4578 = vlaneseq
    %v4579 = vshrl.u32 %v4578, 7
    %v4580 = vsub.s32 0, %v4579
    %v4581 = vrot.slane %v4573, %v4580
    %v4583 = vmul.f32 %v4505, %v4581
    %v4584 = vmul.f32 %v4508, %v4581
    %v4585 = vmul.f32 %v4513, %v4581
    %v4586 = vmul.f32 %v4516, %v4581
    %v4588 = vlaneseq
    %v4589 = vshrl.u32 %v4588, 7
    %v4590 = vsub.s32 0, %v4589
    %v4591 = vrot.slane %v4576, %v4590
    %v4593 = vadd.f32 %v4583, %v4591
    %v4594 = vadd.f32 %v4584, %v4591
    %v4595 = vadd.f32 %v4585, %v4591
    %v4596 = vadd.f32 %v4586, %v4591
    %v4597 = vadd.f32 %v4593, %v3472
    %v4598 = vadd.f32 %v4594, %v3473
    %v4599 = vadd.f32 %v4595, %v3474
    %v4600 = vadd.f32 %v4596, %v3475
    %v4601 = vmul.f32 %v4597, 0.01
    %v4602 = vmul.f32 %v4598, 0.01
    %v4603 = vmul.f32 %v4599, 0.01
    %v4604 = vmul.f32 %v4600, 0.01
    %v4605 = vmax.f32 %v4597, %v4601
    %v4606 = vmax.f32 %v4598, %v4602
    %v4607 = vmax.f32 %v4599, %v4603
    %v4608 = vmax.f32 %v4600, %v4604
    %4609 = vst [vmem:[#allocation2 + $0x3] sm:$0xff] %v4605
    %4610 = vst [vmem:[#allocation2 + $0xb] sm:$0xff] %v4606
    %4611 = vst [vmem:[#allocation2 + $0x1b] sm:$0xff] %v4607
    %4612 = vst [vmem:[#allocation2 + $0x23] sm:$0xff] %v4608
    %v4613 = vld [vmem:[#allocation2] sm:$0xff]
    %v4614 = vld [vmem:[#allocation2 + $0x8] sm:$0xff]
    %v4615 = vld [vmem:[#allocation2 + $0x10] sm:$0x3f]
    %v4616 = vld [vmem:[#allocation2 + $0x18] sm:$0xff]
    %v4617 = vld [vmem:[#allocation2 + $0x20] sm:$0xff]
    %v4618 = vld [vmem:[#allocation2 + $0x28] sm:$0x3f]
    %v4625 = vrot.slane %v4613, 1
    %v4626 = vrot.slane %v4614, 1
    %v4627 = vsel %vm376, %v4625, %v4626
    %v4628 = vrot.slane %v4615, 1
    %v4629 = vsel %vm376, %v4626, %v4628
    %v4630 = vrot.slane %v4616, 1
    %v4631 = vrot.slane %v4617, 1
    %v4632 = vsel %vm376, %v4630, %v4631
    %v4633 = vrot.slane %v4618, 1
    %v4634 = vsel %vm376, %v4631, %v4633
    %v4635 = vrot.slane %v4613, 2
    %v4636 = vrot.slane %v4614, 2
    %v4637 = vsel %vm391, %v4635, %v4636
    %v4638 = vrot.slane %v4615, 2
    %v4639 = vsel %vm391, %v4636, %v4638
    %v4640 = vrot.slane %v4616, 2
    %v4641 = vrot.slane %v4617, 2
    %v4642 = vsel %vm391, %v4640, %v4641
    %v4643 = vrot.slane %v4618, 2
    %v4644 = vsel %vm391, %v4641, %v4643
    %v4645 = vrot.slane %v4613, 3
    %v4646 = vrot.slane %v4614, 3
    %v4647 = vsel %vm406, %v4645, %v4646
    %v4648 = vrot.slane %v4615, 3
    %v4649 = vsel %vm406, %v4646, %v4648
    %v4650 = vrot.slane %v4616, 3
    %v4651 = vrot.slane %v4617, 3
    %v4652 = vsel %vm406, %v4650, %v4651
    %v4653 = vrot.slane %v4618, 3
    %v4654 = vsel %vm406, %v4651, %v4653
    %v4655 = vrot.slane %v4613, 4
    %v4656 = vrot.slane %v4614, 4
    %v4657 = vsel %vm421, %v4655, %v4656
    %v4658 = vrot.slane %v4615, 4
    %v4659 = vsel %vm421, %v4656, %v4658
    %v4660 = vrot.slane %v4616, 4
    %v4661 = vrot.slane %v4617, 4
    %v4662 = vsel %vm421, %v4660, %v4661
    %v4663 = vrot.slane %v4618, 4
    %v4664 = vsel %vm421, %v4661, %v4663
    %v4665 = vrot.slane %v4627, 1
    %v4666 = vrot.slane %v4629, 1
    %v4667 = vsel %vm376, %v4665, %v4666
    %v4668 = vrot.slane %v4637, 1
    %v4669 = vrot.slane %v4639, 1
    %v4670 = vsel %vm376, %v4668, %v4669
    %v4671 = vrot.slane %v4647, 1
    %v4672 = vrot.slane %v4649, 1
    %v4673 = vsel %vm376, %v4671, %v4672
    %v4674 = vrot.slane %v4657, 1
    %v4675 = vrot.slane %v4659, 1
    %v4676 = vsel %vm376, %v4674, %v4675
    %v4677 = vrot.slane %v4628, 1
    %v4678 = vsel %vm376, %v4666, %v4677
    %v4679 = vrot.slane %v4638, 1
    %v4680 = vsel %vm376, %v4669, %v4679
    %v4681 = vrot.slane %v4648, 1
    %v4682 = vsel %vm376, %v4672, %v4681
    %v4683 = vrot.slane %v4658, 1
    %v4684 = vsel %vm376, %v4675, %v4683
    %v4685 = vrot.slane %v4632, 1
    %v4686 = vrot.slane %v4634, 1
    %v4687 = vsel %vm376, %v4685, %v4686
    %v4688 = vrot.slane %v4642, 1
    %v4689 = vrot.slane %v4644, 1
    %v4690 = vsel %vm376, %v4688, %v4689
    %v4691 = vrot.slane %v4652, 1
    %v4692 = vrot.slane %v4654, 1
    %v4693 = vsel %vm376, %v4691, %v4692
    %v4694 = vrot.slane %v4662, 1
    %v4695 = vrot.slane %v4664, 1
    %v4696 = vsel %vm376, %v4694, %v4695
    %v4697 = vrot.slane %v4633, 1
    %v4698 = vsel %vm376, %v4686, %v4697
    %v4699 = vrot.slane %v4643, 1
    %v4700 = vsel %vm376, %v4689, %v4699
    %v4701 = vrot.slane %v4653, 1
    %v4702 = vsel %vm376, %v4692, %v4701
    %v4703 = vrot.slane %v4663, 1
    %v4704 = vsel %vm376, %v4695, %v4703
    %v4725 = vpack.c.bf16 %v4629, %v4627
    %v4726 = vpack.c.bf16 %v4678, %v4667
    %v4727 = vpack.c.bf16 %v4680, %v4670
    %v4728 = vpack.c.bf16 %v4682, %v4673
    %v4729 = vpack.c.bf16 %v4684, %v4676
    %v4730 = vpack.c.bf16 %v4634, %v4632
    %v4731 = vpack.c.bf16 %v4698, %v4687
    %v4732 = vpack.c.bf16 %v4700, %v4690
    %v4733 = vpack.c.bf16 %v4702, %v4693
    %v4734 = vpack.c.bf16 %v4704, %v4696
    %v4735 = vld [vmem:[#allocation20] sm:$0xf]
    %v4736 = vld [vmem:[#allocation20 + $0x4] sm:$0xf]
    %v4737 = vld [vmem:[#allocation20 + $0x8] sm:$0xf]
    %v4738 = vld [vmem:[#allocation20 + $0xc] sm:$0xf]
    %v4739 = vld [vmem:[#allocation20 + $0x10] sm:$0xf]
    %v4740 = vld [vmem:[#allocation20 + $0x14] sm:$0xf]
    %v4741 = vld [vmem:[#allocation20 + $0x18] sm:$0xf]
    %v4742 = vld [vmem:[#allocation20 + $0x1c] sm:$0xf]
    %v4743 = vld [vmem:[#allocation20 + $0x20] sm:$0xf]
    %v4744 = vld [vmem:[#allocation20 + $0x24] sm:$0xf]
    %v4745 = vld [vmem:[#allocation20 + $0x28] sm:$0xf]
    %v4746 = vld [vmem:[#allocation20 + $0x2c] sm:$0xf]
    %v4747 = vld [vmem:[#allocation20 + $0x30] sm:$0xf]
    %v4748 = vld [vmem:[#allocation20 + $0x34] sm:$0xf]
    %v4749 = vld [vmem:[#allocation20 + $0x38] sm:$0xf]
    %v4750 = vld [vmem:[#allocation20 + $0x3c] sm:$0xf]
    %v4751 = vld [vmem:[#allocation20 + $0x40] sm:$0xf]
    %v4752 = vld [vmem:[#allocation20 + $0x44] sm:$0xf]
    %v4753 = vld [vmem:[#allocation20 + $0x48] sm:$0xf]
    %v4754 = vld [vmem:[#allocation20 + $0x4c] sm:$0xf]
    %v4755 = vld [vmem:[#allocation20 + $0x50] sm:$0xf]
    %v4756 = vld [vmem:[#allocation20 + $0x54] sm:$0xf]
    %v4757 = vld [vmem:[#allocation20 + $0x58] sm:$0xf]
    %v4758 = vld [vmem:[#allocation20 + $0x5c] sm:$0xf]
    %v4759 = vld [vmem:[#allocation20 + $0x60] sm:$0xf]
    %v4760 = vld [vmem:[#allocation20 + $0x64] sm:$0xf]
    %v4761 = vld [vmem:[#allocation20 + $0x68] sm:$0xf]
    %v4762 = vld [vmem:[#allocation20 + $0x6c] sm:$0xf]
    %v4763 = vld [vmem:[#allocation20 + $0x70] sm:$0xf]
    %v4764 = vld [vmem:[#allocation20 + $0x74] sm:$0xf]
    %v4765 = vld [vmem:[#allocation20 + $0x78] sm:$0xf]
    %v4766 = vld [vmem:[#allocation20 + $0x7c] sm:$0xf]
    %v4767 = vld [vmem:[#allocation20 + $0x80] sm:$0xf]
    %v4768 = vld [vmem:[#allocation20 + $0x84] sm:$0xf]
    %v4769 = vld [vmem:[#allocation20 + $0x88] sm:$0xf]
    %v4770 = vld [vmem:[#allocation20 + $0x8c] sm:$0xf]
    %v4771 = vld [vmem:[#allocation20 + $0x90] sm:$0xf]
    %v4772 = vld [vmem:[#allocation20 + $0x94] sm:$0xf]
    %v4773 = vld [vmem:[#allocation20 + $0x98] sm:$0xf]
    %v4774 = vld [vmem:[#allocation20 + $0x9c] sm:$0xf]
    %v4775 = vld [vmem:[#allocation20 + $0xa0] sm:$0xf]
    %v4776 = vld [vmem:[#allocation20 + $0xa4] sm:$0xf]
    %v4777 = vld [vmem:[#allocation20 + $0xa8] sm:$0xf]
    %v4778 = vld [vmem:[#allocation20 + $0xac] sm:$0xf]
    %v4779 = vld [vmem:[#allocation20 + $0xb0] sm:$0xf]
    %v4780 = vld [vmem:[#allocation20 + $0xb4] sm:$0xf]
    %v4781 = vld [vmem:[#allocation20 + $0xb8] sm:$0xf]
    %v4782 = vld [vmem:[#allocation20 + $0xbc] sm:$0xf]
    %v4783 = vld [vmem:[#allocation20 + $0xc0] sm:$0xf]
    %v4784 = vld [vmem:[#allocation20 + $0xc4] sm:$0xf]
    %v4785 = vld [vmem:[#allocation20 + $0xc8] sm:$0xf]
    %v4786 = vld [vmem:[#allocation20 + $0xcc] sm:$0xf]
    %v4787 = vld [vmem:[#allocation20 + $0xd0] sm:$0xf]
    %v4788 = vld [vmem:[#allocation20 + $0xd4] sm:$0xf]
    %v4789 = vld [vmem:[#allocation20 + $0xd8] sm:$0xf]
    %v4790 = vld [vmem:[#allocation20 + $0xdc] sm:$0xf]
    %v4791 = vld [vmem:[#allocation20 + $0xe0] sm:$0xf]
    %v4792 = vld [vmem:[#allocation20 + $0xe4] sm:$0xf]
    %v4793 = vld [vmem:[#allocation20 + $0xe8] sm:$0xf]
    %v4794 = vld [vmem:[#allocation20 + $0xec] sm:$0xf]
    %v4795 = vld [vmem:[#allocation20 + $0xf0] sm:$0xf]
    %v4796 = vld [vmem:[#allocation20 + $0xf4] sm:$0xf]
    %v4797 = vld [vmem:[#allocation20 + $0xf8] sm:$0xf]
    %v4798 = vld [vmem:[#allocation20 + $0xfc] sm:$0xf]
    %v4799 = vld [vmem:[#allocation20 + $0x100] sm:$0xf]
    %v4800 = vld [vmem:[#allocation20 + $0x104] sm:$0xf]
    %v4801 = vld [vmem:[#allocation20 + $0x108] sm:$0xf]
    %v4802 = vld [vmem:[#allocation20 + $0x10c] sm:$0xf]
    %v4803 = vld [vmem:[#allocation20 + $0x110] sm:$0xf]
    %v4804 = vld [vmem:[#allocation20 + $0x114] sm:$0xf]
    %v4805 = vld [vmem:[#allocation20 + $0x118] sm:$0xf]
    %v4806 = vld [vmem:[#allocation20 + $0x11c] sm:$0xf]
    %v4807 = vld [vmem:[#allocation20 + $0x120] sm:$0xf]
    %v4808 = vld [vmem:[#allocation20 + $0x124] sm:$0xf]
    %v4809 = vld [vmem:[#allocation20 + $0x128] sm:$0xf]
    %v4810 = vld [vmem:[#allocation20 + $0x12c] sm:$0xf]
    %v4811 = vld [vmem:[#allocation20 + $0x130] sm:$0xf]
    %v4812 = vld [vmem:[#allocation20 + $0x134] sm:$0xf]
    %v4813 = vld [vmem:[#allocation20 + $0x138] sm:$0xf]
    %v4814 = vld [vmem:[#allocation20 + $0x13c] sm:$0xf]
    %v4895 = vunpack.c.l.b16 %v4735
    %v4896 = vunpack.c.l.b16 %v4736
    %v4897 = vunpack.c.l.b16 %v4737
    %v4898 = vunpack.c.l.b16 %v4738
    %v4899 = vunpack.c.l.b16 %v4739
    %v4900 = vunpack.c.l.b16 %v4740
    %v4901 = vunpack.c.l.b16 %v4741
    %v4902 = vunpack.c.l.b16 %v4742
    %v4903 = vunpack.c.l.b16 %v4743
    %v4904 = vunpack.c.l.b16 %v4744
    %v4905 = vunpack.c.l.b16 %v4745
    %v4906 = vunpack.c.l.b16 %v4746
    %v4907 = vunpack.c.l.b16 %v4747
    %v4908 = vunpack.c.l.b16 %v4748
    %v4909 = vunpack.c.l.b16 %v4749
    %v4910 = vunpack.c.l.b16 %v4750
    %v4911 = vunpack.c.l.b16 %v4751
    %v4912 = vunpack.c.l.b16 %v4752
    %v4913 = vunpack.c.l.b16 %v4753
    %v4914 = vunpack.c.l.b16 %v4754
    %v4915 = vunpack.c.l.b16 %v4755
    %v4916 = vunpack.c.l.b16 %v4756
    %v4917 = vunpack.c.l.b16 %v4757
    %v4918 = vunpack.c.l.b16 %v4758
    %v4919 = vunpack.c.l.b16 %v4759
    %v4920 = vunpack.c.l.b16 %v4760
    %v4921 = vunpack.c.l.b16 %v4761
    %v4922 = vunpack.c.l.b16 %v4762
    %v4923 = vunpack.c.l.b16 %v4763
    %v4924 = vunpack.c.l.b16 %v4764
    %v4925 = vunpack.c.l.b16 %v4765
    %v4926 = vunpack.c.l.b16 %v4766
    %v4927 = vunpack.c.l.b16 %v4767
    %v4928 = vunpack.c.l.b16 %v4768
    %v4929 = vunpack.c.l.b16 %v4769
    %v4930 = vunpack.c.l.b16 %v4770
    %v4931 = vunpack.c.l.b16 %v4771
    %v4932 = vunpack.c.l.b16 %v4772
    %v4933 = vunpack.c.l.b16 %v4773
    %v4934 = vunpack.c.l.b16 %v4774
    %v4935 = vunpack.c.l.b16 %v4775
    %v4936 = vunpack.c.l.b16 %v4776
    %v4937 = vunpack.c.l.b16 %v4777
    %v4938 = vunpack.c.l.b16 %v4778
    %v4939 = vunpack.c.l.b16 %v4779
    %v4940 = vunpack.c.l.b16 %v4780
    %v4941 = vunpack.c.l.b16 %v4781
    %v4942 = vunpack.c.l.b16 %v4782
    %v4943 = vunpack.c.l.b16 %v4783
    %v4944 = vunpack.c.l.b16 %v4784
    %v4945 = vunpack.c.l.b16 %v4785
    %v4946 = vunpack.c.l.b16 %v4786
    %v4947 = vunpack.c.l.b16 %v4787
    %v4948 = vunpack.c.l.b16 %v4788
    %v4949 = vunpack.c.l.b16 %v4789
    %v4950 = vunpack.c.l.b16 %v4790
    %v4951 = vunpack.c.l.b16 %v4791
    %v4952 = vunpack.c.l.b16 %v4792
    %v4953 = vunpack.c.l.b16 %v4793
    %v4954 = vunpack.c.l.b16 %v4794
    %v4955 = vunpack.c.l.b16 %v4795
    %v4956 = vunpack.c.l.b16 %v4796
    %v4957 = vunpack.c.l.b16 %v4797
    %v4958 = vunpack.c.l.b16 %v4798
    %v4959 = vunpack.c.l.b16 %v4799
    %v4960 = vunpack.c.l.b16 %v4800
    %v4961 = vunpack.c.l.b16 %v4801
    %v4962 = vunpack.c.l.b16 %v4802
    %v4963 = vunpack.c.l.b16 %v4803
    %v4964 = vunpack.c.l.b16 %v4804
    %v4965 = vunpack.c.l.b16 %v4805
    %v4966 = vunpack.c.l.b16 %v4806
    %v4967 = vunpack.c.l.b16 %v4807
    %v4968 = vunpack.c.l.b16 %v4808
    %v4969 = vunpack.c.l.b16 %v4809
    %v4970 = vunpack.c.l.b16 %v4810
    %v4971 = vunpack.c.l.b16 %v4811
    %v4972 = vunpack.c.l.b16 %v4812
    %v4973 = vunpack.c.l.b16 %v4813
    %v4974 = vunpack.c.l.b16 %v4814
    %v4975 = vpack.c.b16 %v4896, %v4895
    %v4976 = vpack.c.b16 %v4898, %v4897
    %v4977 = vpack.c.b16 %v4900, %v4899
    %v4978 = vpack.c.b16 %v4902, %v4901
    %v4979 = vpack.c.b16 %v4904, %v4903
    %v4980 = vpack.c.b16 %v4906, %v4905
    %v4981 = vpack.c.b16 %v4908, %v4907
    %v4982 = vpack.c.b16 %v4910, %v4909
    %v4983 = vpack.c.b16 %v4912, %v4911
    %v4984 = vpack.c.b16 %v4914, %v4913
    %v4985 = vpack.c.b16 %v4916, %v4915
    %v4986 = vpack.c.b16 %v4918, %v4917
    %v4987 = vpack.c.b16 %v4920, %v4919
    %v4988 = vpack.c.b16 %v4922, %v4921
    %v4989 = vpack.c.b16 %v4924, %v4923
    %v4990 = vpack.c.b16 %v4926, %v4925
    %v4991 = vpack.c.b16 %v4928, %v4927
    %v4992 = vpack.c.b16 %v4930, %v4929
    %v4993 = vpack.c.b16 %v4932, %v4931
    %v4994 = vpack.c.b16 %v4934, %v4933
    %v4995 = vpack.c.b16 %v4936, %v4935
    %v4996 = vpack.c.b16 %v4938, %v4937
    %v4997 = vpack.c.b16 %v4940, %v4939
    %v4998 = vpack.c.b16 %v4942, %v4941
    %v4999 = vpack.c.b16 %v4944, %v4943
    %v5000 = vpack.c.b16 %v4946, %v4945
    %v5001 = vpack.c.b16 %v4948, %v4947
    %v5002 = vpack.c.b16 %v4950, %v4949
    %v5003 = vpack.c.b16 %v4952, %v4951
    %v5004 = vpack.c.b16 %v4954, %v4953
    %v5005 = vpack.c.b16 %v4956, %v4955
    %v5006 = vpack.c.b16 %v4958, %v4957
    %v5007 = vpack.c.b16 %v4960, %v4959
    %v5008 = vpack.c.b16 %v4962, %v4961
    %v5009 = vpack.c.b16 %v4964, %v4963
    %v5010 = vpack.c.b16 %v4966, %v4965
    %v5011 = vpack.c.b16 %v4968, %v4967
    %v5012 = vpack.c.b16 %v4970, %v4969
    %v5013 = vpack.c.b16 %v4972, %v4971
    %v5014 = vpack.c.b16 %v4974, %v4973
    %5055 = vmatprep.subr.bf16.mxu0 0
    %5056 = vmatpush1.bf16.msra.mxu0 %v4975
    %5057 = vmatprep.subr.bf16.mxu0 0
    %5058 = vmatpush1.bf16.msra.mxu0 %v4976
    %5059 = vmatprep.subr.bf16.mxu0 0
    %5060 = vmatpush1.bf16.msra.mxu0 %v4977
    %5061 = vmatprep.subr.bf16.mxu0 0
    %5062 = vmatpush1.bf16.msra.mxu0 %v4978
    %5063 = vmatprep.subr.bf16.mxu0 0
    %5064 = vmatpush1.bf16.msra.mxu0 %v4979
    %5065 = vmatprep.subr.bf16.mxu0 0
    %5066 = vmatpush1.bf16.msra.mxu0 %v4980
    %5067 = vmatprep.subr.bf16.mxu0 0
    %5068 = vmatpush1.bf16.msra.mxu0 %v4981
    %5069 = vmatprep.subr.bf16.mxu0 0
    %5070 = vmatpush1.bf16.msra.mxu0 %v4982
    %5071 = vmatprep.subr.bf16.mxu0 0
    %5072 = vmatpush1.bf16.msra.mxu0 %v4983
    %5073 = vmatprep.subr.bf16.mxu0 0
    %5074 = vmatpush1.bf16.msra.mxu0 %v4984
    %5075 = vmatprep.subr.bf16.mxu0 0
    %5076 = vmatpush1.bf16.msra.mxu0 %v4985
    %5077 = vmatprep.subr.bf16.mxu0 0
    %5078 = vmatpush1.bf16.msra.mxu0 %v4986
    %5079 = vmatprep.subr.bf16.mxu0 0
    %5080 = vmatpush1.bf16.msra.mxu0 %v4987
    %5081 = vmatprep.subr.bf16.mxu0 0
    %5082 = vmatpush1.bf16.msra.mxu0 %v4988
    %5083 = vmatprep.subr.bf16.mxu0 0
    %5084 = vmatpush1.bf16.msra.mxu0 %v4989
    %5085 = vmatprep.subr.bf16.mxu0 0
    %5086 = vmatpush1.bf16.msra.mxu0 %v4990
    %5087 = vmatprep.mubr.bf16.mxu0 %v4726
    %5088 = vmatmul.mubr.bf16.gmra.mrb[0].mxu0 %v4725
    %v5089 = vpop.f32.mrb[0].mxu0
    %v5090 = vadd.f32 0.0, %v5089
    %v5091 = vpop.f32.mrb[0].mxu0
    %v5092 = vpop.f32.mrb[0].mxu0
    %v5093 = vadd.f32 0.0, %v5092
    %v5094 = vpop.f32.mrb[0].mxu0
    %5095 = vmatprep.mubr.bf16.mxu0 %v4731
    %5096 = vmatmul.mubr.bf16.gmra.mrb[0].mxu0 %v4730
    %v5097 = vpop.f32.mrb[0].mxu0
    %v5098 = vadd.f32 0.0, %v5097
    %v5099 = vpop.f32.mrb[0].mxu0
    %v5100 = vpop.f32.mrb[0].mxu0
    %v5101 = vadd.f32 0.0, %v5100
    %v5102 = vpop.f32.mrb[0].mxu0
    %5103 = vdwg.mxu0
    %5104 = vmatprep.subr.bf16.mxu0 0
    %5105 = vmatpush1.bf16.msra.mxu0 %v4991
    %5106 = vmatprep.subr.bf16.mxu0 0
    %5107 = vmatpush1.bf16.msra.mxu0 %v4992
    %5108 = vmatprep.subr.bf16.mxu0 0
    %5109 = vmatpush1.bf16.msra.mxu0 %v4993
    %5110 = vmatprep.subr.bf16.mxu0 0
    %5111 = vmatpush1.bf16.msra.mxu0 %v4994
    %5112 = vmatprep.subr.bf16.mxu0 0
    %5113 = vmatpush1.bf16.msra.mxu0 %v4995
    %5114 = vmatprep.subr.bf16.mxu0 0
    %5115 = vmatpush1.bf16.msra.mxu0 %v4996
    %5116 = vmatprep.subr.bf16.mxu0 0
    %5117 = vmatpush1.bf16.msra.mxu0 %v4997
    %5118 = vmatprep.subr.bf16.mxu0 0
    %5119 = vmatpush1.bf16.msra.mxu0 %v4998
    %5120 = vmatprep.subr.bf16.mxu0 0
    %5121 = vmatpush1.bf16.msra.mxu0 %v4999
    %5122 = vmatprep.subr.bf16.mxu0 0
    %5123 = vmatpush1.bf16.msra.mxu0 %v5000
    %5124 = vmatprep.subr.bf16.mxu0 0
    %5125 = vmatpush1.bf16.msra.mxu0 %v5001
    %5126 = vmatprep.subr.bf16.mxu0 0
    %5127 = vmatpush1.bf16.msra.mxu0 %v5002
    %5128 = vmatprep.subr.bf16.mxu0 0
    %5129 = vmatpush1.bf16.msra.mxu0 %v5003
    %5130 = vmatprep.subr.bf16.mxu0 0
    %5131 = vmatpush1.bf16.msra.mxu0 %v5004
    %5132 = vmatprep.subr.bf16.mxu0 0
    %5133 = vmatpush1.bf16.msra.mxu0 %v5005
    %5134 = vmatprep.subr.bf16.mxu0 0
    %5135 = vmatpush1.bf16.msra.mxu0 %v5006
    %5136 = vmatprep.mubr.bf16.mxu0 %v4728
    %5137 = vmatmul.mubr.bf16.gmra.mrb[0].mxu0 %v4727
    %v5138 = vpop.f32.mrb[0].mxu0
    %v5139 = vadd.f32 %v5090, %v5138
    %v5140 = vpop.f32.mrb[0].mxu0
    %v5141 = vpop.f32.mrb[0].mxu0
    %v5142 = vadd.f32 %v5093, %v5141
    %v5143 = vpop.f32.mrb[0].mxu0
    %5144 = vmatprep.mubr.bf16.mxu0 %v4733
    %5145 = vmatmul.mubr.bf16.gmra.mrb[0].mxu0 %v4732
    %v5146 = vpop.f32.mrb[0].mxu0
    %v5147 = vadd.f32 %v5098, %v5146
    %v5148 = vpop.f32.mrb[0].mxu0
    %v5149 = vpop.f32.mrb[0].mxu0
    %v5150 = vadd.f32 %v5101, %v5149
    %v5151 = vpop.f32.mrb[0].mxu0
    %5152 = vdwg.mxu0
    %5153 = vmatprep.subr.bf16.mxu0 0
    %5154 = vmatpush1.bf16.msra.mxu0 %v5007
    %5155 = vmatprep.subr.bf16.mxu0 0
    %5156 = vmatpush1.bf16.msra.mxu0 %v5008
    %5157 = vmatprep.subr.bf16.mxu0 0
    %5158 = vmatpush1.bf16.msra.mxu0 %v5009
    %5159 = vmatprep.subr.bf16.mxu0 0
    %5160 = vmatpush1.bf16.msra.mxu0 %v5010
    %5161 = vmatprep.subr.bf16.mxu0 0
    %5162 = vmatpush1.bf16.msra.mxu0 %v5011
    %5163 = vmatprep.subr.bf16.mxu0 0
    %5164 = vmatpush1.bf16.msra.mxu0 %v5012
    %5165 = vmatprep.subr.bf16.mxu0 0
    %5166 = vmatpush1.bf16.msra.mxu0 %v5013
    %5167 = vmatprep.subr.bf16.mxu0 0
    %5168 = vmatpush1.bf16.msra.mxu0 %v5014
    %5169 = vmatprep.subr.bf16.mxu0 0
    %5170 = vmatpush1.bf16.msra.mxu0 0
    %5171 = vmatprep.subr.bf16.mxu0 0
    %5172 = vmatpush1.bf16.msra.mxu0 0
    %5173 = vmatprep.subr.bf16.mxu0 0
    %5174 = vmatpush1.bf16.msra.mxu0 0
    %5175 = vmatprep.subr.bf16.mxu0 0
    %5176 = vmatpush1.bf16.msra.mxu0 0
    %5177 = vmatprep.subr.bf16.mxu0 0
    %5178 = vmatpush1.bf16.msra.mxu0 0
    %5179 = vmatprep.subr.bf16.mxu0 0
    %5180 = vmatpush1.bf16.msra.mxu0 0
    %5181 = vmatprep.subr.bf16.mxu0 0
    %5182 = vmatpush1.bf16.msra.mxu0 0
    %5183 = vmatprep.subr.bf16.mxu0 0
    %5184 = vmatpush1.bf16.msra.mxu0 0
    %5185 = vmatprep.mubr.bf16.mxu0 0
    %5186 = vmatmul.mubr.bf16.gmra.mrb[0].mxu0 %v4729
    %v5187 = vpop.f32.mrb[0].mxu0
    %v5188 = vadd.f32 %v5139, %v5187
    %v5189 = vpop.f32.mrb[0].mxu0
    %v5190 = vpop.f32.mrb[0].mxu0
    %v5191 = vadd.f32 %v5142, %v5190
    %v5192 = vpop.f32.mrb[0].mxu0
    %5193 = vmatprep.mubr.bf16.mxu0 0
    %5194 = vmatmul.mubr.bf16.gmra.mrb[0].mxu0 %v4734
    %v5195 = vpop.f32.mrb[0].mxu0
    %v5196 = vadd.f32 %v5147, %v5195
    %v5197 = vpop.f32.mrb[0].mxu0
    %v5198 = vpop.f32.mrb[0].mxu0
    %v5199 = vadd.f32 %v5150, %v5198
    %v5200 = vpop.f32.mrb[0].mxu0
    %5201 = vdwg.mxu0
    %v5202 = vadd.f32 %v5188, %v5191
    %v5203 = vadd.f32 %v5202, %v5196
    %v5204 = vadd.f32 %v5203, %v5199
    %v5205 = vrot.slane %v5204, 4
    %v5206 = vadd.f32 %v5204, %v5205
    %v5207 = vrot.slane %v5206, 2
    %v5208 = vadd.f32 %v5206, %v5207
    %v5209 = vrot.slane %v5208, 1
    %v5210 = vadd.f32 %v5208, %v5209
    %v5211 = vmul.f32 %v5188, %v5188
    %v5212 = vmul.f32 %v5191, %v5191
    %v5213 = vmul.f32 %v5196, %v5196
    %v5214 = vmul.f32 %v5199, %v5199
    %v5215 = vadd.f32 %v5211, %v5212
    %v5216 = vadd.f32 %v5215, %v5213
    %v5217 = vadd.f32 %v5216, %v5214
    %v5218 = vrot.slane %v5217, 4
    %v5219 = vadd.f32 %v5217, %v5218
    %v5220 = vrot.slane %v5219, 2
    %v5221 = vadd.f32 %v5219, %v5220
    %v5222 = vrot.slane %v5221, 1
    %v5223 = vadd.f32 %v5221, %v5222
    %5224 = vrot.lane.b32.xlu0 %v5210, 8
    %v5225 = vpop.permute.xlu0 %5224
    %v5226 = vadd.f32 %v5210, %v5225
    %5227 = vrot.lane.b32.xlu0 %v5223, 8
    %v5228 = vpop.permute.xlu0 %5227
    %v5229 = vadd.f32 %v5223, %v5228
    %5230 = vrot.lane.b32.xlu0 %v5226, 16
    %v5231 = vpop.permute.xlu0 %5230
    %v5232 = vadd.f32 %v5226, %v5231
    %5233 = vrot.lane.b32.xlu0 %v5229, 16
    %v5234 = vpop.permute.xlu0 %5233
    %v5235 = vadd.f32 %v5229, %v5234
    %5236 = vrot.lane.b32.xlu0 %v5232, 32
    %v5237 = vpop.permute.xlu0 %5236
    %v5238 = vadd.f32 %v5232, %v5237
    %5239 = vrot.lane.b32.xlu0 %v5235, 32
    %v5240 = vpop.permute.xlu0 %5239
    %v5241 = vadd.f32 %v5235, %v5240
    %5242 = vrot.lane.b32.xlu0 %v5238, 64
    %v5243 = vpop.permute.xlu0 %5242
    %v5244 = vadd.f32 %v5238, %v5243
    %5245 = vrot.lane.b32.xlu0 %v5241, 64
    %v5246 = vpop.permute.xlu0 %5245
    %v5247 = vadd.f32 %v5241, %v5246
    %v5248 = vmul.f32 %v5244, 0.001953125
    %v5249 = vmul.f32 %v5247, 0.001953125
    %v5250 = vmul.f32 %v5248, %v5248
    %v5251 = vsub.f32 %v5249, %v5250
    %v5252 = vmax.f32 %v5251, 0.0
    %v5253 = vld [vmem:[%s47] sm:$0x1]
    %v5254 = vadd.f32 %v5252, 1e-05
    %v5255 = vrsqrt.pop %v5254
    %v5256 = vmul.f32 %v5253, %v5255
    %v5257 = vld [vmem:[%s49] sm:$0x1]
    %v5258 = vmul.f32 %v5248, %v5256
    %v5259 = vsub.f32 %v5257, %v5258
    %v5261 = vlaneseq
    %v5262 = vshrl.u32 %v5261, 7
    %v5263 = vsub.s32 0, %v5262
    %v5264 = vrot.slane %v5256, %v5263
    %v5266 = vmul.f32 %v5188, %v5264
    %v5267 = vmul.f32 %v5191, %v5264
    %v5268 = vmul.f32 %v5196, %v5264
    %v5269 = vmul.f32 %v5199, %v5264
    %v5271 = vlaneseq
    %v5272 = vshrl.u32 %v5271, 7
    %v5273 = vsub.s32 0, %v5272
    %v5274 = vrot.slane %v5259, %v5273
    %v5276 = vadd.f32 %v5266, %v5274
    %v5277 = vadd.f32 %v5267, %v5274
    %v5278 = vadd.f32 %v5268, %v5274
    %v5279 = vadd.f32 %v5269, %v5274
    %v5280 = vmul.f32 %v5276, 0.01
    %v5281 = vmul.f32 %v5277, 0.01
    %v5282 = vmul.f32 %v5278, 0.01
    %v5283 = vmul.f32 %v5279, 0.01
    %v5284 = vmax.f32 %v5276, %v5280
    %v5285 = vmax.f32 %v5277, %v5281
    %v5286 = vmax.f32 %v5278, %v5282
    %v5287 = vmax.f32 %v5279, %v5283
    %5288 = vst [vmem:[#allocation3 + $0x3] sm:$0xff] %v5284
    %5289 = vst [vmem:[#allocation3 + $0xb] sm:$0xff] %v5285
    %5290 = vst [vmem:[#allocation3 + $0x1b] sm:$0xff] %v5286
    %5291 = vst [vmem:[#allocation3 + $0x23] sm:$0xff] %v5287
    %v5292 = vld [vmem:[#allocation3] sm:$0xff]
    %v5293 = vld [vmem:[#allocation3 + $0x8] sm:$0xff]
    %v5294 = vld [vmem:[#allocation3 + $0x10] sm:$0x3f]
    %v5295 = vld [vmem:[#allocation3 + $0x18] sm:$0xff]
    %v5296 = vld [vmem:[#allocation3 + $0x20] sm:$0xff]
    %v5297 = vld [vmem:[#allocation3 + $0x28] sm:$0x3f]
    %v5304 = vrot.slane %v5292, 1
    %v5305 = vrot.slane %v5293, 1
    %v5306 = vsel %vm376, %v5304, %v5305
    %v5307 = vrot.slane %v5294, 1
    %v5308 = vsel %vm376, %v5305, %v5307
    %v5309 = vrot.slane %v5295, 1
    %v5310 = vrot.slane %v5296, 1
    %v5311 = vsel %vm376, %v5309, %v5310
    %v5312 = vrot.slane %v5297, 1
    %v5313 = vsel %vm376, %v5310, %v5312
    %v5314 = vrot.slane %v5292, 2
    %v5315 = vrot.slane %v5293, 2
    %v5316 = vsel %vm391, %v5314, %v5315
    %v5317 = vrot.slane %v5294, 2
    %v5318 = vsel %vm391, %v5315, %v5317
    %v5319 = vrot.slane %v5295, 2
    %v5320 = vrot.slane %v5296, 2
    %v5321 = vsel %vm391, %v5319, %v5320
    %v5322 = vrot.slane %v5297, 2
    %v5323 = vsel %vm391, %v5320, %v5322
    %v5324 = vrot.slane %v5306, 2
    %v5325 = vrot.slane %v5308, 2
    %v5326 = vsel %vm391, %v5324, %v5325
    %v5327 = vrot.slane %v5316, 2
    %v5328 = vrot.slane %v5318, 2
    %v5329 = vsel %vm391, %v5327, %v5328
    %v5330 = vrot.slane %v5307, 2
    %v5331 = vsel %vm391, %v5325, %v5330
    %v5332 = vrot.slane %v5317, 2
    %v5333 = vsel %vm391, %v5328, %v5332
    %v5334 = vrot.slane %v5311, 2
    %v5335 = vrot.slane %v5313, 2
    %v5336 = vsel %vm391, %v5334, %v5335
    %v5337 = vrot.slane %v5321, 2
    %v5338 = vrot.slane %v5323, 2
    %v5339 = vsel %vm391, %v5337, %v5338
    %v5340 = vrot.slane %v5312, 2
    %v5341 = vsel %vm391, %v5335, %v5340
    %v5342 = vrot.slane %v5322, 2
    %v5343 = vsel %vm391, %v5338, %v5342
    %v5356 = vpack.c.bf16 %v5318, %v5316
    %v5357 = vpack.c.bf16 %v5331, %v5326
    %v5358 = vpack.c.bf16 %v5333, %v5329
    %v5359 = vpack.c.bf16 %v5323, %v5321
    %v5360 = vpack.c.bf16 %v5341, %v5336
    %v5361 = vpack.c.bf16 %v5343, %v5339
    %v5362 = vld [vmem:[#allocation21] sm:$0xf]
    %v5363 = vld [vmem:[#allocation21 + $0x4] sm:$0xf]
    %v5364 = vld [vmem:[#allocation21 + $0x8] sm:$0xf]
    %v5365 = vld [vmem:[#allocation21 + $0xc] sm:$0xf]
    %v5366 = vld [vmem:[#allocation21 + $0x10] sm:$0xf]
    %v5367 = vld [vmem:[#allocation21 + $0x14] sm:$0xf]
    %v5368 = vld [vmem:[#allocation21 + $0x18] sm:$0xf]
    %v5369 = vld [vmem:[#allocation21 + $0x1c] sm:$0xf]
    %v5370 = vld [vmem:[#allocation21 + $0x20] sm:$0xf]
    %v5371 = vld [vmem:[#allocation21 + $0x24] sm:$0xf]
    %v5372 = vld [vmem:[#allocation21 + $0x28] sm:$0xf]
    %v5373 = vld [vmem:[#allocation21 + $0x2c] sm:$0xf]
    %v5374 = vld [vmem:[#allocation21 + $0x30] sm:$0xf]
    %v5375 = vld [vmem:[#allocation21 + $0x34] sm:$0xf]
    %v5376 = vld [vmem:[#allocation21 + $0x38] sm:$0xf]
    %v5377 = vld [vmem:[#allocation21 + $0x3c] sm:$0xf]
    %v5378 = vld [vmem:[#allocation21 + $0x40] sm:$0xf]
    %v5379 = vld [vmem:[#allocation21 + $0x44] sm:$0xf]
    %v5380 = vld [vmem:[#allocation21 + $0x48] sm:$0xf]
    %v5381 = vld [vmem:[#allocation21 + $0x4c] sm:$0xf]
    %v5382 = vld [vmem:[#allocation21 + $0x50] sm:$0xf]
    %v5383 = vld [vmem:[#allocation21 + $0x54] sm:$0xf]
    %v5384 = vld [vmem:[#allocation21 + $0x58] sm:$0xf]
    %v5385 = vld [vmem:[#allocation21 + $0x5c] sm:$0xf]
    %v5386 = vld [vmem:[#allocation21 + $0x60] sm:$0xf]
    %v5387 = vld [vmem:[#allocation21 + $0x64] sm:$0xf]
    %v5388 = vld [vmem:[#allocation21 + $0x68] sm:$0xf]
    %v5389 = vld [vmem:[#allocation21 + $0x6c] sm:$0xf]
    %v5390 = vld [vmem:[#allocation21 + $0x70] sm:$0xf]
    %v5391 = vld [vmem:[#allocation21 + $0x74] sm:$0xf]
    %v5392 = vld [vmem:[#allocation21 + $0x78] sm:$0xf]
    %v5393 = vld [vmem:[#allocation21 + $0x7c] sm:$0xf]
    %v5394 = vld [vmem:[#allocation21 + $0x80] sm:$0xf]
    %v5395 = vld [vmem:[#allocation21 + $0x84] sm:$0xf]
    %v5396 = vld [vmem:[#allocation21 + $0x88] sm:$0xf]
    %v5397 = vld [vmem:[#allocation21 + $0x8c] sm:$0xf]
    %v5398 = vld [vmem:[#allocation21 + $0x90] sm:$0xf]
    %v5399 = vld [vmem:[#allocation21 + $0x94] sm:$0xf]
    %v5400 = vld [vmem:[#allocation21 + $0x98] sm:$0xf]
    %v5401 = vld [vmem:[#allocation21 + $0x9c] sm:$0xf]
    %v5402 = vld [vmem:[#allocation21 + $0xa0] sm:$0xf]
    %v5403 = vld [vmem:[#allocation21 + $0xa4] sm:$0xf]
    %v5404 = vld [vmem:[#allocation21 + $0xa8] sm:$0xf]
    %v5405 = vld [vmem:[#allocation21 + $0xac] sm:$0xf]
    %v5406 = vld [vmem:[#allocation21 + $0xb0] sm:$0xf]
    %v5407 = vld [vmem:[#allocation21 + $0xb4] sm:$0xf]
    %v5408 = vld [vmem:[#allocation21 + $0xb8] sm:$0xf]
    %v5409 = vld [vmem:[#allocation21 + $0xbc] sm:$0xf]
    %v5458 = vunpack.c.l.b16 %v5362
    %v5459 = vunpack.c.l.b16 %v5363
    %v5460 = vunpack.c.l.b16 %v5364
    %v5461 = vunpack.c.l.b16 %v5365
    %v5462 = vunpack.c.l.b16 %v5366
    %v5463 = vunpack.c.l.b16 %v5367
    %v5464 = vunpack.c.l.b16 %v5368
    %v5465 = vunpack.c.l.b16 %v5369
    %v5466 = vunpack.c.l.b16 %v5370
    %v5467 = vunpack.c.l.b16 %v5371
    %v5468 = vunpack.c.l.b16 %v5372
    %v5469 = vunpack.c.l.b16 %v5373
    %v5470 = vunpack.c.l.b16 %v5374
    %v5471 = vunpack.c.l.b16 %v5375
    %v5472 = vunpack.c.l.b16 %v5376
    %v5473 = vunpack.c.l.b16 %v5377
    %v5474 = vunpack.c.l.b16 %v5378
    %v5475 = vunpack.c.l.b16 %v5379
    %v5476 = vunpack.c.l.b16 %v5380
    %v5477 = vunpack.c.l.b16 %v5381
    %v5478 = vunpack.c.l.b16 %v5382
    %v5479 = vunpack.c.l.b16 %v5383
    %v5480 = vunpack.c.l.b16 %v5384
    %v5481 = vunpack.c.l.b16 %v5385
    %v5482 = vunpack.c.l.b16 %v5386
    %v5483 = vunpack.c.l.b16 %v5387
    %v5484 = vunpack.c.l.b16 %v5388
    %v5485 = vunpack.c.l.b16 %v5389
    %v5486 = vunpack.c.l.b16 %v5390
    %v5487 = vunpack.c.l.b16 %v5391
    %v5488 = vunpack.c.l.b16 %v5392
    %v5489 = vunpack.c.l.b16 %v5393
    %v5490 = vunpack.c.l.b16 %v5394
    %v5491 = vunpack.c.l.b16 %v5395
    %v5492 = vunpack.c.l.b16 %v5396
    %v5493 = vunpack.c.l.b16 %v5397
    %v5494 = vunpack.c.l.b16 %v5398
    %v5495 = vunpack.c.l.b16 %v5399
    %v5496 = vunpack.c.l.b16 %v5400
    %v5497 = vunpack.c.l.b16 %v5401
    %v5498 = vunpack.c.l.b16 %v5402
    %v5499 = vunpack.c.l.b16 %v5403
    %v5500 = vunpack.c.l.b16 %v5404
    %v5501 = vunpack.c.l.b16 %v5405
    %v5502 = vunpack.c.l.b16 %v5406
    %v5503 = vunpack.c.l.b16 %v5407
    %v5504 = vunpack.c.l.b16 %v5408
    %v5505 = vunpack.c.l.b16 %v5409
    %v5506 = vpack.c.b16 %v5459, %v5458
    %v5507 = vpack.c.b16 %v5461, %v5460
    %v5508 = vpack.c.b16 %v5463, %v5462
    %v5509 = vpack.c.b16 %v5465, %v5464
    %v5510 = vpack.c.b16 %v5467, %v5466
    %v5511 = vpack.c.b16 %v5469, %v5468
    %v5512 = vpack.c.b16 %v5471, %v5470
    %v5513 = vpack.c.b16 %v5473, %v5472
    %v5514 = vpack.c.b16 %v5475, %v5474
    %v5515 = vpack.c.b16 %v5477, %v5476
    %v5516 = vpack.c.b16 %v5479, %v5478
    %v5517 = vpack.c.b16 %v5481, %v5480
    %v5518 = vpack.c.b16 %v5483, %v5482
    %v5519 = vpack.c.b16 %v5485, %v5484
    %v5520 = vpack.c.b16 %v5487, %v5486
    %v5521 = vpack.c.b16 %v5489, %v5488
    %v5522 = vpack.c.b16 %v5491, %v5490
    %v5523 = vpack.c.b16 %v5493, %v5492
    %v5524 = vpack.c.b16 %v5495, %v5494
    %v5525 = vpack.c.b16 %v5497, %v5496
    %v5526 = vpack.c.b16 %v5499, %v5498
    %v5527 = vpack.c.b16 %v5501, %v5500
    %v5528 = vpack.c.b16 %v5503, %v5502
    %v5529 = vpack.c.b16 %v5505, %v5504
    %5554 = vmatprep.subr.bf16.mxu0 0
    %5555 = vmatpush1.bf16.msra.mxu0 %v5506
    %5556 = vmatprep.subr.bf16.mxu0 0
    %5557 = vmatpush1.bf16.msra.mxu0 %v5507
    %5558 = vmatprep.subr.bf16.mxu0 0
    %5559 = vmatpush1.bf16.msra.mxu0 %v5508
    %5560 = vmatprep.subr.bf16.mxu0 0
    %5561 = vmatpush1.bf16.msra.mxu0 %v5509
    %5562 = vmatprep.subr.bf16.mxu0 0
    %5563 = vmatpush1.bf16.msra.mxu0 %v5510
    %5564 = vmatprep.subr.bf16.mxu0 0
    %5565 = vmatpush1.bf16.msra.mxu0 %v5511
    %5566 = vmatprep.subr.bf16.mxu0 0
    %5567 = vmatpush1.bf16.msra.mxu0 %v5512
    %5568 = vmatprep.subr.bf16.mxu0 0
    %5569 = vmatpush1.bf16.msra.mxu0 %v5513
    %5570 = vmatprep.subr.bf16.mxu0 0
    %5571 = vmatpush1.bf16.msra.mxu0 %v5514
    %5572 = vmatprep.subr.bf16.mxu0 0
    %5573 = vmatpush1.bf16.msra.mxu0 %v5515
    %5574 = vmatprep.subr.bf16.mxu0 0
    %5575 = vmatpush1.bf16.msra.mxu0 %v5516
    %5576 = vmatprep.subr.bf16.mxu0 0
    %5577 = vmatpush1.bf16.msra.mxu0 %v5517
    %5578 = vmatprep.subr.bf16.mxu0 0
    %5579 = vmatpush1.bf16.msra.mxu0 %v5518
    %5580 = vmatprep.subr.bf16.mxu0 0
    %5581 = vmatpush1.bf16.msra.mxu0 %v5519
    %5582 = vmatprep.subr.bf16.mxu0 0
    %5583 = vmatpush1.bf16.msra.mxu0 %v5520
    %5584 = vmatprep.subr.bf16.mxu0 0
    %5585 = vmatpush1.bf16.msra.mxu0 %v5521
    %5586 = vmatprep.mubr.bf16.mxu0 %v5357
    %5587 = vmatmul.mubr.bf16.gmra.mrb[0].mxu0 %v5356
    %v5588 = vpop.f32.mrb[0].mxu0
    %v5589 = vadd.f32 0.0, %v5588
    %v5590 = vpop.f32.mrb[0].mxu0
    %v5591 = vpop.f32.mrb[0].mxu0
    %v5592 = vadd.f32 0.0, %v5591
    %v5593 = vpop.f32.mrb[0].mxu0
    %5594 = vmatprep.mubr.bf16.mxu0 %v5360
    %5595 = vmatmul.mubr.bf16.gmra.mrb[0].mxu0 %v5359
    %v5596 = vpop.f32.mrb[0].mxu0
    %v5597 = vadd.f32 0.0, %v5596
    %v5598 = vpop.f32.mrb[0].mxu0
    %v5599 = vpop.f32.mrb[0].mxu0
    %v5600 = vadd.f32 0.0, %v5599
    %v5601 = vpop.f32.mrb[0].mxu0
    %5602 = vdwg.mxu0
    %5603 = vmatprep.subr.bf16.mxu0 0
    %5604 = vmatpush1.bf16.msra.mxu0 %v5522
    %5605 = vmatprep.subr.bf16.mxu0 0
    %5606 = vmatpush1.bf16.msra.mxu0 %v5523
    %5607 = vmatprep.subr.bf16.mxu0 0
    %5608 = vmatpush1.bf16.msra.mxu0 %v5524
    %5609 = vmatprep.subr.bf16.mxu0 0
    %5610 = vmatpush1.bf16.msra.mxu0 %v5525
    %5611 = vmatprep.subr.bf16.mxu0 0
    %5612 = vmatpush1.bf16.msra.mxu0 %v5526
    %5613 = vmatprep.subr.bf16.mxu0 0
    %5614 = vmatpush1.bf16.msra.mxu0 %v5527
    %5615 = vmatprep.subr.bf16.mxu0 0
    %5616 = vmatpush1.bf16.msra.mxu0 %v5528
    %5617 = vmatprep.subr.bf16.mxu0 0
    %5618 = vmatpush1.bf16.msra.mxu0 %v5529
    %5619 = vmatprep.subr.bf16.mxu0 0
    %5620 = vmatpush1.bf16.msra.mxu0 0
    %5621 = vmatprep.subr.bf16.mxu0 0
    %5622 = vmatpush1.bf16.msra.mxu0 0
    %5623 = vmatprep.subr.bf16.mxu0 0
    %5624 = vmatpush1.bf16.msra.mxu0 0
    %5625 = vmatprep.subr.bf16.mxu0 0
    %5626 = vmatpush1.bf16.msra.mxu0 0
    %5627 = vmatprep.subr.bf16.mxu0 0
    %5628 = vmatpush1.bf16.msra.mxu0 0
    %5629 = vmatprep.subr.bf16.mxu0 0
    %5630 = vmatpush1.bf16.msra.mxu0 0
    %5631 = vmatprep.subr.bf16.mxu0 0
    %5632 = vmatpush1.bf16.msra.mxu0 0
    %5633 = vmatprep.subr.bf16.mxu0 0
    %5634 = vmatpush1.bf16.msra.mxu0 0
    %5635 = vmatprep.mubr.bf16.mxu0 0
    %5636 = vmatmul.mubr.bf16.gmra.mrb[0].mxu0 %v5358
    %v5637 = vpop.f32.mrb[0].mxu0
    %v5638 = vadd.f32 %v5589, %v5637
    %v5639 = vpop.f32.mrb[0].mxu0
    %v5640 = vpop.f32.mrb[0].mxu0
    %v5641 = vadd.f32 %v5592, %v5640
    %v5642 = vpop.f32.mrb[0].mxu0
    %5643 = vmatprep.mubr.bf16.mxu0 0
    %5644 = vmatmul.mubr.bf16.gmra.mrb[0].mxu0 %v5361
    %v5645 = vpop.f32.mrb[0].mxu0
    %v5646 = vadd.f32 %v5597, %v5645
    %v5647 = vpop.f32.mrb[0].mxu0
    %v5648 = vpop.f32.mrb[0].mxu0
    %v5649 = vadd.f32 %v5600, %v5648
    %v5650 = vpop.f32.mrb[0].mxu0
    %5651 = vdwg.mxu0
    %v5652 = vadd.f32 %v5638, %v5641
    %v5653 = vadd.f32 %v5652, %v5646
    %v5654 = vadd.f32 %v5653, %v5649
    %v5655 = vrot.slane %v5654, 4
    %v5656 = vadd.f32 %v5654, %v5655
    %v5657 = vrot.slane %v5656, 2
    %v5658 = vadd.f32 %v5656, %v5657
    %v5659 = vrot.slane %v5658, 1
    %v5660 = vadd.f32 %v5658, %v5659
    %v5661 = vmul.f32 %v5638, %v5638
    %v5662 = vmul.f32 %v5641, %v5641
    %v5663 = vmul.f32 %v5646, %v5646
    %v5664 = vmul.f32 %v5649, %v5649
    %v5665 = vadd.f32 %v5661, %v5662
    %v5666 = vadd.f32 %v5665, %v5663
    %v5667 = vadd.f32 %v5666, %v5664
    %v5668 = vrot.slane %v5667, 4
    %v5669 = vadd.f32 %v5667, %v5668
    %v5670 = vrot.slane %v5669, 2
    %v5671 = vadd.f32 %v5669, %v5670
    %v5672 = vrot.slane %v5671, 1
    %v5673 = vadd.f32 %v5671, %v5672
    %5674 = vrot.lane.b32.xlu0 %v5660, 8
    %v5675 = vpop.permute.xlu0 %5674
    %v5676 = vadd.f32 %v5660, %v5675
    %5677 = vrot.lane.b32.xlu0 %v5673, 8
    %v5678 = vpop.permute.xlu0 %5677
    %v5679 = vadd.f32 %v5673, %v5678
    %5680 = vrot.lane.b32.xlu0 %v5676, 16
    %v5681 = vpop.permute.xlu0 %5680
    %v5682 = vadd.f32 %v5676, %v5681
    %5683 = vrot.lane.b32.xlu0 %v5679, 16
    %v5684 = vpop.permute.xlu0 %5683
    %v5685 = vadd.f32 %v5679, %v5684
    %5686 = vrot.lane.b32.xlu0 %v5682, 32
    %v5687 = vpop.permute.xlu0 %5686
    %v5688 = vadd.f32 %v5682, %v5687
    %5689 = vrot.lane.b32.xlu0 %v5685, 32
    %v5690 = vpop.permute.xlu0 %5689
    %v5691 = vadd.f32 %v5685, %v5690
    %5692 = vrot.lane.b32.xlu0 %v5688, 64
    %v5693 = vpop.permute.xlu0 %5692
    %v5694 = vadd.f32 %v5688, %v5693
    %5695 = vrot.lane.b32.xlu0 %v5691, 64
    %v5696 = vpop.permute.xlu0 %5695
    %v5697 = vadd.f32 %v5691, %v5696
    %v5698 = vmul.f32 %v5694, 0.001953125
    %v5699 = vmul.f32 %v5697, 0.001953125
    %v5700 = vmul.f32 %v5698, %v5698
    %v5701 = vsub.f32 %v5699, %v5700
    %v5702 = vmax.f32 %v5701, 0.0
    %v5703 = vld [vmem:[%s53] sm:$0x1]
    %v5704 = vadd.f32 %v5702, 1e-05
    %v5705 = vrsqrt.pop %v5704
    %v5706 = vmul.f32 %v5703, %v5705
    %v5707 = vld [vmem:[%s55] sm:$0x1]
    %v5708 = vmul.f32 %v5698, %v5706
    %v5709 = vsub.f32 %v5707, %v5708
    %v5711 = vlaneseq
    %v5712 = vshrl.u32 %v5711, 7
    %v5713 = vsub.s32 0, %v5712
    %v5714 = vrot.slane %v5706, %v5713
    %v5716 = vmul.f32 %v5638, %v5714
    %v5717 = vmul.f32 %v5641, %v5714
    %v5718 = vmul.f32 %v5646, %v5714
    %v5719 = vmul.f32 %v5649, %v5714
    %v5721 = vlaneseq
    %v5722 = vshrl.u32 %v5721, 7
    %v5723 = vsub.s32 0, %v5722
    %v5724 = vrot.slane %v5709, %v5723
    %v5726 = vadd.f32 %v5716, %v5724
    %v5727 = vadd.f32 %v5717, %v5724
    %v5728 = vadd.f32 %v5718, %v5724
    %v5729 = vadd.f32 %v5719, %v5724
    %v5730 = vadd.f32 %v5726, %v4605
    %v5731 = vadd.f32 %v5727, %v4606
    %v5732 = vadd.f32 %v5728, %v4607
    %v5733 = vadd.f32 %v5729, %v4608
    %v5734 = vmul.f32 %v5730, 0.01
    %v5735 = vmul.f32 %v5731, 0.01
    %v5736 = vmul.f32 %v5732, 0.01
    %v5737 = vmul.f32 %v5733, 0.01
    %v5738 = vmax.f32 %v5730, %v5734
    %v5739 = vmax.f32 %v5731, %v5735
    %v5740 = vmax.f32 %v5732, %v5736
    %v5741 = vmax.f32 %v5733, %v5737
    %5742 = vst [vmem:[#allocation2 + $0x3] sm:$0xff] %v5738
    %5743 = vst [vmem:[#allocation2 + $0xb] sm:$0xff] %v5739
    %5744 = vst [vmem:[#allocation2 + $0x1b] sm:$0xff] %v5740
    %5745 = vst [vmem:[#allocation2 + $0x23] sm:$0xff] %v5741
    %v5746 = vld [vmem:[#allocation2] sm:$0xff]
    %v5747 = vld [vmem:[#allocation2 + $0x8] sm:$0xff]
    %v5748 = vld [vmem:[#allocation2 + $0x10] sm:$0x3f]
    %v5749 = vld [vmem:[#allocation2 + $0x18] sm:$0xff]
    %v5750 = vld [vmem:[#allocation2 + $0x20] sm:$0xff]
    %v5751 = vld [vmem:[#allocation2 + $0x28] sm:$0x3f]
    %v5758 = vrot.slane %v5746, 1
    %v5759 = vrot.slane %v5747, 1
    %v5760 = vsel %vm376, %v5758, %v5759
    %v5761 = vrot.slane %v5748, 1
    %v5762 = vsel %vm376, %v5759, %v5761
    %v5763 = vrot.slane %v5749, 1
    %v5764 = vrot.slane %v5750, 1
    %v5765 = vsel %vm376, %v5763, %v5764
    %v5766 = vrot.slane %v5751, 1
    %v5767 = vsel %vm376, %v5764, %v5766
    %v5768 = vrot.slane %v5746, 2
    %v5769 = vrot.slane %v5747, 2
    %v5770 = vsel %vm391, %v5768, %v5769
    %v5771 = vrot.slane %v5748, 2
    %v5772 = vsel %vm391, %v5769, %v5771
    %v5773 = vrot.slane %v5749, 2
    %v5774 = vrot.slane %v5750, 2
    %v5775 = vsel %vm391, %v5773, %v5774
    %v5776 = vrot.slane %v5751, 2
    %v5777 = vsel %vm391, %v5774, %v5776
    %v5778 = vrot.slane %v5746, 3
    %v5779 = vrot.slane %v5747, 3
    %v5780 = vsel %vm406, %v5778, %v5779
    %v5781 = vrot.slane %v5748, 3
    %v5782 = vsel %vm406, %v5779, %v5781
    %v5783 = vrot.slane %v5749, 3
    %v5784 = vrot.slane %v5750, 3
    %v5785 = vsel %vm406, %v5783, %v5784
    %v5786 = vrot.slane %v5751, 3
    %v5787 = vsel %vm406, %v5784, %v5786
    %v5788 = vrot.slane %v5746, 4
    %v5789 = vrot.slane %v5747, 4
    %v5790 = vsel %vm421, %v5788, %v5789
    %v5791 = vrot.slane %v5748, 4
    %v5792 = vsel %vm421, %v5789, %v5791
    %v5793 = vrot.slane %v5749, 4
    %v5794 = vrot.slane %v5750, 4
    %v5795 = vsel %vm421, %v5793, %v5794
    %v5796 = vrot.slane %v5751, 4
    %v5797 = vsel %vm421, %v5794, %v5796
    %v5798 = vrot.slane %v5760, 1
    %v5799 = vrot.slane %v5762, 1
    %v5800 = vsel %vm376, %v5798, %v5799
    %v5801 = vrot.slane %v5770, 1
    %v5802 = vrot.slane %v5772, 1
    %v5803 = vsel %vm376, %v5801, %v5802
    %v5804 = vrot.slane %v5780, 1
    %v5805 = vrot.slane %v5782, 1
    %v5806 = vsel %vm376, %v5804, %v5805
    %v5807 = vrot.slane %v5790, 1
    %v5808 = vrot.slane %v5792, 1
    %v5809 = vsel %vm376, %v5807, %v5808
    %v5810 = vrot.slane %v5761, 1
    %v5811 = vsel %vm376, %v5799, %v5810
    %v5812 = vrot.slane %v5771, 1
    %v5813 = vsel %vm376, %v5802, %v5812
    %v5814 = vrot.slane %v5781, 1
    %v5815 = vsel %vm376, %v5805, %v5814
    %v5816 = vrot.slane %v5791, 1
    %v5817 = vsel %vm376, %v5808, %v5816
    %v5818 = vrot.slane %v5765, 1
    %v5819 = vrot.slane %v5767, 1
    %v5820 = vsel %vm376, %v5818, %v5819
    %v5821 = vrot.slane %v5775, 1
    %v5822 = vrot.slane %v5777, 1
    %v5823 = vsel %vm376, %v5821, %v5822
    %v5824 = vrot.slane %v5785, 1
    %v5825 = vrot.slane %v5787, 1
    %v5826 = vsel %vm376, %v5824, %v5825
    %v5827 = vrot.slane %v5795, 1
    %v5828 = vrot.slane %v5797, 1
    %v5829 = vsel %vm376, %v5827, %v5828
    %v5830 = vrot.slane %v5766, 1
    %v5831 = vsel %vm376, %v5819, %v5830
    %v5832 = vrot.slane %v5776, 1
    %v5833 = vsel %vm376, %v5822, %v5832
    %v5834 = vrot.slane %v5786, 1
    %v5835 = vsel %vm376, %v5825, %v5834
    %v5836 = vrot.slane %v5796, 1
    %v5837 = vsel %vm376, %v5828, %v5836
    %v5858 = vpack.c.bf16 %v5762, %v5760
    %v5859 = vpack.c.bf16 %v5811, %v5800
    %v5860 = vpack.c.bf16 %v5813, %v5803
    %v5861 = vpack.c.bf16 %v5815, %v5806
    %v5862 = vpack.c.bf16 %v5817, %v5809
    %v5863 = vpack.c.bf16 %v5767, %v5765
    %v5864 = vpack.c.bf16 %v5831, %v5820
    %v5865 = vpack.c.bf16 %v5833, %v5823
    %v5866 = vpack.c.bf16 %v5835, %v5826
    %v5867 = vpack.c.bf16 %v5837, %v5829
    %v5868 = vld [vmem:[#allocation23] sm:$0xf]
    %v5869 = vld [vmem:[#allocation23 + $0x4] sm:$0xf]
    %v5870 = vld [vmem:[#allocation23 + $0x8] sm:$0xf]
    %v5871 = vld [vmem:[#allocation23 + $0xc] sm:$0xf]
    %v5872 = vld [vmem:[#allocation23 + $0x10] sm:$0xf]
    %v5873 = vld [vmem:[#allocation23 + $0x14] sm:$0xf]
    %v5874 = vld [vmem:[#allocation23 + $0x18] sm:$0xf]
    %v5875 = vld [vmem:[#allocation23 + $0x1c] sm:$0xf]
    %v5876 = vld [vmem:[#allocation23 + $0x20] sm:$0xf]
    %v5877 = vld [vmem:[#allocation23 + $0x24] sm:$0xf]
    %v5878 = vld [vmem:[#allocation23 + $0x28] sm:$0xf]
    %v5879 = vld [vmem:[#allocation23 + $0x2c] sm:$0xf]
    %v5880 = vld [vmem:[#allocation23 + $0x30] sm:$0xf]
    %v5881 = vld [vmem:[#allocation23 + $0x34] sm:$0xf]
    %v5882 = vld [vmem:[#allocation23 + $0x38] sm:$0xf]
    %v5883 = vld [vmem:[#allocation23 + $0x3c] sm:$0xf]
    %v5884 = vld [vmem:[#allocation23 + $0x40] sm:$0xf]
    %v5885 = vld [vmem:[#allocation23 + $0x44] sm:$0xf]
    %v5886 = vld [vmem:[#allocation23 + $0x48] sm:$0xf]
    %v5887 = vld [vmem:[#allocation23 + $0x4c] sm:$0xf]
    %v5888 = vld [vmem:[#allocation23 + $0x50] sm:$0xf]
    %v5889 = vld [vmem:[#allocation23 + $0x54] sm:$0xf]
    %v5890 = vld [vmem:[#allocation23 + $0x58] sm:$0xf]
    %v5891 = vld [vmem:[#allocation23 + $0x5c] sm:$0xf]
    %v5892 = vld [vmem:[#allocation23 + $0x60] sm:$0xf]
    %v5893 = vld [vmem:[#allocation23 + $0x64] sm:$0xf]
    %v5894 = vld [vmem:[#allocation23 + $0x68] sm:$0xf]
    %v5895 = vld [vmem:[#allocation23 + $0x6c] sm:$0xf]
    %v5896 = vld [vmem:[#allocation23 + $0x70] sm:$0xf]
    %v5897 = vld [vmem:[#allocation23 + $0x74] sm:$0xf]
    %v5898 = vld [vmem:[#allocation23 + $0x78] sm:$0xf]
    %v5899 = vld [vmem:[#allocation23 + $0x7c] sm:$0xf]
    %v5900 = vld [vmem:[#allocation23 + $0x80] sm:$0xf]
    %v5901 = vld [vmem:[#allocation23 + $0x84] sm:$0xf]
    %v5902 = vld [vmem:[#allocation23 + $0x88] sm:$0xf]
    %v5903 = vld [vmem:[#allocation23 + $0x8c] sm:$0xf]
    %v5904 = vld [vmem:[#allocation23 + $0x90] sm:$0xf]
    %v5905 = vld [vmem:[#allocation23 + $0x94] sm:$0xf]
    %v5906 = vld [vmem:[#allocation23 + $0x98] sm:$0xf]
    %v5907 = vld [vmem:[#allocation23 + $0x9c] sm:$0xf]
    %v5908 = vld [vmem:[#allocation23 + $0xa0] sm:$0xf]
    %v5909 = vld [vmem:[#allocation23 + $0xa4] sm:$0xf]
    %v5910 = vld [vmem:[#allocation23 + $0xa8] sm:$0xf]
    %v5911 = vld [vmem:[#allocation23 + $0xac] sm:$0xf]
    %v5912 = vld [vmem:[#allocation23 + $0xb0] sm:$0xf]
    %v5913 = vld [vmem:[#allocation23 + $0xb4] sm:$0xf]
    %v5914 = vld [vmem:[#allocation23 + $0xb8] sm:$0xf]
    %v5915 = vld [vmem:[#allocation23 + $0xbc] sm:$0xf]
    %v5916 = vld [vmem:[#allocation23 + $0xc0] sm:$0xf]
    %v5917 = vld [vmem:[#allocation23 + $0xc4] sm:$0xf]
    %v5918 = vld [vmem:[#allocation23 + $0xc8] sm:$0xf]
    %v5919 = vld [vmem:[#allocation23 + $0xcc] sm:$0xf]
    %v5920 = vld [vmem:[#allocation23 + $0xd0] sm:$0xf]
    %v5921 = vld [vmem:[#allocation23 + $0xd4] sm:$0xf]
    %v5922 = vld [vmem:[#allocation23 + $0xd8] sm:$0xf]
    %v5923 = vld [vmem:[#allocation23 + $0xdc] sm:$0xf]
    %v5924 = vld [vmem:[#allocation23 + $0xe0] sm:$0xf]
    %v5925 = vld [vmem:[#allocation23 + $0xe4] sm:$0xf]
    %v5926 = vld [vmem:[#allocation23 + $0xe8] sm:$0xf]
    %v5927 = vld [vmem:[#allocation23 + $0xec] sm:$0xf]
    %v5928 = vld [vmem:[#allocation23 + $0xf0] sm:$0xf]
    %v5929 = vld [vmem:[#allocation23 + $0xf4] sm:$0xf]
    %v5930 = vld [vmem:[#allocation23 + $0xf8] sm:$0xf]
    %v5931 = vld [vmem:[#allocation23 + $0xfc] sm:$0xf]
    %v5932 = vld [vmem:[#allocation23 + $0x100] sm:$0xf]
    %v5933 = vld [vmem:[#allocation23 + $0x104] sm:$0xf]
    %v5934 = vld [vmem:[#allocation23 + $0x108] sm:$0xf]
    %v5935 = vld [vmem:[#allocation23 + $0x10c] sm:$0xf]
    %v5936 = vld [vmem:[#allocation23 + $0x110] sm:$0xf]
    %v5937 = vld [vmem:[#allocation23 + $0x114] sm:$0xf]
    %v5938 = vld [vmem:[#allocation23 + $0x118] sm:$0xf]
    %v5939 = vld [vmem:[#allocation23 + $0x11c] sm:$0xf]
    %v5940 = vld [vmem:[#allocation23 + $0x120] sm:$0xf]
    %v5941 = vld [vmem:[#allocation23 + $0x124] sm:$0xf]
    %v5942 = vld [vmem:[#allocation23 + $0x128] sm:$0xf]
    %v5943 = vld [vmem:[#allocation23 + $0x12c] sm:$0xf]
    %v5944 = vld [vmem:[#allocation23 + $0x130] sm:$0xf]
    %v5945 = vld [vmem:[#allocation23 + $0x134] sm:$0xf]
    %v5946 = vld [vmem:[#allocation23 + $0x138] sm:$0xf]
    %v5947 = vld [vmem:[#allocation23 + $0x13c] sm:$0xf]
    %v6028 = vunpack.c.l.b16 %v5868
    %v6029 = vunpack.c.l.b16 %v5869
    %v6030 = vunpack.c.l.b16 %v5870
    %v6031 = vunpack.c.l.b16 %v5871
    %v6032 = vunpack.c.l.b16 %v5872
    %v6033 = vunpack.c.l.b16 %v5873
    %v6034 = vunpack.c.l.b16 %v5874
    %v6035 = vunpack.c.l.b16 %v5875
    %v6036 = vunpack.c.l.b16 %v5876
    %v6037 = vunpack.c.l.b16 %v5877
    %v6038 = vunpack.c.l.b16 %v5878
    %v6039 = vunpack.c.l.b16 %v5879
    %v6040 = vunpack.c.l.b16 %v5880
    %v6041 = vunpack.c.l.b16 %v5881
    %v6042 = vunpack.c.l.b16 %v5882
    %v6043 = vunpack.c.l.b16 %v5883
    %v6044 = vunpack.c.l.b16 %v5884
    %v6045 = vunpack.c.l.b16 %v5885
    %v6046 = vunpack.c.l.b16 %v5886
    %v6047 = vunpack.c.l.b16 %v5887
    %v6048 = vunpack.c.l.b16 %v5888
    %v6049 = vunpack.c.l.b16 %v5889
    %v6050 = vunpack.c.l.b16 %v5890
    %v6051 = vunpack.c.l.b16 %v5891
    %v6052 = vunpack.c.l.b16 %v5892
    %v6053 = vunpack.c.l.b16 %v5893
    %v6054 = vunpack.c.l.b16 %v5894
    %v6055 = vunpack.c.l.b16 %v5895
    %v6056 = vunpack.c.l.b16 %v5896
    %v6057 = vunpack.c.l.b16 %v5897
    %v6058 = vunpack.c.l.b16 %v5898
    %v6059 = vunpack.c.l.b16 %v5899
    %v6060 = vunpack.c.l.b16 %v5900
    %v6061 = vunpack.c.l.b16 %v5901
    %v6062 = vunpack.c.l.b16 %v5902
    %v6063 = vunpack.c.l.b16 %v5903
    %v6064 = vunpack.c.l.b16 %v5904
    %v6065 = vunpack.c.l.b16 %v5905
    %v6066 = vunpack.c.l.b16 %v5906
    %v6067 = vunpack.c.l.b16 %v5907
    %v6068 = vunpack.c.l.b16 %v5908
    %v6069 = vunpack.c.l.b16 %v5909
    %v6070 = vunpack.c.l.b16 %v5910
    %v6071 = vunpack.c.l.b16 %v5911
    %v6072 = vunpack.c.l.b16 %v5912
    %v6073 = vunpack.c.l.b16 %v5913
    %v6074 = vunpack.c.l.b16 %v5914
    %v6075 = vunpack.c.l.b16 %v5915
    %v6076 = vunpack.c.l.b16 %v5916
    %v6077 = vunpack.c.l.b16 %v5917
    %v6078 = vunpack.c.l.b16 %v5918
    %v6079 = vunpack.c.l.b16 %v5919
    %v6080 = vunpack.c.l.b16 %v5920
    %v6081 = vunpack.c.l.b16 %v5921
    %v6082 = vunpack.c.l.b16 %v5922
    %v6083 = vunpack.c.l.b16 %v5923
    %v6084 = vunpack.c.l.b16 %v5924
    %v6085 = vunpack.c.l.b16 %v5925
    %v6086 = vunpack.c.l.b16 %v5926
    %v6087 = vunpack.c.l.b16 %v5927
    %v6088 = vunpack.c.l.b16 %v5928
    %v6089 = vunpack.c.l.b16 %v5929
    %v6090 = vunpack.c.l.b16 %v5930
    %v6091 = vunpack.c.l.b16 %v5931
    %v6092 = vunpack.c.l.b16 %v5932
    %v6093 = vunpack.c.l.b16 %v5933
    %v6094 = vunpack.c.l.b16 %v5934
    %v6095 = vunpack.c.l.b16 %v5935
    %v6096 = vunpack.c.l.b16 %v5936
    %v6097 = vunpack.c.l.b16 %v5937
    %v6098 = vunpack.c.l.b16 %v5938
    %v6099 = vunpack.c.l.b16 %v5939
    %v6100 = vunpack.c.l.b16 %v5940
    %v6101 = vunpack.c.l.b16 %v5941
    %v6102 = vunpack.c.l.b16 %v5942
    %v6103 = vunpack.c.l.b16 %v5943
    %v6104 = vunpack.c.l.b16 %v5944
    %v6105 = vunpack.c.l.b16 %v5945
    %v6106 = vunpack.c.l.b16 %v5946
    %v6107 = vunpack.c.l.b16 %v5947
    %v6108 = vpack.c.b16 %v6029, %v6028
    %v6109 = vpack.c.b16 %v6031, %v6030
    %v6110 = vpack.c.b16 %v6033, %v6032
    %v6111 = vpack.c.b16 %v6035, %v6034
    %v6112 = vpack.c.b16 %v6037, %v6036
    %v6113 = vpack.c.b16 %v6039, %v6038
    %v6114 = vpack.c.b16 %v6041, %v6040
    %v6115 = vpack.c.b16 %v6043, %v6042
    %v6116 = vpack.c.b16 %v6045, %v6044
    %v6117 = vpack.c.b16 %v6047, %v6046
    %v6118 = vpack.c.b16 %v6049, %v6048
    %v6119 = vpack.c.b16 %v6051, %v6050
    %v6120 = vpack.c.b16 %v6053, %v6052
    %v6121 = vpack.c.b16 %v6055, %v6054
    %v6122 = vpack.c.b16 %v6057, %v6056
    %v6123 = vpack.c.b16 %v6059, %v6058
    %v6124 = vpack.c.b16 %v6061, %v6060
    %v6125 = vpack.c.b16 %v6063, %v6062
    %v6126 = vpack.c.b16 %v6065, %v6064
    %v6127 = vpack.c.b16 %v6067, %v6066
    %v6128 = vpack.c.b16 %v6069, %v6068
    %v6129 = vpack.c.b16 %v6071, %v6070
    %v6130 = vpack.c.b16 %v6073, %v6072
    %v6131 = vpack.c.b16 %v6075, %v6074
    %v6132 = vpack.c.b16 %v6077, %v6076
    %v6133 = vpack.c.b16 %v6079, %v6078
    %v6134 = vpack.c.b16 %v6081, %v6080
    %v6135 = vpack.c.b16 %v6083, %v6082
    %v6136 = vpack.c.b16 %v6085, %v6084
    %v6137 = vpack.c.b16 %v6087, %v6086
    %v6138 = vpack.c.b16 %v6089, %v6088
    %v6139 = vpack.c.b16 %v6091, %v6090
    %v6140 = vpack.c.b16 %v6093, %v6092
    %v6141 = vpack.c.b16 %v6095, %v6094
    %v6142 = vpack.c.b16 %v6097, %v6096
    %v6143 = vpack.c.b16 %v6099, %v6098
    %v6144 = vpack.c.b16 %v6101, %v6100
    %v6145 = vpack.c.b16 %v6103, %v6102
    %v6146 = vpack.c.b16 %v6105, %v6104
    %v6147 = vpack.c.b16 %v6107, %v6106
    %6188 = vmatprep.subr.bf16.mxu0 0
    %6189 = vmatpush1.bf16.msra.mxu0 %v6108
    %6190 = vmatprep.subr.bf16.mxu0 0
    %6191 = vmatpush1.bf16.msra.mxu0 %v6109
    %6192 = vmatprep.subr.bf16.mxu0 0
    %6193 = vmatpush1.bf16.msra.mxu0 %v6110
    %6194 = vmatprep.subr.bf16.mxu0 0
    %6195 = vmatpush1.bf16.msra.mxu0 %v6111
    %6196 = vmatprep.subr.bf16.mxu0 0
    %6197 = vmatpush1.bf16.msra.mxu0 %v6112
    %6198 = vmatprep.subr.bf16.mxu0 0
    %6199 = vmatpush1.bf16.msra.mxu0 %v6113
    %6200 = vmatprep.subr.bf16.mxu0 0
    %6201 = vmatpush1.bf16.msra.mxu0 %v6114
    %6202 = vmatprep.subr.bf16.mxu0 0
    %6203 = vmatpush1.bf16.msra.mxu0 %v6115
    %6204 = vmatprep.subr.bf16.mxu0 0
    %6205 = vmatpush1.bf16.msra.mxu0 %v6116
    %6206 = vmatprep.subr.bf16.mxu0 0
    %6207 = vmatpush1.bf16.msra.mxu0 %v6117
    %6208 = vmatprep.subr.bf16.mxu0 0
    %6209 = vmatpush1.bf16.msra.mxu0 %v6118
    %6210 = vmatprep.subr.bf16.mxu0 0
    %6211 = vmatpush1.bf16.msra.mxu0 %v6119
    %6212 = vmatprep.subr.bf16.mxu0 0
    %6213 = vmatpush1.bf16.msra.mxu0 %v6120
    %6214 = vmatprep.subr.bf16.mxu0 0
    %6215 = vmatpush1.bf16.msra.mxu0 %v6121
    %6216 = vmatprep.subr.bf16.mxu0 0
    %6217 = vmatpush1.bf16.msra.mxu0 %v6122
    %6218 = vmatprep.subr.bf16.mxu0 0
    %6219 = vmatpush1.bf16.msra.mxu0 %v6123
    %6220 = vmatprep.mubr.bf16.mxu0 %v5859
    %6221 = vmatmul.mubr.bf16.gmra.mrb[0].mxu0 %v5858
    %v6222 = vpop.f32.mrb[0].mxu0
    %v6223 = vadd.f32 0.0, %v6222
    %v6224 = vpop.f32.mrb[0].mxu0
    %v6225 = vpop.f32.mrb[0].mxu0
    %v6226 = vadd.f32 0.0, %v6225
    %v6227 = vpop.f32.mrb[0].mxu0
    %6228 = vmatprep.mubr.bf16.mxu0 %v5864
    %6229 = vmatmul.mubr.bf16.gmra.mrb[0].mxu0 %v5863
    %v6230 = vpop.f32.mrb[0].mxu0
    %v6231 = vadd.f32 0.0, %v6230
    %v6232 = vpop.f32.mrb[0].mxu0
    %v6233 = vpop.f32.mrb[0].mxu0
    %v6234 = vadd.f32 0.0, %v6233
    %v6235 = vpop.f32.mrb[0].mxu0
    %6236 = vdwg.mxu0
    %6237 = vmatprep.subr.bf16.mxu0 0
    %6238 = vmatpush1.bf16.msra.mxu0 %v6124
    %6239 = vmatprep.subr.bf16.mxu0 0
    %6240 = vmatpush1.bf16.msra.mxu0 %v6125
    %6241 = vmatprep.subr.bf16.mxu0 0
    %6242 = vmatpush1.bf16.msra.mxu0 %v6126
    %6243 = vmatprep.subr.bf16.mxu0 0
    %6244 = vmatpush1.bf16.msra.mxu0 %v6127
    %6245 = vmatprep.subr.bf16.mxu0 0
    %6246 = vmatpush1.bf16.msra.mxu0 %v6128
    %6247 = vmatprep.subr.bf16.mxu0 0
    %6248 = vmatpush1.bf16.msra.mxu0 %v6129
    %6249 = vmatprep.subr.bf16.mxu0 0
    %6250 = vmatpush1.bf16.msra.mxu0 %v6130
    %6251 = vmatprep.subr.bf16.mxu0 0
    %6252 = vmatpush1.bf16.msra.mxu0 %v6131
    %6253 = vmatprep.subr.bf16.mxu0 0
    %6254 = vmatpush1.bf16.msra.mxu0 %v6132
    %6255 = vmatprep.subr.bf16.mxu0 0
    %6256 = vmatpush1.bf16.msra.mxu0 %v6133
    %6257 = vmatprep.subr.bf16.mxu0 0
    %6258 = vmatpush1.bf16.msra.mxu0 %v6134
    %6259 = vmatprep.subr.bf16.mxu0 0
    %6260 = vmatpush1.bf16.msra.mxu0 %v6135
    %6261 = vmatprep.subr.bf16.mxu0 0
    %6262 = vmatpush1.bf16.msra.mxu0 %v6136
    %6263 = vmatprep.subr.bf16.mxu0 0
    %6264 = vmatpush1.bf16.msra.mxu0 %v6137
    %6265 = vmatprep.subr.bf16.mxu0 0
    %6266 = vmatpush1.bf16.msra.mxu0 %v6138
    %6267 = vmatprep.subr.bf16.mxu0 0
    %6268 = vmatpush1.bf16.msra.mxu0 %v6139
    %6269 = vmatprep.mubr.bf16.mxu0 %v5861
    %6270 = vmatmul.mubr.bf16.gmra.mrb[0].mxu0 %v5860
    %v6271 = vpop.f32.mrb[0].mxu0
    %v6272 = vadd.f32 %v6223, %v6271
    %v6273 = vpop.f32.mrb[0].mxu0
    %v6274 = vpop.f32.mrb[0].mxu0
    %v6275 = vadd.f32 %v6226, %v6274
    %v6276 = vpop.f32.mrb[0].mxu0
    %6277 = vmatprep.mubr.bf16.mxu0 %v5866
    %6278 = vmatmul.mubr.bf16.gmra.mrb[0].mxu0 %v5865
    %v6279 = vpop.f32.mrb[0].mxu0
    %v6280 = vadd.f32 %v6231, %v6279
    %v6281 = vpop.f32.mrb[0].mxu0
    %v6282 = vpop.f32.mrb[0].mxu0
    %v6283 = vadd.f32 %v6234, %v6282
    %v6284 = vpop.f32.mrb[0].mxu0
    %6285 = vdwg.mxu0
    %6286 = vmatprep.subr.bf16.mxu0 0
    %6287 = vmatpush1.bf16.msra.mxu0 %v6140
    %6288 = vmatprep.subr.bf16.mxu0 0
    %6289 = vmatpush1.bf16.msra.mxu0 %v6141
    %6290 = vmatprep.subr.bf16.mxu0 0
    %6291 = vmatpush1.bf16.msra.mxu0 %v6142
    %6292 = vmatprep.subr.bf16.mxu0 0
    %6293 = vmatpush1.bf16.msra.mxu0 %v6143
    %6294 = vmatprep.subr.bf16.mxu0 0
    %6295 = vmatpush1.bf16.msra.mxu0 %v6144
    %6296 = vmatprep.subr.bf16.mxu0 0
    %6297 = vmatpush1.bf16.msra.mxu0 %v6145
    %6298 = vmatprep.subr.bf16.mxu0 0
    %6299 = vmatpush1.bf16.msra.mxu0 %v6146
    %6300 = vmatprep.subr.bf16.mxu0 0
    %6301 = vmatpush1.bf16.msra.mxu0 %v6147
    %6302 = vmatprep.subr.bf16.mxu0 0
    %6303 = vmatpush1.bf16.msra.mxu0 0
    %6304 = vmatprep.subr.bf16.mxu0 0
    %6305 = vmatpush1.bf16.msra.mxu0 0
    %6306 = vmatprep.subr.bf16.mxu0 0
    %6307 = vmatpush1.bf16.msra.mxu0 0
    %6308 = vmatprep.subr.bf16.mxu0 0
    %6309 = vmatpush1.bf16.msra.mxu0 0
    %6310 = vmatprep.subr.bf16.mxu0 0
    %6311 = vmatpush1.bf16.msra.mxu0 0
    %6312 = vmatprep.subr.bf16.mxu0 0
    %6313 = vmatpush1.bf16.msra.mxu0 0
    %6314 = vmatprep.subr.bf16.mxu0 0
    %6315 = vmatpush1.bf16.msra.mxu0 0
    %6316 = vmatprep.subr.bf16.mxu0 0
    %6317 = vmatpush1.bf16.msra.mxu0 0
    %6318 = vmatprep.mubr.bf16.mxu0 0
    %6319 = vmatmul.mubr.bf16.gmra.mrb[0].mxu0 %v5862
    %v6320 = vpop.f32.mrb[0].mxu0
    %v6321 = vadd.f32 %v6272, %v6320
    %v6322 = vpop.f32.mrb[0].mxu0
    %v6323 = vpop.f32.mrb[0].mxu0
    %v6324 = vadd.f32 %v6275, %v6323
    %v6325 = vpop.f32.mrb[0].mxu0
    %6326 = vmatprep.mubr.bf16.mxu0 0
    %6327 = vmatmul.mubr.bf16.gmra.mrb[0].mxu0 %v5867
    %v6328 = vpop.f32.mrb[0].mxu0
    %v6329 = vadd.f32 %v6280, %v6328
    %v6330 = vpop.f32.mrb[0].mxu0
    %v6331 = vpop.f32.mrb[0].mxu0
    %v6332 = vadd.f32 %v6283, %v6331
    %v6333 = vpop.f32.mrb[0].mxu0
    %6334 = vdwg.mxu0
    %v6335 = vadd.f32 %v6321, %v6324
    %v6336 = vadd.f32 %v6335, %v6329
    %v6337 = vadd.f32 %v6336, %v6332
    %v6338 = vrot.slane %v6337, 4
    %v6339 = vadd.f32 %v6337, %v6338
    %v6340 = vrot.slane %v6339, 2
    %v6341 = vadd.f32 %v6339, %v6340
    %v6342 = vrot.slane %v6341, 1
    %v6343 = vadd.f32 %v6341, %v6342
    %v6344 = vmul.f32 %v6321, %v6321
    %v6345 = vmul.f32 %v6324, %v6324
    %v6346 = vmul.f32 %v6329, %v6329
    %v6347 = vmul.f32 %v6332, %v6332
    %v6348 = vadd.f32 %v6344, %v6345
    %v6349 = vadd.f32 %v6348, %v6346
    %v6350 = vadd.f32 %v6349, %v6347
    %v6351 = vrot.slane %v6350, 4
    %v6352 = vadd.f32 %v6350, %v6351
    %v6353 = vrot.slane %v6352, 2
    %v6354 = vadd.f32 %v6352, %v6353
    %v6355 = vrot.slane %v6354, 1
    %v6356 = vadd.f32 %v6354, %v6355
    %6357 = vrot.lane.b32.xlu0 %v6343, 8
    %v6358 = vpop.permute.xlu0 %6357
    %v6359 = vadd.f32 %v6343, %v6358
    %6360 = vrot.lane.b32.xlu0 %v6356, 8
    %v6361 = vpop.permute.xlu0 %6360
    %v6362 = vadd.f32 %v6356, %v6361
    %6363 = vrot.lane.b32.xlu0 %v6359, 16
    %v6364 = vpop.permute.xlu0 %6363
    %v6365 = vadd.f32 %v6359, %v6364
    %6366 = vrot.lane.b32.xlu0 %v6362, 16
    %v6367 = vpop.permute.xlu0 %6366
    %v6368 = vadd.f32 %v6362, %v6367
    %6369 = vrot.lane.b32.xlu0 %v6365, 32
    %v6370 = vpop.permute.xlu0 %6369
    %v6371 = vadd.f32 %v6365, %v6370
    %6372 = vrot.lane.b32.xlu0 %v6368, 32
    %v6373 = vpop.permute.xlu0 %6372
    %v6374 = vadd.f32 %v6368, %v6373
    %6375 = vrot.lane.b32.xlu0 %v6371, 64
    %v6376 = vpop.permute.xlu0 %6375
    %v6377 = vadd.f32 %v6371, %v6376
    %6378 = vrot.lane.b32.xlu0 %v6374, 64
    %v6379 = vpop.permute.xlu0 %6378
    %v6380 = vadd.f32 %v6374, %v6379
    %v6381 = vmul.f32 %v6377, 0.001953125
    %v6382 = vmul.f32 %v6380, 0.001953125
    %v6383 = vmul.f32 %v6381, %v6381
    %v6384 = vsub.f32 %v6382, %v6383
    %v6385 = vmax.f32 %v6384, 0.0
    %v6386 = vld [vmem:[%s59] sm:$0x1]
    %v6387 = vadd.f32 %v6385, 1e-05
    %v6388 = vrsqrt.pop %v6387
    %v6389 = vmul.f32 %v6386, %v6388
    %v6390 = vld [vmem:[%s61] sm:$0x1]
    %v6391 = vmul.f32 %v6381, %v6389
    %v6392 = vsub.f32 %v6390, %v6391
    %v6394 = vlaneseq
    %v6395 = vshrl.u32 %v6394, 7
    %v6396 = vsub.s32 0, %v6395
    %v6397 = vrot.slane %v6389, %v6396
    %v6399 = vmul.f32 %v6321, %v6397
    %v6400 = vmul.f32 %v6324, %v6397
    %v6401 = vmul.f32 %v6329, %v6397
    %v6402 = vmul.f32 %v6332, %v6397
    %v6404 = vlaneseq
    %v6405 = vshrl.u32 %v6404, 7
    %v6406 = vsub.s32 0, %v6405
    %v6407 = vrot.slane %v6392, %v6406
    %v6409 = vadd.f32 %v6399, %v6407
    %v6410 = vadd.f32 %v6400, %v6407
    %v6411 = vadd.f32 %v6401, %v6407
    %v6412 = vadd.f32 %v6402, %v6407
    %v6413 = vmul.f32 %v6409, 0.01
    %v6414 = vmul.f32 %v6410, 0.01
    %v6415 = vmul.f32 %v6411, 0.01
    %v6416 = vmul.f32 %v6412, 0.01
    %v6417 = vmax.f32 %v6409, %v6413
    %v6418 = vmax.f32 %v6410, %v6414
    %v6419 = vmax.f32 %v6411, %v6415
    %v6420 = vmax.f32 %v6412, %v6416
    %6421 = vst [vmem:[#allocation3 + $0x3] sm:$0xff] %v6417
    %6422 = vst [vmem:[#allocation3 + $0xb] sm:$0xff] %v6418
    %6423 = vst [vmem:[#allocation3 + $0x1b] sm:$0xff] %v6419
    %6424 = vst [vmem:[#allocation3 + $0x23] sm:$0xff] %v6420
    %v6425 = vld [vmem:[#allocation3] sm:$0xff]
    %v6426 = vld [vmem:[#allocation3 + $0x8] sm:$0xff]
    %v6427 = vld [vmem:[#allocation3 + $0x10] sm:$0x3f]
    %v6428 = vld [vmem:[#allocation3 + $0x18] sm:$0xff]
    %v6429 = vld [vmem:[#allocation3 + $0x20] sm:$0xff]
    %v6430 = vld [vmem:[#allocation3 + $0x28] sm:$0x3f]
    %v6437 = vrot.slane %v6425, 1
    %v6438 = vrot.slane %v6426, 1
    %v6439 = vsel %vm376, %v6437, %v6438
    %v6440 = vrot.slane %v6427, 1
    %v6441 = vsel %vm376, %v6438, %v6440
    %v6442 = vrot.slane %v6428, 1
    %v6443 = vrot.slane %v6429, 1
    %v6444 = vsel %vm376, %v6442, %v6443
    %v6445 = vrot.slane %v6430, 1
    %v6446 = vsel %vm376, %v6443, %v6445
    %v6447 = vrot.slane %v6425, 2
    %v6448 = vrot.slane %v6426, 2
    %v6449 = vsel %vm391, %v6447, %v6448
    %v6450 = vrot.slane %v6427, 2
    %v6451 = vsel %vm391, %v6448, %v6450
    %v6452 = vrot.slane %v6428, 2
    %v6453 = vrot.slane %v6429, 2
    %v6454 = vsel %vm391, %v6452, %v6453
    %v6455 = vrot.slane %v6430, 2
    %v6456 = vsel %vm391, %v6453, %v6455
    %v6457 = vrot.slane %v6439, 2
    %v6458 = vrot.slane %v6441, 2
    %v6459 = vsel %vm391, %v6457, %v6458
    %v6460 = vrot.slane %v6449, 2
    %v6461 = vrot.slane %v6451, 2
    %v6462 = vsel %vm391, %v6460, %v6461
    %v6463 = vrot.slane %v6440, 2
    %v6464 = vsel %vm391, %v6458, %v6463
    %v6465 = vrot.slane %v6450, 2
    %v6466 = vsel %vm391, %v6461, %v6465
    %v6467 = vrot.slane %v6444, 2
    %v6468 = vrot.slane %v6446, 2
    %v6469 = vsel %vm391, %v6467, %v6468
    %v6470 = vrot.slane %v6454, 2
    %v6471 = vrot.slane %v6456, 2
    %v6472 = vsel %vm391, %v6470, %v6471
    %v6473 = vrot.slane %v6445, 2
    %v6474 = vsel %vm391, %v6468, %v6473
    %v6475 = vrot.slane %v6455, 2
    %v6476 = vsel %vm391, %v6471, %v6475
    %v6489 = vpack.c.bf16 %v6451, %v6449
    %v6490 = vpack.c.bf16 %v6464, %v6459
    %v6491 = vpack.c.bf16 %v6466, %v6462
    %v6492 = vpack.c.bf16 %v6456, %v6454
    %v6493 = vpack.c.bf16 %v6474, %v6469
    %v6494 = vpack.c.bf16 %v6476, %v6472
    %v6495 = vld [vmem:[#allocation24] sm:$0xf]
    %v6496 = vld [vmem:[#allocation24 + $0x4] sm:$0xf]
    %v6497 = vld [vmem:[#allocation24 + $0x8] sm:$0xf]
    %v6498 = vld [vmem:[#allocation24 + $0xc] sm:$0xf]
    %v6499 = vld [vmem:[#allocation24 + $0x10] sm:$0xf]
    %v6500 = vld [vmem:[#allocation24 + $0x14] sm:$0xf]
    %v6501 = vld [vmem:[#allocation24 + $0x18] sm:$0xf]
    %v6502 = vld [vmem:[#allocation24 + $0x1c] sm:$0xf]
    %v6503 = vld [vmem:[#allocation24 + $0x20] sm:$0xf]
    %v6504 = vld [vmem:[#allocation24 + $0x24] sm:$0xf]
    %v6505 = vld [vmem:[#allocation24 + $0x28] sm:$0xf]
    %v6506 = vld [vmem:[#allocation24 + $0x2c] sm:$0xf]
    %v6507 = vld [vmem:[#allocation24 + $0x30] sm:$0xf]
    %v6508 = vld [vmem:[#allocation24 + $0x34] sm:$0xf]
    %v6509 = vld [vmem:[#allocation24 + $0x38] sm:$0xf]
    %v6510 = vld [vmem:[#allocation24 + $0x3c] sm:$0xf]
    %v6511 = vld [vmem:[#allocation24 + $0x40] sm:$0xf]
    %v6512 = vld [vmem:[#allocation24 + $0x44] sm:$0xf]
    %v6513 = vld [vmem:[#allocation24 + $0x48] sm:$0xf]
    %v6514 = vld [vmem:[#allocation24 + $0x4c] sm:$0xf]
    %v6515 = vld [vmem:[#allocation24 + $0x50] sm:$0xf]
    %v6516 = vld [vmem:[#allocation24 + $0x54] sm:$0xf]
    %v6517 = vld [vmem:[#allocation24 + $0x58] sm:$0xf]
    %v6518 = vld [vmem:[#allocation24 + $0x5c] sm:$0xf]
    %v6519 = vld [vmem:[#allocation24 + $0x60] sm:$0xf]
    %v6520 = vld [vmem:[#allocation24 + $0x64] sm:$0xf]
    %v6521 = vld [vmem:[#allocation24 + $0x68] sm:$0xf]
    %v6522 = vld [vmem:[#allocation24 + $0x6c] sm:$0xf]
    %v6523 = vld [vmem:[#allocation24 + $0x70] sm:$0xf]
    %v6524 = vld [vmem:[#allocation24 + $0x74] sm:$0xf]
    %v6525 = vld [vmem:[#allocation24 + $0x78] sm:$0xf]
    %v6526 = vld [vmem:[#allocation24 + $0x7c] sm:$0xf]
    %v6527 = vld [vmem:[#allocation24 + $0x80] sm:$0xf]
    %v6528 = vld [vmem:[#allocation24 + $0x84] sm:$0xf]
    %v6529 = vld [vmem:[#allocation24 + $0x88] sm:$0xf]
    %v6530 = vld [vmem:[#allocation24 + $0x8c] sm:$0xf]
    %v6531 = vld [vmem:[#allocation24 + $0x90] sm:$0xf]
    %v6532 = vld [vmem:[#allocation24 + $0x94] sm:$0xf]
    %v6533 = vld [vmem:[#allocation24 + $0x98] sm:$0xf]
    %v6534 = vld [vmem:[#allocation24 + $0x9c] sm:$0xf]
    %v6535 = vld [vmem:[#allocation24 + $0xa0] sm:$0xf]
    %v6536 = vld [vmem:[#allocation24 + $0xa4] sm:$0xf]
    %v6537 = vld [vmem:[#allocation24 + $0xa8] sm:$0xf]
    %v6538 = vld [vmem:[#allocation24 + $0xac] sm:$0xf]
    %v6539 = vld [vmem:[#allocation24 + $0xb0] sm:$0xf]
    %v6540 = vld [vmem:[#allocation24 + $0xb4] sm:$0xf]
    %v6541 = vld [vmem:[#allocation24 + $0xb8] sm:$0xf]
    %v6542 = vld [vmem:[#allocation24 + $0xbc] sm:$0xf]
    %v6591 = vunpack.c.l.b16 %v6495
    %v6592 = vunpack.c.l.b16 %v6496
    %v6593 = vunpack.c.l.b16 %v6497
    %v6594 = vunpack.c.l.b16 %v6498
    %v6595 = vunpack.c.l.b16 %v6499
    %v6596 = vunpack.c.l.b16 %v6500
    %v6597 = vunpack.c.l.b16 %v6501
    %v6598 = vunpack.c.l.b16 %v6502
    %v6599 = vunpack.c.l.b16 %v6503
    %v6600 = vunpack.c.l.b16 %v6504
    %v6601 = vunpack.c.l.b16 %v6505
    %v6602 = vunpack.c.l.b16 %v6506
    %v6603 = vunpack.c.l.b16 %v6507
    %v6604 = vunpack.c.l.b16 %v6508
    %v6605 = vunpack.c.l.b16 %v6509
    %v6606 = vunpack.c.l.b16 %v6510
    %v6607 = vunpack.c.l.b16 %v6511
    %v6608 = vunpack.c.l.b16 %v6512
    %v6609 = vunpack.c.l.b16 %v6513
    %v6610 = vunpack.c.l.b16 %v6514
    %v6611 = vunpack.c.l.b16 %v6515
    %v6612 = vunpack.c.l.b16 %v6516
    %v6613 = vunpack.c.l.b16 %v6517
    %v6614 = vunpack.c.l.b16 %v6518
    %v6615 = vunpack.c.l.b16 %v6519
    %v6616 = vunpack.c.l.b16 %v6520
    %v6617 = vunpack.c.l.b16 %v6521
    %v6618 = vunpack.c.l.b16 %v6522
    %v6619 = vunpack.c.l.b16 %v6523
    %v6620 = vunpack.c.l.b16 %v6524
    %v6621 = vunpack.c.l.b16 %v6525
    %v6622 = vunpack.c.l.b16 %v6526
    %v6623 = vunpack.c.l.b16 %v6527
    %v6624 = vunpack.c.l.b16 %v6528
    %v6625 = vunpack.c.l.b16 %v6529
    %v6626 = vunpack.c.l.b16 %v6530
    %v6627 = vunpack.c.l.b16 %v6531
    %v6628 = vunpack.c.l.b16 %v6532
    %v6629 = vunpack.c.l.b16 %v6533
    %v6630 = vunpack.c.l.b16 %v6534
    %v6631 = vunpack.c.l.b16 %v6535
    %v6632 = vunpack.c.l.b16 %v6536
    %v6633 = vunpack.c.l.b16 %v6537
    %v6634 = vunpack.c.l.b16 %v6538
    %v6635 = vunpack.c.l.b16 %v6539
    %v6636 = vunpack.c.l.b16 %v6540
    %v6637 = vunpack.c.l.b16 %v6541
    %v6638 = vunpack.c.l.b16 %v6542
    %v6639 = vpack.c.b16 %v6592, %v6591
    %v6640 = vpack.c.b16 %v6594, %v6593
    %v6641 = vpack.c.b16 %v6596, %v6595
    %v6642 = vpack.c.b16 %v6598, %v6597
    %v6643 = vpack.c.b16 %v6600, %v6599
    %v6644 = vpack.c.b16 %v6602, %v6601
    %v6645 = vpack.c.b16 %v6604, %v6603
    %v6646 = vpack.c.b16 %v6606, %v6605
    %v6647 = vpack.c.b16 %v6608, %v6607
    %v6648 = vpack.c.b16 %v6610, %v6609
    %v6649 = vpack.c.b16 %v6612, %v6611
    %v6650 = vpack.c.b16 %v6614, %v6613
    %v6651 = vpack.c.b16 %v6616, %v6615
    %v6652 = vpack.c.b16 %v6618, %v6617
    %v6653 = vpack.c.b16 %v6620, %v6619
    %v6654 = vpack.c.b16 %v6622, %v6621
    %v6655 = vpack.c.b16 %v6624, %v6623
    %v6656 = vpack.c.b16 %v6626, %v6625
    %v6657 = vpack.c.b16 %v6628, %v6627
    %v6658 = vpack.c.b16 %v6630, %v6629
    %v6659 = vpack.c.b16 %v6632, %v6631
    %v6660 = vpack.c.b16 %v6634, %v6633
    %v6661 = vpack.c.b16 %v6636, %v6635
    %v6662 = vpack.c.b16 %v6638, %v6637
    %6687 = vmatprep.subr.bf16.mxu0 0
    %6688 = vmatpush1.bf16.msra.mxu0 %v6639
    %6689 = vmatprep.subr.bf16.mxu0 0
    %6690 = vmatpush1.bf16.msra.mxu0 %v6640
    %6691 = vmatprep.subr.bf16.mxu0 0
    %6692 = vmatpush1.bf16.msra.mxu0 %v6641
    %6693 = vmatprep.subr.bf16.mxu0 0
    %6694 = vmatpush1.bf16.msra.mxu0 %v6642
    %6695 = vmatprep.subr.bf16.mxu0 0
    %6696 = vmatpush1.bf16.msra.mxu0 %v6643
    %6697 = vmatprep.subr.bf16.mxu0 0
    %6698 = vmatpush1.bf16.msra.mxu0 %v6644
    %6699 = vmatprep.subr.bf16.mxu0 0
    %6700 = vmatpush1.bf16.msra.mxu0 %v6645
    %6701 = vmatprep.subr.bf16.mxu0 0
    %6702 = vmatpush1.bf16.msra.mxu0 %v6646
    %6703 = vmatprep.subr.bf16.mxu0 0
    %6704 = vmatpush1.bf16.msra.mxu0 %v6647
    %6705 = vmatprep.subr.bf16.mxu0 0
    %6706 = vmatpush1.bf16.msra.mxu0 %v6648
    %6707 = vmatprep.subr.bf16.mxu0 0
    %6708 = vmatpush1.bf16.msra.mxu0 %v6649
    %6709 = vmatprep.subr.bf16.mxu0 0
    %6710 = vmatpush1.bf16.msra.mxu0 %v6650
    %6711 = vmatprep.subr.bf16.mxu0 0
    %6712 = vmatpush1.bf16.msra.mxu0 %v6651
    %6713 = vmatprep.subr.bf16.mxu0 0
    %6714 = vmatpush1.bf16.msra.mxu0 %v6652
    %6715 = vmatprep.subr.bf16.mxu0 0
    %6716 = vmatpush1.bf16.msra.mxu0 %v6653
    %6717 = vmatprep.subr.bf16.mxu0 0
    %6718 = vmatpush1.bf16.msra.mxu0 %v6654
    %6719 = vmatprep.mubr.bf16.mxu0 %v6490
    %6720 = vmatmul.mubr.bf16.gmra.mrb[0].mxu0 %v6489
    %v6721 = vpop.f32.mrb[0].mxu0
    %v6722 = vadd.f32 0.0, %v6721
    %v6723 = vpop.f32.mrb[0].mxu0
    %v6724 = vpop.f32.mrb[0].mxu0
    %v6725 = vadd.f32 0.0, %v6724
    %v6726 = vpop.f32.mrb[0].mxu0
    %6727 = vmatprep.mubr.bf16.mxu0 %v6493
    %6728 = vmatmul.mubr.bf16.gmra.mrb[0].mxu0 %v6492
    %v6729 = vpop.f32.mrb[0].mxu0
    %v6730 = vadd.f32 0.0, %v6729
    %v6731 = vpop.f32.mrb[0].mxu0
    %v6732 = vpop.f32.mrb[0].mxu0
    %v6733 = vadd.f32 0.0, %v6732
    %v6734 = vpop.f32.mrb[0].mxu0
    %6735 = vdwg.mxu0
    %6736 = vmatprep.subr.bf16.mxu0 0
    %6737 = vmatpush1.bf16.msra.mxu0 %v6655
    %6738 = vmatprep.subr.bf16.mxu0 0
    %6739 = vmatpush1.bf16.msra.mxu0 %v6656
    %6740 = vmatprep.subr.bf16.mxu0 0
    %6741 = vmatpush1.bf16.msra.mxu0 %v6657
    %6742 = vmatprep.subr.bf16.mxu0 0
    %6743 = vmatpush1.bf16.msra.mxu0 %v6658
    %6744 = vmatprep.subr.bf16.mxu0 0
    %6745 = vmatpush1.bf16.msra.mxu0 %v6659
    %6746 = vmatprep.subr.bf16.mxu0 0
    %6747 = vmatpush1.bf16.msra.mxu0 %v6660
    %6748 = vmatprep.subr.bf16.mxu0 0
    %6749 = vmatpush1.bf16.msra.mxu0 %v6661
    %6750 = vmatprep.subr.bf16.mxu0 0
    %6751 = vmatpush1.bf16.msra.mxu0 %v6662
    %6752 = vmatprep.subr.bf16.mxu0 0
    %6753 = vmatpush1.bf16.msra.mxu0 0
    %6754 = vmatprep.subr.bf16.mxu0 0
    %6755 = vmatpush1.bf16.msra.mxu0 0
    %6756 = vmatprep.subr.bf16.mxu0 0
    %6757 = vmatpush1.bf16.msra.mxu0 0
    %6758 = vmatprep.subr.bf16.mxu0 0
    %6759 = vmatpush1.bf16.msra.mxu0 0
    %6760 = vmatprep.subr.bf16.mxu0 0
    %6761 = vmatpush1.bf16.msra.mxu0 0
    %6762 = vmatprep.subr.bf16.mxu0 0
    %6763 = vmatpush1.bf16.msra.mxu0 0
    %6764 = vmatprep.subr.bf16.mxu0 0
    %6765 = vmatpush1.bf16.msra.mxu0 0
    %6766 = vmatprep.subr.bf16.mxu0 0
    %6767 = vmatpush1.bf16.msra.mxu0 0
    %6768 = vmatprep.mubr.bf16.mxu0 0
    %6769 = vmatmul.mubr.bf16.gmra.mrb[0].mxu0 %v6491
    %v6770 = vpop.f32.mrb[0].mxu0
    %v6771 = vadd.f32 %v6722, %v6770
    %v6772 = vpop.f32.mrb[0].mxu0
    %v6773 = vpop.f32.mrb[0].mxu0
    %v6774 = vadd.f32 %v6725, %v6773
    %v6775 = vpop.f32.mrb[0].mxu0
    %6776 = vmatprep.mubr.bf16.mxu0 0
    %6777 = vmatmul.mubr.bf16.gmra.mrb[0].mxu0 %v6494
    %v6778 = vpop.f32.mrb[0].mxu0
    %v6779 = vadd.f32 %v6730, %v6778
    %v6780 = vpop.f32.mrb[0].mxu0
    %v6781 = vpop.f32.mrb[0].mxu0
    %v6782 = vadd.f32 %v6733, %v6781
    %v6783 = vpop.f32.mrb[0].mxu0
    %6784 = vdwg.mxu0
    %v6785 = vadd.f32 %v6771, %v6774
    %v6786 = vadd.f32 %v6785, %v6779
    %v6787 = vadd.f32 %v6786, %v6782
    %v6788 = vrot.slane %v6787, 4
    %v6789 = vadd.f32 %v6787, %v6788
    %v6790 = vrot.slane %v6789, 2
    %v6791 = vadd.f32 %v6789, %v6790
    %v6792 = vrot.slane %v6791, 1
    %v6793 = vadd.f32 %v6791, %v6792
    %v6794 = vmul.f32 %v6771, %v6771
    %v6795 = vmul.f32 %v6774, %v6774
    %v6796 = vmul.f32 %v6779, %v6779
    %v6797 = vmul.f32 %v6782, %v6782
    %v6798 = vadd.f32 %v6794, %v6795
    %v6799 = vadd.f32 %v6798, %v6796
    %v6800 = vadd.f32 %v6799, %v6797
    %v6801 = vrot.slane %v6800, 4
    %v6802 = vadd.f32 %v6800, %v6801
    %v6803 = vrot.slane %v6802, 2
    %v6804 = vadd.f32 %v6802, %v6803
    %v6805 = vrot.slane %v6804, 1
    %v6806 = vadd.f32 %v6804, %v6805
    %6807 = vrot.lane.b32.xlu0 %v6793, 8
    %v6808 = vpop.permute.xlu0 %6807
    %v6809 = vadd.f32 %v6793, %v6808
    %6810 = vrot.lane.b32.xlu0 %v6806, 8
    %v6811 = vpop.permute.xlu0 %6810
    %v6812 = vadd.f32 %v6806, %v6811
    %6813 = vrot.lane.b32.xlu0 %v6809, 16
    %v6814 = vpop.permute.xlu0 %6813
    %v6815 = vadd.f32 %v6809, %v6814
    %6816 = vrot.lane.b32.xlu0 %v6812, 16
    %v6817 = vpop.permute.xlu0 %6816
    %v6818 = vadd.f32 %v6812, %v6817
    %6819 = vrot.lane.b32.xlu0 %v6815, 32
    %v6820 = vpop.permute.xlu0 %6819
    %v6821 = vadd.f32 %v6815, %v6820
    %6822 = vrot.lane.b32.xlu0 %v6818, 32
    %v6823 = vpop.permute.xlu0 %6822
    %v6824 = vadd.f32 %v6818, %v6823
    %6825 = vrot.lane.b32.xlu0 %v6821, 64
    %v6826 = vpop.permute.xlu0 %6825
    %v6827 = vadd.f32 %v6821, %v6826
    %6828 = vrot.lane.b32.xlu0 %v6824, 64
    %v6829 = vpop.permute.xlu0 %6828
    %v6830 = vadd.f32 %v6824, %v6829
    %v6831 = vmul.f32 %v6827, 0.001953125
    %v6832 = vmul.f32 %v6830, 0.001953125
    %v6833 = vmul.f32 %v6831, %v6831
    %v6834 = vsub.f32 %v6832, %v6833
    %v6835 = vmax.f32 %v6834, 0.0
    %v6836 = vld [vmem:[%s65] sm:$0x1]
    %v6837 = vadd.f32 %v6835, 1e-05
    %v6838 = vrsqrt.pop %v6837
    %v6839 = vmul.f32 %v6836, %v6838
    %v6840 = vld [vmem:[%s67] sm:$0x1]
    %v6841 = vmul.f32 %v6831, %v6839
    %v6842 = vsub.f32 %v6840, %v6841
    %v6844 = vlaneseq
    %v6845 = vshrl.u32 %v6844, 7
    %v6846 = vsub.s32 0, %v6845
    %v6847 = vrot.slane %v6839, %v6846
    %v6849 = vmul.f32 %v6771, %v6847
    %v6850 = vmul.f32 %v6774, %v6847
    %v6851 = vmul.f32 %v6779, %v6847
    %v6852 = vmul.f32 %v6782, %v6847
    %v6854 = vlaneseq
    %v6855 = vshrl.u32 %v6854, 7
    %v6856 = vsub.s32 0, %v6855
    %v6857 = vrot.slane %v6842, %v6856
    %v6859 = vadd.f32 %v6849, %v6857
    %v6860 = vadd.f32 %v6850, %v6857
    %v6861 = vadd.f32 %v6851, %v6857
    %v6862 = vadd.f32 %v6852, %v6857
    %v6863 = vadd.f32 %v6859, %v5738
    %v6864 = vadd.f32 %v6860, %v5739
    %v6865 = vadd.f32 %v6861, %v5740
    %v6866 = vadd.f32 %v6862, %v5741
    %v6867 = vmul.f32 %v6863, 0.01
    %v6868 = vmul.f32 %v6864, 0.01
    %v6869 = vmul.f32 %v6865, 0.01
    %v6870 = vmul.f32 %v6866, 0.01
    %v6871 = vmax.f32 %v6863, %v6867
    %v6872 = vmax.f32 %v6864, %v6868
    %v6873 = vmax.f32 %v6865, %v6869
    %v6874 = vmax.f32 %v6866, %v6870
    %6875 = vst [vmem:[#allocation2 + $0x3] sm:$0xff] %v6871
    %6876 = vst [vmem:[#allocation2 + $0xb] sm:$0xff] %v6872
    %6877 = vst [vmem:[#allocation2 + $0x1b] sm:$0xff] %v6873
    %6878 = vst [vmem:[#allocation2 + $0x23] sm:$0xff] %v6874
    %v6879 = vld [vmem:[#allocation2] sm:$0xff]
    %v6880 = vld [vmem:[#allocation2 + $0x8] sm:$0xff]
    %v6881 = vld [vmem:[#allocation2 + $0x10] sm:$0x3f]
    %v6882 = vld [vmem:[#allocation2 + $0x18] sm:$0xff]
    %v6883 = vld [vmem:[#allocation2 + $0x20] sm:$0xff]
    %v6884 = vld [vmem:[#allocation2 + $0x28] sm:$0x3f]
    %v6891 = vrot.slane %v6879, 1
    %v6892 = vrot.slane %v6880, 1
    %v6893 = vsel %vm376, %v6891, %v6892
    %v6894 = vrot.slane %v6881, 1
    %v6895 = vsel %vm376, %v6892, %v6894
    %v6896 = vrot.slane %v6882, 1
    %v6897 = vrot.slane %v6883, 1
    %v6898 = vsel %vm376, %v6896, %v6897
    %v6899 = vrot.slane %v6884, 1
    %v6900 = vsel %vm376, %v6897, %v6899
    %v6901 = vrot.slane %v6879, 2
    %v6902 = vrot.slane %v6880, 2
    %v6903 = vsel %vm391, %v6901, %v6902
    %v6904 = vrot.slane %v6881, 2
    %v6905 = vsel %vm391, %v6902, %v6904
    %v6906 = vrot.slane %v6882, 2
    %v6907 = vrot.slane %v6883, 2
    %v6908 = vsel %vm391, %v6906, %v6907
    %v6909 = vrot.slane %v6884, 2
    %v6910 = vsel %vm391, %v6907, %v6909
    %v6911 = vrot.slane %v6879, 3
    %v6912 = vrot.slane %v6880, 3
    %v6913 = vsel %vm406, %v6911, %v6912
    %v6914 = vrot.slane %v6881, 3
    %v6915 = vsel %vm406, %v6912, %v6914
    %v6916 = vrot.slane %v6882, 3
    %v6917 = vrot.slane %v6883, 3
    %v6918 = vsel %vm406, %v6916, %v6917
    %v6919 = vrot.slane %v6884, 3
    %v6920 = vsel %vm406, %v6917, %v6919
    %v6921 = vrot.slane %v6879, 4
    %v6922 = vrot.slane %v6880, 4
    %v6923 = vsel %vm421, %v6921, %v6922
    %v6924 = vrot.slane %v6881, 4
    %v6925 = vsel %vm421, %v6922, %v6924
    %v6926 = vrot.slane %v6882, 4
    %v6927 = vrot.slane %v6883, 4
    %v6928 = vsel %vm421, %v6926, %v6927
    %v6929 = vrot.slane %v6884, 4
    %v6930 = vsel %vm421, %v6927, %v6929
    %v6931 = vrot.slane %v6893, 1
    %v6932 = vrot.slane %v6895, 1
    %v6933 = vsel %vm376, %v6931, %v6932
    %v6934 = vrot.slane %v6903, 1
    %v6935 = vrot.slane %v6905, 1
    %v6936 = vsel %vm376, %v6934, %v6935
    %v6937 = vrot.slane %v6913, 1
    %v6938 = vrot.slane %v6915, 1
    %v6939 = vsel %vm376, %v6937, %v6938
    %v6940 = vrot.slane %v6923, 1
    %v6941 = vrot.slane %v6925, 1
    %v6942 = vsel %vm376, %v6940, %v6941
    %v6943 = vrot.slane %v6894, 1
    %v6944 = vsel %vm376, %v6932, %v6943
    %v6945 = vrot.slane %v6904, 1
    %v6946 = vsel %vm376, %v6935, %v6945
    %v6947 = vrot.slane %v6914, 1
    %v6948 = vsel %vm376, %v6938, %v6947
    %v6949 = vrot.slane %v6924, 1
    %v6950 = vsel %vm376, %v6941, %v6949
    %v6951 = vrot.slane %v6898, 1
    %v6952 = vrot.slane %v6900, 1
    %v6953 = vsel %vm376, %v6951, %v6952
    %v6954 = vrot.slane %v6908, 1
    %v6955 = vrot.slane %v6910, 1
    %v6956 = vsel %vm376, %v6954, %v6955
    %v6957 = vrot.slane %v6918, 1
    %v6958 = vrot.slane %v6920, 1
    %v6959 = vsel %vm376, %v6957, %v6958
    %v6960 = vrot.slane %v6928, 1
    %v6961 = vrot.slane %v6930, 1
    %v6962 = vsel %vm376, %v6960, %v6961
    %v6963 = vrot.slane %v6899, 1
    %v6964 = vsel %vm376, %v6952, %v6963
    %v6965 = vrot.slane %v6909, 1
    %v6966 = vsel %vm376, %v6955, %v6965
    %v6967 = vrot.slane %v6919, 1
    %v6968 = vsel %vm376, %v6958, %v6967
    %v6969 = vrot.slane %v6929, 1
    %v6970 = vsel %vm376, %v6961, %v6969
    %v6991 = vpack.c.bf16 %v6895, %v6893
    %v6992 = vpack.c.bf16 %v6944, %v6933
    %v6993 = vpack.c.bf16 %v6946, %v6936
    %v6994 = vpack.c.bf16 %v6948, %v6939
    %v6995 = vpack.c.bf16 %v6950, %v6942
    %v6996 = vpack.c.bf16 %v6900, %v6898
    %v6997 = vpack.c.bf16 %v6964, %v6953
    %v6998 = vpack.c.bf16 %v6966, %v6956
    %v6999 = vpack.c.bf16 %v6968, %v6959
    %v7000 = vpack.c.bf16 %v6970, %v6962
    %v7001 = vld [vmem:[#allocation26] sm:$0xf]
    %v7002 = vld [vmem:[#allocation26 + $0x4] sm:$0xf]
    %v7003 = vld [vmem:[#allocation26 + $0x8] sm:$0xf]
    %v7004 = vld [vmem:[#allocation26 + $0xc] sm:$0xf]
    %v7005 = vld [vmem:[#allocation26 + $0x10] sm:$0xf]
    %v7006 = vld [vmem:[#allocation26 + $0x14] sm:$0xf]
    %v7007 = vld [vmem:[#allocation26 + $0x18] sm:$0xf]
    %v7008 = vld [vmem:[#allocation26 + $0x1c] sm:$0xf]
    %v7009 = vld [vmem:[#allocation26 + $0x20] sm:$0xf]
    %v7010 = vld [vmem:[#allocation26 + $0x24] sm:$0xf]
    %v7011 = vld [vmem:[#allocation26 + $0x28] sm:$0xf]
    %v7012 = vld [vmem:[#allocation26 + $0x2c] sm:$0xf]
    %v7013 = vld [vmem:[#allocation26 + $0x30] sm:$0xf]
    %v7014 = vld [vmem:[#allocation26 + $0x34] sm:$0xf]
    %v7015 = vld [vmem:[#allocation26 + $0x38] sm:$0xf]
    %v7016 = vld [vmem:[#allocation26 + $0x3c] sm:$0xf]
    %v7017 = vld [vmem:[#allocation26 + $0x40] sm:$0xf]
    %v7018 = vld [vmem:[#allocation26 + $0x44] sm:$0xf]
    %v7019 = vld [vmem:[#allocation26 + $0x48] sm:$0xf]
    %v7020 = vld [vmem:[#allocation26 + $0x4c] sm:$0xf]
    %v7021 = vld [vmem:[#allocation26 + $0x50] sm:$0xf]
    %v7022 = vld [vmem:[#allocation26 + $0x54] sm:$0xf]
    %v7023 = vld [vmem:[#allocation26 + $0x58] sm:$0xf]
    %v7024 = vld [vmem:[#allocation26 + $0x5c] sm:$0xf]
    %v7025 = vld [vmem:[#allocation26 + $0x60] sm:$0xf]
    %v7026 = vld [vmem:[#allocation26 + $0x64] sm:$0xf]
    %v7027 = vld [vmem:[#allocation26 + $0x68] sm:$0xf]
    %v7028 = vld [vmem:[#allocation26 + $0x6c] sm:$0xf]
    %v7029 = vld [vmem:[#allocation26 + $0x70] sm:$0xf]
    %v7030 = vld [vmem:[#allocation26 + $0x74] sm:$0xf]
    %v7031 = vld [vmem:[#allocation26 + $0x78] sm:$0xf]
    %v7032 = vld [vmem:[#allocation26 + $0x7c] sm:$0xf]
    %v7033 = vld [vmem:[#allocation26 + $0x80] sm:$0xf]
    %v7034 = vld [vmem:[#allocation26 + $0x84] sm:$0xf]
    %v7035 = vld [vmem:[#allocation26 + $0x88] sm:$0xf]
    %v7036 = vld [vmem:[#allocation26 + $0x8c] sm:$0xf]
    %v7037 = vld [vmem:[#allocation26 + $0x90] sm:$0xf]
    %v7038 = vld [vmem:[#allocation26 + $0x94] sm:$0xf]
    %v7039 = vld [vmem:[#allocation26 + $0x98] sm:$0xf]
    %v7040 = vld [vmem:[#allocation26 + $0x9c] sm:$0xf]
    %v7041 = vld [vmem:[#allocation26 + $0xa0] sm:$0xf]
    %v7042 = vld [vmem:[#allocation26 + $0xa4] sm:$0xf]
    %v7043 = vld [vmem:[#allocation26 + $0xa8] sm:$0xf]
    %v7044 = vld [vmem:[#allocation26 + $0xac] sm:$0xf]
    %v7045 = vld [vmem:[#allocation26 + $0xb0] sm:$0xf]
    %v7046 = vld [vmem:[#allocation26 + $0xb4] sm:$0xf]
    %v7047 = vld [vmem:[#allocation26 + $0xb8] sm:$0xf]
    %v7048 = vld [vmem:[#allocation26 + $0xbc] sm:$0xf]
    %v7049 = vld [vmem:[#allocation26 + $0xc0] sm:$0xf]
    %v7050 = vld [vmem:[#allocation26 + $0xc4] sm:$0xf]
    %v7051 = vld [vmem:[#allocation26 + $0xc8] sm:$0xf]
    %v7052 = vld [vmem:[#allocation26 + $0xcc] sm:$0xf]
    %v7053 = vld [vmem:[#allocation26 + $0xd0] sm:$0xf]
    %v7054 = vld [vmem:[#allocation26 + $0xd4] sm:$0xf]
    %v7055 = vld [vmem:[#allocation26 + $0xd8] sm:$0xf]
    %v7056 = vld [vmem:[#allocation26 + $0xdc] sm:$0xf]
    %v7057 = vld [vmem:[#allocation26 + $0xe0] sm:$0xf]
    %v7058 = vld [vmem:[#allocation26 + $0xe4] sm:$0xf]
    %v7059 = vld [vmem:[#allocation26 + $0xe8] sm:$0xf]
    %v7060 = vld [vmem:[#allocation26 + $0xec] sm:$0xf]
    %v7061 = vld [vmem:[#allocation26 + $0xf0] sm:$0xf]
    %v7062 = vld [vmem:[#allocation26 + $0xf4] sm:$0xf]
    %v7063 = vld [vmem:[#allocation26 + $0xf8] sm:$0xf]
    %v7064 = vld [vmem:[#allocation26 + $0xfc] sm:$0xf]
    %v7065 = vld [vmem:[#allocation26 + $0x100] sm:$0xf]
    %v7066 = vld [vmem:[#allocation26 + $0x104] sm:$0xf]
    %v7067 = vld [vmem:[#allocation26 + $0x108] sm:$0xf]
    %v7068 = vld [vmem:[#allocation26 + $0x10c] sm:$0xf]
    %v7069 = vld [vmem:[#allocation26 + $0x110] sm:$0xf]
    %v7070 = vld [vmem:[#allocation26 + $0x114] sm:$0xf]
    %v7071 = vld [vmem:[#allocation26 + $0x118] sm:$0xf]
    %v7072 = vld [vmem:[#allocation26 + $0x11c] sm:$0xf]
    %v7073 = vld [vmem:[#allocation26 + $0x120] sm:$0xf]
    %v7074 = vld [vmem:[#allocation26 + $0x124] sm:$0xf]
    %v7075 = vld [vmem:[#allocation26 + $0x128] sm:$0xf]
    %v7076 = vld [vmem:[#allocation26 + $0x12c] sm:$0xf]
    %v7077 = vld [vmem:[#allocation26 + $0x130] sm:$0xf]
    %v7078 = vld [vmem:[#allocation26 + $0x134] sm:$0xf]
    %v7079 = vld [vmem:[#allocation26 + $0x138] sm:$0xf]
    %v7080 = vld [vmem:[#allocation26 + $0x13c] sm:$0xf]
    %v7161 = vunpack.c.l.b16 %v7001
    %v7162 = vunpack.c.l.b16 %v7002
    %v7163 = vunpack.c.l.b16 %v7003
    %v7164 = vunpack.c.l.b16 %v7004
    %v7165 = vunpack.c.l.b16 %v7005
    %v7166 = vunpack.c.l.b16 %v7006
    %v7167 = vunpack.c.l.b16 %v7007
    %v7168 = vunpack.c.l.b16 %v7008
    %v7169 = vunpack.c.l.b16 %v7009
    %v7170 = vunpack.c.l.b16 %v7010
    %v7171 = vunpack.c.l.b16 %v7011
    %v7172 = vunpack.c.l.b16 %v7012
    %v7173 = vunpack.c.l.b16 %v7013
    %v7174 = vunpack.c.l.b16 %v7014
    %v7175 = vunpack.c.l.b16 %v7015
    %v7176 = vunpack.c.l.b16 %v7016
    %v7177 = vunpack.c.l.b16 %v7017
    %v7178 = vunpack.c.l.b16 %v7018
    %v7179 = vunpack.c.l.b16 %v7019
    %v7180 = vunpack.c.l.b16 %v7020
    %v7181 = vunpack.c.l.b16 %v7021
    %v7182 = vunpack.c.l.b16 %v7022
    %v7183 = vunpack.c.l.b16 %v7023
    %v7184 = vunpack.c.l.b16 %v7024
    %v7185 = vunpack.c.l.b16 %v7025
    %v7186 = vunpack.c.l.b16 %v7026
    %v7187 = vunpack.c.l.b16 %v7027
    %v7188 = vunpack.c.l.b16 %v7028
    %v7189 = vunpack.c.l.b16 %v7029
    %v7190 = vunpack.c.l.b16 %v7030
    %v7191 = vunpack.c.l.b16 %v7031
    %v7192 = vunpack.c.l.b16 %v7032
    %v7193 = vunpack.c.l.b16 %v7033
    %v7194 = vunpack.c.l.b16 %v7034
    %v7195 = vunpack.c.l.b16 %v7035
    %v7196 = vunpack.c.l.b16 %v7036
    %v7197 = vunpack.c.l.b16 %v7037
    %v7198 = vunpack.c.l.b16 %v7038
    %v7199 = vunpack.c.l.b16 %v7039
    %v7200 = vunpack.c.l.b16 %v7040
    %v7201 = vunpack.c.l.b16 %v7041
    %v7202 = vunpack.c.l.b16 %v7042
    %v7203 = vunpack.c.l.b16 %v7043
    %v7204 = vunpack.c.l.b16 %v7044
    %v7205 = vunpack.c.l.b16 %v7045
    %v7206 = vunpack.c.l.b16 %v7046
    %v7207 = vunpack.c.l.b16 %v7047
    %v7208 = vunpack.c.l.b16 %v7048
    %v7209 = vunpack.c.l.b16 %v7049
    %v7210 = vunpack.c.l.b16 %v7050
    %v7211 = vunpack.c.l.b16 %v7051
    %v7212 = vunpack.c.l.b16 %v7052
    %v7213 = vunpack.c.l.b16 %v7053
    %v7214 = vunpack.c.l.b16 %v7054
    %v7215 = vunpack.c.l.b16 %v7055
    %v7216 = vunpack.c.l.b16 %v7056
    %v7217 = vunpack.c.l.b16 %v7057
    %v7218 = vunpack.c.l.b16 %v7058
    %v7219 = vunpack.c.l.b16 %v7059
    %v7220 = vunpack.c.l.b16 %v7060
    %v7221 = vunpack.c.l.b16 %v7061
    %v7222 = vunpack.c.l.b16 %v7062
    %v7223 = vunpack.c.l.b16 %v7063
    %v7224 = vunpack.c.l.b16 %v7064
    %v7225 = vunpack.c.l.b16 %v7065
    %v7226 = vunpack.c.l.b16 %v7066
    %v7227 = vunpack.c.l.b16 %v7067
    %v7228 = vunpack.c.l.b16 %v7068
    %v7229 = vunpack.c.l.b16 %v7069
    %v7230 = vunpack.c.l.b16 %v7070
    %v7231 = vunpack.c.l.b16 %v7071
    %v7232 = vunpack.c.l.b16 %v7072
    %v7233 = vunpack.c.l.b16 %v7073
    %v7234 = vunpack.c.l.b16 %v7074
    %v7235 = vunpack.c.l.b16 %v7075
    %v7236 = vunpack.c.l.b16 %v7076
    %v7237 = vunpack.c.l.b16 %v7077
    %v7238 = vunpack.c.l.b16 %v7078
    %v7239 = vunpack.c.l.b16 %v7079
    %v7240 = vunpack.c.l.b16 %v7080
    %v7241 = vpack.c.b16 %v7162, %v7161
    %v7242 = vpack.c.b16 %v7164, %v7163
    %v7243 = vpack.c.b16 %v7166, %v7165
    %v7244 = vpack.c.b16 %v7168, %v7167
    %v7245 = vpack.c.b16 %v7170, %v7169
    %v7246 = vpack.c.b16 %v7172, %v7171
    %v7247 = vpack.c.b16 %v7174, %v7173
    %v7248 = vpack.c.b16 %v7176, %v7175
    %v7249 = vpack.c.b16 %v7178, %v7177
    %v7250 = vpack.c.b16 %v7180, %v7179
    %v7251 = vpack.c.b16 %v7182, %v7181
    %v7252 = vpack.c.b16 %v7184, %v7183
    %v7253 = vpack.c.b16 %v7186, %v7185
    %v7254 = vpack.c.b16 %v7188, %v7187
    %v7255 = vpack.c.b16 %v7190, %v7189
    %v7256 = vpack.c.b16 %v7192, %v7191
    %v7257 = vpack.c.b16 %v7194, %v7193
    %v7258 = vpack.c.b16 %v7196, %v7195
    %v7259 = vpack.c.b16 %v7198, %v7197
    %v7260 = vpack.c.b16 %v7200, %v7199
    %v7261 = vpack.c.b16 %v7202, %v7201
    %v7262 = vpack.c.b16 %v7204, %v7203
    %v7263 = vpack.c.b16 %v7206, %v7205
    %v7264 = vpack.c.b16 %v7208, %v7207
    %v7265 = vpack.c.b16 %v7210, %v7209
    %v7266 = vpack.c.b16 %v7212, %v7211
    %v7267 = vpack.c.b16 %v7214, %v7213
    %v7268 = vpack.c.b16 %v7216, %v7215
    %v7269 = vpack.c.b16 %v7218, %v7217
    %v7270 = vpack.c.b16 %v7220, %v7219
    %v7271 = vpack.c.b16 %v7222, %v7221
    %v7272 = vpack.c.b16 %v7224, %v7223
    %v7273 = vpack.c.b16 %v7226, %v7225
    %v7274 = vpack.c.b16 %v7228, %v7227
    %v7275 = vpack.c.b16 %v7230, %v7229
    %v7276 = vpack.c.b16 %v7232, %v7231
    %v7277 = vpack.c.b16 %v7234, %v7233
    %v7278 = vpack.c.b16 %v7236, %v7235
    %v7279 = vpack.c.b16 %v7238, %v7237
    %v7280 = vpack.c.b16 %v7240, %v7239
    %7321 = vmatprep.subr.bf16.mxu0 0
    %7322 = vmatpush1.bf16.msra.mxu0 %v7241
    %7323 = vmatprep.subr.bf16.mxu0 0
    %7324 = vmatpush1.bf16.msra.mxu0 %v7242
    %7325 = vmatprep.subr.bf16.mxu0 0
    %7326 = vmatpush1.bf16.msra.mxu0 %v7243
    %7327 = vmatprep.subr.bf16.mxu0 0
    %7328 = vmatpush1.bf16.msra.mxu0 %v7244
    %7329 = vmatprep.subr.bf16.mxu0 0
    %7330 = vmatpush1.bf16.msra.mxu0 %v7245
    %7331 = vmatprep.subr.bf16.mxu0 0
    %7332 = vmatpush1.bf16.msra.mxu0 %v7246
    %7333 = vmatprep.subr.bf16.mxu0 0
    %7334 = vmatpush1.bf16.msra.mxu0 %v7247
    %7335 = vmatprep.subr.bf16.mxu0 0
    %7336 = vmatpush1.bf16.msra.mxu0 %v7248
    %7337 = vmatprep.subr.bf16.mxu0 0
    %7338 = vmatpush1.bf16.msra.mxu0 %v7249
    %7339 = vmatprep.subr.bf16.mxu0 0
    %7340 = vmatpush1.bf16.msra.mxu0 %v7250
    %7341 = vmatprep.subr.bf16.mxu0 0
    %7342 = vmatpush1.bf16.msra.mxu0 %v7251
    %7343 = vmatprep.subr.bf16.mxu0 0
    %7344 = vmatpush1.bf16.msra.mxu0 %v7252
    %7345 = vmatprep.subr.bf16.mxu0 0
    %7346 = vmatpush1.bf16.msra.mxu0 %v7253
    %7347 = vmatprep.subr.bf16.mxu0 0
    %7348 = vmatpush1.bf16.msra.mxu0 %v7254
    %7349 = vmatprep.subr.bf16.mxu0 0
    %7350 = vmatpush1.bf16.msra.mxu0 %v7255
    %7351 = vmatprep.subr.bf16.mxu0 0
    %7352 = vmatpush1.bf16.msra.mxu0 %v7256
    %7353 = vmatprep.mubr.bf16.mxu0 %v6992
    %7354 = vmatmul.mubr.bf16.gmra.mrb[0].mxu0 %v6991
    %v7355 = vpop.f32.mrb[0].mxu0
    %v7356 = vadd.f32 0.0, %v7355
    %v7357 = vpop.f32.mrb[0].mxu0
    %v7358 = vpop.f32.mrb[0].mxu0
    %v7359 = vadd.f32 0.0, %v7358
    %v7360 = vpop.f32.mrb[0].mxu0
    %7361 = vmatprep.mubr.bf16.mxu0 %v6997
    %7362 = vmatmul.mubr.bf16.gmra.mrb[0].mxu0 %v6996
    %v7363 = vpop.f32.mrb[0].mxu0
    %v7364 = vadd.f32 0.0, %v7363
    %v7365 = vpop.f32.mrb[0].mxu0
    %v7366 = vpop.f32.mrb[0].mxu0
    %v7367 = vadd.f32 0.0, %v7366
    %v7368 = vpop.f32.mrb[0].mxu0
    %7369 = vdwg.mxu0
    %7370 = vmatprep.subr.bf16.mxu0 0
    %7371 = vmatpush1.bf16.msra.mxu0 %v7257
    %7372 = vmatprep.subr.bf16.mxu0 0
    %7373 = vmatpush1.bf16.msra.mxu0 %v7258
    %7374 = vmatprep.subr.bf16.mxu0 0
    %7375 = vmatpush1.bf16.msra.mxu0 %v7259
    %7376 = vmatprep.subr.bf16.mxu0 0
    %7377 = vmatpush1.bf16.msra.mxu0 %v7260
    %7378 = vmatprep.subr.bf16.mxu0 0
    %7379 = vmatpush1.bf16.msra.mxu0 %v7261
    %7380 = vmatprep.subr.bf16.mxu0 0
    %7381 = vmatpush1.bf16.msra.mxu0 %v7262
    %7382 = vmatprep.subr.bf16.mxu0 0
    %7383 = vmatpush1.bf16.msra.mxu0 %v7263
    %7384 = vmatprep.subr.bf16.mxu0 0
    %7385 = vmatpush1.bf16.msra.mxu0 %v7264
    %7386 = vmatprep.subr.bf16.mxu0 0
    %7387 = vmatpush1.bf16.msra.mxu0 %v7265
    %7388 = vmatprep.subr.bf16.mxu0 0
    %7389 = vmatpush1.bf16.msra.mxu0 %v7266
    %7390 = vmatprep.subr.bf16.mxu0 0
    %7391 = vmatpush1.bf16.msra.mxu0 %v7267
    %7392 = vmatprep.subr.bf16.mxu0 0
    %7393 = vmatpush1.bf16.msra.mxu0 %v7268
    %7394 = vmatprep.subr.bf16.mxu0 0
    %7395 = vmatpush1.bf16.msra.mxu0 %v7269
    %7396 = vmatprep.subr.bf16.mxu0 0
    %7397 = vmatpush1.bf16.msra.mxu0 %v7270
    %7398 = vmatprep.subr.bf16.mxu0 0
    %7399 = vmatpush1.bf16.msra.mxu0 %v7271
    %7400 = vmatprep.subr.bf16.mxu0 0
    %7401 = vmatpush1.bf16.msra.mxu0 %v7272
    %7402 = vmatprep.mubr.bf16.mxu0 %v6994
    %7403 = vmatmul.mubr.bf16.gmra.mrb[0].mxu0 %v6993
    %v7404 = vpop.f32.mrb[0].mxu0
    %v7405 = vadd.f32 %v7356, %v7404
    %v7406 = vpop.f32.mrb[0].mxu0
    %v7407 = vpop.f32.mrb[0].mxu0
    %v7408 = vadd.f32 %v7359, %v7407
    %v7409 = vpop.f32.mrb[0].mxu0
    %7410 = vmatprep.mubr.bf16.mxu0 %v6999
    %7411 = vmatmul.mubr.bf16.gmra.mrb[0].mxu0 %v6998
    %v7412 = vpop.f32.mrb[0].mxu0
    %v7413 = vadd.f32 %v7364, %v7412
    %v7414 = vpop.f32.mrb[0].mxu0
    %v7415 = vpop.f32.mrb[0].mxu0
    %v7416 = vadd.f32 %v7367, %v7415
    %v7417 = vpop.f32.mrb[0].mxu0
    %7418 = vdwg.mxu0
    %7419 = vmatprep.subr.bf16.mxu0 0
    %7420 = vmatpush1.bf16.msra.mxu0 %v7273
    %7421 = vmatprep.subr.bf16.mxu0 0
    %7422 = vmatpush1.bf16.msra.mxu0 %v7274
    %7423 = vmatprep.subr.bf16.mxu0 0
    %7424 = vmatpush1.bf16.msra.mxu0 %v7275
    %7425 = vmatprep.subr.bf16.mxu0 0
    %7426 = vmatpush1.bf16.msra.mxu0 %v7276
    %7427 = vmatprep.subr.bf16.mxu0 0
    %7428 = vmatpush1.bf16.msra.mxu0 %v7277
    %7429 = vmatprep.subr.bf16.mxu0 0
    %7430 = vmatpush1.bf16.msra.mxu0 %v7278
    %7431 = vmatprep.subr.bf16.mxu0 0
    %7432 = vmatpush1.bf16.msra.mxu0 %v7279
    %7433 = vmatprep.subr.bf16.mxu0 0
    %7434 = vmatpush1.bf16.msra.mxu0 %v7280
    %7435 = vmatprep.subr.bf16.mxu0 0
    %7436 = vmatpush1.bf16.msra.mxu0 0
    %7437 = vmatprep.subr.bf16.mxu0 0
    %7438 = vmatpush1.bf16.msra.mxu0 0
    %7439 = vmatprep.subr.bf16.mxu0 0
    %7440 = vmatpush1.bf16.msra.mxu0 0
    %7441 = vmatprep.subr.bf16.mxu0 0
    %7442 = vmatpush1.bf16.msra.mxu0 0
    %7443 = vmatprep.subr.bf16.mxu0 0
    %7444 = vmatpush1.bf16.msra.mxu0 0
    %7445 = vmatprep.subr.bf16.mxu0 0
    %7446 = vmatpush1.bf16.msra.mxu0 0
    %7447 = vmatprep.subr.bf16.mxu0 0
    %7448 = vmatpush1.bf16.msra.mxu0 0
    %7449 = vmatprep.subr.bf16.mxu0 0
    %7450 = vmatpush1.bf16.msra.mxu0 0
    %7451 = vmatprep.mubr.bf16.mxu0 0
    %7452 = vmatmul.mubr.bf16.gmra.mrb[0].mxu0 %v6995
    %v7453 = vpop.f32.mrb[0].mxu0
    %v7454 = vadd.f32 %v7405, %v7453
    %v7455 = vpop.f32.mrb[0].mxu0
    %v7456 = vpop.f32.mrb[0].mxu0
    %v7457 = vadd.f32 %v7408, %v7456
    %v7458 = vpop.f32.mrb[0].mxu0
    %7459 = vmatprep.mubr.bf16.mxu0 0
    %7460 = vmatmul.mubr.bf16.gmra.mrb[0].mxu0 %v7000
    %v7461 = vpop.f32.mrb[0].mxu0
    %v7462 = vadd.f32 %v7413, %v7461
    %v7463 = vpop.f32.mrb[0].mxu0
    %v7464 = vpop.f32.mrb[0].mxu0
    %v7465 = vadd.f32 %v7416, %v7464
    %v7466 = vpop.f32.mrb[0].mxu0
    %7467 = vdwg.mxu0
    %v7468 = vadd.f32 %v7454, %v7457
    %v7469 = vadd.f32 %v7468, %v7462
    %v7470 = vadd.f32 %v7469, %v7465
    %v7471 = vrot.slane %v7470, 4
    %v7472 = vadd.f32 %v7470, %v7471
    %v7473 = vrot.slane %v7472, 2
    %v7474 = vadd.f32 %v7472, %v7473
    %v7475 = vrot.slane %v7474, 1
    %v7476 = vadd.f32 %v7474, %v7475
    %v7477 = vmul.f32 %v7454, %v7454
    %v7478 = vmul.f32 %v7457, %v7457
    %v7479 = vmul.f32 %v7462, %v7462
    %v7480 = vmul.f32 %v7465, %v7465
    %v7481 = vadd.f32 %v7477, %v7478
    %v7482 = vadd.f32 %v7481, %v7479
    %v7483 = vadd.f32 %v7482, %v7480
    %v7484 = vrot.slane %v7483, 4
    %v7485 = vadd.f32 %v7483, %v7484
    %v7486 = vrot.slane %v7485, 2
    %v7487 = vadd.f32 %v7485, %v7486
    %v7488 = vrot.slane %v7487, 1
    %v7489 = vadd.f32 %v7487, %v7488
    %7490 = vrot.lane.b32.xlu0 %v7476, 8
    %v7491 = vpop.permute.xlu0 %7490
    %v7492 = vadd.f32 %v7476, %v7491
    %7493 = vrot.lane.b32.xlu0 %v7489, 8
    %v7494 = vpop.permute.xlu0 %7493
    %v7495 = vadd.f32 %v7489, %v7494
    %7496 = vrot.lane.b32.xlu0 %v7492, 16
    %v7497 = vpop.permute.xlu0 %7496
    %v7498 = vadd.f32 %v7492, %v7497
    %7499 = vrot.lane.b32.xlu0 %v7495, 16
    %v7500 = vpop.permute.xlu0 %7499
    %v7501 = vadd.f32 %v7495, %v7500
    %7502 = vrot.lane.b32.xlu0 %v7498, 32
    %v7503 = vpop.permute.xlu0 %7502
    %v7504 = vadd.f32 %v7498, %v7503
    %7505 = vrot.lane.b32.xlu0 %v7501, 32
    %v7506 = vpop.permute.xlu0 %7505
    %v7507 = vadd.f32 %v7501, %v7506
    %7508 = vrot.lane.b32.xlu0 %v7504, 64
    %v7509 = vpop.permute.xlu0 %7508
    %v7510 = vadd.f32 %v7504, %v7509
    %7511 = vrot.lane.b32.xlu0 %v7507, 64
    %v7512 = vpop.permute.xlu0 %7511
    %v7513 = vadd.f32 %v7507, %v7512
    %v7514 = vmul.f32 %v7510, 0.001953125
    %v7515 = vmul.f32 %v7513, 0.001953125
    %v7516 = vmul.f32 %v7514, %v7514
    %v7517 = vsub.f32 %v7515, %v7516
    %v7518 = vmax.f32 %v7517, 0.0
    %v7519 = vld [vmem:[%s71] sm:$0x1]
    %v7520 = vadd.f32 %v7518, 1e-05
    %v7521 = vrsqrt.pop %v7520
    %v7522 = vmul.f32 %v7519, %v7521
    %v7523 = vld [vmem:[%s73] sm:$0x1]
    %v7524 = vmul.f32 %v7514, %v7522
    %v7525 = vsub.f32 %v7523, %v7524
    %v7527 = vlaneseq
    %v7528 = vshrl.u32 %v7527, 7
    %v7529 = vsub.s32 0, %v7528
    %v7530 = vrot.slane %v7522, %v7529
    %v7532 = vmul.f32 %v7454, %v7530
    %v7533 = vmul.f32 %v7457, %v7530
    %v7534 = vmul.f32 %v7462, %v7530
    %v7535 = vmul.f32 %v7465, %v7530
    %v7537 = vlaneseq
    %v7538 = vshrl.u32 %v7537, 7
    %v7539 = vsub.s32 0, %v7538
    %v7540 = vrot.slane %v7525, %v7539
    %v7542 = vadd.f32 %v7532, %v7540
    %v7543 = vadd.f32 %v7533, %v7540
    %v7544 = vadd.f32 %v7534, %v7540
    %v7545 = vadd.f32 %v7535, %v7540
    %v7546 = vmul.f32 %v7542, 0.01
    %v7547 = vmul.f32 %v7543, 0.01
    %v7548 = vmul.f32 %v7544, 0.01
    %v7549 = vmul.f32 %v7545, 0.01
    %v7550 = vmax.f32 %v7542, %v7546
    %v7551 = vmax.f32 %v7543, %v7547
    %v7552 = vmax.f32 %v7544, %v7548
    %v7553 = vmax.f32 %v7545, %v7549
    %7554 = vst [vmem:[#allocation3 + $0x3] sm:$0xff] %v7550
    %7555 = vst [vmem:[#allocation3 + $0xb] sm:$0xff] %v7551
    %7556 = vst [vmem:[#allocation3 + $0x1b] sm:$0xff] %v7552
    %7557 = vst [vmem:[#allocation3 + $0x23] sm:$0xff] %v7553
    %v7558 = vld [vmem:[#allocation3] sm:$0xff]
    %v7559 = vld [vmem:[#allocation3 + $0x8] sm:$0xff]
    %v7560 = vld [vmem:[#allocation3 + $0x10] sm:$0x3f]
    %v7561 = vld [vmem:[#allocation3 + $0x18] sm:$0xff]
    %v7562 = vld [vmem:[#allocation3 + $0x20] sm:$0xff]
    %v7563 = vld [vmem:[#allocation3 + $0x28] sm:$0x3f]
    %v7570 = vrot.slane %v7558, 1
    %v7571 = vrot.slane %v7559, 1
    %v7572 = vsel %vm376, %v7570, %v7571
    %v7573 = vrot.slane %v7560, 1
    %v7574 = vsel %vm376, %v7571, %v7573
    %v7575 = vrot.slane %v7561, 1
    %v7576 = vrot.slane %v7562, 1
    %v7577 = vsel %vm376, %v7575, %v7576
    %v7578 = vrot.slane %v7563, 1
    %v7579 = vsel %vm376, %v7576, %v7578
    %v7580 = vrot.slane %v7558, 2
    %v7581 = vrot.slane %v7559, 2
    %v7582 = vsel %vm391, %v7580, %v7581
    %v7583 = vrot.slane %v7560, 2
    %v7584 = vsel %vm391, %v7581, %v7583
    %v7585 = vrot.slane %v7561, 2
    %v7586 = vrot.slane %v7562, 2
    %v7587 = vsel %vm391, %v7585, %v7586
    %v7588 = vrot.slane %v7563, 2
    %v7589 = vsel %vm391, %v7586, %v7588
    %v7590 = vrot.slane %v7572, 2
    %v7591 = vrot.slane %v7574, 2
    %v7592 = vsel %vm391, %v7590, %v7591
    %v7593 = vrot.slane %v7582, 2
    %v7594 = vrot.slane %v7584, 2
    %v7595 = vsel %vm391, %v7593, %v7594
    %v7596 = vrot.slane %v7573, 2
    %v7597 = vsel %vm391, %v7591, %v7596
    %v7598 = vrot.slane %v7583, 2
    %v7599 = vsel %vm391, %v7594, %v7598
    %v7600 = vrot.slane %v7577, 2
    %v7601 = vrot.slane %v7579, 2
    %v7602 = vsel %vm391, %v7600, %v7601
    %v7603 = vrot.slane %v7587, 2
    %v7604 = vrot.slane %v7589, 2
    %v7605 = vsel %vm391, %v7603, %v7604
    %v7606 = vrot.slane %v7578, 2
    %v7607 = vsel %vm391, %v7601, %v7606
    %v7608 = vrot.slane %v7588, 2
    %v7609 = vsel %vm391, %v7604, %v7608
    %v7622 = vpack.c.bf16 %v7584, %v7582
    %v7623 = vpack.c.bf16 %v7597, %v7592
    %v7624 = vpack.c.bf16 %v7599, %v7595
    %v7625 = vpack.c.bf16 %v7589, %v7587
    %v7626 = vpack.c.bf16 %v7607, %v7602
    %v7627 = vpack.c.bf16 %v7609, %v7605
    %v7628 = vld [vmem:[%s75] sm:$0xf]
    %v7629 = vld [vmem:[%s75 + $0x4] sm:$0xf]
    %v7630 = vld [vmem:[%s75 + $0x8] sm:$0xf]
    %v7631 = vld [vmem:[%s75 + $0xc] sm:$0xf]
    %v7632 = vld [vmem:[%s75 + $0x10] sm:$0xf]
    %v7633 = vld [vmem:[%s75 + $0x14] sm:$0xf]
    %v7634 = vld [vmem:[%s75 + $0x18] sm:$0xf]
    %v7635 = vld [vmem:[%s75 + $0x1c] sm:$0xf]
    %v7636 = vld [vmem:[%s75 + $0x20] sm:$0xf]
    %v7637 = vld [vmem:[%s75 + $0x24] sm:$0xf]
    %v7638 = vld [vmem:[%s75 + $0x28] sm:$0xf]
    %v7639 = vld [vmem:[%s75 + $0x2c] sm:$0xf]
    %v7640 = vld [vmem:[%s75 + $0x30] sm:$0xf]
    %v7641 = vld [vmem:[%s75 + $0x34] sm:$0xf]
    %v7642 = vld [vmem:[%s75 + $0x38] sm:$0xf]
    %v7643 = vld [vmem:[%s75 + $0x3c] sm:$0xf]
    %v7644 = vld [vmem:[%s75 + $0x40] sm:$0xf]
    %v7645 = vld [vmem:[%s75 + $0x44] sm:$0xf]
    %v7646 = vld [vmem:[%s75 + $0x48] sm:$0xf]
    %v7647 = vld [vmem:[%s75 + $0x4c] sm:$0xf]
    %v7648 = vld [vmem:[%s75 + $0x50] sm:$0xf]
    %v7649 = vld [vmem:[%s75 + $0x54] sm:$0xf]
    %v7650 = vld [vmem:[%s75 + $0x58] sm:$0xf]
    %v7651 = vld [vmem:[%s75 + $0x5c] sm:$0xf]
    %v7652 = vld [vmem:[%s75 + $0x60] sm:$0xf]
    %v7653 = vld [vmem:[%s75 + $0x64] sm:$0xf]
    %v7654 = vld [vmem:[%s75 + $0x68] sm:$0xf]
    %v7655 = vld [vmem:[%s75 + $0x6c] sm:$0xf]
    %v7656 = vld [vmem:[%s75 + $0x70] sm:$0xf]
    %v7657 = vld [vmem:[%s75 + $0x74] sm:$0xf]
    %v7658 = vld [vmem:[%s75 + $0x78] sm:$0xf]
    %v7659 = vld [vmem:[%s75 + $0x7c] sm:$0xf]
    %v7660 = vld [vmem:[%s75 + $0x80] sm:$0xf]
    %v7661 = vld [vmem:[%s75 + $0x84] sm:$0xf]
    %v7662 = vld [vmem:[%s75 + $0x88] sm:$0xf]
    %v7663 = vld [vmem:[%s75 + $0x8c] sm:$0xf]
    %v7664 = vld [vmem:[%s75 + $0x90] sm:$0xf]
    %v7665 = vld [vmem:[%s75 + $0x94] sm:$0xf]
    %v7666 = vld [vmem:[%s75 + $0x98] sm:$0xf]
    %v7667 = vld [vmem:[%s75 + $0x9c] sm:$0xf]
    %v7668 = vld [vmem:[%s75 + $0xa0] sm:$0xf]
    %v7669 = vld [vmem:[%s75 + $0xa4] sm:$0xf]
    %v7670 = vld [vmem:[%s75 + $0xa8] sm:$0xf]
    %v7671 = vld [vmem:[%s75 + $0xac] sm:$0xf]
    %v7672 = vld [vmem:[%s75 + $0xb0] sm:$0xf]
    %v7673 = vld [vmem:[%s75 + $0xb4] sm:$0xf]
    %v7674 = vld [vmem:[%s75 + $0xb8] sm:$0xf]
    %v7675 = vld [vmem:[%s75 + $0xbc] sm:$0xf]
    %v7724 = vunpack.c.l.b16 %v7628
    %v7725 = vunpack.c.l.b16 %v7629
    %v7726 = vunpack.c.l.b16 %v7630
    %v7727 = vunpack.c.l.b16 %v7631
    %v7728 = vunpack.c.l.b16 %v7632
    %v7729 = vunpack.c.l.b16 %v7633
    %v7730 = vunpack.c.l.b16 %v7634
    %v7731 = vunpack.c.l.b16 %v7635
    %v7732 = vunpack.c.l.b16 %v7636
    %v7733 = vunpack.c.l.b16 %v7637
    %v7734 = vunpack.c.l.b16 %v7638
    %v7735 = vunpack.c.l.b16 %v7639
    %v7736 = vunpack.c.l.b16 %v7640
    %v7737 = vunpack.c.l.b16 %v7641
    %v7738 = vunpack.c.l.b16 %v7642
    %v7739 = vunpack.c.l.b16 %v7643
    %v7740 = vunpack.c.l.b16 %v7644
    %v7741 = vunpack.c.l.b16 %v7645
    %v7742 = vunpack.c.l.b16 %v7646
    %v7743 = vunpack.c.l.b16 %v7647
    %v7744 = vunpack.c.l.b16 %v7648
    %v7745 = vunpack.c.l.b16 %v7649
    %v7746 = vunpack.c.l.b16 %v7650
    %v7747 = vunpack.c.l.b16 %v7651
    %v7748 = vunpack.c.l.b16 %v7652
    %v7749 = vunpack.c.l.b16 %v7653
    %v7750 = vunpack.c.l.b16 %v7654
    %v7751 = vunpack.c.l.b16 %v7655
    %v7752 = vunpack.c.l.b16 %v7656
    %v7753 = vunpack.c.l.b16 %v7657
    %v7754 = vunpack.c.l.b16 %v7658
    %v7755 = vunpack.c.l.b16 %v7659
    %v7756 = vunpack.c.l.b16 %v7660
    %v7757 = vunpack.c.l.b16 %v7661
    %v7758 = vunpack.c.l.b16 %v7662
    %v7759 = vunpack.c.l.b16 %v7663
    %v7760 = vunpack.c.l.b16 %v7664
    %v7761 = vunpack.c.l.b16 %v7665
    %v7762 = vunpack.c.l.b16 %v7666
    %v7763 = vunpack.c.l.b16 %v7667
    %v7764 = vunpack.c.l.b16 %v7668
    %v7765 = vunpack.c.l.b16 %v7669
    %v7766 = vunpack.c.l.b16 %v7670
    %v7767 = vunpack.c.l.b16 %v7671
    %v7768 = vunpack.c.l.b16 %v7672
    %v7769 = vunpack.c.l.b16 %v7673
    %v7770 = vunpack.c.l.b16 %v7674
    %v7771 = vunpack.c.l.b16 %v7675
    %v7772 = vpack.c.b16 %v7725, %v7724
    %v7773 = vpack.c.b16 %v7727, %v7726
    %v7774 = vpack.c.b16 %v7729, %v7728
    %v7775 = vpack.c.b16 %v7731, %v7730
    %v7776 = vpack.c.b16 %v7733, %v7732
    %v7777 = vpack.c.b16 %v7735, %v7734
    %v7778 = vpack.c.b16 %v7737, %v7736
    %v7779 = vpack.c.b16 %v7739, %v7738
    %v7780 = vpack.c.b16 %v7741, %v7740
    %v7781 = vpack.c.b16 %v7743, %v7742
    %v7782 = vpack.c.b16 %v7745, %v7744
    %v7783 = vpack.c.b16 %v7747, %v7746
    %v7784 = vpack.c.b16 %v7749, %v7748
    %v7785 = vpack.c.b16 %v7751, %v7750
    %v7786 = vpack.c.b16 %v7753, %v7752
    %v7787 = vpack.c.b16 %v7755, %v7754
    %v7788 = vpack.c.b16 %v7757, %v7756
    %v7789 = vpack.c.b16 %v7759, %v7758
    %v7790 = vpack.c.b16 %v7761, %v7760
    %v7791 = vpack.c.b16 %v7763, %v7762
    %v7792 = vpack.c.b16 %v7765, %v7764
    %v7793 = vpack.c.b16 %v7767, %v7766
    %v7794 = vpack.c.b16 %v7769, %v7768
    %v7795 = vpack.c.b16 %v7771, %v7770
    %7820 = vmatprep.subr.bf16.mxu0 0
    %7821 = vmatpush1.bf16.msra.mxu0 %v7772
    %7822 = vmatprep.subr.bf16.mxu0 0
    %7823 = vmatpush1.bf16.msra.mxu0 %v7773
    %7824 = vmatprep.subr.bf16.mxu0 0
    %7825 = vmatpush1.bf16.msra.mxu0 %v7774
    %7826 = vmatprep.subr.bf16.mxu0 0
    %7827 = vmatpush1.bf16.msra.mxu0 %v7775
    %7828 = vmatprep.subr.bf16.mxu0 0
    %7829 = vmatpush1.bf16.msra.mxu0 %v7776
    %7830 = vmatprep.subr.bf16.mxu0 0
    %7831 = vmatpush1.bf16.msra.mxu0 %v7777
    %7832 = vmatprep.subr.bf16.mxu0 0
    %7833 = vmatpush1.bf16.msra.mxu0 %v7778
    %7834 = vmatprep.subr.bf16.mxu0 0
    %7835 = vmatpush1.bf16.msra.mxu0 %v7779
    %7836 = vmatprep.subr.bf16.mxu0 0
    %7837 = vmatpush1.bf16.msra.mxu0 %v7780
    %7838 = vmatprep.subr.bf16.mxu0 0
    %7839 = vmatpush1.bf16.msra.mxu0 %v7781
    %7840 = vmatprep.subr.bf16.mxu0 0
    %7841 = vmatpush1.bf16.msra.mxu0 %v7782
    %7842 = vmatprep.subr.bf16.mxu0 0
    %7843 = vmatpush1.bf16.msra.mxu0 %v7783
    %7844 = vmatprep.subr.bf16.mxu0 0
    %7845 = vmatpush1.bf16.msra.mxu0 %v7784
    %7846 = vmatprep.subr.bf16.mxu0 0
    %7847 = vmatpush1.bf16.msra.mxu0 %v7785
    %7848 = vmatprep.subr.bf16.mxu0 0
    %7849 = vmatpush1.bf16.msra.mxu0 %v7786
    %7850 = vmatprep.subr.bf16.mxu0 0
    %7851 = vmatpush1.bf16.msra.mxu0 %v7787
    %7852 = vmatprep.mubr.bf16.mxu0 %v7623
    %7853 = vmatmul.mubr.bf16.gmra.mrb[0].mxu0 %v7622
    %v7854 = vpop.f32.mrb[0].mxu0
    %v7855 = vadd.f32 0.0, %v7854
    %v7856 = vpop.f32.mrb[0].mxu0
    %v7857 = vpop.f32.mrb[0].mxu0
    %v7858 = vadd.f32 0.0, %v7857
    %v7859 = vpop.f32.mrb[0].mxu0
    %7860 = vmatprep.mubr.bf16.mxu0 %v7626
    %7861 = vmatmul.mubr.bf16.gmra.mrb[0].mxu0 %v7625
    %v7862 = vpop.f32.mrb[0].mxu0
    %v7863 = vadd.f32 0.0, %v7862
    %v7864 = vpop.f32.mrb[0].mxu0
    %v7865 = vpop.f32.mrb[0].mxu0
    %v7866 = vadd.f32 0.0, %v7865
    %v7867 = vpop.f32.mrb[0].mxu0
    %7868 = vdwg.mxu0
    %7869 = vmatprep.subr.bf16.mxu0 0
    %7870 = vmatpush1.bf16.msra.mxu0 %v7788
    %7871 = vmatprep.subr.bf16.mxu0 0
    %7872 = vmatpush1.bf16.msra.mxu0 %v7789
    %7873 = vmatprep.subr.bf16.mxu0 0
    %7874 = vmatpush1.bf16.msra.mxu0 %v7790
    %7875 = vmatprep.subr.bf16.mxu0 0
    %7876 = vmatpush1.bf16.msra.mxu0 %v7791
    %7877 = vmatprep.subr.bf16.mxu0 0
    %7878 = vmatpush1.bf16.msra.mxu0 %v7792
    %7879 = vmatprep.subr.bf16.mxu0 0
    %7880 = vmatpush1.bf16.msra.mxu0 %v7793
    %7881 = vmatprep.subr.bf16.mxu0 0
    %7882 = vmatpush1.bf16.msra.mxu0 %v7794
    %7883 = vmatprep.subr.bf16.mxu0 0
    %7884 = vmatpush1.bf16.msra.mxu0 %v7795
    %7885 = vmatprep.subr.bf16.mxu0 0
    %7886 = vmatpush1.bf16.msra.mxu0 0
    %7887 = vmatprep.subr.bf16.mxu0 0
    %7888 = vmatpush1.bf16.msra.mxu0 0
    %7889 = vmatprep.subr.bf16.mxu0 0
    %7890 = vmatpush1.bf16.msra.mxu0 0
    %7891 = vmatprep.subr.bf16.mxu0 0
    %7892 = vmatpush1.bf16.msra.mxu0 0
    %7893 = vmatprep.subr.bf16.mxu0 0
    %7894 = vmatpush1.bf16.msra.mxu0 0
    %7895 = vmatprep.subr.bf16.mxu0 0
    %7896 = vmatpush1.bf16.msra.mxu0 0
    %7897 = vmatprep.subr.bf16.mxu0 0
    %7898 = vmatpush1.bf16.msra.mxu0 0
    %7899 = vmatprep.subr.bf16.mxu0 0
    %7900 = vmatpush1.bf16.msra.mxu0 0
    %7901 = vmatprep.mubr.bf16.mxu0 0
    %7902 = vmatmul.mubr.bf16.gmra.mrb[0].mxu0 %v7624
    %v7903 = vpop.f32.mrb[0].mxu0
    %v7904 = vadd.f32 %v7855, %v7903
    %v7905 = vpop.f32.mrb[0].mxu0
    %v7906 = vpop.f32.mrb[0].mxu0
    %v7907 = vadd.f32 %v7858, %v7906
    %v7908 = vpop.f32.mrb[0].mxu0
    %7909 = vmatprep.mubr.bf16.mxu0 0
    %7910 = vmatmul.mubr.bf16.gmra.mrb[0].mxu0 %v7627
    %v7911 = vpop.f32.mrb[0].mxu0
    %v7912 = vadd.f32 %v7863, %v7911
    %v7913 = vpop.f32.mrb[0].mxu0
    %v7914 = vpop.f32.mrb[0].mxu0
    %v7915 = vadd.f32 %v7866, %v7914
    %v7916 = vpop.f32.mrb[0].mxu0
    %7917 = vdwg.mxu0
    %vm7918 = vcmask 130048
    %v7919 = vsel %vm7918, %v7904, 0.0
    %v7920 = vsel %vm7918, %v7907, 0.0
    %v7921 = vadd.f32 %v7919, %v7920
    %v7922 = vsel %vm7918, %v7912, 0.0
    %v7923 = vadd.f32 %v7921, %v7922
    %v7924 = vsel %vm7918, %v7915, 0.0
    %v7925 = vadd.f32 %v7923, %v7924
    %7926 = vadd.xlane.f32.xlu0 %v7925
    %v7927 = vpop.xlane.xlu0 %7926
    %v7928 = vrot.slane %v7927, 4
    %v7929 = vadd.f32 %v7927, %v7928
    %v7930 = vrot.slane %v7929, 2
    %v7931 = vadd.f32 %v7929, %v7930
    %v7932 = vrot.slane %v7931, 1
    %v7933 = vadd.f32 %v7931, %v7932
    %s7934 = vtos %v7933
    %s7935 = smul.f32 %s7934, 0.001953125
    %v7936 = vmul.f32 %v7904, %v7904
    %v7937 = vmul.f32 %v7907, %v7907
    %v7938 = vmul.f32 %v7912, %v7912
    %v7939 = vmul.f32 %v7915, %v7915
    %v7940 = vsel %vm7918, %v7936, 0.0
    %v7941 = vsel %vm7918, %v7937, 0.0
    %v7942 = vadd.f32 %v7940, %v7941
    %v7943 = vsel %vm7918, %v7938, 0.0
    %v7944 = vadd.f32 %v7942, %v7943
    %v7945 = vsel %vm7918, %v7939, 0.0
    %v7946 = vadd.f32 %v7944, %v7945
    %7947 = vadd.xlane.f32.xlu0 %v7946
    %v7948 = vpop.xlane.xlu0 %7947
    %v7949 = vrot.slane %v7948, 4
    %v7950 = vadd.f32 %v7948, %v7949
    %v7951 = vrot.slane %v7950, 2
    %v7952 = vadd.f32 %v7950, %v7951
    %v7953 = vrot.slane %v7952, 1
    %v7954 = vadd.f32 %v7952, %v7953
    %s7955 = vtos %v7954
    %s7956 = smul.f32 %s7955, 0.001953125
    %s7957 = smul.f32 %s7935, %s7935
    %s7958 = ssub.f32 %s7956, %s7957
    %s7959 = smax.f32 %s7958, 0.0
    %v7960 = vld [vmem:[%s77] sm:$0x1]
    %s7961 = sadd.f32 %s7959, 1e-05
    %v7962 = vstv %s7961
    %v7963 = vrsqrt.pop %v7962
    %s7964 = vtos %v7963
    %v7965 = vstv %s7964
    %v7966 = vmul.f32 %v7960, %v7965
    %v7967 = vld [vmem:[%s79] sm:$0x1]
    %v7968 = vstv %s7935
    %v7969 = vmul.f32 %v7968, %v7966
    %v7970 = vsub.f32 %v7967, %v7969
    %v7972 = vlaneseq
    %v7973 = vshrl.u32 %v7972, 7
    %v7974 = vsub.s32 0, %v7973
    %v7975 = vrot.slane %v7966, %v7974
    %v7977 = vmul.f32 %v7904, %v7975
    %v7978 = vmul.f32 %v7907, %v7975
    %v7979 = vmul.f32 %v7912, %v7975
    %v7980 = vmul.f32 %v7915, %v7975
    %v7982 = vlaneseq
    %v7983 = vshrl.u32 %v7982, 7
    %v7984 = vsub.s32 0, %v7983
    %v7985 = vrot.slane %v7970, %v7984
    %v7987 = vadd.f32 %v7977, %v7985
    %v7988 = vadd.f32 %v7978, %v7985
    %v7989 = vadd.f32 %v7979, %v7985
    %v7990 = vadd.f32 %v7980, %v7985
    %v7991 = vxor.u32 %v7987, 2147483648
    %v7992 = vxor.u32 %v7988, 2147483648
    %v7993 = vxor.u32 %v7989, 2147483648
    %v7994 = vxor.u32 %v7990, 2147483648
    %v7995 = vmul.f32 %v7991, 1.442695
    %v7996 = vpow.pop %v7995
    %v7997 = vmul.f32 %v7992, 1.442695
    %v7998 = vpow.pop %v7997
    %v7999 = vmul.f32 %v7993, 1.442695
    %v8000 = vpow.pop %v7999
    %v8001 = vmul.f32 %v7994, 1.442695
    %v8002 = vpow.pop %v8001
    %v8003 = vadd.f32 %v7996, 1.0
    %v8004 = vadd.f32 %v7998, 1.0
    %v8005 = vadd.f32 %v8000, 1.0
    %v8006 = vadd.f32 %v8002, 1.0
    %v8007 = vrcp.pop %v8003
    %v8008 = vmul.f32 1.0, %v8007
    %v8009 = vrcp.pop %v8004
    %v8010 = vmul.f32 1.0, %v8009
    %v8011 = vrcp.pop %v8005
    %v8012 = vmul.f32 1.0, %v8011
    %v8013 = vrcp.pop %v8006
    %v8014 = vmul.f32 1.0, %v8013
    %8015 = vst.msk [vmem:[%s81] sm:$0xff] %vm7918, %v8008
    %8016 = vst.msk [vmem:[%s81 + $0x8] sm:$0xff] %vm7918, %v8010
    %8017 = vst.msk [vmem:[%s81 + $0x10] sm:$0xff] %vm7918, %v8012
    %8018 = vst.msk [vmem:[%s81 + $0x18] sm:$0xff] %vm7918, %v8014
    // Predicated region
    $region222: #{resnet_forward.1} parent=1 // pred_check
      _
    $region223: #{resnet_forward.1} parent=1 // pred_check_branch
      %8020 = sbr.rel (0) target = $region225
    $region224: #{resnet_forward.1} parent=1 // pred_region
      _
    $region225: #{resnet_forward.1} parent=1 // pred_fallthru
      _
    // Predicated region
    $region226: #{resnet_forward.1} parent=1 // pred_check
      _
    $region227: #{resnet_forward.1} parent=1 // pred_check_branch
      %8022 = sbr.rel (0) target = $region229
    $region228: #{resnet_forward.1} parent=1 // pred_region
      _
    $region229: #{resnet_forward.1} parent=1 // pred_fallthru
      _
    %8023 = vsyncpa [#allocation5], 1
    %8024 = vsyncpa [#allocation7], 1
    %8025 = vsyncpa [#allocation10], 1
    %8026 = vsyncpa [#allocation13], 1
    %8027 = vsyncpa [#allocation16], 1
    %8028 = vsyncpa [#allocation19], 1
    %8029 = vsyncpa [#allocation22], 1
    %8030 = vsyncpa [#allocation25], 1

</llo_original>
